<compile_context>
chip_gen: v6e
topology: v6e:2x2x1
jax: 0.10.0
libtpu: 0.0.40
codegen_flags: <defaults>
</compile_context>

<pallas_src>
import functools

import jax
import jax.numpy as jnp
from jax import lax
from jax.experimental import pallas as pl
from jax.experimental.pallas import tpu as pltpu

# Keep MXU f32 matmuls at full precision so the kernel matches the f32
# reference tightly (applies to both the Pallas dots and the reference).
jax.config.update("jax_default_matmul_precision", "highest")

REGIONS = 6
REGION_IDXS = [[0, 1], [2, 3], [4], [5], [6], [7]]
REGION_IN = [10, 10, 5, 5, 5, 5]          # per-region flattened input size
REGION_OFF = [0, 10, 20, 25, 30, 35]      # column offset into flattened x
IN_FLAT = 40                              # 8 channels * 5 features
EPS = 1e-5
RLANES = 128                              # lanes used by the region mask


def _default_tiling():
    """Per-generation batch tile / VMEM budget (perf review items 5-7)."""
    kind = ""
    try:
        kind = jax.devices()[0].device_kind.lower()
    except Exception:
        pass
    if "v7" in kind or "tpu7" in kind:     # 64 MiB physical VMEM on v7x
        return 1024, 48 * 1024 * 1024
    return 2048, 64 * 1024 * 1024          # v5e / v6e: 128 MiB physical VMEM


# ---------------------------------------------------------------------------
# Pass 1 (large batch): stats only.  Recompute-friendly -- y is never stored.
# Outputs are the per-column (lane-dense) sum and sum-of-squares accumulated
# across batch tiles ("arbitrary" sequential grid, output-as-accumulator).
# ---------------------------------------------------------------------------
def _stats_kernel(x_ref, w_ref, b_ref, sum_ref, sq_ref,
                  *, block_b, b_actual, has_ragged):
    pid = pl.program_id(0)
    last = pl.num_programs(0) - 1

    @pl.when(pid == 0)
    def _():
        sum_ref[...] = jnp.zeros_like(sum_ref)
        sq_ref[...] = jnp.zeros_like(sq_ref)

    y = jnp.dot(x_ref[...], w_ref[...], preferred_element_type=jnp.float32)
    y = jnp.maximum(y + b_ref[...], 0.0)

    def _accumulate(yv):
        sum_ref[...] += jnp.sum(yv, axis=0, keepdims=True)
        sq_ref[...] += jnp.sum(yv * yv, axis=0, keepdims=True)

    if has_ragged:
        # Only the last tile contains padded (stale) rows -> gate the masking
        # so full tiles pay no iota/cmp/select cost (review item 3).
        @pl.when(pid == last)
        def _():
            row = pid * block_b + lax.broadcasted_iota(jnp.int32, y.shape, 0)
            _accumulate(jnp.where(row < b_actual, y, 0.0))

        @pl.when(pid != last)
        def _():
            _accumulate(y)
    else:
        _accumulate(y)


# ---------------------------------------------------------------------------
# Pass 2 (large batch): recompute y = relu(x@W+b) (K=40, ~50x cheaper than the
# DMA it replaces) and apply the fused BN affine.  "parallel" grid -> megacore
# sharding of the dominant HBM traffic on v7x.
# ---------------------------------------------------------------------------
def _output_kernel(x_ref, w_ref, b_ref, scale_ref, shift_ref, o_ref):
    y = jnp.dot(x_ref[...], w_ref[...], preferred_element_type=jnp.float32)
    y = jnp.maximum(y + b_ref[...], 0.0)
    o_ref[...] = y * scale_ref[...] + shift_ref[...]


# ---------------------------------------------------------------------------
# Small-batch fast path: single launch, single grid step, y kept on-chip.
# Region reduction / lane broadcast of the BN stats via two tiny M=1 MXU
# matmuls against a region-indicator mask (no cross-lane reshapes).
# ---------------------------------------------------------------------------
def _fused_kernel(x_ref, w_ref, b_ref, gammae_ref, betae_ref,
                  mask_ref, mask_t_ref, o_ref, *, inv_n, eps):
    y = jnp.dot(x_ref[...], w_ref[...], preferred_element_type=jnp.float32)
    y = jnp.maximum(y + b_ref[...], 0.0)

    col_sum = jnp.sum(y, axis=0, keepdims=True)          # (1, N)
    col_sq = jnp.sum(y * y, axis=0, keepdims=True)        # (1, N)
    r_sum = jnp.dot(col_sum, mask_ref[...],
                    preferred_element_type=jnp.float32)   # (1, RLANES)
    r_sq = jnp.dot(col_sq, mask_ref[...],
                   preferred_element_type=jnp.float32)
    mean = r_sum * inv_n
    var = r_sq * inv_n - mean * mean                      # biased (training BN)
    inv_std = lax.rsqrt(var + eps)
    mean_b = jnp.dot(mean, mask_t_ref[...],
                     preferred_element_type=jnp.float32)  # (1, N)
    inv_std_b = jnp.dot(inv_std, mask_t_ref[...],
                        preferred_element_type=jnp.float32)
    scale = inv_std_b * gammae_ref[...]
    shift = betae_ref[...] - mean_b * scale
    o_ref[...] = y * scale + shift


def build_fused_params(weights, biases, gamma, beta, output_size):
    """Pack per-region Linear params into a block-diagonal weight plus
    lane-dense BN affine vectors and the region-indicator masks."""
    O = output_size
    N = REGIONS * O
    w_pad = jnp.zeros((IN_FLAT, N), jnp.float32)
    b_pad = jnp.zeros((1, N), jnp.float32)
    mask = jnp.zeros((N, RLANES), jnp.float32)
    for r in range(REGIONS):
        off = REGION_OFF[r]
        w_pad = w_pad.at[off:off + REGION_IN[r],
                         r * O:(r + 1) * O].set(weights[r].T)
        b_pad = b_pad.at[0, r * O:(r + 1) * O].set(biases[r])
        mask = mask.at[r * O:(r + 1) * O, r].set(1.0)
    gammae = jnp.broadcast_to(gamma[:, None], (REGIONS, O)).reshape(1, N)
    betae = jnp.broadcast_to(beta[:, None], (REGIONS, O)).reshape(1, N)
    return dict(w=w_pad, b=b_pad, gammae=gammae, betae=betae,
                mask=mask, mask_t=mask.T,
                gamma=jnp.asarray(gamma, jnp.float32),
                beta=jnp.asarray(beta, jnp.float32))


def peripheral_feature_extractor2(x, params, *, output_size, block_b=None):
    """x: (B, 8, 5) float32 -> (B, 6, output_size) float32."""
    B = x.shape[0]
    O = output_size
    N = REGIONS * O
    default_bt, vmem_limit = _default_tiling()
    bt = default_bt if block_b is None else int(block_b)
    bt = max(8, (bt // 8) * 8)                 # sublane-aligned batch tile

    x_flat = x.reshape(B, IN_FLAT).astype(jnp.float32)
    w_pad, b_pad = params["w"], params["b"]
    inv_n = 1.0 / float(B * O)

    # ---------------- small batch: single fused call ----------------
    if B <= bt:
        out = pl.pallas_call(
            functools.partial(_fused_kernel, inv_n=inv_n, eps=EPS),
            out_shape=jax.ShapeDtypeStruct((B, N), jnp.float32),
            grid_spec=pltpu.PrefetchScalarGridSpec(
                num_scalar_prefetch=0,
                grid=(1,),
                in_specs=[
                    pl.BlockSpec((B, IN_FLAT), lambda i: (0, 0)),
                    pl.BlockSpec((IN_FLAT, N), lambda i: (0, 0)),
                    pl.BlockSpec((1, N), lambda i: (0, 0)),
                    pl.BlockSpec((1, N), lambda i: (0, 0)),
                    pl.BlockSpec((1, N), lambda i: (0, 0)),
                    pl.BlockSpec((N, RLANES), lambda i: (0, 0)),
                    pl.BlockSpec((RLANES, N), lambda i: (0, 0)),
                ],
                out_specs=pl.BlockSpec((B, N), lambda i: (0, 0)),
            ),
            compiler_params=pltpu.CompilerParams(
                dimension_semantics=("arbitrary",),
                vmem_limit_bytes=vmem_limit),
        )(x_flat, w_pad, b_pad, params["gammae"], params["betae"],
          params["mask"], params["mask_t"])
        return out.reshape(B, REGIONS, O)

    # ---------------- large batch: stats pass + output pass ----------------
    nbt = -(-B // bt)                          # ceil-div; last block may be ragged
    has_ragged = (B % bt) != 0

    col_sum, col_sq = pl.pallas_call(
        functools.partial(_stats_kernel, block_b=bt, b_actual=B,
                          has_ragged=has_ragged),
        out_shape=(jax.ShapeDtypeStruct((1, N), jnp.float32),
                   jax.ShapeDtypeStruct((1, N), jnp.float32)),
        grid_spec=pltpu.PrefetchScalarGridSpec(
            num_scalar_prefetch=0,
            grid=(nbt,),
            in_specs=[
                pl.BlockSpec((bt, IN_FLAT), lambda i: (i, 0)),   # x tile
                pl.BlockSpec((IN_FLAT, N), lambda i: (0, 0)),    # block-diag W
                pl.BlockSpec((1, N), lambda i: (0, 0)),          # bias
            ],
            out_specs=[pl.BlockSpec((1, N), lambda i: (0, 0)),   # column sum
                       pl.BlockSpec((1, N), lambda i: (0, 0))],  # column sumsq
        ),
        compiler_params=pltpu.CompilerParams(
            dimension_semantics=("arbitrary",),
            vmem_limit_bytes=vmem_limit),
    )(x_flat, w_pad, b_pad)

    # Tiny BN finalize in plain JAX (review item 9): region reduction,
    # biased variance, fused scale/shift broadcast back to lane-dense (1, N).
    r_sum = col_sum.reshape(REGIONS, O).sum(axis=1)
    r_sq = col_sq.reshape(REGIONS, O).sum(axis=1)
    mean = r_sum * inv_n
    var = r_sq * inv_n - mean * mean
    inv_std = lax.rsqrt(var + EPS)
    scale_r = params["gamma"] * inv_std
    shift_r = params["beta"] - mean * scale_r
    scale = jnp.broadcast_to(scale_r[:, None], (REGIONS, O)).reshape(1, N)
    shift = jnp.broadcast_to(shift_r[:, None], (REGIONS, O)).reshape(1, N)

    out = pl.pallas_call(
        _output_kernel,
        out_shape=jax.ShapeDtypeStruct((B, N), jnp.float32),
        grid_spec=pltpu.PrefetchScalarGridSpec(
            num_scalar_prefetch=0,
            grid=(nbt,),
            in_specs=[
                pl.BlockSpec((bt, IN_FLAT), lambda i: (i, 0)),   # x tile
                pl.BlockSpec((IN_FLAT, N), lambda i: (0, 0)),    # block-diag W
                pl.BlockSpec((1, N), lambda i: (0, 0)),          # bias
                pl.BlockSpec((1, N), lambda i: (0, 0)),          # scale
                pl.BlockSpec((1, N), lambda i: (0, 0)),          # shift
            ],
            out_specs=pl.BlockSpec((bt, N), lambda i: (i, 0)),
        ),
        compiler_params=pltpu.CompilerParams(
            dimension_semantics=("parallel",),      # megacore on v7x
            vmem_limit_bytes=vmem_limit),
    )(x_flat, w_pad, b_pad, scale, shift)

    return out.reshape(B, REGIONS, O)


def init_params(key, output_size):
    """Deterministic synthetic per-region (W_r: (O, in_r), b_r: (O,)) like
    nn.Linear, plus BN gamma/beta (6,)."""
    O = output_size
    keys = jax.random.split(key, 2 * REGIONS + 2)
    weights, biases = [], []
    for r in range(REGIONS):
        in_r = REGION_IN[r]
        weights.append(0.1 * jax.random.normal(keys[2 * r], (O, in_r),
                                               jnp.float32))
        biases.append(0.1 * jax.random.normal(keys[2 * r + 1], (O,),
                                              jnp.float32))
    gamma = 1.0 + 0.1 * jax.random.normal(keys[-2], (REGIONS,), jnp.float32)
    beta = 0.1 * jax.random.normal(keys[-1], (REGIONS,), jnp.float32)
    return weights, biases, gamma, beta


def reference_forward(x, weights, biases, gamma, beta, output_size):
    """Pure-JAX reference mirroring the PyTorch forward (training-mode BN)."""
    B = x.shape[0]
    outs = []
    for r, idx in enumerate(REGION_IDXS):
        xr = x[:, jnp.array(idx), :].reshape(B, -1)
        outs.append(jnp.maximum(xr @ weights[r].T + biases[r], 0.0))
    y = jnp.concatenate(outs, axis=-1).reshape(B, REGIONS, output_size)
    mean = jnp.mean(y, axis=(0, 2), keepdims=True)
    var = jnp.mean((y - mean) ** 2, axis=(0, 2), keepdims=True)
    return (y - mean) / jnp.sqrt(var + EPS) * gamma[None, :, None] \
        + beta[None, :, None]


if __name__ == "__main__":
    key = jax.random.PRNGKey(0)

    # Case 1: module sizes (O=64), tiny batch -> single fused kernel path.
    # Case 2: forced small tile (block_b=8), B=20 -> two-pass path with a
    #         ragged last batch tile (row masking gated to the last step).
    # Case 3: two-pass path, exact tiles, N=192 (not a 128 multiple) to check
    #         the non-lane-dense output case.
    cases = [dict(B=4, O=64, block_b=None),
             dict(B=20, O=64, block_b=8),
             dict(B=16, O=32, block_b=8)]

    ok = True
    for c in cases:
        B, O = c["B"], c["O"]
        k_x, k_p = jax.random.split(jax.random.fold_in(key, B * 1000 + O))
        x = jax.random.normal(k_x, (B, 8, 5), jnp.float32)
        weights, biases, gamma, beta = init_params(k_p, O)
        params = build_fused_params(weights, biases, gamma, beta, O)

        out = peripheral_feature_extractor2(
            x, params, output_size=O, block_b=c["block_b"])
        out = jax.block_until_ready(out)

        ref = reference_forward(x, weights, biases, gamma, beta, O)
        assert out.shape == (B, REGIONS, O)
        err = float(jnp.max(jnp.abs(out - ref)))
        if not jnp.allclose(out, ref, atol=2e-4, rtol=2e-4):
            ok = False
            print(f"MISMATCH B={B} O={O}: max err {err}")

    if ok:
        print("KERNEL_OK")
</pallas_src>

<mosaic_0001>
module attributes {stable_mosaic.version = 11 : i64} {
  func.func @_fused_kernel(%arg0: i32, %arg1: memref<4x40xf32, #tpu.memory_space<vmem>>, %arg2: memref<40x384xf32, #tpu.memory_space<vmem>>, %arg3: memref<1x384xf32, #tpu.memory_space<vmem>>, %arg4: memref<1x384xf32, #tpu.memory_space<vmem>>, %arg5: memref<1x384xf32, #tpu.memory_space<vmem>>, %arg6: memref<384x128xf32, #tpu.memory_space<vmem>>, %arg7: memref<128x384xf32, #tpu.memory_space<vmem>>, %arg8: memref<4x384xf32, #tpu.memory_space<vmem>>) attributes {dimension_semantics = [#tpu.dimension_semantics<arbitrary>], iteration_bounds = array<i64: 1>, scalar_prefetch = 0 : i64, scratch_operands = 0 : i64, tpu.core_type = #tpu.core_type<tc>, window_params = [{pipeline_mode = #tpu.pipeline_mode<synchronous>, transform_indices = @transform_0, window_bounds = array<i64: 4, 40>}, {pipeline_mode = #tpu.pipeline_mode<synchronous>, transform_indices = @transform_1, window_bounds = array<i64: 40, 384>}, {pipeline_mode = #tpu.pipeline_mode<synchronous>, transform_indices = @transform_2, window_bounds = array<i64: 1, 384>}, {pipeline_mode = #tpu.pipeline_mode<synchronous>, transform_indices = @transform_3, window_bounds = array<i64: 1, 384>}, {pipeline_mode = #tpu.pipeline_mode<synchronous>, transform_indices = @transform_4, window_bounds = array<i64: 1, 384>}, {pipeline_mode = #tpu.pipeline_mode<synchronous>, transform_indices = @transform_5, window_bounds = array<i64: 384, 128>}, {pipeline_mode = #tpu.pipeline_mode<synchronous>, transform_indices = @transform_6, window_bounds = array<i64: 128, 384>}, {pipeline_mode = #tpu.pipeline_mode<synchronous>, transform_indices = @transform_7, window_bounds = array<i64: 4, 384>}]} {
    %c0 = arith.constant 0 : index
    %c0_0 = arith.constant 0 : index
    %0 = vector.load %arg1[%c0, %c0_0] : memref<4x40xf32, #tpu.memory_space<vmem>>, vector<4x40xf32>
    %c0_1 = arith.constant 0 : index
    %c0_2 = arith.constant 0 : index
    %1 = vector.load %arg2[%c0_1, %c0_2] : memref<40x384xf32, #tpu.memory_space<vmem>>, vector<40x384xf32>
    %cst = arith.constant dense<0.000000e+00> : vector<4x384xf32>
    %2 = tpu.matmul %0, %1, %cst {dimension_numbers = #tpu.dot_dimension_numbers<[1], [0], [0], [1], [0, 0, 1, 1], [], []>, precision = #tpu.contract_precision<fp32>} : vector<4x40xf32>, vector<40x384xf32>, vector<4x384xf32> -> vector<4x384xf32>
    %c0_3 = arith.constant 0 : index
    %c0_4 = arith.constant 0 : index
    %3 = vector.load %arg3[%c0_3, %c0_4] : memref<1x384xf32, #tpu.memory_space<vmem>>, vector<1x384xf32>
    %4 = vector.broadcast %3 : vector<1x384xf32> to vector<4x384xf32>
    %5 = arith.addf %2, %4 : vector<4x384xf32>
    %cst_5 = arith.constant 0.000000e+00 : f32
    %6 = vector.broadcast %cst_5 : f32 to vector<4x384xf32>
    %7 = arith.maximumf %5, %6 : vector<4x384xf32>
    %cst_6 = arith.constant dense<0.000000e+00> : vector<384xf32>
    %8 = vector.multi_reduction <add>, %7, %cst_6 [0] : vector<4x384xf32> to vector<384xf32>
    %9 = vector.shape_cast %8 : vector<384xf32> to vector<1x384xf32>
    %10 = arith.mulf %7, %7 : vector<4x384xf32>
    %cst_7 = arith.constant dense<0.000000e+00> : vector<384xf32>
    %11 = vector.multi_reduction <add>, %10, %cst_7 [0] : vector<4x384xf32> to vector<384xf32>
    %12 = vector.shape_cast %11 : vector<384xf32> to vector<1x384xf32>
    %c0_8 = arith.constant 0 : index
    %c0_9 = arith.constant 0 : index
    %13 = vector.load %arg6[%c0_8, %c0_9] : memref<384x128xf32, #tpu.memory_space<vmem>>, vector<384x128xf32>
    %cst_10 = arith.constant dense<0.000000e+00> : vector<1x128xf32>
    %14 = tpu.matmul %9, %13, %cst_10 {dimension_numbers = #tpu.dot_dimension_numbers<[1], [0], [0], [1], [0, 0, 1, 1], [], []>, precision = #tpu.contract_precision<fp32>} : vector<1x384xf32>, vector<384x128xf32>, vector<1x128xf32> -> vector<1x128xf32>
    %c0_11 = arith.constant 0 : index
    %c0_12 = arith.constant 0 : index
    %15 = vector.load %arg6[%c0_11, %c0_12] : memref<384x128xf32, #tpu.memory_space<vmem>>, vector<384x128xf32>
    %cst_13 = arith.constant dense<0.000000e+00> : vector<1x128xf32>
    %16 = tpu.matmul %12, %15, %cst_13 {dimension_numbers = #tpu.dot_dimension_numbers<[1], [0], [0], [1], [0, 0, 1, 1], [], []>, precision = #tpu.contract_precision<fp32>} : vector<1x384xf32>, vector<384x128xf32>, vector<1x128xf32> -> vector<1x128xf32>
    %cst_14 = arith.constant 3.906250e-03 : f32
    %17 = vector.broadcast %cst_14 : f32 to vector<1x128xf32>
    %18 = arith.mulf %14, %17 : vector<1x128xf32>
    %cst_15 = arith.constant 3.906250e-03 : f32
    %19 = vector.broadcast %cst_15 : f32 to vector<1x128xf32>
    %20 = arith.mulf %16, %19 : vector<1x128xf32>
    %21 = arith.mulf %18, %18 : vector<1x128xf32>
    %22 = arith.subf %20, %21 : vector<1x128xf32>
    %cst_16 = arith.constant 9.99999974E-6 : f32
    %23 = vector.broadcast %cst_16 : f32 to vector<1x128xf32>
    %24 = arith.addf %22, %23 : vector<1x128xf32>
    %25 = math.rsqrt %24 : vector<1x128xf32>
    %c0_17 = arith.constant 0 : index
    %c0_18 = arith.constant 0 : index
    %26 = vector.load %arg7[%c0_17, %c0_18] : memref<128x384xf32, #tpu.memory_space<vmem>>, vector<128x384xf32>
    %cst_19 = arith.constant dense<0.000000e+00> : vector<1x384xf32>
    %27 = tpu.matmul %18, %26, %cst_19 {dimension_numbers = #tpu.dot_dimension_numbers<[1], [0], [0], [1], [0, 0, 1, 1], [], []>, precision = #tpu.contract_precision<fp32>} : vector<1x128xf32>, vector<128x384xf32>, vector<1x384xf32> -> vector<1x384xf32>
    %c0_20 = arith.constant 0 : index
    %c0_21 = arith.constant 0 : index
    %28 = vector.load %arg7[%c0_20, %c0_21] : memref<128x384xf32, #tpu.memory_space<vmem>>, vector<128x384xf32>
    %cst_22 = arith.constant dense<0.000000e+00> : vector<1x384xf32>
    %29 = tpu.matmul %25, %28, %cst_22 {dimension_numbers = #tpu.dot_dimension_numbers<[1], [0], [0], [1], [0, 0, 1, 1], [], []>, precision = #tpu.contract_precision<fp32>} : vector<1x128xf32>, vector<128x384xf32>, vector<1x384xf32> -> vector<1x384xf32>
    %c0_23 = arith.constant 0 : index
    %c0_24 = arith.constant 0 : index
    %30 = vector.load %arg4[%c0_23, %c0_24] : memref<1x384xf32, #tpu.memory_space<vmem>>, vector<1x384xf32>
    %31 = arith.mulf %29, %30 : vector<1x384xf32>
    %c0_25 = arith.constant 0 : index
    %c0_26 = arith.constant 0 : index
    %32 = vector.load %arg5[%c0_25, %c0_26] : memref<1x384xf32, #tpu.memory_space<vmem>>, vector<1x384xf32>
    %33 = arith.mulf %27, %31 : vector<1x384xf32>
    %34 = arith.subf %32, %33 : vector<1x384xf32>
    %35 = vector.broadcast %31 : vector<1x384xf32> to vector<4x384xf32>
    %36 = arith.mulf %7, %35 : vector<4x384xf32>
    %37 = vector.broadcast %34 : vector<1x384xf32> to vector<4x384xf32>
    %38 = arith.addf %36, %37 : vector<4x384xf32>
    %c0_27 = arith.constant 0 : index
    %c0_28 = arith.constant 0 : index
    %39 = vector.load %arg8[%c0_27, %c0_28] : memref<4x384xf32, #tpu.memory_space<vmem>>, vector<4x384xf32>
    tpu.vector_store %arg8[%c0_27, %c0_28], %38 {strides = array<i32>} : memref<4x384xf32, #tpu.memory_space<vmem>>, vector<4x384xf32>,
    return
  }
  func.func @transform_0(%arg0: i32) -> (i32, i32) {
    %c0_i32 = arith.constant 0 : i32
    %c0_i32_0 = arith.constant 0 : i32
    %c0_i32_1 = arith.constant 0 : i32
    return %c0_i32, %c0_i32_0 : i32, i32
  }
  func.func @transform_1(%arg0: i32) -> (i32, i32) {
    %c0_i32 = arith.constant 0 : i32
    %c0_i32_0 = arith.constant 0 : i32
    %c0_i32_1 = arith.constant 0 : i32
    return %c0_i32, %c0_i32_0 : i32, i32
  }
  func.func @transform_2(%arg0: i32) -> (i32, i32) {
    %c0_i32 = arith.constant 0 : i32
    %c0_i32_0 = arith.constant 0 : i32
    %c0_i32_1 = arith.constant 0 : i32
    return %c0_i32, %c0_i32_0 : i32, i32
  }
  func.func @transform_3(%arg0: i32) -> (i32, i32) {
    %c0_i32 = arith.constant 0 : i32
    %c0_i32_0 = arith.constant 0 : i32
    %c0_i32_1 = arith.constant 0 : i32
    return %c0_i32, %c0_i32_0 : i32, i32
  }
  func.func @transform_4(%arg0: i32) -> (i32, i32) {
    %c0_i32 = arith.constant 0 : i32
    %c0_i32_0 = arith.constant 0 : i32
    %c0_i32_1 = arith.constant 0 : i32
    return %c0_i32, %c0_i32_0 : i32, i32
  }
  func.func @transform_5(%arg0: i32) -> (i32, i32) {
    %c0_i32 = arith.constant 0 : i32
    %c0_i32_0 = arith.constant 0 : i32
    %c0_i32_1 = arith.constant 0 : i32
    return %c0_i32, %c0_i32_0 : i32, i32
  }
  func.func @transform_6(%arg0: i32) -> (i32, i32) {
    %c0_i32 = arith.constant 0 : i32
    %c0_i32_0 = arith.constant 0 : i32
    %c0_i32_1 = arith.constant 0 : i32
    return %c0_i32, %c0_i32_0 : i32, i32
  }
  func.func @transform_7(%arg0: i32) -> (i32, i32) {
    %c0_i32 = arith.constant 0 : i32
    %c0_i32_0 = arith.constant 0 : i32
    %c0_i32_1 = arith.constant 0 : i32
    return %c0_i32, %c0_i32_0 : i32, i32
  }
}

</mosaic_0001>

<llo_original>
// kernel: tpu_custom_call.1
$region0: #{tpu_custom_call.1}
  #allocation0 [shape = 'u32[]', space=smem, size = 0x4, offset = 0x4, fixed_abs, tag = 'smem constant byte address 0x4 - core index']
  #allocation1 [shape = 'u32[144,128]{1,0:T(1,128)}', space=vmem, size = 0x12000, scoped, tag = 'internal scratch']
  %s0 = inlined_call_operand.hbm [shape: f32[4,40], index: 0, kind: input, shape index: {}]
  %s1 = inlined_call_operand.hbm [shape: f32[40,384], index: 1, kind: input, shape index: {}]
  %s2 = inlined_call_operand.vmem [shape: f32[1,384], index: 2, kind: input, shape index: {}]
  %s3 = inlined_call_operand.hbm [shape: f32[1,384], index: 3, kind: input, shape index: {}]
  %s4 = inlined_call_operand.vmem [shape: f32[1,384], index: 4, kind: input, shape index: {}]
  %s5 = inlined_call_operand.hbm [shape: f32[384,128], index: 5, kind: input, shape index: {}]
  %s6 = inlined_call_operand.hbm [shape: f32[128,384], index: 6, kind: input, shape index: {}]
  %s7 = inlined_call_operand.hbm [shape: f32[4,384], index: 7, kind: output, shape index: {}]
  %s8 = sld [smem:[#allocation0]]
  $region58: #{tpu_custom_call.1} parent=0
    _
  %s10 = ssub.s32 1, %s8
  %s11 = scalar_select 0, %s10, %s8
  $region1: #{tpu_custom_call.1} parent=0
    #allocation2 [shape = 'u8[2048]{0}', space=vmem, size = 0x800, scoped, tag = 'input window, operand 0, single buffered']
    #allocation3 [shape = 's32[1]{0}', space=sflag, size = 0x4, scoped, tag = 'scoped memory for tpu_custom_call.1']
    #allocation4 [shape = 's32[1]{0}', space=sflag, size = 0x4, scoped, tag = 'scoped memory for tpu_custom_call.1']
    #allocation5 [shape = 'u8[61440]{0}', space=vmem, size = 0xf000, scoped, tag = 'input window, operand 1, single buffered']
    #allocation6 [shape = 's32[1]{0}', space=sflag, size = 0x4, scoped, tag = 'scoped memory for tpu_custom_call.1']
    #allocation7 [shape = 'u8[1536]{0}', space=vmem, size = 0x800, scoped, tag = 'input window, operand 3, single buffered']
    #allocation8 [shape = 'u8[196608]{0}', space=vmem, size = 0x30000, scoped, tag = 'input window, operand 5, single buffered']
    #allocation9 [shape = 's32[1]{0}', space=sflag, size = 0x4, scoped, tag = 'scoped memory for tpu_custom_call.1']
    #allocation10 [shape = 'u8[196608]{0}', space=vmem, size = 0x30000, scoped, tag = 'input window, operand 6, single buffered']
    #allocation11 [shape = 'u8[6144]{0}', space=vmem, size = 0x1800, scoped, tag = 'output window, operand 0, single buffered']
    %12 = vsyncpa [#allocation3], 0
    %13 = vsyncpa [#allocation6], 0
    %14 = vsyncpa [#allocation9], 0
    %15 = vsyncpa [#allocation4], 0
    // Predicated region
    $region2: #{tpu_custom_call.1} parent=1 // pred_check
      _
    $region3: #{tpu_custom_call.1} parent=1 // pred_check_branch
      %17 = sbr.rel (0) target = $region5
    $region4: #{tpu_custom_call.1} parent=1 // pred_region
      %s19 = ssub.s32 64, 64
      %20 = vsyncadd [#allocation3], %s19
      %s22 = sshll.u32 [#allocation2], 4
      %s23 = int_to_ptr.vmem [resolvable:$true] %s22
      %25 = dma.hbm_to_vmem [thread:$0]  %s0, 64, %s23, [#allocation3]
    $region5: #{tpu_custom_call.1} parent=1 // pred_fallthru
      _
    // Predicated region
    $region6: #{tpu_custom_call.1} parent=1 // pred_check
      _
    $region7: #{tpu_custom_call.1} parent=1 // pred_check_branch
      %27 = sbr.rel (0) target = $region9
    $region8: #{tpu_custom_call.1} parent=1 // pred_region
      %s29 = ssub.s32 1920, 1920
      %30 = vsyncadd [#allocation6], %s29
      %s31 = sshll.u32 [#allocation5], 4
      %s32 = int_to_ptr.vmem [resolvable:$true] %s31
      %37 = dma.hbm_to_vmem [thread:$0]  %s1, 1920, %s32, [#allocation6], 384, 384, 24
    $region9: #{tpu_custom_call.1} parent=1 // pred_fallthru
      _
    // Predicated region
    $region10: #{tpu_custom_call.1} parent=1 // pred_check
      _
    $region11: #{tpu_custom_call.1} parent=1 // pred_check_branch
      %39 = sbr.rel (0) target = $region13
    $region12: #{tpu_custom_call.1} parent=1 // pred_region
      _
    $region13: #{tpu_custom_call.1} parent=1 // pred_fallthru
      _
    // Predicated region
    $region14: #{tpu_custom_call.1} parent=1 // pred_check
      _
    $region15: #{tpu_custom_call.1} parent=1 // pred_check_branch
      %41 = sbr.rel (0) target = $region17
    $region16: #{tpu_custom_call.1} parent=1 // pred_region
      %s43 = ssub.s32 48, 48
      %44 = vsyncadd [#allocation6], %s43
      %s46 = sshll.u32 [#allocation7], 4
      %s47 = int_to_ptr.vmem [resolvable:$true] %s46
      %49 = dma.hbm_to_vmem [thread:$0]  %s3, 48, %s47, [#allocation6]
    $region17: #{tpu_custom_call.1} parent=1 // pred_fallthru
      _
    // Predicated region
    $region18: #{tpu_custom_call.1} parent=1 // pred_check
      _
    $region19: #{tpu_custom_call.1} parent=1 // pred_check_branch
      %51 = sbr.rel (0) target = $region21
    $region20: #{tpu_custom_call.1} parent=1 // pred_region
      _
    $region21: #{tpu_custom_call.1} parent=1 // pred_fallthru
      _
    // Predicated region
    $region22: #{tpu_custom_call.1} parent=1 // pred_check
      _
    $region23: #{tpu_custom_call.1} parent=1 // pred_check_branch
      %53 = sbr.rel (0) target = $region25
    $region24: #{tpu_custom_call.1} parent=1 // pred_region
      %s55 = ssub.s32 6144, 6144
      %56 = vsyncadd [#allocation9], %s55
      %s57 = sshll.u32 [#allocation8], 4
      %s58 = int_to_ptr.vmem [resolvable:$true] %s57
      %63 = dma.hbm_to_vmem [thread:$0]  %s5, 6144, %s58, [#allocation9], 128, 128, 8
    $region25: #{tpu_custom_call.1} parent=1 // pred_fallthru
      _
    // Predicated region
    $region26: #{tpu_custom_call.1} parent=1 // pred_check
      _
    $region27: #{tpu_custom_call.1} parent=1 // pred_check_branch
      %65 = sbr.rel (0) target = $region29
    $region28: #{tpu_custom_call.1} parent=1 // pred_region
      %s67 = ssub.s32 6144, 6144
      %68 = vsyncadd [#allocation9], %s67
      %s69 = sshll.u32 [#allocation10], 4
      %s70 = int_to_ptr.vmem [resolvable:$true] %s69
      %75 = dma.hbm_to_vmem [thread:$0]  %s6, 6144, %s70, [#allocation9], 384, 384, 24
    $region29: #{tpu_custom_call.1} parent=1 // pred_fallthru
      _
    // Predicated region
    $region30: #{tpu_custom_call.1} parent=1 // pred_check
      _
    $region31: #{tpu_custom_call.1} parent=1 // pred_check_branch
      %77 = sbr.rel (0) target = $region33
    $region32: #{tpu_custom_call.1} parent=1 // pred_region
      %78 = dma.done [#allocation3], 64
    $region33: #{tpu_custom_call.1} parent=1 // pred_fallthru
      _
    // Predicated region
    $region34: #{tpu_custom_call.1} parent=1 // pred_check
      _
    $region35: #{tpu_custom_call.1} parent=1 // pred_check_branch
      %80 = sbr.rel (0) target = $region37
    $region36: #{tpu_custom_call.1} parent=1 // pred_region
      %81 = dma.done [#allocation6], 1920
    $region37: #{tpu_custom_call.1} parent=1 // pred_fallthru
      _
    // Predicated region
    $region38: #{tpu_custom_call.1} parent=1 // pred_check
      _
    $region39: #{tpu_custom_call.1} parent=1 // pred_check_branch
      %83 = sbr.rel (0) target = $region41
    $region40: #{tpu_custom_call.1} parent=1 // pred_region
      %84 = dma.done [#allocation6], 48
    $region41: #{tpu_custom_call.1} parent=1 // pred_fallthru
      _
    // Predicated region
    $region42: #{tpu_custom_call.1} parent=1 // pred_check
      _
    $region43: #{tpu_custom_call.1} parent=1 // pred_check_branch
      %86 = sbr.rel (0) target = $region45
    $region44: #{tpu_custom_call.1} parent=1 // pred_region
      %87 = dma.done [#allocation9], 6144
    $region45: #{tpu_custom_call.1} parent=1 // pred_fallthru
      _
    // Predicated region
    $region46: #{tpu_custom_call.1} parent=1 // pred_check
      _
    $region47: #{tpu_custom_call.1} parent=1 // pred_check_branch
      %89 = sbr.rel (0) target = $region49
    $region48: #{tpu_custom_call.1} parent=1 // pred_region
      %90 = dma.done [#allocation9], 6144
    $region49: #{tpu_custom_call.1} parent=1 // pred_fallthru
      _
    %v91 = vld [vmem:[#allocation2] sm:$0xf]
    %v92 = vld [vmem:[#allocation5] sm:$0xff]
    %v93 = vld [vmem:[#allocation5 + $0x8] sm:$0xff]
    %v94 = vld [vmem:[#allocation5 + $0x10] sm:$0xff]
    %v95 = vld [vmem:[#allocation5 + $0x18] sm:$0xff]
    %v96 = vld [vmem:[#allocation5 + $0x20] sm:$0xff]
    %v97 = vld [vmem:[#allocation5 + $0x28] sm:$0xff]
    %v98 = vld [vmem:[#allocation5 + $0x30] sm:$0xff]
    %v99 = vld [vmem:[#allocation5 + $0x38] sm:$0xff]
    %v100 = vld [vmem:[#allocation5 + $0x40] sm:$0xff]
    %v101 = vld [vmem:[#allocation5 + $0x48] sm:$0xff]
    %v102 = vld [vmem:[#allocation5 + $0x50] sm:$0xff]
    %v103 = vld [vmem:[#allocation5 + $0x58] sm:$0xff]
    %v104 = vld [vmem:[#allocation5 + $0x60] sm:$0xff]
    %v105 = vld [vmem:[#allocation5 + $0x68] sm:$0xff]
    %v106 = vld [vmem:[#allocation5 + $0x70] sm:$0xff]
    %v107 = vld [vmem:[%s2] sm:$0x7]
    %v109 = vlaneseq
    %v110 = vshrl.u32 %v109, 7
    %v111 = vsub.s32 0, %v110
    %v112 = vrot.slane %v107, %v111
    %v113 = vlaneseq
    %v114 = vshrl.u32 %v113, 7
    %v115 = vsub.s32 1, %v114
    %v116 = vrot.slane %v107, %v115
    %v117 = vlaneseq
    %v118 = vshrl.u32 %v117, 7
    %v119 = vsub.s32 2, %v118
    %v120 = vrot.slane %v107, %v119
    %vm124 = vcmask 326656
    %v126 = vsel %vm124, %v91, 0
    %128 = vmatprep.subr.mxu0 0.0
    %129 = vmatpush1.msra.mxu0 0.0
    %130 = vmatprep.subr.mxu0 0.0
    %131 = vmatpush1.msra.mxu0 0.0
    %132 = vmatprep.subr.mxu0 0.0
    %133 = vmatpush1.msra.mxu0 0.0
    %134 = vmatprep.subr.mxu0 0.0
    %135 = vmatpush1.msra.mxu0 0.0
    %136 = vmatprep.subr.mxu0 0.0
    %137 = vmatpush1.msra.mxu0 0.0
    %138 = vmatprep.subr.mxu0 0.0
    %139 = vmatpush1.msra.mxu0 0.0
    %140 = vmatprep.subr.mxu0 0.0
    %141 = vmatpush1.msra.mxu0 0.0
    %142 = vmatprep.subr.mxu0 0.0
    %143 = vmatpush1.msra.mxu0 0.0
    %144 = vmatprep.subr.mxu0 0.0
    %145 = vmatpush1.msra.mxu0 0.0
    %146 = vmatprep.subr.mxu0 0.0
    %147 = vmatpush1.msra.mxu0 0.0
    %148 = vmatprep.subr.mxu0 0.0
    %149 = vmatpush1.msra.mxu0 0.0
    %v150 = vand.u32 %v105, 4294901760
    %151 = vmatprep.subr.mxu0 %v150
    %v152 = vand.u32 %v104, 4294901760
    %153 = vmatpush1.msra.mxu0 %v152
    %v154 = vand.u32 %v102, 4294901760
    %155 = vmatprep.subr.mxu0 %v154
    %v156 = vand.u32 %v101, 4294901760
    %157 = vmatpush1.msra.mxu0 %v156
    %v158 = vand.u32 %v99, 4294901760
    %159 = vmatprep.subr.mxu0 %v158
    %v160 = vand.u32 %v98, 4294901760
    %161 = vmatpush1.msra.mxu0 %v160
    %v162 = vand.u32 %v96, 4294901760
    %163 = vmatprep.subr.mxu0 %v162
    %v164 = vand.u32 %v95, 4294901760
    %165 = vmatpush1.msra.mxu0 %v164
    %v166 = vand.u32 %v93, 4294901760
    %167 = vmatprep.subr.mxu0 %v166
    %v168 = vand.u32 %v92, 4294901760
    %169 = vmatpush1.msra.mxu0 %v168
    %170 = vmatprep.subr.mxu0 0.0
    %171 = vmatpush2.msra.mxu0 0.0
    %172 = vmatprep.subr.mxu0 0.0
    %173 = vmatpush2.msra.mxu0 0.0
    %174 = vmatprep.subr.mxu0 0.0
    %175 = vmatpush2.msra.mxu0 0.0
    %176 = vmatprep.subr.mxu0 0.0
    %177 = vmatpush2.msra.mxu0 0.0
    %178 = vmatprep.subr.mxu0 0.0
    %179 = vmatpush2.msra.mxu0 0.0
    %180 = vmatprep.subr.mxu0 0.0
    %181 = vmatpush2.msra.mxu0 0.0
    %182 = vmatprep.subr.mxu0 0.0
    %183 = vmatpush2.msra.mxu0 0.0
    %184 = vmatprep.subr.mxu0 0.0
    %185 = vmatpush2.msra.mxu0 0.0
    %186 = vmatprep.subr.mxu0 0.0
    %187 = vmatpush2.msra.mxu0 0.0
    %188 = vmatprep.subr.mxu0 0.0
    %189 = vmatpush2.msra.mxu0 0.0
    %190 = vmatprep.subr.mxu0 0.0
    %191 = vmatpush2.msra.mxu0 0.0
    %192 = vmatprep.subr.mxu0 0.0
    %193 = vmatpush2.msra.mxu0 0.0
    %194 = vmatprep.subr.mxu0 0.0
    %195 = vmatpush2.msra.mxu0 0.0
    %196 = vmatprep.subr.mxu0 0.0
    %197 = vmatpush2.msra.mxu0 0.0
    %198 = vmatprep.subr.mxu0 0.0
    %199 = vmatpush2.msra.mxu0 0.0
    %200 = vmatprep.subr.mxu0 0.0
    %201 = vmatpush2.msra.mxu0 0.0
    %202 = vmatprep.mubr.f32.mxu0 0.0
    %v203 = vand.u32 %v126, 4294901760
    %v204 = vsub.f32 %v126, %v203
    %v205 = vand.u32 %v204, 4294901760
    %v206 = vsub.f32 %v204, %v205
    %v207 = vand.u32 %v206, 4294901760
    %208 = vmatmul.mubr.f32.gmra.mxu0 %v207
    %v209 = vpop.f32.mrf.mxu0
    %v210 = vadd.f32 %v112, %v209
    %v211 = vpop.f32.mrf.mxu0
    %v212 = vadd.f32 %v116, %v211
    %213 = vdwg.mxu0
    %214 = vmatprep.subr.mxu0 0.0
    %215 = vmatpush1.msra.mxu0 0.0
    %216 = vmatprep.subr.mxu0 0.0
    %217 = vmatpush1.msra.mxu0 0.0
    %218 = vmatprep.subr.mxu0 0.0
    %219 = vmatpush1.msra.mxu0 0.0
    %220 = vmatprep.subr.mxu0 0.0
    %221 = vmatpush1.msra.mxu0 0.0
    %222 = vmatprep.subr.mxu0 0.0
    %223 = vmatpush1.msra.mxu0 0.0
    %224 = vmatprep.subr.mxu0 0.0
    %225 = vmatpush1.msra.mxu0 0.0
    %226 = vmatprep.subr.mxu0 0.0
    %227 = vmatpush1.msra.mxu0 0.0
    %228 = vmatprep.subr.mxu0 0.0
    %229 = vmatpush1.msra.mxu0 0.0
    %230 = vmatprep.subr.mxu0 0.0
    %231 = vmatpush1.msra.mxu0 0.0
    %232 = vmatprep.subr.mxu0 0.0
    %233 = vmatpush1.msra.mxu0 0.0
    %234 = vmatprep.subr.mxu0 0.0
    %235 = vmatpush1.msra.mxu0 0.0
    %v236 = vand.u32 %v105, 4294901760
    %v237 = vsub.f32 %v105, %v236
    %v238 = vand.u32 %v237, 4294901760
    %v239 = vsub.f32 %v237, %v238
    %v240 = vand.u32 %v239, 4294901760
    %241 = vmatprep.subr.mxu0 %v240
    %v242 = vand.u32 %v104, 4294901760
    %v243 = vsub.f32 %v104, %v242
    %v244 = vand.u32 %v243, 4294901760
    %v245 = vsub.f32 %v243, %v244
    %v246 = vand.u32 %v245, 4294901760
    %247 = vmatpush1.msra.mxu0 %v246
    %v248 = vand.u32 %v102, 4294901760
    %v249 = vsub.f32 %v102, %v248
    %v250 = vand.u32 %v249, 4294901760
    %v251 = vsub.f32 %v249, %v250
    %v252 = vand.u32 %v251, 4294901760
    %253 = vmatprep.subr.mxu0 %v252
    %v254 = vand.u32 %v101, 4294901760
    %v255 = vsub.f32 %v101, %v254
    %v256 = vand.u32 %v255, 4294901760
    %v257 = vsub.f32 %v255, %v256
    %v258 = vand.u32 %v257, 4294901760
    %259 = vmatpush1.msra.mxu0 %v258
    %v260 = vand.u32 %v99, 4294901760
    %v261 = vsub.f32 %v99, %v260
    %v262 = vand.u32 %v261, 4294901760
    %v263 = vsub.f32 %v261, %v262
    %v264 = vand.u32 %v263, 4294901760
    %265 = vmatprep.subr.mxu0 %v264
    %v266 = vand.u32 %v98, 4294901760
    %v267 = vsub.f32 %v98, %v266
    %v268 = vand.u32 %v267, 4294901760
    %v269 = vsub.f32 %v267, %v268
    %v270 = vand.u32 %v269, 4294901760
    %271 = vmatpush1.msra.mxu0 %v270
    %v272 = vand.u32 %v96, 4294901760
    %v273 = vsub.f32 %v96, %v272
    %v274 = vand.u32 %v273, 4294901760
    %v275 = vsub.f32 %v273, %v274
    %v276 = vand.u32 %v275, 4294901760
    %277 = vmatprep.subr.mxu0 %v276
    %v278 = vand.u32 %v95, 4294901760
    %v279 = vsub.f32 %v95, %v278
    %v280 = vand.u32 %v279, 4294901760
    %v281 = vsub.f32 %v279, %v280
    %v282 = vand.u32 %v281, 4294901760
    %283 = vmatpush1.msra.mxu0 %v282
    %v284 = vand.u32 %v93, 4294901760
    %v285 = vsub.f32 %v93, %v284
    %v286 = vand.u32 %v285, 4294901760
    %v287 = vsub.f32 %v285, %v286
    %v288 = vand.u32 %v287, 4294901760
    %289 = vmatprep.subr.mxu0 %v288
    %v290 = vand.u32 %v92, 4294901760
    %v291 = vsub.f32 %v92, %v290
    %v292 = vand.u32 %v291, 4294901760
    %v293 = vsub.f32 %v291, %v292
    %v294 = vand.u32 %v293, 4294901760
    %295 = vmatpush1.msra.mxu0 %v294
    %296 = vmatprep.subr.mxu0 0.0
    %297 = vmatpush2.msra.mxu0 0.0
    %298 = vmatprep.subr.mxu0 0.0
    %299 = vmatpush2.msra.mxu0 0.0
    %300 = vmatprep.subr.mxu0 0.0
    %301 = vmatpush2.msra.mxu0 0.0
    %302 = vmatprep.subr.mxu0 0.0
    %303 = vmatpush2.msra.mxu0 0.0
    %304 = vmatprep.subr.mxu0 0.0
    %305 = vmatpush2.msra.mxu0 0.0
    %306 = vmatprep.subr.mxu0 0.0
    %307 = vmatpush2.msra.mxu0 0.0
    %308 = vmatprep.subr.mxu0 0.0
    %309 = vmatpush2.msra.mxu0 0.0
    %310 = vmatprep.subr.mxu0 0.0
    %311 = vmatpush2.msra.mxu0 0.0
    %312 = vmatprep.subr.mxu0 0.0
    %313 = vmatpush2.msra.mxu0 0.0
    %314 = vmatprep.subr.mxu0 0.0
    %315 = vmatpush2.msra.mxu0 0.0
    %316 = vmatprep.subr.mxu0 0.0
    %317 = vmatpush2.msra.mxu0 0.0
    %318 = vmatprep.subr.mxu0 0.0
    %319 = vmatpush2.msra.mxu0 0.0
    %320 = vmatprep.subr.mxu0 0.0
    %321 = vmatpush2.msra.mxu0 0.0
    %322 = vmatprep.subr.mxu0 0.0
    %323 = vmatpush2.msra.mxu0 0.0
    %324 = vmatprep.subr.mxu0 0.0
    %325 = vmatpush2.msra.mxu0 0.0
    %326 = vmatprep.subr.mxu0 0.0
    %327 = vmatpush2.msra.mxu0 0.0
    %328 = vmatprep.mubr.f32.mxu0 0.0
    %v329 = vand.u32 %v126, 4294901760
    %330 = vmatmul.mubr.f32.gmra.mxu0 %v329
    %v331 = vpop.f32.mrf.mxu0
    %v332 = vadd.f32 %v210, %v331
    %v333 = vpop.f32.mrf.mxu0
    %v334 = vadd.f32 %v212, %v333
    %335 = vdwg.mxu0
    %336 = vmatprep.subr.mxu0 0.0
    %337 = vmatpush1.msra.mxu0 0.0
    %338 = vmatprep.subr.mxu0 0.0
    %339 = vmatpush1.msra.mxu0 0.0
    %340 = vmatprep.subr.mxu0 0.0
    %341 = vmatpush1.msra.mxu0 0.0
    %342 = vmatprep.subr.mxu0 0.0
    %343 = vmatpush1.msra.mxu0 0.0
    %344 = vmatprep.subr.mxu0 0.0
    %345 = vmatpush1.msra.mxu0 0.0
    %346 = vmatprep.subr.mxu0 0.0
    %347 = vmatpush1.msra.mxu0 0.0
    %348 = vmatprep.subr.mxu0 0.0
    %349 = vmatpush1.msra.mxu0 0.0
    %350 = vmatprep.subr.mxu0 0.0
    %351 = vmatpush1.msra.mxu0 0.0
    %352 = vmatprep.subr.mxu0 0.0
    %353 = vmatpush1.msra.mxu0 0.0
    %354 = vmatprep.subr.mxu0 0.0
    %355 = vmatpush1.msra.mxu0 0.0
    %356 = vmatprep.subr.mxu0 0.0
    %357 = vmatpush1.msra.mxu0 0.0
    %v358 = vand.u32 %v105, 4294901760
    %v359 = vsub.f32 %v105, %v358
    %360 = vmatprep.subr.mxu0 %v359
    %v361 = vand.u32 %v104, 4294901760
    %v362 = vsub.f32 %v104, %v361
    %363 = vmatpush1.msra.mxu0 %v362
    %v364 = vand.u32 %v102, 4294901760
    %v365 = vsub.f32 %v102, %v364
    %366 = vmatprep.subr.mxu0 %v365
    %v367 = vand.u32 %v101, 4294901760
    %v368 = vsub.f32 %v101, %v367
    %369 = vmatpush1.msra.mxu0 %v368
    %v370 = vand.u32 %v99, 4294901760
    %v371 = vsub.f32 %v99, %v370
    %372 = vmatprep.subr.mxu0 %v371
    %v373 = vand.u32 %v98, 4294901760
    %v374 = vsub.f32 %v98, %v373
    %375 = vmatpush1.msra.mxu0 %v374
    %v376 = vand.u32 %v96, 4294901760
    %v377 = vsub.f32 %v96, %v376
    %378 = vmatprep.subr.mxu0 %v377
    %v379 = vand.u32 %v95, 4294901760
    %v380 = vsub.f32 %v95, %v379
    %381 = vmatpush1.msra.mxu0 %v380
    %v382 = vand.u32 %v93, 4294901760
    %v383 = vsub.f32 %v93, %v382
    %384 = vmatprep.subr.mxu0 %v383
    %v385 = vand.u32 %v92, 4294901760
    %v386 = vsub.f32 %v92, %v385
    %387 = vmatpush1.msra.mxu0 %v386
    %388 = vmatprep.subr.mxu0 0.0
    %389 = vmatpush2.msra.mxu0 0.0
    %390 = vmatprep.subr.mxu0 0.0
    %391 = vmatpush2.msra.mxu0 0.0
    %392 = vmatprep.subr.mxu0 0.0
    %393 = vmatpush2.msra.mxu0 0.0
    %394 = vmatprep.subr.mxu0 0.0
    %395 = vmatpush2.msra.mxu0 0.0
    %396 = vmatprep.subr.mxu0 0.0
    %397 = vmatpush2.msra.mxu0 0.0
    %398 = vmatprep.subr.mxu0 0.0
    %399 = vmatpush2.msra.mxu0 0.0
    %400 = vmatprep.subr.mxu0 0.0
    %401 = vmatpush2.msra.mxu0 0.0
    %402 = vmatprep.subr.mxu0 0.0
    %403 = vmatpush2.msra.mxu0 0.0
    %404 = vmatprep.subr.mxu0 0.0
    %405 = vmatpush2.msra.mxu0 0.0
    %406 = vmatprep.subr.mxu0 0.0
    %407 = vmatpush2.msra.mxu0 0.0
    %408 = vmatprep.subr.mxu0 0.0
    %409 = vmatpush2.msra.mxu0 0.0
    %410 = vmatprep.subr.mxu0 0.0
    %411 = vmatpush2.msra.mxu0 0.0
    %412 = vmatprep.subr.mxu0 0.0
    %413 = vmatpush2.msra.mxu0 0.0
    %414 = vmatprep.subr.mxu0 0.0
    %415 = vmatpush2.msra.mxu0 0.0
    %416 = vmatprep.subr.mxu0 0.0
    %417 = vmatpush2.msra.mxu0 0.0
    %418 = vmatprep.subr.mxu0 0.0
    %419 = vmatpush2.msra.mxu0 0.0
    %420 = vmatprep.mubr.f32.mxu0 0.0
    %v421 = vand.u32 %v126, 4294901760
    %v422 = vsub.f32 %v126, %v421
    %423 = vmatmul.mubr.f32.gmra.mxu0 %v422
    %v424 = vpop.f32.mrf.mxu0
    %v425 = vadd.f32 %v332, %v424
    %v426 = vpop.f32.mrf.mxu0
    %v427 = vadd.f32 %v334, %v426
    %428 = vdwg.mxu0
    %429 = vmatprep.subr.mxu0 0.0
    %430 = vmatpush1.msra.mxu0 0.0
    %431 = vmatprep.subr.mxu0 0.0
    %432 = vmatpush1.msra.mxu0 0.0
    %433 = vmatprep.subr.mxu0 0.0
    %434 = vmatpush1.msra.mxu0 0.0
    %435 = vmatprep.subr.mxu0 0.0
    %436 = vmatpush1.msra.mxu0 0.0
    %437 = vmatprep.subr.mxu0 0.0
    %438 = vmatpush1.msra.mxu0 0.0
    %439 = vmatprep.subr.mxu0 0.0
    %440 = vmatpush1.msra.mxu0 0.0
    %441 = vmatprep.subr.mxu0 0.0
    %442 = vmatpush1.msra.mxu0 0.0
    %443 = vmatprep.subr.mxu0 0.0
    %444 = vmatpush1.msra.mxu0 0.0
    %445 = vmatprep.subr.mxu0 0.0
    %446 = vmatpush1.msra.mxu0 0.0
    %447 = vmatprep.subr.mxu0 0.0
    %448 = vmatpush1.msra.mxu0 0.0
    %449 = vmatprep.subr.mxu0 0.0
    %450 = vmatpush1.msra.mxu0 0.0
    %v451 = vand.u32 %v105, 4294901760
    %452 = vmatprep.subr.mxu0 %v451
    %v453 = vand.u32 %v104, 4294901760
    %454 = vmatpush1.msra.mxu0 %v453
    %v455 = vand.u32 %v102, 4294901760
    %456 = vmatprep.subr.mxu0 %v455
    %v457 = vand.u32 %v101, 4294901760
    %458 = vmatpush1.msra.mxu0 %v457
    %v459 = vand.u32 %v99, 4294901760
    %460 = vmatprep.subr.mxu0 %v459
    %v461 = vand.u32 %v98, 4294901760
    %462 = vmatpush1.msra.mxu0 %v461
    %v463 = vand.u32 %v96, 4294901760
    %464 = vmatprep.subr.mxu0 %v463
    %v465 = vand.u32 %v95, 4294901760
    %466 = vmatpush1.msra.mxu0 %v465
    %v467 = vand.u32 %v93, 4294901760
    %468 = vmatprep.subr.mxu0 %v467
    %v469 = vand.u32 %v92, 4294901760
    %470 = vmatpush1.msra.mxu0 %v469
    %471 = vmatprep.subr.mxu0 0.0
    %472 = vmatpush2.msra.mxu0 0.0
    %473 = vmatprep.subr.mxu0 0.0
    %474 = vmatpush2.msra.mxu0 0.0
    %475 = vmatprep.subr.mxu0 0.0
    %476 = vmatpush2.msra.mxu0 0.0
    %477 = vmatprep.subr.mxu0 0.0
    %478 = vmatpush2.msra.mxu0 0.0
    %479 = vmatprep.subr.mxu0 0.0
    %480 = vmatpush2.msra.mxu0 0.0
    %481 = vmatprep.subr.mxu0 0.0
    %482 = vmatpush2.msra.mxu0 0.0
    %483 = vmatprep.subr.mxu0 0.0
    %484 = vmatpush2.msra.mxu0 0.0
    %485 = vmatprep.subr.mxu0 0.0
    %486 = vmatpush2.msra.mxu0 0.0
    %487 = vmatprep.subr.mxu0 0.0
    %488 = vmatpush2.msra.mxu0 0.0
    %489 = vmatprep.subr.mxu0 0.0
    %490 = vmatpush2.msra.mxu0 0.0
    %491 = vmatprep.subr.mxu0 0.0
    %492 = vmatpush2.msra.mxu0 0.0
    %493 = vmatprep.subr.mxu0 0.0
    %494 = vmatpush2.msra.mxu0 0.0
    %495 = vmatprep.subr.mxu0 0.0
    %496 = vmatpush2.msra.mxu0 0.0
    %497 = vmatprep.subr.mxu0 0.0
    %498 = vmatpush2.msra.mxu0 0.0
    %499 = vmatprep.subr.mxu0 0.0
    %500 = vmatpush2.msra.mxu0 0.0
    %501 = vmatprep.subr.mxu0 0.0
    %502 = vmatpush2.msra.mxu0 0.0
    %503 = vmatprep.mubr.f32.mxu0 0.0
    %v504 = vand.u32 %v126, 4294901760
    %v505 = vsub.f32 %v126, %v504
    %v506 = vand.u32 %v505, 4294901760
    %507 = vmatmul.mubr.f32.gmra.mxu0 %v506
    %v508 = vpop.f32.mrf.mxu0
    %v509 = vadd.f32 %v425, %v508
    %v510 = vpop.f32.mrf.mxu0
    %v511 = vadd.f32 %v427, %v510
    %512 = vdwg.mxu0
    %513 = vmatprep.subr.mxu0 0.0
    %514 = vmatpush1.msra.mxu0 0.0
    %515 = vmatprep.subr.mxu0 0.0
    %516 = vmatpush1.msra.mxu0 0.0
    %517 = vmatprep.subr.mxu0 0.0
    %518 = vmatpush1.msra.mxu0 0.0
    %519 = vmatprep.subr.mxu0 0.0
    %520 = vmatpush1.msra.mxu0 0.0
    %521 = vmatprep.subr.mxu0 0.0
    %522 = vmatpush1.msra.mxu0 0.0
    %523 = vmatprep.subr.mxu0 0.0
    %524 = vmatpush1.msra.mxu0 0.0
    %525 = vmatprep.subr.mxu0 0.0
    %526 = vmatpush1.msra.mxu0 0.0
    %527 = vmatprep.subr.mxu0 0.0
    %528 = vmatpush1.msra.mxu0 0.0
    %529 = vmatprep.subr.mxu0 0.0
    %530 = vmatpush1.msra.mxu0 0.0
    %531 = vmatprep.subr.mxu0 0.0
    %532 = vmatpush1.msra.mxu0 0.0
    %533 = vmatprep.subr.mxu0 0.0
    %534 = vmatpush1.msra.mxu0 0.0
    %v535 = vand.u32 %v105, 4294901760
    %v536 = vsub.f32 %v105, %v535
    %v537 = vand.u32 %v536, 4294901760
    %538 = vmatprep.subr.mxu0 %v537
    %v539 = vand.u32 %v104, 4294901760
    %v540 = vsub.f32 %v104, %v539
    %v541 = vand.u32 %v540, 4294901760
    %542 = vmatpush1.msra.mxu0 %v541
    %v543 = vand.u32 %v102, 4294901760
    %v544 = vsub.f32 %v102, %v543
    %v545 = vand.u32 %v544, 4294901760
    %546 = vmatprep.subr.mxu0 %v545
    %v547 = vand.u32 %v101, 4294901760
    %v548 = vsub.f32 %v101, %v547
    %v549 = vand.u32 %v548, 4294901760
    %550 = vmatpush1.msra.mxu0 %v549
    %v551 = vand.u32 %v99, 4294901760
    %v552 = vsub.f32 %v99, %v551
    %v553 = vand.u32 %v552, 4294901760
    %554 = vmatprep.subr.mxu0 %v553
    %v555 = vand.u32 %v98, 4294901760
    %v556 = vsub.f32 %v98, %v555
    %v557 = vand.u32 %v556, 4294901760
    %558 = vmatpush1.msra.mxu0 %v557
    %v559 = vand.u32 %v96, 4294901760
    %v560 = vsub.f32 %v96, %v559
    %v561 = vand.u32 %v560, 4294901760
    %562 = vmatprep.subr.mxu0 %v561
    %v563 = vand.u32 %v95, 4294901760
    %v564 = vsub.f32 %v95, %v563
    %v565 = vand.u32 %v564, 4294901760
    %566 = vmatpush1.msra.mxu0 %v565
    %v567 = vand.u32 %v93, 4294901760
    %v568 = vsub.f32 %v93, %v567
    %v569 = vand.u32 %v568, 4294901760
    %570 = vmatprep.subr.mxu0 %v569
    %v571 = vand.u32 %v92, 4294901760
    %v572 = vsub.f32 %v92, %v571
    %v573 = vand.u32 %v572, 4294901760
    %574 = vmatpush1.msra.mxu0 %v573
    %575 = vmatprep.subr.mxu0 0.0
    %576 = vmatpush2.msra.mxu0 0.0
    %577 = vmatprep.subr.mxu0 0.0
    %578 = vmatpush2.msra.mxu0 0.0
    %579 = vmatprep.subr.mxu0 0.0
    %580 = vmatpush2.msra.mxu0 0.0
    %581 = vmatprep.subr.mxu0 0.0
    %582 = vmatpush2.msra.mxu0 0.0
    %583 = vmatprep.subr.mxu0 0.0
    %584 = vmatpush2.msra.mxu0 0.0
    %585 = vmatprep.subr.mxu0 0.0
    %586 = vmatpush2.msra.mxu0 0.0
    %587 = vmatprep.subr.mxu0 0.0
    %588 = vmatpush2.msra.mxu0 0.0
    %589 = vmatprep.subr.mxu0 0.0
    %590 = vmatpush2.msra.mxu0 0.0
    %591 = vmatprep.subr.mxu0 0.0
    %592 = vmatpush2.msra.mxu0 0.0
    %593 = vmatprep.subr.mxu0 0.0
    %594 = vmatpush2.msra.mxu0 0.0
    %595 = vmatprep.subr.mxu0 0.0
    %596 = vmatpush2.msra.mxu0 0.0
    %597 = vmatprep.subr.mxu0 0.0
    %598 = vmatpush2.msra.mxu0 0.0
    %599 = vmatprep.subr.mxu0 0.0
    %600 = vmatpush2.msra.mxu0 0.0
    %601 = vmatprep.subr.mxu0 0.0
    %602 = vmatpush2.msra.mxu0 0.0
    %603 = vmatprep.subr.mxu0 0.0
    %604 = vmatpush2.msra.mxu0 0.0
    %605 = vmatprep.subr.mxu0 0.0
    %606 = vmatpush2.msra.mxu0 0.0
    %607 = vmatprep.mubr.f32.mxu0 0.0
    %v608 = vand.u32 %v126, 4294901760
    %609 = vmatmul.mubr.f32.gmra.mxu0 %v608
    %v610 = vpop.f32.mrf.mxu0
    %v611 = vadd.f32 %v509, %v610
    %v612 = vpop.f32.mrf.mxu0
    %v613 = vadd.f32 %v511, %v612
    %614 = vdwg.mxu0
    %615 = vmatprep.subr.mxu0 0.0
    %616 = vmatpush1.msra.mxu0 0.0
    %617 = vmatprep.subr.mxu0 0.0
    %618 = vmatpush1.msra.mxu0 0.0
    %619 = vmatprep.subr.mxu0 0.0
    %620 = vmatpush1.msra.mxu0 0.0
    %621 = vmatprep.subr.mxu0 0.0
    %622 = vmatpush1.msra.mxu0 0.0
    %623 = vmatprep.subr.mxu0 0.0
    %624 = vmatpush1.msra.mxu0 0.0
    %625 = vmatprep.subr.mxu0 0.0
    %626 = vmatpush1.msra.mxu0 0.0
    %627 = vmatprep.subr.mxu0 0.0
    %628 = vmatpush1.msra.mxu0 0.0
    %629 = vmatprep.subr.mxu0 0.0
    %630 = vmatpush1.msra.mxu0 0.0
    %631 = vmatprep.subr.mxu0 0.0
    %632 = vmatpush1.msra.mxu0 0.0
    %633 = vmatprep.subr.mxu0 0.0
    %634 = vmatpush1.msra.mxu0 0.0
    %635 = vmatprep.subr.mxu0 0.0
    %636 = vmatpush1.msra.mxu0 0.0
    %v637 = vand.u32 %v105, 4294901760
    %638 = vmatprep.subr.mxu0 %v637
    %v639 = vand.u32 %v104, 4294901760
    %640 = vmatpush1.msra.mxu0 %v639
    %v641 = vand.u32 %v102, 4294901760
    %642 = vmatprep.subr.mxu0 %v641
    %v643 = vand.u32 %v101, 4294901760
    %644 = vmatpush1.msra.mxu0 %v643
    %v645 = vand.u32 %v99, 4294901760
    %646 = vmatprep.subr.mxu0 %v645
    %v647 = vand.u32 %v98, 4294901760
    %648 = vmatpush1.msra.mxu0 %v647
    %v649 = vand.u32 %v96, 4294901760
    %650 = vmatprep.subr.mxu0 %v649
    %v651 = vand.u32 %v95, 4294901760
    %652 = vmatpush1.msra.mxu0 %v651
    %v653 = vand.u32 %v93, 4294901760
    %654 = vmatprep.subr.mxu0 %v653
    %v655 = vand.u32 %v92, 4294901760
    %656 = vmatpush1.msra.mxu0 %v655
    %657 = vmatprep.subr.mxu0 0.0
    %658 = vmatpush2.msra.mxu0 0.0
    %659 = vmatprep.subr.mxu0 0.0
    %660 = vmatpush2.msra.mxu0 0.0
    %661 = vmatprep.subr.mxu0 0.0
    %662 = vmatpush2.msra.mxu0 0.0
    %663 = vmatprep.subr.mxu0 0.0
    %664 = vmatpush2.msra.mxu0 0.0
    %665 = vmatprep.subr.mxu0 0.0
    %666 = vmatpush2.msra.mxu0 0.0
    %667 = vmatprep.subr.mxu0 0.0
    %668 = vmatpush2.msra.mxu0 0.0
    %669 = vmatprep.subr.mxu0 0.0
    %670 = vmatpush2.msra.mxu0 0.0
    %671 = vmatprep.subr.mxu0 0.0
    %672 = vmatpush2.msra.mxu0 0.0
    %673 = vmatprep.subr.mxu0 0.0
    %674 = vmatpush2.msra.mxu0 0.0
    %675 = vmatprep.subr.mxu0 0.0
    %676 = vmatpush2.msra.mxu0 0.0
    %677 = vmatprep.subr.mxu0 0.0
    %678 = vmatpush2.msra.mxu0 0.0
    %679 = vmatprep.subr.mxu0 0.0
    %680 = vmatpush2.msra.mxu0 0.0
    %681 = vmatprep.subr.mxu0 0.0
    %682 = vmatpush2.msra.mxu0 0.0
    %683 = vmatprep.subr.mxu0 0.0
    %684 = vmatpush2.msra.mxu0 0.0
    %685 = vmatprep.subr.mxu0 0.0
    %686 = vmatpush2.msra.mxu0 0.0
    %687 = vmatprep.subr.mxu0 0.0
    %688 = vmatpush2.msra.mxu0 0.0
    %689 = vmatprep.mubr.f32.mxu0 0.0
    %v690 = vand.u32 %v126, 4294901760
    %691 = vmatmul.mubr.f32.gmra.mxu0 %v690
    %v692 = vpop.f32.mrf.mxu0
    %v693 = vadd.f32 %v611, %v692
    %v694 = vpop.f32.mrf.mxu0
    %v695 = vadd.f32 %v613, %v694
    %696 = vdwg.mxu0
    %697 = vmatprep.subr.mxu0 0.0
    %698 = vmatpush1.msra.mxu0 0.0
    %699 = vmatprep.subr.mxu0 0.0
    %700 = vmatpush1.msra.mxu0 0.0
    %701 = vmatprep.subr.mxu0 0.0
    %702 = vmatpush1.msra.mxu0 0.0
    %703 = vmatprep.subr.mxu0 0.0
    %704 = vmatpush1.msra.mxu0 0.0
    %705 = vmatprep.subr.mxu0 0.0
    %706 = vmatpush1.msra.mxu0 0.0
    %707 = vmatprep.subr.mxu0 0.0
    %708 = vmatpush1.msra.mxu0 0.0
    %709 = vmatprep.subr.mxu0 0.0
    %710 = vmatpush1.msra.mxu0 0.0
    %711 = vmatprep.subr.mxu0 0.0
    %712 = vmatpush1.msra.mxu0 0.0
    %713 = vmatprep.subr.mxu0 0.0
    %714 = vmatpush1.msra.mxu0 0.0
    %715 = vmatprep.subr.mxu0 0.0
    %716 = vmatpush1.msra.mxu0 0.0
    %717 = vmatprep.subr.mxu0 0.0
    %718 = vmatpush1.msra.mxu0 0.0
    %719 = vmatprep.subr.mxu0 0.0
    %v720 = vand.u32 %v106, 4294901760
    %721 = vmatpush1.msra.mxu0 %v720
    %722 = vmatprep.subr.mxu0 0.0
    %v723 = vand.u32 %v103, 4294901760
    %724 = vmatpush1.msra.mxu0 %v723
    %725 = vmatprep.subr.mxu0 0.0
    %v726 = vand.u32 %v100, 4294901760
    %727 = vmatpush1.msra.mxu0 %v726
    %728 = vmatprep.subr.mxu0 0.0
    %v729 = vand.u32 %v97, 4294901760
    %730 = vmatpush1.msra.mxu0 %v729
    %731 = vmatprep.subr.mxu0 0.0
    %v732 = vand.u32 %v94, 4294901760
    %733 = vmatpush1.msra.mxu0 %v732
    %734 = vmatprep.subr.mxu0 0.0
    %735 = vmatpush2.msra.mxu0 0.0
    %736 = vmatprep.subr.mxu0 0.0
    %737 = vmatpush2.msra.mxu0 0.0
    %738 = vmatprep.subr.mxu0 0.0
    %739 = vmatpush2.msra.mxu0 0.0
    %740 = vmatprep.subr.mxu0 0.0
    %741 = vmatpush2.msra.mxu0 0.0
    %742 = vmatprep.subr.mxu0 0.0
    %743 = vmatpush2.msra.mxu0 0.0
    %744 = vmatprep.subr.mxu0 0.0
    %745 = vmatpush2.msra.mxu0 0.0
    %746 = vmatprep.subr.mxu0 0.0
    %747 = vmatpush2.msra.mxu0 0.0
    %748 = vmatprep.subr.mxu0 0.0
    %749 = vmatpush2.msra.mxu0 0.0
    %750 = vmatprep.subr.mxu0 0.0
    %751 = vmatpush2.msra.mxu0 0.0
    %752 = vmatprep.subr.mxu0 0.0
    %753 = vmatpush2.msra.mxu0 0.0
    %754 = vmatprep.subr.mxu0 0.0
    %755 = vmatpush2.msra.mxu0 0.0
    %756 = vmatprep.subr.mxu0 0.0
    %757 = vmatpush2.msra.mxu0 0.0
    %758 = vmatprep.subr.mxu0 0.0
    %759 = vmatpush2.msra.mxu0 0.0
    %760 = vmatprep.subr.mxu0 0.0
    %761 = vmatpush2.msra.mxu0 0.0
    %762 = vmatprep.subr.mxu0 0.0
    %763 = vmatpush2.msra.mxu0 0.0
    %764 = vmatprep.subr.mxu0 0.0
    %765 = vmatpush2.msra.mxu0 0.0
    %766 = vmatprep.mubr.f32.mxu0 0.0
    %v767 = vand.u32 %v126, 4294901760
    %v768 = vsub.f32 %v126, %v767
    %v769 = vand.u32 %v768, 4294901760
    %v770 = vsub.f32 %v768, %v769
    %v771 = vand.u32 %v770, 4294901760
    %772 = vmatmul.mubr.f32.gmra.mxu0 %v771
    %v773 = vpop.f32.mrf.mxu0
    %v774 = vadd.f32 %v120, %v773
    %v775 = vpop.f32.mrf.mxu0
    %776 = vdwg.mxu0
    %777 = vmatprep.subr.mxu0 0.0
    %778 = vmatpush1.msra.mxu0 0.0
    %779 = vmatprep.subr.mxu0 0.0
    %780 = vmatpush1.msra.mxu0 0.0
    %781 = vmatprep.subr.mxu0 0.0
    %782 = vmatpush1.msra.mxu0 0.0
    %783 = vmatprep.subr.mxu0 0.0
    %784 = vmatpush1.msra.mxu0 0.0
    %785 = vmatprep.subr.mxu0 0.0
    %786 = vmatpush1.msra.mxu0 0.0
    %787 = vmatprep.subr.mxu0 0.0
    %788 = vmatpush1.msra.mxu0 0.0
    %789 = vmatprep.subr.mxu0 0.0
    %790 = vmatpush1.msra.mxu0 0.0
    %791 = vmatprep.subr.mxu0 0.0
    %792 = vmatpush1.msra.mxu0 0.0
    %793 = vmatprep.subr.mxu0 0.0
    %794 = vmatpush1.msra.mxu0 0.0
    %795 = vmatprep.subr.mxu0 0.0
    %796 = vmatpush1.msra.mxu0 0.0
    %797 = vmatprep.subr.mxu0 0.0
    %798 = vmatpush1.msra.mxu0 0.0
    %799 = vmatprep.subr.mxu0 0.0
    %v800 = vand.u32 %v106, 4294901760
    %v801 = vsub.f32 %v106, %v800
    %v802 = vand.u32 %v801, 4294901760
    %v803 = vsub.f32 %v801, %v802
    %v804 = vand.u32 %v803, 4294901760
    %805 = vmatpush1.msra.mxu0 %v804
    %806 = vmatprep.subr.mxu0 0.0
    %v807 = vand.u32 %v103, 4294901760
    %v808 = vsub.f32 %v103, %v807
    %v809 = vand.u32 %v808, 4294901760
    %v810 = vsub.f32 %v808, %v809
    %v811 = vand.u32 %v810, 4294901760
    %812 = vmatpush1.msra.mxu0 %v811
    %813 = vmatprep.subr.mxu0 0.0
    %v814 = vand.u32 %v100, 4294901760
    %v815 = vsub.f32 %v100, %v814
    %v816 = vand.u32 %v815, 4294901760
    %v817 = vsub.f32 %v815, %v816
    %v818 = vand.u32 %v817, 4294901760
    %819 = vmatpush1.msra.mxu0 %v818
    %820 = vmatprep.subr.mxu0 0.0
    %v821 = vand.u32 %v97, 4294901760
    %v822 = vsub.f32 %v97, %v821
    %v823 = vand.u32 %v822, 4294901760
    %v824 = vsub.f32 %v822, %v823
    %v825 = vand.u32 %v824, 4294901760
    %826 = vmatpush1.msra.mxu0 %v825
    %827 = vmatprep.subr.mxu0 0.0
    %v828 = vand.u32 %v94, 4294901760
    %v829 = vsub.f32 %v94, %v828
    %v830 = vand.u32 %v829, 4294901760
    %v831 = vsub.f32 %v829, %v830
    %v832 = vand.u32 %v831, 4294901760
    %833 = vmatpush1.msra.mxu0 %v832
    %834 = vmatprep.subr.mxu0 0.0
    %835 = vmatpush2.msra.mxu0 0.0
    %836 = vmatprep.subr.mxu0 0.0
    %837 = vmatpush2.msra.mxu0 0.0
    %838 = vmatprep.subr.mxu0 0.0
    %839 = vmatpush2.msra.mxu0 0.0
    %840 = vmatprep.subr.mxu0 0.0
    %841 = vmatpush2.msra.mxu0 0.0
    %842 = vmatprep.subr.mxu0 0.0
    %843 = vmatpush2.msra.mxu0 0.0
    %844 = vmatprep.subr.mxu0 0.0
    %845 = vmatpush2.msra.mxu0 0.0
    %846 = vmatprep.subr.mxu0 0.0
    %847 = vmatpush2.msra.mxu0 0.0
    %848 = vmatprep.subr.mxu0 0.0
    %849 = vmatpush2.msra.mxu0 0.0
    %850 = vmatprep.subr.mxu0 0.0
    %851 = vmatpush2.msra.mxu0 0.0
    %852 = vmatprep.subr.mxu0 0.0
    %853 = vmatpush2.msra.mxu0 0.0
    %854 = vmatprep.subr.mxu0 0.0
    %855 = vmatpush2.msra.mxu0 0.0
    %856 = vmatprep.subr.mxu0 0.0
    %857 = vmatpush2.msra.mxu0 0.0
    %858 = vmatprep.subr.mxu0 0.0
    %859 = vmatpush2.msra.mxu0 0.0
    %860 = vmatprep.subr.mxu0 0.0
    %861 = vmatpush2.msra.mxu0 0.0
    %862 = vmatprep.subr.mxu0 0.0
    %863 = vmatpush2.msra.mxu0 0.0
    %864 = vmatprep.subr.mxu0 0.0
    %865 = vmatpush2.msra.mxu0 0.0
    %866 = vmatprep.mubr.f32.mxu0 0.0
    %v867 = vand.u32 %v126, 4294901760
    %868 = vmatmul.mubr.f32.gmra.mxu0 %v867
    %v869 = vpop.f32.mrf.mxu0
    %v870 = vadd.f32 %v774, %v869
    %v871 = vpop.f32.mrf.mxu0
    %872 = vdwg.mxu0
    %873 = vmatprep.subr.mxu0 0.0
    %874 = vmatpush1.msra.mxu0 0.0
    %875 = vmatprep.subr.mxu0 0.0
    %876 = vmatpush1.msra.mxu0 0.0
    %877 = vmatprep.subr.mxu0 0.0
    %878 = vmatpush1.msra.mxu0 0.0
    %879 = vmatprep.subr.mxu0 0.0
    %880 = vmatpush1.msra.mxu0 0.0
    %881 = vmatprep.subr.mxu0 0.0
    %882 = vmatpush1.msra.mxu0 0.0
    %883 = vmatprep.subr.mxu0 0.0
    %884 = vmatpush1.msra.mxu0 0.0
    %885 = vmatprep.subr.mxu0 0.0
    %886 = vmatpush1.msra.mxu0 0.0
    %887 = vmatprep.subr.mxu0 0.0
    %888 = vmatpush1.msra.mxu0 0.0
    %889 = vmatprep.subr.mxu0 0.0
    %890 = vmatpush1.msra.mxu0 0.0
    %891 = vmatprep.subr.mxu0 0.0
    %892 = vmatpush1.msra.mxu0 0.0
    %893 = vmatprep.subr.mxu0 0.0
    %894 = vmatpush1.msra.mxu0 0.0
    %895 = vmatprep.subr.mxu0 0.0
    %v896 = vand.u32 %v106, 4294901760
    %v897 = vsub.f32 %v106, %v896
    %898 = vmatpush1.msra.mxu0 %v897
    %899 = vmatprep.subr.mxu0 0.0
    %v900 = vand.u32 %v103, 4294901760
    %v901 = vsub.f32 %v103, %v900
    %902 = vmatpush1.msra.mxu0 %v901
    %903 = vmatprep.subr.mxu0 0.0
    %v904 = vand.u32 %v100, 4294901760
    %v905 = vsub.f32 %v100, %v904
    %906 = vmatpush1.msra.mxu0 %v905
    %907 = vmatprep.subr.mxu0 0.0
    %v908 = vand.u32 %v97, 4294901760
    %v909 = vsub.f32 %v97, %v908
    %910 = vmatpush1.msra.mxu0 %v909
    %911 = vmatprep.subr.mxu0 0.0
    %v912 = vand.u32 %v94, 4294901760
    %v913 = vsub.f32 %v94, %v912
    %914 = vmatpush1.msra.mxu0 %v913
    %915 = vmatprep.subr.mxu0 0.0
    %916 = vmatpush2.msra.mxu0 0.0
    %917 = vmatprep.subr.mxu0 0.0
    %918 = vmatpush2.msra.mxu0 0.0
    %919 = vmatprep.subr.mxu0 0.0
    %920 = vmatpush2.msra.mxu0 0.0
    %921 = vmatprep.subr.mxu0 0.0
    %922 = vmatpush2.msra.mxu0 0.0
    %923 = vmatprep.subr.mxu0 0.0
    %924 = vmatpush2.msra.mxu0 0.0
    %925 = vmatprep.subr.mxu0 0.0
    %926 = vmatpush2.msra.mxu0 0.0
    %927 = vmatprep.subr.mxu0 0.0
    %928 = vmatpush2.msra.mxu0 0.0
    %929 = vmatprep.subr.mxu0 0.0
    %930 = vmatpush2.msra.mxu0 0.0
    %931 = vmatprep.subr.mxu0 0.0
    %932 = vmatpush2.msra.mxu0 0.0
    %933 = vmatprep.subr.mxu0 0.0
    %934 = vmatpush2.msra.mxu0 0.0
    %935 = vmatprep.subr.mxu0 0.0
    %936 = vmatpush2.msra.mxu0 0.0
    %937 = vmatprep.subr.mxu0 0.0
    %938 = vmatpush2.msra.mxu0 0.0
    %939 = vmatprep.subr.mxu0 0.0
    %940 = vmatpush2.msra.mxu0 0.0
    %941 = vmatprep.subr.mxu0 0.0
    %942 = vmatpush2.msra.mxu0 0.0
    %943 = vmatprep.subr.mxu0 0.0
    %944 = vmatpush2.msra.mxu0 0.0
    %945 = vmatprep.subr.mxu0 0.0
    %946 = vmatpush2.msra.mxu0 0.0
    %947 = vmatprep.mubr.f32.mxu0 0.0
    %v948 = vand.u32 %v126, 4294901760
    %v949 = vsub.f32 %v126, %v948
    %950 = vmatmul.mubr.f32.gmra.mxu0 %v949
    %v951 = vpop.f32.mrf.mxu0
    %v952 = vadd.f32 %v870, %v951
    %v953 = vpop.f32.mrf.mxu0
    %954 = vdwg.mxu0
    %955 = vmatprep.subr.mxu0 0.0
    %956 = vmatpush1.msra.mxu0 0.0
    %957 = vmatprep.subr.mxu0 0.0
    %958 = vmatpush1.msra.mxu0 0.0
    %959 = vmatprep.subr.mxu0 0.0
    %960 = vmatpush1.msra.mxu0 0.0
    %961 = vmatprep.subr.mxu0 0.0
    %962 = vmatpush1.msra.mxu0 0.0
    %963 = vmatprep.subr.mxu0 0.0
    %964 = vmatpush1.msra.mxu0 0.0
    %965 = vmatprep.subr.mxu0 0.0
    %966 = vmatpush1.msra.mxu0 0.0
    %967 = vmatprep.subr.mxu0 0.0
    %968 = vmatpush1.msra.mxu0 0.0
    %969 = vmatprep.subr.mxu0 0.0
    %970 = vmatpush1.msra.mxu0 0.0
    %971 = vmatprep.subr.mxu0 0.0
    %972 = vmatpush1.msra.mxu0 0.0
    %973 = vmatprep.subr.mxu0 0.0
    %974 = vmatpush1.msra.mxu0 0.0
    %975 = vmatprep.subr.mxu0 0.0
    %976 = vmatpush1.msra.mxu0 0.0
    %977 = vmatprep.subr.mxu0 0.0
    %v978 = vand.u32 %v106, 4294901760
    %979 = vmatpush1.msra.mxu0 %v978
    %980 = vmatprep.subr.mxu0 0.0
    %v981 = vand.u32 %v103, 4294901760
    %982 = vmatpush1.msra.mxu0 %v981
    %983 = vmatprep.subr.mxu0 0.0
    %v984 = vand.u32 %v100, 4294901760
    %985 = vmatpush1.msra.mxu0 %v984
    %986 = vmatprep.subr.mxu0 0.0
    %v987 = vand.u32 %v97, 4294901760
    %988 = vmatpush1.msra.mxu0 %v987
    %989 = vmatprep.subr.mxu0 0.0
    %v990 = vand.u32 %v94, 4294901760
    %991 = vmatpush1.msra.mxu0 %v990
    %992 = vmatprep.subr.mxu0 0.0
    %993 = vmatpush2.msra.mxu0 0.0
    %994 = vmatprep.subr.mxu0 0.0
    %995 = vmatpush2.msra.mxu0 0.0
    %996 = vmatprep.subr.mxu0 0.0
    %997 = vmatpush2.msra.mxu0 0.0
    %998 = vmatprep.subr.mxu0 0.0
    %999 = vmatpush2.msra.mxu0 0.0
    %1000 = vmatprep.subr.mxu0 0.0
    %1001 = vmatpush2.msra.mxu0 0.0
    %1002 = vmatprep.subr.mxu0 0.0
    %1003 = vmatpush2.msra.mxu0 0.0
    %1004 = vmatprep.subr.mxu0 0.0
    %1005 = vmatpush2.msra.mxu0 0.0
    %1006 = vmatprep.subr.mxu0 0.0
    %1007 = vmatpush2.msra.mxu0 0.0
    %1008 = vmatprep.subr.mxu0 0.0
    %1009 = vmatpush2.msra.mxu0 0.0
    %1010 = vmatprep.subr.mxu0 0.0
    %1011 = vmatpush2.msra.mxu0 0.0
    %1012 = vmatprep.subr.mxu0 0.0
    %1013 = vmatpush2.msra.mxu0 0.0
    %1014 = vmatprep.subr.mxu0 0.0
    %1015 = vmatpush2.msra.mxu0 0.0
    %1016 = vmatprep.subr.mxu0 0.0
    %1017 = vmatpush2.msra.mxu0 0.0
    %1018 = vmatprep.subr.mxu0 0.0
    %1019 = vmatpush2.msra.mxu0 0.0
    %1020 = vmatprep.subr.mxu0 0.0
    %1021 = vmatpush2.msra.mxu0 0.0
    %1022 = vmatprep.subr.mxu0 0.0
    %1023 = vmatpush2.msra.mxu0 0.0
    %1024 = vmatprep.mubr.f32.mxu0 0.0
    %v1025 = vand.u32 %v126, 4294901760
    %v1026 = vsub.f32 %v126, %v1025
    %v1027 = vand.u32 %v1026, 4294901760
    %1028 = vmatmul.mubr.f32.gmra.mxu0 %v1027
    %v1029 = vpop.f32.mrf.mxu0
    %v1030 = vadd.f32 %v952, %v1029
    %v1031 = vpop.f32.mrf.mxu0
    %1032 = vdwg.mxu0
    %1033 = vmatprep.subr.mxu0 0.0
    %1034 = vmatpush1.msra.mxu0 0.0
    %1035 = vmatprep.subr.mxu0 0.0
    %1036 = vmatpush1.msra.mxu0 0.0
    %1037 = vmatprep.subr.mxu0 0.0
    %1038 = vmatpush1.msra.mxu0 0.0
    %1039 = vmatprep.subr.mxu0 0.0
    %1040 = vmatpush1.msra.mxu0 0.0
    %1041 = vmatprep.subr.mxu0 0.0
    %1042 = vmatpush1.msra.mxu0 0.0
    %1043 = vmatprep.subr.mxu0 0.0
    %1044 = vmatpush1.msra.mxu0 0.0
    %1045 = vmatprep.subr.mxu0 0.0
    %1046 = vmatpush1.msra.mxu0 0.0
    %1047 = vmatprep.subr.mxu0 0.0
    %1048 = vmatpush1.msra.mxu0 0.0
    %1049 = vmatprep.subr.mxu0 0.0
    %1050 = vmatpush1.msra.mxu0 0.0
    %1051 = vmatprep.subr.mxu0 0.0
    %1052 = vmatpush1.msra.mxu0 0.0
    %1053 = vmatprep.subr.mxu0 0.0
    %1054 = vmatpush1.msra.mxu0 0.0
    %1055 = vmatprep.subr.mxu0 0.0
    %v1056 = vand.u32 %v106, 4294901760
    %v1057 = vsub.f32 %v106, %v1056
    %v1058 = vand.u32 %v1057, 4294901760
    %1059 = vmatpush1.msra.mxu0 %v1058
    %1060 = vmatprep.subr.mxu0 0.0
    %v1061 = vand.u32 %v103, 4294901760
    %v1062 = vsub.f32 %v103, %v1061
    %v1063 = vand.u32 %v1062, 4294901760
    %1064 = vmatpush1.msra.mxu0 %v1063
    %1065 = vmatprep.subr.mxu0 0.0
    %v1066 = vand.u32 %v100, 4294901760
    %v1067 = vsub.f32 %v100, %v1066
    %v1068 = vand.u32 %v1067, 4294901760
    %1069 = vmatpush1.msra.mxu0 %v1068
    %1070 = vmatprep.subr.mxu0 0.0
    %v1071 = vand.u32 %v97, 4294901760
    %v1072 = vsub.f32 %v97, %v1071
    %v1073 = vand.u32 %v1072, 4294901760
    %1074 = vmatpush1.msra.mxu0 %v1073
    %1075 = vmatprep.subr.mxu0 0.0
    %v1076 = vand.u32 %v94, 4294901760
    %v1077 = vsub.f32 %v94, %v1076
    %v1078 = vand.u32 %v1077, 4294901760
    %1079 = vmatpush1.msra.mxu0 %v1078
    %1080 = vmatprep.subr.mxu0 0.0
    %1081 = vmatpush2.msra.mxu0 0.0
    %1082 = vmatprep.subr.mxu0 0.0
    %1083 = vmatpush2.msra.mxu0 0.0
    %1084 = vmatprep.subr.mxu0 0.0
    %1085 = vmatpush2.msra.mxu0 0.0
    %1086 = vmatprep.subr.mxu0 0.0
    %1087 = vmatpush2.msra.mxu0 0.0
    %1088 = vmatprep.subr.mxu0 0.0
    %1089 = vmatpush2.msra.mxu0 0.0
    %1090 = vmatprep.subr.mxu0 0.0
    %1091 = vmatpush2.msra.mxu0 0.0
    %1092 = vmatprep.subr.mxu0 0.0
    %1093 = vmatpush2.msra.mxu0 0.0
    %1094 = vmatprep.subr.mxu0 0.0
    %1095 = vmatpush2.msra.mxu0 0.0
    %1096 = vmatprep.subr.mxu0 0.0
    %1097 = vmatpush2.msra.mxu0 0.0
    %1098 = vmatprep.subr.mxu0 0.0
    %1099 = vmatpush2.msra.mxu0 0.0
    %1100 = vmatprep.subr.mxu0 0.0
    %1101 = vmatpush2.msra.mxu0 0.0
    %1102 = vmatprep.subr.mxu0 0.0
    %1103 = vmatpush2.msra.mxu0 0.0
    %1104 = vmatprep.subr.mxu0 0.0
    %1105 = vmatpush2.msra.mxu0 0.0
    %1106 = vmatprep.subr.mxu0 0.0
    %1107 = vmatpush2.msra.mxu0 0.0
    %1108 = vmatprep.subr.mxu0 0.0
    %1109 = vmatpush2.msra.mxu0 0.0
    %1110 = vmatprep.subr.mxu0 0.0
    %1111 = vmatpush2.msra.mxu0 0.0
    %1112 = vmatprep.mubr.f32.mxu0 0.0
    %v1113 = vand.u32 %v126, 4294901760
    %1114 = vmatmul.mubr.f32.gmra.mxu0 %v1113
    %v1115 = vpop.f32.mrf.mxu0
    %v1116 = vadd.f32 %v1030, %v1115
    %v1117 = vpop.f32.mrf.mxu0
    %1118 = vdwg.mxu0
    %1119 = vmatprep.subr.mxu0 0.0
    %1120 = vmatpush1.msra.mxu0 0.0
    %1121 = vmatprep.subr.mxu0 0.0
    %1122 = vmatpush1.msra.mxu0 0.0
    %1123 = vmatprep.subr.mxu0 0.0
    %1124 = vmatpush1.msra.mxu0 0.0
    %1125 = vmatprep.subr.mxu0 0.0
    %1126 = vmatpush1.msra.mxu0 0.0
    %1127 = vmatprep.subr.mxu0 0.0
    %1128 = vmatpush1.msra.mxu0 0.0
    %1129 = vmatprep.subr.mxu0 0.0
    %1130 = vmatpush1.msra.mxu0 0.0
    %1131 = vmatprep.subr.mxu0 0.0
    %1132 = vmatpush1.msra.mxu0 0.0
    %1133 = vmatprep.subr.mxu0 0.0
    %1134 = vmatpush1.msra.mxu0 0.0
    %1135 = vmatprep.subr.mxu0 0.0
    %1136 = vmatpush1.msra.mxu0 0.0
    %1137 = vmatprep.subr.mxu0 0.0
    %1138 = vmatpush1.msra.mxu0 0.0
    %1139 = vmatprep.subr.mxu0 0.0
    %1140 = vmatpush1.msra.mxu0 0.0
    %1141 = vmatprep.subr.mxu0 0.0
    %v1142 = vand.u32 %v106, 4294901760
    %1143 = vmatpush1.msra.mxu0 %v1142
    %1144 = vmatprep.subr.mxu0 0.0
    %v1145 = vand.u32 %v103, 4294901760
    %1146 = vmatpush1.msra.mxu0 %v1145
    %1147 = vmatprep.subr.mxu0 0.0
    %v1148 = vand.u32 %v100, 4294901760
    %1149 = vmatpush1.msra.mxu0 %v1148
    %1150 = vmatprep.subr.mxu0 0.0
    %v1151 = vand.u32 %v97, 4294901760
    %1152 = vmatpush1.msra.mxu0 %v1151
    %1153 = vmatprep.subr.mxu0 0.0
    %v1154 = vand.u32 %v94, 4294901760
    %1155 = vmatpush1.msra.mxu0 %v1154
    %1156 = vmatprep.subr.mxu0 0.0
    %1157 = vmatpush2.msra.mxu0 0.0
    %1158 = vmatprep.subr.mxu0 0.0
    %1159 = vmatpush2.msra.mxu0 0.0
    %1160 = vmatprep.subr.mxu0 0.0
    %1161 = vmatpush2.msra.mxu0 0.0
    %1162 = vmatprep.subr.mxu0 0.0
    %1163 = vmatpush2.msra.mxu0 0.0
    %1164 = vmatprep.subr.mxu0 0.0
    %1165 = vmatpush2.msra.mxu0 0.0
    %1166 = vmatprep.subr.mxu0 0.0
    %1167 = vmatpush2.msra.mxu0 0.0
    %1168 = vmatprep.subr.mxu0 0.0
    %1169 = vmatpush2.msra.mxu0 0.0
    %1170 = vmatprep.subr.mxu0 0.0
    %1171 = vmatpush2.msra.mxu0 0.0
    %1172 = vmatprep.subr.mxu0 0.0
    %1173 = vmatpush2.msra.mxu0 0.0
    %1174 = vmatprep.subr.mxu0 0.0
    %1175 = vmatpush2.msra.mxu0 0.0
    %1176 = vmatprep.subr.mxu0 0.0
    %1177 = vmatpush2.msra.mxu0 0.0
    %1178 = vmatprep.subr.mxu0 0.0
    %1179 = vmatpush2.msra.mxu0 0.0
    %1180 = vmatprep.subr.mxu0 0.0
    %1181 = vmatpush2.msra.mxu0 0.0
    %1182 = vmatprep.subr.mxu0 0.0
    %1183 = vmatpush2.msra.mxu0 0.0
    %1184 = vmatprep.subr.mxu0 0.0
    %1185 = vmatpush2.msra.mxu0 0.0
    %1186 = vmatprep.subr.mxu0 0.0
    %1187 = vmatpush2.msra.mxu0 0.0
    %1188 = vmatprep.mubr.f32.mxu0 0.0
    %v1189 = vand.u32 %v126, 4294901760
    %1190 = vmatmul.mubr.f32.gmra.mxu0 %v1189
    %v1191 = vpop.f32.mrf.mxu0
    %v1192 = vadd.f32 %v1116, %v1191
    %v1193 = vpop.f32.mrf.mxu0
    %1194 = vdwg.mxu0
    %v1195 = vmax.f32 %v693, 0.0
    %v1196 = vmax.f32 %v695, 0.0
    %v1197 = vmax.f32 %v1192, 0.0
    %vm1198 = vcmask 1043456
    %v1199 = vsel %vm1198, %v1195, 0.0
    %v1200 = vrot.slane %v1199, 4
    %v1201 = vadd.f32 %v1199, %v1200
    %v1202 = vrot.slane %v1201, 2
    %v1203 = vadd.f32 %v1201, %v1202
    %v1204 = vrot.slane %v1203, 1
    %v1205 = vadd.f32 %v1203, %v1204
    %v1206 = vsel %vm1198, %v1196, 0.0
    %v1207 = vrot.slane %v1206, 4
    %v1208 = vadd.f32 %v1206, %v1207
    %v1209 = vrot.slane %v1208, 2
    %v1210 = vadd.f32 %v1208, %v1209
    %v1211 = vrot.slane %v1210, 1
    %v1212 = vadd.f32 %v1210, %v1211
    %v1213 = vsel %vm1198, %v1197, 0.0
    %v1214 = vrot.slane %v1213, 4
    %v1215 = vadd.f32 %v1213, %v1214
    %v1216 = vrot.slane %v1215, 2
    %v1217 = vadd.f32 %v1215, %v1216
    %v1218 = vrot.slane %v1217, 1
    %v1219 = vadd.f32 %v1217, %v1218
    %v1220 = vmul.f32 %v1195, %v1195
    %v1221 = vmul.f32 %v1196, %v1196
    %v1222 = vmul.f32 %v1197, %v1197
    %v1223 = vsel %vm1198, %v1220, 0.0
    %v1224 = vrot.slane %v1223, 4
    %v1225 = vadd.f32 %v1223, %v1224
    %v1226 = vrot.slane %v1225, 2
    %v1227 = vadd.f32 %v1225, %v1226
    %v1228 = vrot.slane %v1227, 1
    %v1229 = vadd.f32 %v1227, %v1228
    %v1230 = vsel %vm1198, %v1221, 0.0
    %v1231 = vrot.slane %v1230, 4
    %v1232 = vadd.f32 %v1230, %v1231
    %v1233 = vrot.slane %v1232, 2
    %v1234 = vadd.f32 %v1232, %v1233
    %v1235 = vrot.slane %v1234, 1
    %v1236 = vadd.f32 %v1234, %v1235
    %v1237 = vsel %vm1198, %v1222, 0.0
    %v1238 = vrot.slane %v1237, 4
    %v1239 = vadd.f32 %v1237, %v1238
    %v1240 = vrot.slane %v1239, 2
    %v1241 = vadd.f32 %v1239, %v1240
    %v1242 = vrot.slane %v1241, 1
    %v1243 = vadd.f32 %v1241, %v1242
    %v1244 = vld [vmem:[#allocation8] sm:$0xff]
    %v1245 = vld [vmem:[#allocation8 + $0x8] sm:$0xff]
    %v1246 = vld [vmem:[#allocation8 + $0x10] sm:$0xff]
    %v1247 = vld [vmem:[#allocation8 + $0x18] sm:$0xff]
    %v1248 = vld [vmem:[#allocation8 + $0x20] sm:$0xff]
    %v1249 = vld [vmem:[#allocation8 + $0x28] sm:$0xff]
    %v1250 = vld [vmem:[#allocation8 + $0x30] sm:$0xff]
    %v1251 = vld [vmem:[#allocation8 + $0x38] sm:$0xff]
    %v1252 = vld [vmem:[#allocation8 + $0x40] sm:$0xff]
    %v1253 = vld [vmem:[#allocation8 + $0x48] sm:$0xff]
    %v1254 = vld [vmem:[#allocation8 + $0x50] sm:$0xff]
    %v1255 = vld [vmem:[#allocation8 + $0x58] sm:$0xff]
    %v1256 = vld [vmem:[#allocation8 + $0x60] sm:$0xff]
    %v1257 = vld [vmem:[#allocation8 + $0x68] sm:$0xff]
    %v1258 = vld [vmem:[#allocation8 + $0x70] sm:$0xff]
    %v1259 = vld [vmem:[#allocation8 + $0x78] sm:$0xff]
    %v1260 = vld [vmem:[#allocation8 + $0x80] sm:$0xff]
    %v1261 = vld [vmem:[#allocation8 + $0x88] sm:$0xff]
    %v1262 = vld [vmem:[#allocation8 + $0x90] sm:$0xff]
    %v1263 = vld [vmem:[#allocation8 + $0x98] sm:$0xff]
    %v1264 = vld [vmem:[#allocation8 + $0xa0] sm:$0xff]
    %v1265 = vld [vmem:[#allocation8 + $0xa8] sm:$0xff]
    %v1266 = vld [vmem:[#allocation8 + $0xb0] sm:$0xff]
    %v1267 = vld [vmem:[#allocation8 + $0xb8] sm:$0xff]
    %v1268 = vld [vmem:[#allocation8 + $0xc0] sm:$0xff]
    %v1269 = vld [vmem:[#allocation8 + $0xc8] sm:$0xff]
    %v1270 = vld [vmem:[#allocation8 + $0xd0] sm:$0xff]
    %v1271 = vld [vmem:[#allocation8 + $0xd8] sm:$0xff]
    %v1272 = vld [vmem:[#allocation8 + $0xe0] sm:$0xff]
    %v1273 = vld [vmem:[#allocation8 + $0xe8] sm:$0xff]
    %v1274 = vld [vmem:[#allocation8 + $0xf0] sm:$0xff]
    %v1275 = vld [vmem:[#allocation8 + $0xf8] sm:$0xff]
    %v1276 = vld [vmem:[#allocation8 + $0x100] sm:$0xff]
    %v1277 = vld [vmem:[#allocation8 + $0x108] sm:$0xff]
    %v1278 = vld [vmem:[#allocation8 + $0x110] sm:$0xff]
    %v1279 = vld [vmem:[#allocation8 + $0x118] sm:$0xff]
    %v1280 = vld [vmem:[#allocation8 + $0x120] sm:$0xff]
    %v1281 = vld [vmem:[#allocation8 + $0x128] sm:$0xff]
    %v1282 = vld [vmem:[#allocation8 + $0x130] sm:$0xff]
    %v1283 = vld [vmem:[#allocation8 + $0x138] sm:$0xff]
    %v1284 = vld [vmem:[#allocation8 + $0x140] sm:$0xff]
    %v1285 = vld [vmem:[#allocation8 + $0x148] sm:$0xff]
    %v1286 = vld [vmem:[#allocation8 + $0x150] sm:$0xff]
    %v1287 = vld [vmem:[#allocation8 + $0x158] sm:$0xff]
    %v1288 = vld [vmem:[#allocation8 + $0x160] sm:$0xff]
    %v1289 = vld [vmem:[#allocation8 + $0x168] sm:$0xff]
    %v1290 = vld [vmem:[#allocation8 + $0x170] sm:$0xff]
    %v1291 = vld [vmem:[#allocation8 + $0x178] sm:$0xff]
    %1292 = vmatprep.subr.mxu0 0.0
    %v1293 = vand.u32 %v1259, 4294901760
    %1294 = vmatpush1.msra.mxu0 %v1293
    %1295 = vmatprep.subr.mxu0 0.0
    %v1296 = vand.u32 %v1258, 4294901760
    %1297 = vmatpush1.msra.mxu0 %v1296
    %1298 = vmatprep.subr.mxu0 0.0
    %v1299 = vand.u32 %v1257, 4294901760
    %1300 = vmatpush1.msra.mxu0 %v1299
    %1301 = vmatprep.subr.mxu0 0.0
    %v1302 = vand.u32 %v1256, 4294901760
    %1303 = vmatpush1.msra.mxu0 %v1302
    %1304 = vmatprep.subr.mxu0 0.0
    %v1305 = vand.u32 %v1255, 4294901760
    %1306 = vmatpush1.msra.mxu0 %v1305
    %1307 = vmatprep.subr.mxu0 0.0
    %v1308 = vand.u32 %v1254, 4294901760
    %1309 = vmatpush1.msra.mxu0 %v1308
    %1310 = vmatprep.subr.mxu0 0.0
    %v1311 = vand.u32 %v1253, 4294901760
    %1312 = vmatpush1.msra.mxu0 %v1311
    %1313 = vmatprep.subr.mxu0 0.0
    %v1314 = vand.u32 %v1252, 4294901760
    %1315 = vmatpush1.msra.mxu0 %v1314
    %1316 = vmatprep.subr.mxu0 0.0
    %v1317 = vand.u32 %v1251, 4294901760
    %1318 = vmatpush1.msra.mxu0 %v1317
    %1319 = vmatprep.subr.mxu0 0.0
    %v1320 = vand.u32 %v1250, 4294901760
    %1321 = vmatpush1.msra.mxu0 %v1320
    %1322 = vmatprep.subr.mxu0 0.0
    %v1323 = vand.u32 %v1249, 4294901760
    %1324 = vmatpush1.msra.mxu0 %v1323
    %1325 = vmatprep.subr.mxu0 0.0
    %v1326 = vand.u32 %v1248, 4294901760
    %1327 = vmatpush1.msra.mxu0 %v1326
    %1328 = vmatprep.subr.mxu0 0.0
    %v1329 = vand.u32 %v1247, 4294901760
    %1330 = vmatpush1.msra.mxu0 %v1329
    %1331 = vmatprep.subr.mxu0 0.0
    %v1332 = vand.u32 %v1246, 4294901760
    %1333 = vmatpush1.msra.mxu0 %v1332
    %1334 = vmatprep.subr.mxu0 0.0
    %v1335 = vand.u32 %v1245, 4294901760
    %1336 = vmatpush1.msra.mxu0 %v1335
    %1337 = vmatprep.subr.mxu0 0.0
    %v1338 = vand.u32 %v1244, 4294901760
    %1339 = vmatpush1.msra.mxu0 %v1338
    %1340 = vmatprep.subr.mxu0 0.0
    %v1341 = vand.u32 %v1275, 4294901760
    %1342 = vmatpush2.msra.mxu0 %v1341
    %1343 = vmatprep.subr.mxu0 0.0
    %v1344 = vand.u32 %v1274, 4294901760
    %1345 = vmatpush2.msra.mxu0 %v1344
    %1346 = vmatprep.subr.mxu0 0.0
    %v1347 = vand.u32 %v1273, 4294901760
    %1348 = vmatpush2.msra.mxu0 %v1347
    %1349 = vmatprep.subr.mxu0 0.0
    %v1350 = vand.u32 %v1272, 4294901760
    %1351 = vmatpush2.msra.mxu0 %v1350
    %1352 = vmatprep.subr.mxu0 0.0
    %v1353 = vand.u32 %v1271, 4294901760
    %1354 = vmatpush2.msra.mxu0 %v1353
    %1355 = vmatprep.subr.mxu0 0.0
    %v1356 = vand.u32 %v1270, 4294901760
    %1357 = vmatpush2.msra.mxu0 %v1356
    %1358 = vmatprep.subr.mxu0 0.0
    %v1359 = vand.u32 %v1269, 4294901760
    %1360 = vmatpush2.msra.mxu0 %v1359
    %1361 = vmatprep.subr.mxu0 0.0
    %v1362 = vand.u32 %v1268, 4294901760
    %1363 = vmatpush2.msra.mxu0 %v1362
    %1364 = vmatprep.subr.mxu0 0.0
    %v1365 = vand.u32 %v1267, 4294901760
    %1366 = vmatpush2.msra.mxu0 %v1365
    %1367 = vmatprep.subr.mxu0 0.0
    %v1368 = vand.u32 %v1266, 4294901760
    %1369 = vmatpush2.msra.mxu0 %v1368
    %1370 = vmatprep.subr.mxu0 0.0
    %v1371 = vand.u32 %v1265, 4294901760
    %1372 = vmatpush2.msra.mxu0 %v1371
    %1373 = vmatprep.subr.mxu0 0.0
    %v1374 = vand.u32 %v1264, 4294901760
    %1375 = vmatpush2.msra.mxu0 %v1374
    %1376 = vmatprep.subr.mxu0 0.0
    %v1377 = vand.u32 %v1263, 4294901760
    %1378 = vmatpush2.msra.mxu0 %v1377
    %1379 = vmatprep.subr.mxu0 0.0
    %v1380 = vand.u32 %v1262, 4294901760
    %1381 = vmatpush2.msra.mxu0 %v1380
    %1382 = vmatprep.subr.mxu0 0.0
    %v1383 = vand.u32 %v1261, 4294901760
    %1384 = vmatpush2.msra.mxu0 %v1383
    %1385 = vmatprep.subr.mxu0 0.0
    %v1386 = vand.u32 %v1260, 4294901760
    %1387 = vmatpush2.msra.mxu0 %v1386
    %v1388 = vand.u32 %v1212, 4294901760
    %v1389 = vsub.f32 %v1212, %v1388
    %v1390 = vand.u32 %v1389, 4294901760
    %v1391 = vsub.f32 %v1389, %v1390
    %v1392 = vand.u32 %v1391, 4294901760
    %1393 = vmatprep.mubr.f32.mxu0 %v1392
    %v1394 = vand.u32 %v1205, 4294901760
    %v1395 = vsub.f32 %v1205, %v1394
    %v1396 = vand.u32 %v1395, 4294901760
    %v1397 = vsub.f32 %v1395, %v1396
    %v1398 = vand.u32 %v1397, 4294901760
    %1399 = vmatmul.mubr.f32.gmra.mxu0 %v1398
    %v1400 = vpop.f32.mrf.mxu0
    %v1401 = vadd.f32 0.0, %v1400
    %v1402 = vpop.f32.mrf.mxu0
    %1403 = vdwg.mxu0
    %1404 = vmatprep.subr.mxu0 0.0
    %v1405 = vand.u32 %v1259, 4294901760
    %v1406 = vsub.f32 %v1259, %v1405
    %v1407 = vand.u32 %v1406, 4294901760
    %v1408 = vsub.f32 %v1406, %v1407
    %v1409 = vand.u32 %v1408, 4294901760
    %1410 = vmatpush1.msra.mxu0 %v1409
    %1411 = vmatprep.subr.mxu0 0.0
    %v1412 = vand.u32 %v1258, 4294901760
    %v1413 = vsub.f32 %v1258, %v1412
    %v1414 = vand.u32 %v1413, 4294901760
    %v1415 = vsub.f32 %v1413, %v1414
    %v1416 = vand.u32 %v1415, 4294901760
    %1417 = vmatpush1.msra.mxu0 %v1416
    %1418 = vmatprep.subr.mxu0 0.0
    %v1419 = vand.u32 %v1257, 4294901760
    %v1420 = vsub.f32 %v1257, %v1419
    %v1421 = vand.u32 %v1420, 4294901760
    %v1422 = vsub.f32 %v1420, %v1421
    %v1423 = vand.u32 %v1422, 4294901760
    %1424 = vmatpush1.msra.mxu0 %v1423
    %1425 = vmatprep.subr.mxu0 0.0
    %v1426 = vand.u32 %v1256, 4294901760
    %v1427 = vsub.f32 %v1256, %v1426
    %v1428 = vand.u32 %v1427, 4294901760
    %v1429 = vsub.f32 %v1427, %v1428
    %v1430 = vand.u32 %v1429, 4294901760
    %1431 = vmatpush1.msra.mxu0 %v1430
    %1432 = vmatprep.subr.mxu0 0.0
    %v1433 = vand.u32 %v1255, 4294901760
    %v1434 = vsub.f32 %v1255, %v1433
    %v1435 = vand.u32 %v1434, 4294901760
    %v1436 = vsub.f32 %v1434, %v1435
    %v1437 = vand.u32 %v1436, 4294901760
    %1438 = vmatpush1.msra.mxu0 %v1437
    %1439 = vmatprep.subr.mxu0 0.0
    %v1440 = vand.u32 %v1254, 4294901760
    %v1441 = vsub.f32 %v1254, %v1440
    %v1442 = vand.u32 %v1441, 4294901760
    %v1443 = vsub.f32 %v1441, %v1442
    %v1444 = vand.u32 %v1443, 4294901760
    %1445 = vmatpush1.msra.mxu0 %v1444
    %1446 = vmatprep.subr.mxu0 0.0
    %v1447 = vand.u32 %v1253, 4294901760
    %v1448 = vsub.f32 %v1253, %v1447
    %v1449 = vand.u32 %v1448, 4294901760
    %v1450 = vsub.f32 %v1448, %v1449
    %v1451 = vand.u32 %v1450, 4294901760
    %1452 = vmatpush1.msra.mxu0 %v1451
    %1453 = vmatprep.subr.mxu0 0.0
    %v1454 = vand.u32 %v1252, 4294901760
    %v1455 = vsub.f32 %v1252, %v1454
    %v1456 = vand.u32 %v1455, 4294901760
    %v1457 = vsub.f32 %v1455, %v1456
    %v1458 = vand.u32 %v1457, 4294901760
    %1459 = vmatpush1.msra.mxu0 %v1458
    %1460 = vmatprep.subr.mxu0 0.0
    %v1461 = vand.u32 %v1251, 4294901760
    %v1462 = vsub.f32 %v1251, %v1461
    %v1463 = vand.u32 %v1462, 4294901760
    %v1464 = vsub.f32 %v1462, %v1463
    %v1465 = vand.u32 %v1464, 4294901760
    %1466 = vmatpush1.msra.mxu0 %v1465
    %1467 = vmatprep.subr.mxu0 0.0
    %v1468 = vand.u32 %v1250, 4294901760
    %v1469 = vsub.f32 %v1250, %v1468
    %v1470 = vand.u32 %v1469, 4294901760
    %v1471 = vsub.f32 %v1469, %v1470
    %v1472 = vand.u32 %v1471, 4294901760
    %1473 = vmatpush1.msra.mxu0 %v1472
    %1474 = vmatprep.subr.mxu0 0.0
    %v1475 = vand.u32 %v1249, 4294901760
    %v1476 = vsub.f32 %v1249, %v1475
    %v1477 = vand.u32 %v1476, 4294901760
    %v1478 = vsub.f32 %v1476, %v1477
    %v1479 = vand.u32 %v1478, 4294901760
    %1480 = vmatpush1.msra.mxu0 %v1479
    %1481 = vmatprep.subr.mxu0 0.0
    %v1482 = vand.u32 %v1248, 4294901760
    %v1483 = vsub.f32 %v1248, %v1482
    %v1484 = vand.u32 %v1483, 4294901760
    %v1485 = vsub.f32 %v1483, %v1484
    %v1486 = vand.u32 %v1485, 4294901760
    %1487 = vmatpush1.msra.mxu0 %v1486
    %1488 = vmatprep.subr.mxu0 0.0
    %v1489 = vand.u32 %v1247, 4294901760
    %v1490 = vsub.f32 %v1247, %v1489
    %v1491 = vand.u32 %v1490, 4294901760
    %v1492 = vsub.f32 %v1490, %v1491
    %v1493 = vand.u32 %v1492, 4294901760
    %1494 = vmatpush1.msra.mxu0 %v1493
    %1495 = vmatprep.subr.mxu0 0.0
    %v1496 = vand.u32 %v1246, 4294901760
    %v1497 = vsub.f32 %v1246, %v1496
    %v1498 = vand.u32 %v1497, 4294901760
    %v1499 = vsub.f32 %v1497, %v1498
    %v1500 = vand.u32 %v1499, 4294901760
    %1501 = vmatpush1.msra.mxu0 %v1500
    %1502 = vmatprep.subr.mxu0 0.0
    %v1503 = vand.u32 %v1245, 4294901760
    %v1504 = vsub.f32 %v1245, %v1503
    %v1505 = vand.u32 %v1504, 4294901760
    %v1506 = vsub.f32 %v1504, %v1505
    %v1507 = vand.u32 %v1506, 4294901760
    %1508 = vmatpush1.msra.mxu0 %v1507
    %1509 = vmatprep.subr.mxu0 0.0
    %v1510 = vand.u32 %v1244, 4294901760
    %v1511 = vsub.f32 %v1244, %v1510
    %v1512 = vand.u32 %v1511, 4294901760
    %v1513 = vsub.f32 %v1511, %v1512
    %v1514 = vand.u32 %v1513, 4294901760
    %1515 = vmatpush1.msra.mxu0 %v1514
    %1516 = vmatprep.subr.mxu0 0.0
    %v1517 = vand.u32 %v1275, 4294901760
    %v1518 = vsub.f32 %v1275, %v1517
    %v1519 = vand.u32 %v1518, 4294901760
    %v1520 = vsub.f32 %v1518, %v1519
    %v1521 = vand.u32 %v1520, 4294901760
    %1522 = vmatpush2.msra.mxu0 %v1521
    %1523 = vmatprep.subr.mxu0 0.0
    %v1524 = vand.u32 %v1274, 4294901760
    %v1525 = vsub.f32 %v1274, %v1524
    %v1526 = vand.u32 %v1525, 4294901760
    %v1527 = vsub.f32 %v1525, %v1526
    %v1528 = vand.u32 %v1527, 4294901760
    %1529 = vmatpush2.msra.mxu0 %v1528
    %1530 = vmatprep.subr.mxu0 0.0
    %v1531 = vand.u32 %v1273, 4294901760
    %v1532 = vsub.f32 %v1273, %v1531
    %v1533 = vand.u32 %v1532, 4294901760
    %v1534 = vsub.f32 %v1532, %v1533
    %v1535 = vand.u32 %v1534, 4294901760
    %1536 = vmatpush2.msra.mxu0 %v1535
    %1537 = vmatprep.subr.mxu0 0.0
    %v1538 = vand.u32 %v1272, 4294901760
    %v1539 = vsub.f32 %v1272, %v1538
    %v1540 = vand.u32 %v1539, 4294901760
    %v1541 = vsub.f32 %v1539, %v1540
    %v1542 = vand.u32 %v1541, 4294901760
    %1543 = vmatpush2.msra.mxu0 %v1542
    %1544 = vmatprep.subr.mxu0 0.0
    %v1545 = vand.u32 %v1271, 4294901760
    %v1546 = vsub.f32 %v1271, %v1545
    %v1547 = vand.u32 %v1546, 4294901760
    %v1548 = vsub.f32 %v1546, %v1547
    %v1549 = vand.u32 %v1548, 4294901760
    %1550 = vmatpush2.msra.mxu0 %v1549
    %1551 = vmatprep.subr.mxu0 0.0
    %v1552 = vand.u32 %v1270, 4294901760
    %v1553 = vsub.f32 %v1270, %v1552
    %v1554 = vand.u32 %v1553, 4294901760
    %v1555 = vsub.f32 %v1553, %v1554
    %v1556 = vand.u32 %v1555, 4294901760
    %1557 = vmatpush2.msra.mxu0 %v1556
    %1558 = vmatprep.subr.mxu0 0.0
    %v1559 = vand.u32 %v1269, 4294901760
    %v1560 = vsub.f32 %v1269, %v1559
    %v1561 = vand.u32 %v1560, 4294901760
    %v1562 = vsub.f32 %v1560, %v1561
    %v1563 = vand.u32 %v1562, 4294901760
    %1564 = vmatpush2.msra.mxu0 %v1563
    %1565 = vmatprep.subr.mxu0 0.0
    %v1566 = vand.u32 %v1268, 4294901760
    %v1567 = vsub.f32 %v1268, %v1566
    %v1568 = vand.u32 %v1567, 4294901760
    %v1569 = vsub.f32 %v1567, %v1568
    %v1570 = vand.u32 %v1569, 4294901760
    %1571 = vmatpush2.msra.mxu0 %v1570
    %1572 = vmatprep.subr.mxu0 0.0
    %v1573 = vand.u32 %v1267, 4294901760
    %v1574 = vsub.f32 %v1267, %v1573
    %v1575 = vand.u32 %v1574, 4294901760
    %v1576 = vsub.f32 %v1574, %v1575
    %v1577 = vand.u32 %v1576, 4294901760
    %1578 = vmatpush2.msra.mxu0 %v1577
    %1579 = vmatprep.subr.mxu0 0.0
    %v1580 = vand.u32 %v1266, 4294901760
    %v1581 = vsub.f32 %v1266, %v1580
    %v1582 = vand.u32 %v1581, 4294901760
    %v1583 = vsub.f32 %v1581, %v1582
    %v1584 = vand.u32 %v1583, 4294901760
    %1585 = vmatpush2.msra.mxu0 %v1584
    %1586 = vmatprep.subr.mxu0 0.0
    %v1587 = vand.u32 %v1265, 4294901760
    %v1588 = vsub.f32 %v1265, %v1587
    %v1589 = vand.u32 %v1588, 4294901760
    %v1590 = vsub.f32 %v1588, %v1589
    %v1591 = vand.u32 %v1590, 4294901760
    %1592 = vmatpush2.msra.mxu0 %v1591
    %1593 = vmatprep.subr.mxu0 0.0
    %v1594 = vand.u32 %v1264, 4294901760
    %v1595 = vsub.f32 %v1264, %v1594
    %v1596 = vand.u32 %v1595, 4294901760
    %v1597 = vsub.f32 %v1595, %v1596
    %v1598 = vand.u32 %v1597, 4294901760
    %1599 = vmatpush2.msra.mxu0 %v1598
    %1600 = vmatprep.subr.mxu0 0.0
    %v1601 = vand.u32 %v1263, 4294901760
    %v1602 = vsub.f32 %v1263, %v1601
    %v1603 = vand.u32 %v1602, 4294901760
    %v1604 = vsub.f32 %v1602, %v1603
    %v1605 = vand.u32 %v1604, 4294901760
    %1606 = vmatpush2.msra.mxu0 %v1605
    %1607 = vmatprep.subr.mxu0 0.0
    %v1608 = vand.u32 %v1262, 4294901760
    %v1609 = vsub.f32 %v1262, %v1608
    %v1610 = vand.u32 %v1609, 4294901760
    %v1611 = vsub.f32 %v1609, %v1610
    %v1612 = vand.u32 %v1611, 4294901760
    %1613 = vmatpush2.msra.mxu0 %v1612
    %1614 = vmatprep.subr.mxu0 0.0
    %v1615 = vand.u32 %v1261, 4294901760
    %v1616 = vsub.f32 %v1261, %v1615
    %v1617 = vand.u32 %v1616, 4294901760
    %v1618 = vsub.f32 %v1616, %v1617
    %v1619 = vand.u32 %v1618, 4294901760
    %1620 = vmatpush2.msra.mxu0 %v1619
    %1621 = vmatprep.subr.mxu0 0.0
    %v1622 = vand.u32 %v1260, 4294901760
    %v1623 = vsub.f32 %v1260, %v1622
    %v1624 = vand.u32 %v1623, 4294901760
    %v1625 = vsub.f32 %v1623, %v1624
    %v1626 = vand.u32 %v1625, 4294901760
    %1627 = vmatpush2.msra.mxu0 %v1626
    %v1628 = vand.u32 %v1212, 4294901760
    %1629 = vmatprep.mubr.f32.mxu0 %v1628
    %v1630 = vand.u32 %v1205, 4294901760
    %1631 = vmatmul.mubr.f32.gmra.mxu0 %v1630
    %v1632 = vpop.f32.mrf.mxu0
    %v1633 = vadd.f32 %v1401, %v1632
    %v1634 = vpop.f32.mrf.mxu0
    %1635 = vdwg.mxu0
    %1636 = vmatprep.subr.mxu0 0.0
    %v1637 = vand.u32 %v1259, 4294901760
    %v1638 = vsub.f32 %v1259, %v1637
    %1639 = vmatpush1.msra.mxu0 %v1638
    %1640 = vmatprep.subr.mxu0 0.0
    %v1641 = vand.u32 %v1258, 4294901760
    %v1642 = vsub.f32 %v1258, %v1641
    %1643 = vmatpush1.msra.mxu0 %v1642
    %1644 = vmatprep.subr.mxu0 0.0
    %v1645 = vand.u32 %v1257, 4294901760
    %v1646 = vsub.f32 %v1257, %v1645
    %1647 = vmatpush1.msra.mxu0 %v1646
    %1648 = vmatprep.subr.mxu0 0.0
    %v1649 = vand.u32 %v1256, 4294901760
    %v1650 = vsub.f32 %v1256, %v1649
    %1651 = vmatpush1.msra.mxu0 %v1650
    %1652 = vmatprep.subr.mxu0 0.0
    %v1653 = vand.u32 %v1255, 4294901760
    %v1654 = vsub.f32 %v1255, %v1653
    %1655 = vmatpush1.msra.mxu0 %v1654
    %1656 = vmatprep.subr.mxu0 0.0
    %v1657 = vand.u32 %v1254, 4294901760
    %v1658 = vsub.f32 %v1254, %v1657
    %1659 = vmatpush1.msra.mxu0 %v1658
    %1660 = vmatprep.subr.mxu0 0.0
    %v1661 = vand.u32 %v1253, 4294901760
    %v1662 = vsub.f32 %v1253, %v1661
    %1663 = vmatpush1.msra.mxu0 %v1662
    %1664 = vmatprep.subr.mxu0 0.0
    %v1665 = vand.u32 %v1252, 4294901760
    %v1666 = vsub.f32 %v1252, %v1665
    %1667 = vmatpush1.msra.mxu0 %v1666
    %1668 = vmatprep.subr.mxu0 0.0
    %v1669 = vand.u32 %v1251, 4294901760
    %v1670 = vsub.f32 %v1251, %v1669
    %1671 = vmatpush1.msra.mxu0 %v1670
    %1672 = vmatprep.subr.mxu0 0.0
    %v1673 = vand.u32 %v1250, 4294901760
    %v1674 = vsub.f32 %v1250, %v1673
    %1675 = vmatpush1.msra.mxu0 %v1674
    %1676 = vmatprep.subr.mxu0 0.0
    %v1677 = vand.u32 %v1249, 4294901760
    %v1678 = vsub.f32 %v1249, %v1677
    %1679 = vmatpush1.msra.mxu0 %v1678
    %1680 = vmatprep.subr.mxu0 0.0
    %v1681 = vand.u32 %v1248, 4294901760
    %v1682 = vsub.f32 %v1248, %v1681
    %1683 = vmatpush1.msra.mxu0 %v1682
    %1684 = vmatprep.subr.mxu0 0.0
    %v1685 = vand.u32 %v1247, 4294901760
    %v1686 = vsub.f32 %v1247, %v1685
    %1687 = vmatpush1.msra.mxu0 %v1686
    %1688 = vmatprep.subr.mxu0 0.0
    %v1689 = vand.u32 %v1246, 4294901760
    %v1690 = vsub.f32 %v1246, %v1689
    %1691 = vmatpush1.msra.mxu0 %v1690
    %1692 = vmatprep.subr.mxu0 0.0
    %v1693 = vand.u32 %v1245, 4294901760
    %v1694 = vsub.f32 %v1245, %v1693
    %1695 = vmatpush1.msra.mxu0 %v1694
    %1696 = vmatprep.subr.mxu0 0.0
    %v1697 = vand.u32 %v1244, 4294901760
    %v1698 = vsub.f32 %v1244, %v1697
    %1699 = vmatpush1.msra.mxu0 %v1698
    %1700 = vmatprep.subr.mxu0 0.0
    %v1701 = vand.u32 %v1275, 4294901760
    %v1702 = vsub.f32 %v1275, %v1701
    %1703 = vmatpush2.msra.mxu0 %v1702
    %1704 = vmatprep.subr.mxu0 0.0
    %v1705 = vand.u32 %v1274, 4294901760
    %v1706 = vsub.f32 %v1274, %v1705
    %1707 = vmatpush2.msra.mxu0 %v1706
    %1708 = vmatprep.subr.mxu0 0.0
    %v1709 = vand.u32 %v1273, 4294901760
    %v1710 = vsub.f32 %v1273, %v1709
    %1711 = vmatpush2.msra.mxu0 %v1710
    %1712 = vmatprep.subr.mxu0 0.0
    %v1713 = vand.u32 %v1272, 4294901760
    %v1714 = vsub.f32 %v1272, %v1713
    %1715 = vmatpush2.msra.mxu0 %v1714
    %1716 = vmatprep.subr.mxu0 0.0
    %v1717 = vand.u32 %v1271, 4294901760
    %v1718 = vsub.f32 %v1271, %v1717
    %1719 = vmatpush2.msra.mxu0 %v1718
    %1720 = vmatprep.subr.mxu0 0.0
    %v1721 = vand.u32 %v1270, 4294901760
    %v1722 = vsub.f32 %v1270, %v1721
    %1723 = vmatpush2.msra.mxu0 %v1722
    %1724 = vmatprep.subr.mxu0 0.0
    %v1725 = vand.u32 %v1269, 4294901760
    %v1726 = vsub.f32 %v1269, %v1725
    %1727 = vmatpush2.msra.mxu0 %v1726
    %1728 = vmatprep.subr.mxu0 0.0
    %v1729 = vand.u32 %v1268, 4294901760
    %v1730 = vsub.f32 %v1268, %v1729
    %1731 = vmatpush2.msra.mxu0 %v1730
    %1732 = vmatprep.subr.mxu0 0.0
    %v1733 = vand.u32 %v1267, 4294901760
    %v1734 = vsub.f32 %v1267, %v1733
    %1735 = vmatpush2.msra.mxu0 %v1734
    %1736 = vmatprep.subr.mxu0 0.0
    %v1737 = vand.u32 %v1266, 4294901760
    %v1738 = vsub.f32 %v1266, %v1737
    %1739 = vmatpush2.msra.mxu0 %v1738
    %1740 = vmatprep.subr.mxu0 0.0
    %v1741 = vand.u32 %v1265, 4294901760
    %v1742 = vsub.f32 %v1265, %v1741
    %1743 = vmatpush2.msra.mxu0 %v1742
    %1744 = vmatprep.subr.mxu0 0.0
    %v1745 = vand.u32 %v1264, 4294901760
    %v1746 = vsub.f32 %v1264, %v1745
    %1747 = vmatpush2.msra.mxu0 %v1746
    %1748 = vmatprep.subr.mxu0 0.0
    %v1749 = vand.u32 %v1263, 4294901760
    %v1750 = vsub.f32 %v1263, %v1749
    %1751 = vmatpush2.msra.mxu0 %v1750
    %1752 = vmatprep.subr.mxu0 0.0
    %v1753 = vand.u32 %v1262, 4294901760
    %v1754 = vsub.f32 %v1262, %v1753
    %1755 = vmatpush2.msra.mxu0 %v1754
    %1756 = vmatprep.subr.mxu0 0.0
    %v1757 = vand.u32 %v1261, 4294901760
    %v1758 = vsub.f32 %v1261, %v1757
    %1759 = vmatpush2.msra.mxu0 %v1758
    %1760 = vmatprep.subr.mxu0 0.0
    %v1761 = vand.u32 %v1260, 4294901760
    %v1762 = vsub.f32 %v1260, %v1761
    %1763 = vmatpush2.msra.mxu0 %v1762
    %v1764 = vand.u32 %v1212, 4294901760
    %v1765 = vsub.f32 %v1212, %v1764
    %1766 = vmatprep.mubr.f32.mxu0 %v1765
    %v1767 = vand.u32 %v1205, 4294901760
    %v1768 = vsub.f32 %v1205, %v1767
    %1769 = vmatmul.mubr.f32.gmra.mxu0 %v1768
    %v1770 = vpop.f32.mrf.mxu0
    %v1771 = vadd.f32 %v1633, %v1770
    %v1772 = vpop.f32.mrf.mxu0
    %1773 = vdwg.mxu0
    %1774 = vmatprep.subr.mxu0 0.0
    %v1775 = vand.u32 %v1259, 4294901760
    %1776 = vmatpush1.msra.mxu0 %v1775
    %1777 = vmatprep.subr.mxu0 0.0
    %v1778 = vand.u32 %v1258, 4294901760
    %1779 = vmatpush1.msra.mxu0 %v1778
    %1780 = vmatprep.subr.mxu0 0.0
    %v1781 = vand.u32 %v1257, 4294901760
    %1782 = vmatpush1.msra.mxu0 %v1781
    %1783 = vmatprep.subr.mxu0 0.0
    %v1784 = vand.u32 %v1256, 4294901760
    %1785 = vmatpush1.msra.mxu0 %v1784
    %1786 = vmatprep.subr.mxu0 0.0
    %v1787 = vand.u32 %v1255, 4294901760
    %1788 = vmatpush1.msra.mxu0 %v1787
    %1789 = vmatprep.subr.mxu0 0.0
    %v1790 = vand.u32 %v1254, 4294901760
    %1791 = vmatpush1.msra.mxu0 %v1790
    %1792 = vmatprep.subr.mxu0 0.0
    %v1793 = vand.u32 %v1253, 4294901760
    %1794 = vmatpush1.msra.mxu0 %v1793
    %1795 = vmatprep.subr.mxu0 0.0
    %v1796 = vand.u32 %v1252, 4294901760
    %1797 = vmatpush1.msra.mxu0 %v1796
    %1798 = vmatprep.subr.mxu0 0.0
    %v1799 = vand.u32 %v1251, 4294901760
    %1800 = vmatpush1.msra.mxu0 %v1799
    %1801 = vmatprep.subr.mxu0 0.0
    %v1802 = vand.u32 %v1250, 4294901760
    %1803 = vmatpush1.msra.mxu0 %v1802
    %1804 = vmatprep.subr.mxu0 0.0
    %v1805 = vand.u32 %v1249, 4294901760
    %1806 = vmatpush1.msra.mxu0 %v1805
    %1807 = vmatprep.subr.mxu0 0.0
    %v1808 = vand.u32 %v1248, 4294901760
    %1809 = vmatpush1.msra.mxu0 %v1808
    %1810 = vmatprep.subr.mxu0 0.0
    %v1811 = vand.u32 %v1247, 4294901760
    %1812 = vmatpush1.msra.mxu0 %v1811
    %1813 = vmatprep.subr.mxu0 0.0
    %v1814 = vand.u32 %v1246, 4294901760
    %1815 = vmatpush1.msra.mxu0 %v1814
    %1816 = vmatprep.subr.mxu0 0.0
    %v1817 = vand.u32 %v1245, 4294901760
    %1818 = vmatpush1.msra.mxu0 %v1817
    %1819 = vmatprep.subr.mxu0 0.0
    %v1820 = vand.u32 %v1244, 4294901760
    %1821 = vmatpush1.msra.mxu0 %v1820
    %1822 = vmatprep.subr.mxu0 0.0
    %v1823 = vand.u32 %v1275, 4294901760
    %1824 = vmatpush2.msra.mxu0 %v1823
    %1825 = vmatprep.subr.mxu0 0.0
    %v1826 = vand.u32 %v1274, 4294901760
    %1827 = vmatpush2.msra.mxu0 %v1826
    %1828 = vmatprep.subr.mxu0 0.0
    %v1829 = vand.u32 %v1273, 4294901760
    %1830 = vmatpush2.msra.mxu0 %v1829
    %1831 = vmatprep.subr.mxu0 0.0
    %v1832 = vand.u32 %v1272, 4294901760
    %1833 = vmatpush2.msra.mxu0 %v1832
    %1834 = vmatprep.subr.mxu0 0.0
    %v1835 = vand.u32 %v1271, 4294901760
    %1836 = vmatpush2.msra.mxu0 %v1835
    %1837 = vmatprep.subr.mxu0 0.0
    %v1838 = vand.u32 %v1270, 4294901760
    %1839 = vmatpush2.msra.mxu0 %v1838
    %1840 = vmatprep.subr.mxu0 0.0
    %v1841 = vand.u32 %v1269, 4294901760
    %1842 = vmatpush2.msra.mxu0 %v1841
    %1843 = vmatprep.subr.mxu0 0.0
    %v1844 = vand.u32 %v1268, 4294901760
    %1845 = vmatpush2.msra.mxu0 %v1844
    %1846 = vmatprep.subr.mxu0 0.0
    %v1847 = vand.u32 %v1267, 4294901760
    %1848 = vmatpush2.msra.mxu0 %v1847
    %1849 = vmatprep.subr.mxu0 0.0
    %v1850 = vand.u32 %v1266, 4294901760
    %1851 = vmatpush2.msra.mxu0 %v1850
    %1852 = vmatprep.subr.mxu0 0.0
    %v1853 = vand.u32 %v1265, 4294901760
    %1854 = vmatpush2.msra.mxu0 %v1853
    %1855 = vmatprep.subr.mxu0 0.0
    %v1856 = vand.u32 %v1264, 4294901760
    %1857 = vmatpush2.msra.mxu0 %v1856
    %1858 = vmatprep.subr.mxu0 0.0
    %v1859 = vand.u32 %v1263, 4294901760
    %1860 = vmatpush2.msra.mxu0 %v1859
    %1861 = vmatprep.subr.mxu0 0.0
    %v1862 = vand.u32 %v1262, 4294901760
    %1863 = vmatpush2.msra.mxu0 %v1862
    %1864 = vmatprep.subr.mxu0 0.0
    %v1865 = vand.u32 %v1261, 4294901760
    %1866 = vmatpush2.msra.mxu0 %v1865
    %1867 = vmatprep.subr.mxu0 0.0
    %v1868 = vand.u32 %v1260, 4294901760
    %1869 = vmatpush2.msra.mxu0 %v1868
    %v1870 = vand.u32 %v1212, 4294901760
    %v1871 = vsub.f32 %v1212, %v1870
    %v1872 = vand.u32 %v1871, 4294901760
    %1873 = vmatprep.mubr.f32.mxu0 %v1872
    %v1874 = vand.u32 %v1205, 4294901760
    %v1875 = vsub.f32 %v1205, %v1874
    %v1876 = vand.u32 %v1875, 4294901760
    %1877 = vmatmul.mubr.f32.gmra.mxu0 %v1876
    %v1878 = vpop.f32.mrf.mxu0
    %v1879 = vadd.f32 %v1771, %v1878
    %v1880 = vpop.f32.mrf.mxu0
    %1881 = vdwg.mxu0
    %1882 = vmatprep.subr.mxu0 0.0
    %v1883 = vand.u32 %v1259, 4294901760
    %v1884 = vsub.f32 %v1259, %v1883
    %v1885 = vand.u32 %v1884, 4294901760
    %1886 = vmatpush1.msra.mxu0 %v1885
    %1887 = vmatprep.subr.mxu0 0.0
    %v1888 = vand.u32 %v1258, 4294901760
    %v1889 = vsub.f32 %v1258, %v1888
    %v1890 = vand.u32 %v1889, 4294901760
    %1891 = vmatpush1.msra.mxu0 %v1890
    %1892 = vmatprep.subr.mxu0 0.0
    %v1893 = vand.u32 %v1257, 4294901760
    %v1894 = vsub.f32 %v1257, %v1893
    %v1895 = vand.u32 %v1894, 4294901760
    %1896 = vmatpush1.msra.mxu0 %v1895
    %1897 = vmatprep.subr.mxu0 0.0
    %v1898 = vand.u32 %v1256, 4294901760
    %v1899 = vsub.f32 %v1256, %v1898
    %v1900 = vand.u32 %v1899, 4294901760
    %1901 = vmatpush1.msra.mxu0 %v1900
    %1902 = vmatprep.subr.mxu0 0.0
    %v1903 = vand.u32 %v1255, 4294901760
    %v1904 = vsub.f32 %v1255, %v1903
    %v1905 = vand.u32 %v1904, 4294901760
    %1906 = vmatpush1.msra.mxu0 %v1905
    %1907 = vmatprep.subr.mxu0 0.0
    %v1908 = vand.u32 %v1254, 4294901760
    %v1909 = vsub.f32 %v1254, %v1908
    %v1910 = vand.u32 %v1909, 4294901760
    %1911 = vmatpush1.msra.mxu0 %v1910
    %1912 = vmatprep.subr.mxu0 0.0
    %v1913 = vand.u32 %v1253, 4294901760
    %v1914 = vsub.f32 %v1253, %v1913
    %v1915 = vand.u32 %v1914, 4294901760
    %1916 = vmatpush1.msra.mxu0 %v1915
    %1917 = vmatprep.subr.mxu0 0.0
    %v1918 = vand.u32 %v1252, 4294901760
    %v1919 = vsub.f32 %v1252, %v1918
    %v1920 = vand.u32 %v1919, 4294901760
    %1921 = vmatpush1.msra.mxu0 %v1920
    %1922 = vmatprep.subr.mxu0 0.0
    %v1923 = vand.u32 %v1251, 4294901760
    %v1924 = vsub.f32 %v1251, %v1923
    %v1925 = vand.u32 %v1924, 4294901760
    %1926 = vmatpush1.msra.mxu0 %v1925
    %1927 = vmatprep.subr.mxu0 0.0
    %v1928 = vand.u32 %v1250, 4294901760
    %v1929 = vsub.f32 %v1250, %v1928
    %v1930 = vand.u32 %v1929, 4294901760
    %1931 = vmatpush1.msra.mxu0 %v1930
    %1932 = vmatprep.subr.mxu0 0.0
    %v1933 = vand.u32 %v1249, 4294901760
    %v1934 = vsub.f32 %v1249, %v1933
    %v1935 = vand.u32 %v1934, 4294901760
    %1936 = vmatpush1.msra.mxu0 %v1935
    %1937 = vmatprep.subr.mxu0 0.0
    %v1938 = vand.u32 %v1248, 4294901760
    %v1939 = vsub.f32 %v1248, %v1938
    %v1940 = vand.u32 %v1939, 4294901760
    %1941 = vmatpush1.msra.mxu0 %v1940
    %1942 = vmatprep.subr.mxu0 0.0
    %v1943 = vand.u32 %v1247, 4294901760
    %v1944 = vsub.f32 %v1247, %v1943
    %v1945 = vand.u32 %v1944, 4294901760
    %1946 = vmatpush1.msra.mxu0 %v1945
    %1947 = vmatprep.subr.mxu0 0.0
    %v1948 = vand.u32 %v1246, 4294901760
    %v1949 = vsub.f32 %v1246, %v1948
    %v1950 = vand.u32 %v1949, 4294901760
    %1951 = vmatpush1.msra.mxu0 %v1950
    %1952 = vmatprep.subr.mxu0 0.0
    %v1953 = vand.u32 %v1245, 4294901760
    %v1954 = vsub.f32 %v1245, %v1953
    %v1955 = vand.u32 %v1954, 4294901760
    %1956 = vmatpush1.msra.mxu0 %v1955
    %1957 = vmatprep.subr.mxu0 0.0
    %v1958 = vand.u32 %v1244, 4294901760
    %v1959 = vsub.f32 %v1244, %v1958
    %v1960 = vand.u32 %v1959, 4294901760
    %1961 = vmatpush1.msra.mxu0 %v1960
    %1962 = vmatprep.subr.mxu0 0.0
    %v1963 = vand.u32 %v1275, 4294901760
    %v1964 = vsub.f32 %v1275, %v1963
    %v1965 = vand.u32 %v1964, 4294901760
    %1966 = vmatpush2.msra.mxu0 %v1965
    %1967 = vmatprep.subr.mxu0 0.0
    %v1968 = vand.u32 %v1274, 4294901760
    %v1969 = vsub.f32 %v1274, %v1968
    %v1970 = vand.u32 %v1969, 4294901760
    %1971 = vmatpush2.msra.mxu0 %v1970
    %1972 = vmatprep.subr.mxu0 0.0
    %v1973 = vand.u32 %v1273, 4294901760
    %v1974 = vsub.f32 %v1273, %v1973
    %v1975 = vand.u32 %v1974, 4294901760
    %1976 = vmatpush2.msra.mxu0 %v1975
    %1977 = vmatprep.subr.mxu0 0.0
    %v1978 = vand.u32 %v1272, 4294901760
    %v1979 = vsub.f32 %v1272, %v1978
    %v1980 = vand.u32 %v1979, 4294901760
    %1981 = vmatpush2.msra.mxu0 %v1980
    %1982 = vmatprep.subr.mxu0 0.0
    %v1983 = vand.u32 %v1271, 4294901760
    %v1984 = vsub.f32 %v1271, %v1983
    %v1985 = vand.u32 %v1984, 4294901760
    %1986 = vmatpush2.msra.mxu0 %v1985
    %1987 = vmatprep.subr.mxu0 0.0
    %v1988 = vand.u32 %v1270, 4294901760
    %v1989 = vsub.f32 %v1270, %v1988
    %v1990 = vand.u32 %v1989, 4294901760
    %1991 = vmatpush2.msra.mxu0 %v1990
    %1992 = vmatprep.subr.mxu0 0.0
    %v1993 = vand.u32 %v1269, 4294901760
    %v1994 = vsub.f32 %v1269, %v1993
    %v1995 = vand.u32 %v1994, 4294901760
    %1996 = vmatpush2.msra.mxu0 %v1995
    %1997 = vmatprep.subr.mxu0 0.0
    %v1998 = vand.u32 %v1268, 4294901760
    %v1999 = vsub.f32 %v1268, %v1998
    %v2000 = vand.u32 %v1999, 4294901760
    %2001 = vmatpush2.msra.mxu0 %v2000
    %2002 = vmatprep.subr.mxu0 0.0
    %v2003 = vand.u32 %v1267, 4294901760
    %v2004 = vsub.f32 %v1267, %v2003
    %v2005 = vand.u32 %v2004, 4294901760
    %2006 = vmatpush2.msra.mxu0 %v2005
    %2007 = vmatprep.subr.mxu0 0.0
    %v2008 = vand.u32 %v1266, 4294901760
    %v2009 = vsub.f32 %v1266, %v2008
    %v2010 = vand.u32 %v2009, 4294901760
    %2011 = vmatpush2.msra.mxu0 %v2010
    %2012 = vmatprep.subr.mxu0 0.0
    %v2013 = vand.u32 %v1265, 4294901760
    %v2014 = vsub.f32 %v1265, %v2013
    %v2015 = vand.u32 %v2014, 4294901760
    %2016 = vmatpush2.msra.mxu0 %v2015
    %2017 = vmatprep.subr.mxu0 0.0
    %v2018 = vand.u32 %v1264, 4294901760
    %v2019 = vsub.f32 %v1264, %v2018
    %v2020 = vand.u32 %v2019, 4294901760
    %2021 = vmatpush2.msra.mxu0 %v2020
    %2022 = vmatprep.subr.mxu0 0.0
    %v2023 = vand.u32 %v1263, 4294901760
    %v2024 = vsub.f32 %v1263, %v2023
    %v2025 = vand.u32 %v2024, 4294901760
    %2026 = vmatpush2.msra.mxu0 %v2025
    %2027 = vmatprep.subr.mxu0 0.0
    %v2028 = vand.u32 %v1262, 4294901760
    %v2029 = vsub.f32 %v1262, %v2028
    %v2030 = vand.u32 %v2029, 4294901760
    %2031 = vmatpush2.msra.mxu0 %v2030
    %2032 = vmatprep.subr.mxu0 0.0
    %v2033 = vand.u32 %v1261, 4294901760
    %v2034 = vsub.f32 %v1261, %v2033
    %v2035 = vand.u32 %v2034, 4294901760
    %2036 = vmatpush2.msra.mxu0 %v2035
    %2037 = vmatprep.subr.mxu0 0.0
    %v2038 = vand.u32 %v1260, 4294901760
    %v2039 = vsub.f32 %v1260, %v2038
    %v2040 = vand.u32 %v2039, 4294901760
    %2041 = vmatpush2.msra.mxu0 %v2040
    %v2042 = vand.u32 %v1212, 4294901760
    %2043 = vmatprep.mubr.f32.mxu0 %v2042
    %v2044 = vand.u32 %v1205, 4294901760
    %2045 = vmatmul.mubr.f32.gmra.mxu0 %v2044
    %v2046 = vpop.f32.mrf.mxu0
    %v2047 = vadd.f32 %v1879, %v2046
    %v2048 = vpop.f32.mrf.mxu0
    %2049 = vdwg.mxu0
    %2050 = vmatprep.subr.mxu0 0.0
    %v2051 = vand.u32 %v1259, 4294901760
    %2052 = vmatpush1.msra.mxu0 %v2051
    %2053 = vmatprep.subr.mxu0 0.0
    %v2054 = vand.u32 %v1258, 4294901760
    %2055 = vmatpush1.msra.mxu0 %v2054
    %2056 = vmatprep.subr.mxu0 0.0
    %v2057 = vand.u32 %v1257, 4294901760
    %2058 = vmatpush1.msra.mxu0 %v2057
    %2059 = vmatprep.subr.mxu0 0.0
    %v2060 = vand.u32 %v1256, 4294901760
    %2061 = vmatpush1.msra.mxu0 %v2060
    %2062 = vmatprep.subr.mxu0 0.0
    %v2063 = vand.u32 %v1255, 4294901760
    %2064 = vmatpush1.msra.mxu0 %v2063
    %2065 = vmatprep.subr.mxu0 0.0
    %v2066 = vand.u32 %v1254, 4294901760
    %2067 = vmatpush1.msra.mxu0 %v2066
    %2068 = vmatprep.subr.mxu0 0.0
    %v2069 = vand.u32 %v1253, 4294901760
    %2070 = vmatpush1.msra.mxu0 %v2069
    %2071 = vmatprep.subr.mxu0 0.0
    %v2072 = vand.u32 %v1252, 4294901760
    %2073 = vmatpush1.msra.mxu0 %v2072
    %2074 = vmatprep.subr.mxu0 0.0
    %v2075 = vand.u32 %v1251, 4294901760
    %2076 = vmatpush1.msra.mxu0 %v2075
    %2077 = vmatprep.subr.mxu0 0.0
    %v2078 = vand.u32 %v1250, 4294901760
    %2079 = vmatpush1.msra.mxu0 %v2078
    %2080 = vmatprep.subr.mxu0 0.0
    %v2081 = vand.u32 %v1249, 4294901760
    %2082 = vmatpush1.msra.mxu0 %v2081
    %2083 = vmatprep.subr.mxu0 0.0
    %v2084 = vand.u32 %v1248, 4294901760
    %2085 = vmatpush1.msra.mxu0 %v2084
    %2086 = vmatprep.subr.mxu0 0.0
    %v2087 = vand.u32 %v1247, 4294901760
    %2088 = vmatpush1.msra.mxu0 %v2087
    %2089 = vmatprep.subr.mxu0 0.0
    %v2090 = vand.u32 %v1246, 4294901760
    %2091 = vmatpush1.msra.mxu0 %v2090
    %2092 = vmatprep.subr.mxu0 0.0
    %v2093 = vand.u32 %v1245, 4294901760
    %2094 = vmatpush1.msra.mxu0 %v2093
    %2095 = vmatprep.subr.mxu0 0.0
    %v2096 = vand.u32 %v1244, 4294901760
    %2097 = vmatpush1.msra.mxu0 %v2096
    %2098 = vmatprep.subr.mxu0 0.0
    %v2099 = vand.u32 %v1275, 4294901760
    %2100 = vmatpush2.msra.mxu0 %v2099
    %2101 = vmatprep.subr.mxu0 0.0
    %v2102 = vand.u32 %v1274, 4294901760
    %2103 = vmatpush2.msra.mxu0 %v2102
    %2104 = vmatprep.subr.mxu0 0.0
    %v2105 = vand.u32 %v1273, 4294901760
    %2106 = vmatpush2.msra.mxu0 %v2105
    %2107 = vmatprep.subr.mxu0 0.0
    %v2108 = vand.u32 %v1272, 4294901760
    %2109 = vmatpush2.msra.mxu0 %v2108
    %2110 = vmatprep.subr.mxu0 0.0
    %v2111 = vand.u32 %v1271, 4294901760
    %2112 = vmatpush2.msra.mxu0 %v2111
    %2113 = vmatprep.subr.mxu0 0.0
    %v2114 = vand.u32 %v1270, 4294901760
    %2115 = vmatpush2.msra.mxu0 %v2114
    %2116 = vmatprep.subr.mxu0 0.0
    %v2117 = vand.u32 %v1269, 4294901760
    %2118 = vmatpush2.msra.mxu0 %v2117
    %2119 = vmatprep.subr.mxu0 0.0
    %v2120 = vand.u32 %v1268, 4294901760
    %2121 = vmatpush2.msra.mxu0 %v2120
    %2122 = vmatprep.subr.mxu0 0.0
    %v2123 = vand.u32 %v1267, 4294901760
    %2124 = vmatpush2.msra.mxu0 %v2123
    %2125 = vmatprep.subr.mxu0 0.0
    %v2126 = vand.u32 %v1266, 4294901760
    %2127 = vmatpush2.msra.mxu0 %v2126
    %2128 = vmatprep.subr.mxu0 0.0
    %v2129 = vand.u32 %v1265, 4294901760
    %2130 = vmatpush2.msra.mxu0 %v2129
    %2131 = vmatprep.subr.mxu0 0.0
    %v2132 = vand.u32 %v1264, 4294901760
    %2133 = vmatpush2.msra.mxu0 %v2132
    %2134 = vmatprep.subr.mxu0 0.0
    %v2135 = vand.u32 %v1263, 4294901760
    %2136 = vmatpush2.msra.mxu0 %v2135
    %2137 = vmatprep.subr.mxu0 0.0
    %v2138 = vand.u32 %v1262, 4294901760
    %2139 = vmatpush2.msra.mxu0 %v2138
    %2140 = vmatprep.subr.mxu0 0.0
    %v2141 = vand.u32 %v1261, 4294901760
    %2142 = vmatpush2.msra.mxu0 %v2141
    %2143 = vmatprep.subr.mxu0 0.0
    %v2144 = vand.u32 %v1260, 4294901760
    %2145 = vmatpush2.msra.mxu0 %v2144
    %v2146 = vand.u32 %v1212, 4294901760
    %2147 = vmatprep.mubr.f32.mxu0 %v2146
    %v2148 = vand.u32 %v1205, 4294901760
    %2149 = vmatmul.mubr.f32.gmra.mxu0 %v2148
    %v2150 = vpop.f32.mrf.mxu0
    %v2151 = vadd.f32 %v2047, %v2150
    %v2152 = vpop.f32.mrf.mxu0
    %2153 = vdwg.mxu0
    %2154 = vmatprep.subr.mxu0 0.0
    %v2155 = vand.u32 %v1291, 4294901760
    %2156 = vmatpush1.msra.mxu0 %v2155
    %2157 = vmatprep.subr.mxu0 0.0
    %v2158 = vand.u32 %v1290, 4294901760
    %2159 = vmatpush1.msra.mxu0 %v2158
    %2160 = vmatprep.subr.mxu0 0.0
    %v2161 = vand.u32 %v1289, 4294901760
    %2162 = vmatpush1.msra.mxu0 %v2161
    %2163 = vmatprep.subr.mxu0 0.0
    %v2164 = vand.u32 %v1288, 4294901760
    %2165 = vmatpush1.msra.mxu0 %v2164
    %2166 = vmatprep.subr.mxu0 0.0
    %v2167 = vand.u32 %v1287, 4294901760
    %2168 = vmatpush1.msra.mxu0 %v2167
    %2169 = vmatprep.subr.mxu0 0.0
    %v2170 = vand.u32 %v1286, 4294901760
    %2171 = vmatpush1.msra.mxu0 %v2170
    %2172 = vmatprep.subr.mxu0 0.0
    %v2173 = vand.u32 %v1285, 4294901760
    %2174 = vmatpush1.msra.mxu0 %v2173
    %2175 = vmatprep.subr.mxu0 0.0
    %v2176 = vand.u32 %v1284, 4294901760
    %2177 = vmatpush1.msra.mxu0 %v2176
    %2178 = vmatprep.subr.mxu0 0.0
    %v2179 = vand.u32 %v1283, 4294901760
    %2180 = vmatpush1.msra.mxu0 %v2179
    %2181 = vmatprep.subr.mxu0 0.0
    %v2182 = vand.u32 %v1282, 4294901760
    %2183 = vmatpush1.msra.mxu0 %v2182
    %2184 = vmatprep.subr.mxu0 0.0
    %v2185 = vand.u32 %v1281, 4294901760
    %2186 = vmatpush1.msra.mxu0 %v2185
    %2187 = vmatprep.subr.mxu0 0.0
    %v2188 = vand.u32 %v1280, 4294901760
    %2189 = vmatpush1.msra.mxu0 %v2188
    %2190 = vmatprep.subr.mxu0 0.0
    %v2191 = vand.u32 %v1279, 4294901760
    %2192 = vmatpush1.msra.mxu0 %v2191
    %2193 = vmatprep.subr.mxu0 0.0
    %v2194 = vand.u32 %v1278, 4294901760
    %2195 = vmatpush1.msra.mxu0 %v2194
    %2196 = vmatprep.subr.mxu0 0.0
    %v2197 = vand.u32 %v1277, 4294901760
    %2198 = vmatpush1.msra.mxu0 %v2197
    %2199 = vmatprep.subr.mxu0 0.0
    %v2200 = vand.u32 %v1276, 4294901760
    %2201 = vmatpush1.msra.mxu0 %v2200
    %2202 = vmatprep.subr.mxu0 0.0
    %2203 = vmatpush2.msra.mxu0 0.0
    %2204 = vmatprep.subr.mxu0 0.0
    %2205 = vmatpush2.msra.mxu0 0.0
    %2206 = vmatprep.subr.mxu0 0.0
    %2207 = vmatpush2.msra.mxu0 0.0
    %2208 = vmatprep.subr.mxu0 0.0
    %2209 = vmatpush2.msra.mxu0 0.0
    %2210 = vmatprep.subr.mxu0 0.0
    %2211 = vmatpush2.msra.mxu0 0.0
    %2212 = vmatprep.subr.mxu0 0.0
    %2213 = vmatpush2.msra.mxu0 0.0
    %2214 = vmatprep.subr.mxu0 0.0
    %2215 = vmatpush2.msra.mxu0 0.0
    %2216 = vmatprep.subr.mxu0 0.0
    %2217 = vmatpush2.msra.mxu0 0.0
    %2218 = vmatprep.subr.mxu0 0.0
    %2219 = vmatpush2.msra.mxu0 0.0
    %2220 = vmatprep.subr.mxu0 0.0
    %2221 = vmatpush2.msra.mxu0 0.0
    %2222 = vmatprep.subr.mxu0 0.0
    %2223 = vmatpush2.msra.mxu0 0.0
    %2224 = vmatprep.subr.mxu0 0.0
    %2225 = vmatpush2.msra.mxu0 0.0
    %2226 = vmatprep.subr.mxu0 0.0
    %2227 = vmatpush2.msra.mxu0 0.0
    %2228 = vmatprep.subr.mxu0 0.0
    %2229 = vmatpush2.msra.mxu0 0.0
    %2230 = vmatprep.subr.mxu0 0.0
    %2231 = vmatpush2.msra.mxu0 0.0
    %2232 = vmatprep.subr.mxu0 0.0
    %2233 = vmatpush2.msra.mxu0 0.0
    %2234 = vmatprep.mubr.f32.mxu0 0.0
    %v2235 = vand.u32 %v1219, 4294901760
    %v2236 = vsub.f32 %v1219, %v2235
    %v2237 = vand.u32 %v2236, 4294901760
    %v2238 = vsub.f32 %v2236, %v2237
    %v2239 = vand.u32 %v2238, 4294901760
    %2240 = vmatmul.mubr.f32.gmra.mxu0 %v2239
    %v2241 = vpop.f32.mrf.mxu0
    %v2242 = vadd.f32 %v2151, %v2241
    %v2243 = vpop.f32.mrf.mxu0
    %2244 = vdwg.mxu0
    %2245 = vmatprep.subr.mxu0 0.0
    %v2246 = vand.u32 %v1291, 4294901760
    %v2247 = vsub.f32 %v1291, %v2246
    %v2248 = vand.u32 %v2247, 4294901760
    %v2249 = vsub.f32 %v2247, %v2248
    %v2250 = vand.u32 %v2249, 4294901760
    %2251 = vmatpush1.msra.mxu0 %v2250
    %2252 = vmatprep.subr.mxu0 0.0
    %v2253 = vand.u32 %v1290, 4294901760
    %v2254 = vsub.f32 %v1290, %v2253
    %v2255 = vand.u32 %v2254, 4294901760
    %v2256 = vsub.f32 %v2254, %v2255
    %v2257 = vand.u32 %v2256, 4294901760
    %2258 = vmatpush1.msra.mxu0 %v2257
    %2259 = vmatprep.subr.mxu0 0.0
    %v2260 = vand.u32 %v1289, 4294901760
    %v2261 = vsub.f32 %v1289, %v2260
    %v2262 = vand.u32 %v2261, 4294901760
    %v2263 = vsub.f32 %v2261, %v2262
    %v2264 = vand.u32 %v2263, 4294901760
    %2265 = vmatpush1.msra.mxu0 %v2264
    %2266 = vmatprep.subr.mxu0 0.0
    %v2267 = vand.u32 %v1288, 4294901760
    %v2268 = vsub.f32 %v1288, %v2267
    %v2269 = vand.u32 %v2268, 4294901760
    %v2270 = vsub.f32 %v2268, %v2269
    %v2271 = vand.u32 %v2270, 4294901760
    %2272 = vmatpush1.msra.mxu0 %v2271
    %2273 = vmatprep.subr.mxu0 0.0
    %v2274 = vand.u32 %v1287, 4294901760
    %v2275 = vsub.f32 %v1287, %v2274
    %v2276 = vand.u32 %v2275, 4294901760
    %v2277 = vsub.f32 %v2275, %v2276
    %v2278 = vand.u32 %v2277, 4294901760
    %2279 = vmatpush1.msra.mxu0 %v2278
    %2280 = vmatprep.subr.mxu0 0.0
    %v2281 = vand.u32 %v1286, 4294901760
    %v2282 = vsub.f32 %v1286, %v2281
    %v2283 = vand.u32 %v2282, 4294901760
    %v2284 = vsub.f32 %v2282, %v2283
    %v2285 = vand.u32 %v2284, 4294901760
    %2286 = vmatpush1.msra.mxu0 %v2285
    %2287 = vmatprep.subr.mxu0 0.0
    %v2288 = vand.u32 %v1285, 4294901760
    %v2289 = vsub.f32 %v1285, %v2288
    %v2290 = vand.u32 %v2289, 4294901760
    %v2291 = vsub.f32 %v2289, %v2290
    %v2292 = vand.u32 %v2291, 4294901760
    %2293 = vmatpush1.msra.mxu0 %v2292
    %2294 = vmatprep.subr.mxu0 0.0
    %v2295 = vand.u32 %v1284, 4294901760
    %v2296 = vsub.f32 %v1284, %v2295
    %v2297 = vand.u32 %v2296, 4294901760
    %v2298 = vsub.f32 %v2296, %v2297
    %v2299 = vand.u32 %v2298, 4294901760
    %2300 = vmatpush1.msra.mxu0 %v2299
    %2301 = vmatprep.subr.mxu0 0.0
    %v2302 = vand.u32 %v1283, 4294901760
    %v2303 = vsub.f32 %v1283, %v2302
    %v2304 = vand.u32 %v2303, 4294901760
    %v2305 = vsub.f32 %v2303, %v2304
    %v2306 = vand.u32 %v2305, 4294901760
    %2307 = vmatpush1.msra.mxu0 %v2306
    %2308 = vmatprep.subr.mxu0 0.0
    %v2309 = vand.u32 %v1282, 4294901760
    %v2310 = vsub.f32 %v1282, %v2309
    %v2311 = vand.u32 %v2310, 4294901760
    %v2312 = vsub.f32 %v2310, %v2311
    %v2313 = vand.u32 %v2312, 4294901760
    %2314 = vmatpush1.msra.mxu0 %v2313
    %2315 = vmatprep.subr.mxu0 0.0
    %v2316 = vand.u32 %v1281, 4294901760
    %v2317 = vsub.f32 %v1281, %v2316
    %v2318 = vand.u32 %v2317, 4294901760
    %v2319 = vsub.f32 %v2317, %v2318
    %v2320 = vand.u32 %v2319, 4294901760
    %2321 = vmatpush1.msra.mxu0 %v2320
    %2322 = vmatprep.subr.mxu0 0.0
    %v2323 = vand.u32 %v1280, 4294901760
    %v2324 = vsub.f32 %v1280, %v2323
    %v2325 = vand.u32 %v2324, 4294901760
    %v2326 = vsub.f32 %v2324, %v2325
    %v2327 = vand.u32 %v2326, 4294901760
    %2328 = vmatpush1.msra.mxu0 %v2327
    %2329 = vmatprep.subr.mxu0 0.0
    %v2330 = vand.u32 %v1279, 4294901760
    %v2331 = vsub.f32 %v1279, %v2330
    %v2332 = vand.u32 %v2331, 4294901760
    %v2333 = vsub.f32 %v2331, %v2332
    %v2334 = vand.u32 %v2333, 4294901760
    %2335 = vmatpush1.msra.mxu0 %v2334
    %2336 = vmatprep.subr.mxu0 0.0
    %v2337 = vand.u32 %v1278, 4294901760
    %v2338 = vsub.f32 %v1278, %v2337
    %v2339 = vand.u32 %v2338, 4294901760
    %v2340 = vsub.f32 %v2338, %v2339
    %v2341 = vand.u32 %v2340, 4294901760
    %2342 = vmatpush1.msra.mxu0 %v2341
    %2343 = vmatprep.subr.mxu0 0.0
    %v2344 = vand.u32 %v1277, 4294901760
    %v2345 = vsub.f32 %v1277, %v2344
    %v2346 = vand.u32 %v2345, 4294901760
    %v2347 = vsub.f32 %v2345, %v2346
    %v2348 = vand.u32 %v2347, 4294901760
    %2349 = vmatpush1.msra.mxu0 %v2348
    %2350 = vmatprep.subr.mxu0 0.0
    %v2351 = vand.u32 %v1276, 4294901760
    %v2352 = vsub.f32 %v1276, %v2351
    %v2353 = vand.u32 %v2352, 4294901760
    %v2354 = vsub.f32 %v2352, %v2353
    %v2355 = vand.u32 %v2354, 4294901760
    %2356 = vmatpush1.msra.mxu0 %v2355
    %2357 = vmatprep.subr.mxu0 0.0
    %2358 = vmatpush2.msra.mxu0 0.0
    %2359 = vmatprep.subr.mxu0 0.0
    %2360 = vmatpush2.msra.mxu0 0.0
    %2361 = vmatprep.subr.mxu0 0.0
    %2362 = vmatpush2.msra.mxu0 0.0
    %2363 = vmatprep.subr.mxu0 0.0
    %2364 = vmatpush2.msra.mxu0 0.0
    %2365 = vmatprep.subr.mxu0 0.0
    %2366 = vmatpush2.msra.mxu0 0.0
    %2367 = vmatprep.subr.mxu0 0.0
    %2368 = vmatpush2.msra.mxu0 0.0
    %2369 = vmatprep.subr.mxu0 0.0
    %2370 = vmatpush2.msra.mxu0 0.0
    %2371 = vmatprep.subr.mxu0 0.0
    %2372 = vmatpush2.msra.mxu0 0.0
    %2373 = vmatprep.subr.mxu0 0.0
    %2374 = vmatpush2.msra.mxu0 0.0
    %2375 = vmatprep.subr.mxu0 0.0
    %2376 = vmatpush2.msra.mxu0 0.0
    %2377 = vmatprep.subr.mxu0 0.0
    %2378 = vmatpush2.msra.mxu0 0.0
    %2379 = vmatprep.subr.mxu0 0.0
    %2380 = vmatpush2.msra.mxu0 0.0
    %2381 = vmatprep.subr.mxu0 0.0
    %2382 = vmatpush2.msra.mxu0 0.0
    %2383 = vmatprep.subr.mxu0 0.0
    %2384 = vmatpush2.msra.mxu0 0.0
    %2385 = vmatprep.subr.mxu0 0.0
    %2386 = vmatpush2.msra.mxu0 0.0
    %2387 = vmatprep.subr.mxu0 0.0
    %2388 = vmatpush2.msra.mxu0 0.0
    %2389 = vmatprep.mubr.f32.mxu0 0.0
    %v2390 = vand.u32 %v1219, 4294901760
    %2391 = vmatmul.mubr.f32.gmra.mxu0 %v2390
    %v2392 = vpop.f32.mrf.mxu0
    %v2393 = vadd.f32 %v2242, %v2392
    %v2394 = vpop.f32.mrf.mxu0
    %2395 = vdwg.mxu0
    %2396 = vmatprep.subr.mxu0 0.0
    %v2397 = vand.u32 %v1291, 4294901760
    %v2398 = vsub.f32 %v1291, %v2397
    %2399 = vmatpush1.msra.mxu0 %v2398
    %2400 = vmatprep.subr.mxu0 0.0
    %v2401 = vand.u32 %v1290, 4294901760
    %v2402 = vsub.f32 %v1290, %v2401
    %2403 = vmatpush1.msra.mxu0 %v2402
    %2404 = vmatprep.subr.mxu0 0.0
    %v2405 = vand.u32 %v1289, 4294901760
    %v2406 = vsub.f32 %v1289, %v2405
    %2407 = vmatpush1.msra.mxu0 %v2406
    %2408 = vmatprep.subr.mxu0 0.0
    %v2409 = vand.u32 %v1288, 4294901760
    %v2410 = vsub.f32 %v1288, %v2409
    %2411 = vmatpush1.msra.mxu0 %v2410
    %2412 = vmatprep.subr.mxu0 0.0
    %v2413 = vand.u32 %v1287, 4294901760
    %v2414 = vsub.f32 %v1287, %v2413
    %2415 = vmatpush1.msra.mxu0 %v2414
    %2416 = vmatprep.subr.mxu0 0.0
    %v2417 = vand.u32 %v1286, 4294901760
    %v2418 = vsub.f32 %v1286, %v2417
    %2419 = vmatpush1.msra.mxu0 %v2418
    %2420 = vmatprep.subr.mxu0 0.0
    %v2421 = vand.u32 %v1285, 4294901760
    %v2422 = vsub.f32 %v1285, %v2421
    %2423 = vmatpush1.msra.mxu0 %v2422
    %2424 = vmatprep.subr.mxu0 0.0
    %v2425 = vand.u32 %v1284, 4294901760
    %v2426 = vsub.f32 %v1284, %v2425
    %2427 = vmatpush1.msra.mxu0 %v2426
    %2428 = vmatprep.subr.mxu0 0.0
    %v2429 = vand.u32 %v1283, 4294901760
    %v2430 = vsub.f32 %v1283, %v2429
    %2431 = vmatpush1.msra.mxu0 %v2430
    %2432 = vmatprep.subr.mxu0 0.0
    %v2433 = vand.u32 %v1282, 4294901760
    %v2434 = vsub.f32 %v1282, %v2433
    %2435 = vmatpush1.msra.mxu0 %v2434
    %2436 = vmatprep.subr.mxu0 0.0
    %v2437 = vand.u32 %v1281, 4294901760
    %v2438 = vsub.f32 %v1281, %v2437
    %2439 = vmatpush1.msra.mxu0 %v2438
    %2440 = vmatprep.subr.mxu0 0.0
    %v2441 = vand.u32 %v1280, 4294901760
    %v2442 = vsub.f32 %v1280, %v2441
    %2443 = vmatpush1.msra.mxu0 %v2442
    %2444 = vmatprep.subr.mxu0 0.0
    %v2445 = vand.u32 %v1279, 4294901760
    %v2446 = vsub.f32 %v1279, %v2445
    %2447 = vmatpush1.msra.mxu0 %v2446
    %2448 = vmatprep.subr.mxu0 0.0
    %v2449 = vand.u32 %v1278, 4294901760
    %v2450 = vsub.f32 %v1278, %v2449
    %2451 = vmatpush1.msra.mxu0 %v2450
    %2452 = vmatprep.subr.mxu0 0.0
    %v2453 = vand.u32 %v1277, 4294901760
    %v2454 = vsub.f32 %v1277, %v2453
    %2455 = vmatpush1.msra.mxu0 %v2454
    %2456 = vmatprep.subr.mxu0 0.0
    %v2457 = vand.u32 %v1276, 4294901760
    %v2458 = vsub.f32 %v1276, %v2457
    %2459 = vmatpush1.msra.mxu0 %v2458
    %2460 = vmatprep.subr.mxu0 0.0
    %2461 = vmatpush2.msra.mxu0 0.0
    %2462 = vmatprep.subr.mxu0 0.0
    %2463 = vmatpush2.msra.mxu0 0.0
    %2464 = vmatprep.subr.mxu0 0.0
    %2465 = vmatpush2.msra.mxu0 0.0
    %2466 = vmatprep.subr.mxu0 0.0
    %2467 = vmatpush2.msra.mxu0 0.0
    %2468 = vmatprep.subr.mxu0 0.0
    %2469 = vmatpush2.msra.mxu0 0.0
    %2470 = vmatprep.subr.mxu0 0.0
    %2471 = vmatpush2.msra.mxu0 0.0
    %2472 = vmatprep.subr.mxu0 0.0
    %2473 = vmatpush2.msra.mxu0 0.0
    %2474 = vmatprep.subr.mxu0 0.0
    %2475 = vmatpush2.msra.mxu0 0.0
    %2476 = vmatprep.subr.mxu0 0.0
    %2477 = vmatpush2.msra.mxu0 0.0
    %2478 = vmatprep.subr.mxu0 0.0
    %2479 = vmatpush2.msra.mxu0 0.0
    %2480 = vmatprep.subr.mxu0 0.0
    %2481 = vmatpush2.msra.mxu0 0.0
    %2482 = vmatprep.subr.mxu0 0.0
    %2483 = vmatpush2.msra.mxu0 0.0
    %2484 = vmatprep.subr.mxu0 0.0
    %2485 = vmatpush2.msra.mxu0 0.0
    %2486 = vmatprep.subr.mxu0 0.0
    %2487 = vmatpush2.msra.mxu0 0.0
    %2488 = vmatprep.subr.mxu0 0.0
    %2489 = vmatpush2.msra.mxu0 0.0
    %2490 = vmatprep.subr.mxu0 0.0
    %2491 = vmatpush2.msra.mxu0 0.0
    %2492 = vmatprep.mubr.f32.mxu0 0.0
    %v2493 = vand.u32 %v1219, 4294901760
    %v2494 = vsub.f32 %v1219, %v2493
    %2495 = vmatmul.mubr.f32.gmra.mxu0 %v2494
    %v2496 = vpop.f32.mrf.mxu0
    %v2497 = vadd.f32 %v2393, %v2496
    %v2498 = vpop.f32.mrf.mxu0
    %2499 = vdwg.mxu0
    %2500 = vmatprep.subr.mxu0 0.0
    %v2501 = vand.u32 %v1291, 4294901760
    %2502 = vmatpush1.msra.mxu0 %v2501
    %2503 = vmatprep.subr.mxu0 0.0
    %v2504 = vand.u32 %v1290, 4294901760
    %2505 = vmatpush1.msra.mxu0 %v2504
    %2506 = vmatprep.subr.mxu0 0.0
    %v2507 = vand.u32 %v1289, 4294901760
    %2508 = vmatpush1.msra.mxu0 %v2507
    %2509 = vmatprep.subr.mxu0 0.0
    %v2510 = vand.u32 %v1288, 4294901760
    %2511 = vmatpush1.msra.mxu0 %v2510
    %2512 = vmatprep.subr.mxu0 0.0
    %v2513 = vand.u32 %v1287, 4294901760
    %2514 = vmatpush1.msra.mxu0 %v2513
    %2515 = vmatprep.subr.mxu0 0.0
    %v2516 = vand.u32 %v1286, 4294901760
    %2517 = vmatpush1.msra.mxu0 %v2516
    %2518 = vmatprep.subr.mxu0 0.0
    %v2519 = vand.u32 %v1285, 4294901760
    %2520 = vmatpush1.msra.mxu0 %v2519
    %2521 = vmatprep.subr.mxu0 0.0
    %v2522 = vand.u32 %v1284, 4294901760
    %2523 = vmatpush1.msra.mxu0 %v2522
    %2524 = vmatprep.subr.mxu0 0.0
    %v2525 = vand.u32 %v1283, 4294901760
    %2526 = vmatpush1.msra.mxu0 %v2525
    %2527 = vmatprep.subr.mxu0 0.0
    %v2528 = vand.u32 %v1282, 4294901760
    %2529 = vmatpush1.msra.mxu0 %v2528
    %2530 = vmatprep.subr.mxu0 0.0
    %v2531 = vand.u32 %v1281, 4294901760
    %2532 = vmatpush1.msra.mxu0 %v2531
    %2533 = vmatprep.subr.mxu0 0.0
    %v2534 = vand.u32 %v1280, 4294901760
    %2535 = vmatpush1.msra.mxu0 %v2534
    %2536 = vmatprep.subr.mxu0 0.0
    %v2537 = vand.u32 %v1279, 4294901760
    %2538 = vmatpush1.msra.mxu0 %v2537
    %2539 = vmatprep.subr.mxu0 0.0
    %v2540 = vand.u32 %v1278, 4294901760
    %2541 = vmatpush1.msra.mxu0 %v2540
    %2542 = vmatprep.subr.mxu0 0.0
    %v2543 = vand.u32 %v1277, 4294901760
    %2544 = vmatpush1.msra.mxu0 %v2543
    %2545 = vmatprep.subr.mxu0 0.0
    %v2546 = vand.u32 %v1276, 4294901760
    %2547 = vmatpush1.msra.mxu0 %v2546
    %2548 = vmatprep.subr.mxu0 0.0
    %2549 = vmatpush2.msra.mxu0 0.0
    %2550 = vmatprep.subr.mxu0 0.0
    %2551 = vmatpush2.msra.mxu0 0.0
    %2552 = vmatprep.subr.mxu0 0.0
    %2553 = vmatpush2.msra.mxu0 0.0
    %2554 = vmatprep.subr.mxu0 0.0
    %2555 = vmatpush2.msra.mxu0 0.0
    %2556 = vmatprep.subr.mxu0 0.0
    %2557 = vmatpush2.msra.mxu0 0.0
    %2558 = vmatprep.subr.mxu0 0.0
    %2559 = vmatpush2.msra.mxu0 0.0
    %2560 = vmatprep.subr.mxu0 0.0
    %2561 = vmatpush2.msra.mxu0 0.0
    %2562 = vmatprep.subr.mxu0 0.0
    %2563 = vmatpush2.msra.mxu0 0.0
    %2564 = vmatprep.subr.mxu0 0.0
    %2565 = vmatpush2.msra.mxu0 0.0
    %2566 = vmatprep.subr.mxu0 0.0
    %2567 = vmatpush2.msra.mxu0 0.0
    %2568 = vmatprep.subr.mxu0 0.0
    %2569 = vmatpush2.msra.mxu0 0.0
    %2570 = vmatprep.subr.mxu0 0.0
    %2571 = vmatpush2.msra.mxu0 0.0
    %2572 = vmatprep.subr.mxu0 0.0
    %2573 = vmatpush2.msra.mxu0 0.0
    %2574 = vmatprep.subr.mxu0 0.0
    %2575 = vmatpush2.msra.mxu0 0.0
    %2576 = vmatprep.subr.mxu0 0.0
    %2577 = vmatpush2.msra.mxu0 0.0
    %2578 = vmatprep.subr.mxu0 0.0
    %2579 = vmatpush2.msra.mxu0 0.0
    %2580 = vmatprep.mubr.f32.mxu0 0.0
    %v2581 = vand.u32 %v1219, 4294901760
    %v2582 = vsub.f32 %v1219, %v2581
    %v2583 = vand.u32 %v2582, 4294901760
    %2584 = vmatmul.mubr.f32.gmra.mxu0 %v2583
    %v2585 = vpop.f32.mrf.mxu0
    %v2586 = vadd.f32 %v2497, %v2585
    %v2587 = vpop.f32.mrf.mxu0
    %2588 = vdwg.mxu0
    %2589 = vmatprep.subr.mxu0 0.0
    %v2590 = vand.u32 %v1291, 4294901760
    %v2591 = vsub.f32 %v1291, %v2590
    %v2592 = vand.u32 %v2591, 4294901760
    %2593 = vmatpush1.msra.mxu0 %v2592
    %2594 = vmatprep.subr.mxu0 0.0
    %v2595 = vand.u32 %v1290, 4294901760
    %v2596 = vsub.f32 %v1290, %v2595
    %v2597 = vand.u32 %v2596, 4294901760
    %2598 = vmatpush1.msra.mxu0 %v2597
    %2599 = vmatprep.subr.mxu0 0.0
    %v2600 = vand.u32 %v1289, 4294901760
    %v2601 = vsub.f32 %v1289, %v2600
    %v2602 = vand.u32 %v2601, 4294901760
    %2603 = vmatpush1.msra.mxu0 %v2602
    %2604 = vmatprep.subr.mxu0 0.0
    %v2605 = vand.u32 %v1288, 4294901760
    %v2606 = vsub.f32 %v1288, %v2605
    %v2607 = vand.u32 %v2606, 4294901760
    %2608 = vmatpush1.msra.mxu0 %v2607
    %2609 = vmatprep.subr.mxu0 0.0
    %v2610 = vand.u32 %v1287, 4294901760
    %v2611 = vsub.f32 %v1287, %v2610
    %v2612 = vand.u32 %v2611, 4294901760
    %2613 = vmatpush1.msra.mxu0 %v2612
    %2614 = vmatprep.subr.mxu0 0.0
    %v2615 = vand.u32 %v1286, 4294901760
    %v2616 = vsub.f32 %v1286, %v2615
    %v2617 = vand.u32 %v2616, 4294901760
    %2618 = vmatpush1.msra.mxu0 %v2617
    %2619 = vmatprep.subr.mxu0 0.0
    %v2620 = vand.u32 %v1285, 4294901760
    %v2621 = vsub.f32 %v1285, %v2620
    %v2622 = vand.u32 %v2621, 4294901760
    %2623 = vmatpush1.msra.mxu0 %v2622
    %2624 = vmatprep.subr.mxu0 0.0
    %v2625 = vand.u32 %v1284, 4294901760
    %v2626 = vsub.f32 %v1284, %v2625
    %v2627 = vand.u32 %v2626, 4294901760
    %2628 = vmatpush1.msra.mxu0 %v2627
    %2629 = vmatprep.subr.mxu0 0.0
    %v2630 = vand.u32 %v1283, 4294901760
    %v2631 = vsub.f32 %v1283, %v2630
    %v2632 = vand.u32 %v2631, 4294901760
    %2633 = vmatpush1.msra.mxu0 %v2632
    %2634 = vmatprep.subr.mxu0 0.0
    %v2635 = vand.u32 %v1282, 4294901760
    %v2636 = vsub.f32 %v1282, %v2635
    %v2637 = vand.u32 %v2636, 4294901760
    %2638 = vmatpush1.msra.mxu0 %v2637
    %2639 = vmatprep.subr.mxu0 0.0
    %v2640 = vand.u32 %v1281, 4294901760
    %v2641 = vsub.f32 %v1281, %v2640
    %v2642 = vand.u32 %v2641, 4294901760
    %2643 = vmatpush1.msra.mxu0 %v2642
    %2644 = vmatprep.subr.mxu0 0.0
    %v2645 = vand.u32 %v1280, 4294901760
    %v2646 = vsub.f32 %v1280, %v2645
    %v2647 = vand.u32 %v2646, 4294901760
    %2648 = vmatpush1.msra.mxu0 %v2647
    %2649 = vmatprep.subr.mxu0 0.0
    %v2650 = vand.u32 %v1279, 4294901760
    %v2651 = vsub.f32 %v1279, %v2650
    %v2652 = vand.u32 %v2651, 4294901760
    %2653 = vmatpush1.msra.mxu0 %v2652
    %2654 = vmatprep.subr.mxu0 0.0
    %v2655 = vand.u32 %v1278, 4294901760
    %v2656 = vsub.f32 %v1278, %v2655
    %v2657 = vand.u32 %v2656, 4294901760
    %2658 = vmatpush1.msra.mxu0 %v2657
    %2659 = vmatprep.subr.mxu0 0.0
    %v2660 = vand.u32 %v1277, 4294901760
    %v2661 = vsub.f32 %v1277, %v2660
    %v2662 = vand.u32 %v2661, 4294901760
    %2663 = vmatpush1.msra.mxu0 %v2662
    %2664 = vmatprep.subr.mxu0 0.0
    %v2665 = vand.u32 %v1276, 4294901760
    %v2666 = vsub.f32 %v1276, %v2665
    %v2667 = vand.u32 %v2666, 4294901760
    %2668 = vmatpush1.msra.mxu0 %v2667
    %2669 = vmatprep.subr.mxu0 0.0
    %2670 = vmatpush2.msra.mxu0 0.0
    %2671 = vmatprep.subr.mxu0 0.0
    %2672 = vmatpush2.msra.mxu0 0.0
    %2673 = vmatprep.subr.mxu0 0.0
    %2674 = vmatpush2.msra.mxu0 0.0
    %2675 = vmatprep.subr.mxu0 0.0
    %2676 = vmatpush2.msra.mxu0 0.0
    %2677 = vmatprep.subr.mxu0 0.0
    %2678 = vmatpush2.msra.mxu0 0.0
    %2679 = vmatprep.subr.mxu0 0.0
    %2680 = vmatpush2.msra.mxu0 0.0
    %2681 = vmatprep.subr.mxu0 0.0
    %2682 = vmatpush2.msra.mxu0 0.0
    %2683 = vmatprep.subr.mxu0 0.0
    %2684 = vmatpush2.msra.mxu0 0.0
    %2685 = vmatprep.subr.mxu0 0.0
    %2686 = vmatpush2.msra.mxu0 0.0
    %2687 = vmatprep.subr.mxu0 0.0
    %2688 = vmatpush2.msra.mxu0 0.0
    %2689 = vmatprep.subr.mxu0 0.0
    %2690 = vmatpush2.msra.mxu0 0.0
    %2691 = vmatprep.subr.mxu0 0.0
    %2692 = vmatpush2.msra.mxu0 0.0
    %2693 = vmatprep.subr.mxu0 0.0
    %2694 = vmatpush2.msra.mxu0 0.0
    %2695 = vmatprep.subr.mxu0 0.0
    %2696 = vmatpush2.msra.mxu0 0.0
    %2697 = vmatprep.subr.mxu0 0.0
    %2698 = vmatpush2.msra.mxu0 0.0
    %2699 = vmatprep.subr.mxu0 0.0
    %2700 = vmatpush2.msra.mxu0 0.0
    %2701 = vmatprep.mubr.f32.mxu0 0.0
    %v2702 = vand.u32 %v1219, 4294901760
    %2703 = vmatmul.mubr.f32.gmra.mxu0 %v2702
    %v2704 = vpop.f32.mrf.mxu0
    %v2705 = vadd.f32 %v2586, %v2704
    %v2706 = vpop.f32.mrf.mxu0
    %2707 = vdwg.mxu0
    %2708 = vmatprep.subr.mxu0 0.0
    %v2709 = vand.u32 %v1291, 4294901760
    %2710 = vmatpush1.msra.mxu0 %v2709
    %2711 = vmatprep.subr.mxu0 0.0
    %v2712 = vand.u32 %v1290, 4294901760
    %2713 = vmatpush1.msra.mxu0 %v2712
    %2714 = vmatprep.subr.mxu0 0.0
    %v2715 = vand.u32 %v1289, 4294901760
    %2716 = vmatpush1.msra.mxu0 %v2715
    %2717 = vmatprep.subr.mxu0 0.0
    %v2718 = vand.u32 %v1288, 4294901760
    %2719 = vmatpush1.msra.mxu0 %v2718
    %2720 = vmatprep.subr.mxu0 0.0
    %v2721 = vand.u32 %v1287, 4294901760
    %2722 = vmatpush1.msra.mxu0 %v2721
    %2723 = vmatprep.subr.mxu0 0.0
    %v2724 = vand.u32 %v1286, 4294901760
    %2725 = vmatpush1.msra.mxu0 %v2724
    %2726 = vmatprep.subr.mxu0 0.0
    %v2727 = vand.u32 %v1285, 4294901760
    %2728 = vmatpush1.msra.mxu0 %v2727
    %2729 = vmatprep.subr.mxu0 0.0
    %v2730 = vand.u32 %v1284, 4294901760
    %2731 = vmatpush1.msra.mxu0 %v2730
    %2732 = vmatprep.subr.mxu0 0.0
    %v2733 = vand.u32 %v1283, 4294901760
    %2734 = vmatpush1.msra.mxu0 %v2733
    %2735 = vmatprep.subr.mxu0 0.0
    %v2736 = vand.u32 %v1282, 4294901760
    %2737 = vmatpush1.msra.mxu0 %v2736
    %2738 = vmatprep.subr.mxu0 0.0
    %v2739 = vand.u32 %v1281, 4294901760
    %2740 = vmatpush1.msra.mxu0 %v2739
    %2741 = vmatprep.subr.mxu0 0.0
    %v2742 = vand.u32 %v1280, 4294901760
    %2743 = vmatpush1.msra.mxu0 %v2742
    %2744 = vmatprep.subr.mxu0 0.0
    %v2745 = vand.u32 %v1279, 4294901760
    %2746 = vmatpush1.msra.mxu0 %v2745
    %2747 = vmatprep.subr.mxu0 0.0
    %v2748 = vand.u32 %v1278, 4294901760
    %2749 = vmatpush1.msra.mxu0 %v2748
    %2750 = vmatprep.subr.mxu0 0.0
    %v2751 = vand.u32 %v1277, 4294901760
    %2752 = vmatpush1.msra.mxu0 %v2751
    %2753 = vmatprep.subr.mxu0 0.0
    %v2754 = vand.u32 %v1276, 4294901760
    %2755 = vmatpush1.msra.mxu0 %v2754
    %2756 = vmatprep.subr.mxu0 0.0
    %2757 = vmatpush2.msra.mxu0 0.0
    %2758 = vmatprep.subr.mxu0 0.0
    %2759 = vmatpush2.msra.mxu0 0.0
    %2760 = vmatprep.subr.mxu0 0.0
    %2761 = vmatpush2.msra.mxu0 0.0
    %2762 = vmatprep.subr.mxu0 0.0
    %2763 = vmatpush2.msra.mxu0 0.0
    %2764 = vmatprep.subr.mxu0 0.0
    %2765 = vmatpush2.msra.mxu0 0.0
    %2766 = vmatprep.subr.mxu0 0.0
    %2767 = vmatpush2.msra.mxu0 0.0
    %2768 = vmatprep.subr.mxu0 0.0
    %2769 = vmatpush2.msra.mxu0 0.0
    %2770 = vmatprep.subr.mxu0 0.0
    %2771 = vmatpush2.msra.mxu0 0.0
    %2772 = vmatprep.subr.mxu0 0.0
    %2773 = vmatpush2.msra.mxu0 0.0
    %2774 = vmatprep.subr.mxu0 0.0
    %2775 = vmatpush2.msra.mxu0 0.0
    %2776 = vmatprep.subr.mxu0 0.0
    %2777 = vmatpush2.msra.mxu0 0.0
    %2778 = vmatprep.subr.mxu0 0.0
    %2779 = vmatpush2.msra.mxu0 0.0
    %2780 = vmatprep.subr.mxu0 0.0
    %2781 = vmatpush2.msra.mxu0 0.0
    %2782 = vmatprep.subr.mxu0 0.0
    %2783 = vmatpush2.msra.mxu0 0.0
    %2784 = vmatprep.subr.mxu0 0.0
    %2785 = vmatpush2.msra.mxu0 0.0
    %2786 = vmatprep.subr.mxu0 0.0
    %2787 = vmatpush2.msra.mxu0 0.0
    %2788 = vmatprep.mubr.f32.mxu0 0.0
    %v2789 = vand.u32 %v1219, 4294901760
    %2790 = vmatmul.mubr.f32.gmra.mxu0 %v2789
    %v2791 = vpop.f32.mrf.mxu0
    %v2792 = vadd.f32 %v2705, %v2791
    %v2793 = vpop.f32.mrf.mxu0
    %2794 = vdwg.mxu0
    %2795 = vmatprep.subr.mxu0 0.0
    %v2796 = vand.u32 %v1259, 4294901760
    %2797 = vmatpush1.msra.mxu0 %v2796
    %2798 = vmatprep.subr.mxu0 0.0
    %v2799 = vand.u32 %v1258, 4294901760
    %2800 = vmatpush1.msra.mxu0 %v2799
    %2801 = vmatprep.subr.mxu0 0.0
    %v2802 = vand.u32 %v1257, 4294901760
    %2803 = vmatpush1.msra.mxu0 %v2802
    %2804 = vmatprep.subr.mxu0 0.0
    %v2805 = vand.u32 %v1256, 4294901760
    %2806 = vmatpush1.msra.mxu0 %v2805
    %2807 = vmatprep.subr.mxu0 0.0
    %v2808 = vand.u32 %v1255, 4294901760
    %2809 = vmatpush1.msra.mxu0 %v2808
    %2810 = vmatprep.subr.mxu0 0.0
    %v2811 = vand.u32 %v1254, 4294901760
    %2812 = vmatpush1.msra.mxu0 %v2811
    %2813 = vmatprep.subr.mxu0 0.0
    %v2814 = vand.u32 %v1253, 4294901760
    %2815 = vmatpush1.msra.mxu0 %v2814
    %2816 = vmatprep.subr.mxu0 0.0
    %v2817 = vand.u32 %v1252, 4294901760
    %2818 = vmatpush1.msra.mxu0 %v2817
    %2819 = vmatprep.subr.mxu0 0.0
    %v2820 = vand.u32 %v1251, 4294901760
    %2821 = vmatpush1.msra.mxu0 %v2820
    %2822 = vmatprep.subr.mxu0 0.0
    %v2823 = vand.u32 %v1250, 4294901760
    %2824 = vmatpush1.msra.mxu0 %v2823
    %2825 = vmatprep.subr.mxu0 0.0
    %v2826 = vand.u32 %v1249, 4294901760
    %2827 = vmatpush1.msra.mxu0 %v2826
    %2828 = vmatprep.subr.mxu0 0.0
    %v2829 = vand.u32 %v1248, 4294901760
    %2830 = vmatpush1.msra.mxu0 %v2829
    %2831 = vmatprep.subr.mxu0 0.0
    %v2832 = vand.u32 %v1247, 4294901760
    %2833 = vmatpush1.msra.mxu0 %v2832
    %2834 = vmatprep.subr.mxu0 0.0
    %v2835 = vand.u32 %v1246, 4294901760
    %2836 = vmatpush1.msra.mxu0 %v2835
    %2837 = vmatprep.subr.mxu0 0.0
    %v2838 = vand.u32 %v1245, 4294901760
    %2839 = vmatpush1.msra.mxu0 %v2838
    %2840 = vmatprep.subr.mxu0 0.0
    %v2841 = vand.u32 %v1244, 4294901760
    %2842 = vmatpush1.msra.mxu0 %v2841
    %2843 = vmatprep.subr.mxu0 0.0
    %v2844 = vand.u32 %v1275, 4294901760
    %2845 = vmatpush2.msra.mxu0 %v2844
    %2846 = vmatprep.subr.mxu0 0.0
    %v2847 = vand.u32 %v1274, 4294901760
    %2848 = vmatpush2.msra.mxu0 %v2847
    %2849 = vmatprep.subr.mxu0 0.0
    %v2850 = vand.u32 %v1273, 4294901760
    %2851 = vmatpush2.msra.mxu0 %v2850
    %2852 = vmatprep.subr.mxu0 0.0
    %v2853 = vand.u32 %v1272, 4294901760
    %2854 = vmatpush2.msra.mxu0 %v2853
    %2855 = vmatprep.subr.mxu0 0.0
    %v2856 = vand.u32 %v1271, 4294901760
    %2857 = vmatpush2.msra.mxu0 %v2856
    %2858 = vmatprep.subr.mxu0 0.0
    %v2859 = vand.u32 %v1270, 4294901760
    %2860 = vmatpush2.msra.mxu0 %v2859
    %2861 = vmatprep.subr.mxu0 0.0
    %v2862 = vand.u32 %v1269, 4294901760
    %2863 = vmatpush2.msra.mxu0 %v2862
    %2864 = vmatprep.subr.mxu0 0.0
    %v2865 = vand.u32 %v1268, 4294901760
    %2866 = vmatpush2.msra.mxu0 %v2865
    %2867 = vmatprep.subr.mxu0 0.0
    %v2868 = vand.u32 %v1267, 4294901760
    %2869 = vmatpush2.msra.mxu0 %v2868
    %2870 = vmatprep.subr.mxu0 0.0
    %v2871 = vand.u32 %v1266, 4294901760
    %2872 = vmatpush2.msra.mxu0 %v2871
    %2873 = vmatprep.subr.mxu0 0.0
    %v2874 = vand.u32 %v1265, 4294901760
    %2875 = vmatpush2.msra.mxu0 %v2874
    %2876 = vmatprep.subr.mxu0 0.0
    %v2877 = vand.u32 %v1264, 4294901760
    %2878 = vmatpush2.msra.mxu0 %v2877
    %2879 = vmatprep.subr.mxu0 0.0
    %v2880 = vand.u32 %v1263, 4294901760
    %2881 = vmatpush2.msra.mxu0 %v2880
    %2882 = vmatprep.subr.mxu0 0.0
    %v2883 = vand.u32 %v1262, 4294901760
    %2884 = vmatpush2.msra.mxu0 %v2883
    %2885 = vmatprep.subr.mxu0 0.0
    %v2886 = vand.u32 %v1261, 4294901760
    %2887 = vmatpush2.msra.mxu0 %v2886
    %2888 = vmatprep.subr.mxu0 0.0
    %v2889 = vand.u32 %v1260, 4294901760
    %2890 = vmatpush2.msra.mxu0 %v2889
    %v2891 = vand.u32 %v1236, 4294901760
    %v2892 = vsub.f32 %v1236, %v2891
    %v2893 = vand.u32 %v2892, 4294901760
    %v2894 = vsub.f32 %v2892, %v2893
    %v2895 = vand.u32 %v2894, 4294901760
    %2896 = vmatprep.mubr.f32.mxu0 %v2895
    %v2897 = vand.u32 %v1229, 4294901760
    %v2898 = vsub.f32 %v1229, %v2897
    %v2899 = vand.u32 %v2898, 4294901760
    %v2900 = vsub.f32 %v2898, %v2899
    %v2901 = vand.u32 %v2900, 4294901760
    %2902 = vmatmul.mubr.f32.gmra.mxu0 %v2901
    %v2903 = vpop.f32.mrf.mxu0
    %v2904 = vadd.f32 0.0, %v2903
    %v2905 = vpop.f32.mrf.mxu0
    %2906 = vdwg.mxu0
    %2907 = vmatprep.subr.mxu0 0.0
    %v2908 = vand.u32 %v1259, 4294901760
    %v2909 = vsub.f32 %v1259, %v2908
    %v2910 = vand.u32 %v2909, 4294901760
    %v2911 = vsub.f32 %v2909, %v2910
    %v2912 = vand.u32 %v2911, 4294901760
    %2913 = vmatpush1.msra.mxu0 %v2912
    %2914 = vmatprep.subr.mxu0 0.0
    %v2915 = vand.u32 %v1258, 4294901760
    %v2916 = vsub.f32 %v1258, %v2915
    %v2917 = vand.u32 %v2916, 4294901760
    %v2918 = vsub.f32 %v2916, %v2917
    %v2919 = vand.u32 %v2918, 4294901760
    %2920 = vmatpush1.msra.mxu0 %v2919
    %2921 = vmatprep.subr.mxu0 0.0
    %v2922 = vand.u32 %v1257, 4294901760
    %v2923 = vsub.f32 %v1257, %v2922
    %v2924 = vand.u32 %v2923, 4294901760
    %v2925 = vsub.f32 %v2923, %v2924
    %v2926 = vand.u32 %v2925, 4294901760
    %2927 = vmatpush1.msra.mxu0 %v2926
    %2928 = vmatprep.subr.mxu0 0.0
    %v2929 = vand.u32 %v1256, 4294901760
    %v2930 = vsub.f32 %v1256, %v2929
    %v2931 = vand.u32 %v2930, 4294901760
    %v2932 = vsub.f32 %v2930, %v2931
    %v2933 = vand.u32 %v2932, 4294901760
    %2934 = vmatpush1.msra.mxu0 %v2933
    %2935 = vmatprep.subr.mxu0 0.0
    %v2936 = vand.u32 %v1255, 4294901760
    %v2937 = vsub.f32 %v1255, %v2936
    %v2938 = vand.u32 %v2937, 4294901760
    %v2939 = vsub.f32 %v2937, %v2938
    %v2940 = vand.u32 %v2939, 4294901760
    %2941 = vmatpush1.msra.mxu0 %v2940
    %2942 = vmatprep.subr.mxu0 0.0
    %v2943 = vand.u32 %v1254, 4294901760
    %v2944 = vsub.f32 %v1254, %v2943
    %v2945 = vand.u32 %v2944, 4294901760
    %v2946 = vsub.f32 %v2944, %v2945
    %v2947 = vand.u32 %v2946, 4294901760
    %2948 = vmatpush1.msra.mxu0 %v2947
    %2949 = vmatprep.subr.mxu0 0.0
    %v2950 = vand.u32 %v1253, 4294901760
    %v2951 = vsub.f32 %v1253, %v2950
    %v2952 = vand.u32 %v2951, 4294901760
    %v2953 = vsub.f32 %v2951, %v2952
    %v2954 = vand.u32 %v2953, 4294901760
    %2955 = vmatpush1.msra.mxu0 %v2954
    %2956 = vmatprep.subr.mxu0 0.0
    %v2957 = vand.u32 %v1252, 4294901760
    %v2958 = vsub.f32 %v1252, %v2957
    %v2959 = vand.u32 %v2958, 4294901760
    %v2960 = vsub.f32 %v2958, %v2959
    %v2961 = vand.u32 %v2960, 4294901760
    %2962 = vmatpush1.msra.mxu0 %v2961
    %2963 = vmatprep.subr.mxu0 0.0
    %v2964 = vand.u32 %v1251, 4294901760
    %v2965 = vsub.f32 %v1251, %v2964
    %v2966 = vand.u32 %v2965, 4294901760
    %v2967 = vsub.f32 %v2965, %v2966
    %v2968 = vand.u32 %v2967, 4294901760
    %2969 = vmatpush1.msra.mxu0 %v2968
    %2970 = vmatprep.subr.mxu0 0.0
    %v2971 = vand.u32 %v1250, 4294901760
    %v2972 = vsub.f32 %v1250, %v2971
    %v2973 = vand.u32 %v2972, 4294901760
    %v2974 = vsub.f32 %v2972, %v2973
    %v2975 = vand.u32 %v2974, 4294901760
    %2976 = vmatpush1.msra.mxu0 %v2975
    %2977 = vmatprep.subr.mxu0 0.0
    %v2978 = vand.u32 %v1249, 4294901760
    %v2979 = vsub.f32 %v1249, %v2978
    %v2980 = vand.u32 %v2979, 4294901760
    %v2981 = vsub.f32 %v2979, %v2980
    %v2982 = vand.u32 %v2981, 4294901760
    %2983 = vmatpush1.msra.mxu0 %v2982
    %2984 = vmatprep.subr.mxu0 0.0
    %v2985 = vand.u32 %v1248, 4294901760
    %v2986 = vsub.f32 %v1248, %v2985
    %v2987 = vand.u32 %v2986, 4294901760
    %v2988 = vsub.f32 %v2986, %v2987
    %v2989 = vand.u32 %v2988, 4294901760
    %2990 = vmatpush1.msra.mxu0 %v2989
    %2991 = vmatprep.subr.mxu0 0.0
    %v2992 = vand.u32 %v1247, 4294901760
    %v2993 = vsub.f32 %v1247, %v2992
    %v2994 = vand.u32 %v2993, 4294901760
    %v2995 = vsub.f32 %v2993, %v2994
    %v2996 = vand.u32 %v2995, 4294901760
    %2997 = vmatpush1.msra.mxu0 %v2996
    %2998 = vmatprep.subr.mxu0 0.0
    %v2999 = vand.u32 %v1246, 4294901760
    %v3000 = vsub.f32 %v1246, %v2999
    %v3001 = vand.u32 %v3000, 4294901760
    %v3002 = vsub.f32 %v3000, %v3001
    %v3003 = vand.u32 %v3002, 4294901760
    %3004 = vmatpush1.msra.mxu0 %v3003
    %3005 = vmatprep.subr.mxu0 0.0
    %v3006 = vand.u32 %v1245, 4294901760
    %v3007 = vsub.f32 %v1245, %v3006
    %v3008 = vand.u32 %v3007, 4294901760
    %v3009 = vsub.f32 %v3007, %v3008
    %v3010 = vand.u32 %v3009, 4294901760
    %3011 = vmatpush1.msra.mxu0 %v3010
    %3012 = vmatprep.subr.mxu0 0.0
    %v3013 = vand.u32 %v1244, 4294901760
    %v3014 = vsub.f32 %v1244, %v3013
    %v3015 = vand.u32 %v3014, 4294901760
    %v3016 = vsub.f32 %v3014, %v3015
    %v3017 = vand.u32 %v3016, 4294901760
    %3018 = vmatpush1.msra.mxu0 %v3017
    %3019 = vmatprep.subr.mxu0 0.0
    %v3020 = vand.u32 %v1275, 4294901760
    %v3021 = vsub.f32 %v1275, %v3020
    %v3022 = vand.u32 %v3021, 4294901760
    %v3023 = vsub.f32 %v3021, %v3022
    %v3024 = vand.u32 %v3023, 4294901760
    %3025 = vmatpush2.msra.mxu0 %v3024
    %3026 = vmatprep.subr.mxu0 0.0
    %v3027 = vand.u32 %v1274, 4294901760
    %v3028 = vsub.f32 %v1274, %v3027
    %v3029 = vand.u32 %v3028, 4294901760
    %v3030 = vsub.f32 %v3028, %v3029
    %v3031 = vand.u32 %v3030, 4294901760
    %3032 = vmatpush2.msra.mxu0 %v3031
    %3033 = vmatprep.subr.mxu0 0.0
    %v3034 = vand.u32 %v1273, 4294901760
    %v3035 = vsub.f32 %v1273, %v3034
    %v3036 = vand.u32 %v3035, 4294901760
    %v3037 = vsub.f32 %v3035, %v3036
    %v3038 = vand.u32 %v3037, 4294901760
    %3039 = vmatpush2.msra.mxu0 %v3038
    %3040 = vmatprep.subr.mxu0 0.0
    %v3041 = vand.u32 %v1272, 4294901760
    %v3042 = vsub.f32 %v1272, %v3041
    %v3043 = vand.u32 %v3042, 4294901760
    %v3044 = vsub.f32 %v3042, %v3043
    %v3045 = vand.u32 %v3044, 4294901760
    %3046 = vmatpush2.msra.mxu0 %v3045
    %3047 = vmatprep.subr.mxu0 0.0
    %v3048 = vand.u32 %v1271, 4294901760
    %v3049 = vsub.f32 %v1271, %v3048
    %v3050 = vand.u32 %v3049, 4294901760
    %v3051 = vsub.f32 %v3049, %v3050
    %v3052 = vand.u32 %v3051, 4294901760
    %3053 = vmatpush2.msra.mxu0 %v3052
    %3054 = vmatprep.subr.mxu0 0.0
    %v3055 = vand.u32 %v1270, 4294901760
    %v3056 = vsub.f32 %v1270, %v3055
    %v3057 = vand.u32 %v3056, 4294901760
    %v3058 = vsub.f32 %v3056, %v3057
    %v3059 = vand.u32 %v3058, 4294901760
    %3060 = vmatpush2.msra.mxu0 %v3059
    %3061 = vmatprep.subr.mxu0 0.0
    %v3062 = vand.u32 %v1269, 4294901760
    %v3063 = vsub.f32 %v1269, %v3062
    %v3064 = vand.u32 %v3063, 4294901760
    %v3065 = vsub.f32 %v3063, %v3064
    %v3066 = vand.u32 %v3065, 4294901760
    %3067 = vmatpush2.msra.mxu0 %v3066
    %3068 = vmatprep.subr.mxu0 0.0
    %v3069 = vand.u32 %v1268, 4294901760
    %v3070 = vsub.f32 %v1268, %v3069
    %v3071 = vand.u32 %v3070, 4294901760
    %v3072 = vsub.f32 %v3070, %v3071
    %v3073 = vand.u32 %v3072, 4294901760
    %3074 = vmatpush2.msra.mxu0 %v3073
    %3075 = vmatprep.subr.mxu0 0.0
    %v3076 = vand.u32 %v1267, 4294901760
    %v3077 = vsub.f32 %v1267, %v3076
    %v3078 = vand.u32 %v3077, 4294901760
    %v3079 = vsub.f32 %v3077, %v3078
    %v3080 = vand.u32 %v3079, 4294901760
    %3081 = vmatpush2.msra.mxu0 %v3080
    %3082 = vmatprep.subr.mxu0 0.0
    %v3083 = vand.u32 %v1266, 4294901760
    %v3084 = vsub.f32 %v1266, %v3083
    %v3085 = vand.u32 %v3084, 4294901760
    %v3086 = vsub.f32 %v3084, %v3085
    %v3087 = vand.u32 %v3086, 4294901760
    %3088 = vmatpush2.msra.mxu0 %v3087
    %3089 = vmatprep.subr.mxu0 0.0
    %v3090 = vand.u32 %v1265, 4294901760
    %v3091 = vsub.f32 %v1265, %v3090
    %v3092 = vand.u32 %v3091, 4294901760
    %v3093 = vsub.f32 %v3091, %v3092
    %v3094 = vand.u32 %v3093, 4294901760
    %3095 = vmatpush2.msra.mxu0 %v3094
    %3096 = vmatprep.subr.mxu0 0.0
    %v3097 = vand.u32 %v1264, 4294901760
    %v3098 = vsub.f32 %v1264, %v3097
    %v3099 = vand.u32 %v3098, 4294901760
    %v3100 = vsub.f32 %v3098, %v3099
    %v3101 = vand.u32 %v3100, 4294901760
    %3102 = vmatpush2.msra.mxu0 %v3101
    %3103 = vmatprep.subr.mxu0 0.0
    %v3104 = vand.u32 %v1263, 4294901760
    %v3105 = vsub.f32 %v1263, %v3104
    %v3106 = vand.u32 %v3105, 4294901760
    %v3107 = vsub.f32 %v3105, %v3106
    %v3108 = vand.u32 %v3107, 4294901760
    %3109 = vmatpush2.msra.mxu0 %v3108
    %3110 = vmatprep.subr.mxu0 0.0
    %v3111 = vand.u32 %v1262, 4294901760
    %v3112 = vsub.f32 %v1262, %v3111
    %v3113 = vand.u32 %v3112, 4294901760
    %v3114 = vsub.f32 %v3112, %v3113
    %v3115 = vand.u32 %v3114, 4294901760
    %3116 = vmatpush2.msra.mxu0 %v3115
    %3117 = vmatprep.subr.mxu0 0.0
    %v3118 = vand.u32 %v1261, 4294901760
    %v3119 = vsub.f32 %v1261, %v3118
    %v3120 = vand.u32 %v3119, 4294901760
    %v3121 = vsub.f32 %v3119, %v3120
    %v3122 = vand.u32 %v3121, 4294901760
    %3123 = vmatpush2.msra.mxu0 %v3122
    %3124 = vmatprep.subr.mxu0 0.0
    %v3125 = vand.u32 %v1260, 4294901760
    %v3126 = vsub.f32 %v1260, %v3125
    %v3127 = vand.u32 %v3126, 4294901760
    %v3128 = vsub.f32 %v3126, %v3127
    %v3129 = vand.u32 %v3128, 4294901760
    %3130 = vmatpush2.msra.mxu0 %v3129
    %v3131 = vand.u32 %v1236, 4294901760
    %3132 = vmatprep.mubr.f32.mxu0 %v3131
    %v3133 = vand.u32 %v1229, 4294901760
    %3134 = vmatmul.mubr.f32.gmra.mxu0 %v3133
    %v3135 = vpop.f32.mrf.mxu0
    %v3136 = vadd.f32 %v2904, %v3135
    %v3137 = vpop.f32.mrf.mxu0
    %3138 = vdwg.mxu0
    %3139 = vmatprep.subr.mxu0 0.0
    %v3140 = vand.u32 %v1259, 4294901760
    %v3141 = vsub.f32 %v1259, %v3140
    %3142 = vmatpush1.msra.mxu0 %v3141
    %3143 = vmatprep.subr.mxu0 0.0
    %v3144 = vand.u32 %v1258, 4294901760
    %v3145 = vsub.f32 %v1258, %v3144
    %3146 = vmatpush1.msra.mxu0 %v3145
    %3147 = vmatprep.subr.mxu0 0.0
    %v3148 = vand.u32 %v1257, 4294901760
    %v3149 = vsub.f32 %v1257, %v3148
    %3150 = vmatpush1.msra.mxu0 %v3149
    %3151 = vmatprep.subr.mxu0 0.0
    %v3152 = vand.u32 %v1256, 4294901760
    %v3153 = vsub.f32 %v1256, %v3152
    %3154 = vmatpush1.msra.mxu0 %v3153
    %3155 = vmatprep.subr.mxu0 0.0
    %v3156 = vand.u32 %v1255, 4294901760
    %v3157 = vsub.f32 %v1255, %v3156
    %3158 = vmatpush1.msra.mxu0 %v3157
    %3159 = vmatprep.subr.mxu0 0.0
    %v3160 = vand.u32 %v1254, 4294901760
    %v3161 = vsub.f32 %v1254, %v3160
    %3162 = vmatpush1.msra.mxu0 %v3161
    %3163 = vmatprep.subr.mxu0 0.0
    %v3164 = vand.u32 %v1253, 4294901760
    %v3165 = vsub.f32 %v1253, %v3164
    %3166 = vmatpush1.msra.mxu0 %v3165
    %3167 = vmatprep.subr.mxu0 0.0
    %v3168 = vand.u32 %v1252, 4294901760
    %v3169 = vsub.f32 %v1252, %v3168
    %3170 = vmatpush1.msra.mxu0 %v3169
    %3171 = vmatprep.subr.mxu0 0.0
    %v3172 = vand.u32 %v1251, 4294901760
    %v3173 = vsub.f32 %v1251, %v3172
    %3174 = vmatpush1.msra.mxu0 %v3173
    %3175 = vmatprep.subr.mxu0 0.0
    %v3176 = vand.u32 %v1250, 4294901760
    %v3177 = vsub.f32 %v1250, %v3176
    %3178 = vmatpush1.msra.mxu0 %v3177
    %3179 = vmatprep.subr.mxu0 0.0
    %v3180 = vand.u32 %v1249, 4294901760
    %v3181 = vsub.f32 %v1249, %v3180
    %3182 = vmatpush1.msra.mxu0 %v3181
    %3183 = vmatprep.subr.mxu0 0.0
    %v3184 = vand.u32 %v1248, 4294901760
    %v3185 = vsub.f32 %v1248, %v3184
    %3186 = vmatpush1.msra.mxu0 %v3185
    %3187 = vmatprep.subr.mxu0 0.0
    %v3188 = vand.u32 %v1247, 4294901760
    %v3189 = vsub.f32 %v1247, %v3188
    %3190 = vmatpush1.msra.mxu0 %v3189
    %3191 = vmatprep.subr.mxu0 0.0
    %v3192 = vand.u32 %v1246, 4294901760
    %v3193 = vsub.f32 %v1246, %v3192
    %3194 = vmatpush1.msra.mxu0 %v3193
    %3195 = vmatprep.subr.mxu0 0.0
    %v3196 = vand.u32 %v1245, 4294901760
    %v3197 = vsub.f32 %v1245, %v3196
    %3198 = vmatpush1.msra.mxu0 %v3197
    %3199 = vmatprep.subr.mxu0 0.0
    %v3200 = vand.u32 %v1244, 4294901760
    %v3201 = vsub.f32 %v1244, %v3200
    %3202 = vmatpush1.msra.mxu0 %v3201
    %3203 = vmatprep.subr.mxu0 0.0
    %v3204 = vand.u32 %v1275, 4294901760
    %v3205 = vsub.f32 %v1275, %v3204
    %3206 = vmatpush2.msra.mxu0 %v3205
    %3207 = vmatprep.subr.mxu0 0.0
    %v3208 = vand.u32 %v1274, 4294901760
    %v3209 = vsub.f32 %v1274, %v3208
    %3210 = vmatpush2.msra.mxu0 %v3209
    %3211 = vmatprep.subr.mxu0 0.0
    %v3212 = vand.u32 %v1273, 4294901760
    %v3213 = vsub.f32 %v1273, %v3212
    %3214 = vmatpush2.msra.mxu0 %v3213
    %3215 = vmatprep.subr.mxu0 0.0
    %v3216 = vand.u32 %v1272, 4294901760
    %v3217 = vsub.f32 %v1272, %v3216
    %3218 = vmatpush2.msra.mxu0 %v3217
    %3219 = vmatprep.subr.mxu0 0.0
    %v3220 = vand.u32 %v1271, 4294901760
    %v3221 = vsub.f32 %v1271, %v3220
    %3222 = vmatpush2.msra.mxu0 %v3221
    %3223 = vmatprep.subr.mxu0 0.0
    %v3224 = vand.u32 %v1270, 4294901760
    %v3225 = vsub.f32 %v1270, %v3224
    %3226 = vmatpush2.msra.mxu0 %v3225
    %3227 = vmatprep.subr.mxu0 0.0
    %v3228 = vand.u32 %v1269, 4294901760
    %v3229 = vsub.f32 %v1269, %v3228
    %3230 = vmatpush2.msra.mxu0 %v3229
    %3231 = vmatprep.subr.mxu0 0.0
    %v3232 = vand.u32 %v1268, 4294901760
    %v3233 = vsub.f32 %v1268, %v3232
    %3234 = vmatpush2.msra.mxu0 %v3233
    %3235 = vmatprep.subr.mxu0 0.0
    %v3236 = vand.u32 %v1267, 4294901760
    %v3237 = vsub.f32 %v1267, %v3236
    %3238 = vmatpush2.msra.mxu0 %v3237
    %3239 = vmatprep.subr.mxu0 0.0
    %v3240 = vand.u32 %v1266, 4294901760
    %v3241 = vsub.f32 %v1266, %v3240
    %3242 = vmatpush2.msra.mxu0 %v3241
    %3243 = vmatprep.subr.mxu0 0.0
    %v3244 = vand.u32 %v1265, 4294901760
    %v3245 = vsub.f32 %v1265, %v3244
    %3246 = vmatpush2.msra.mxu0 %v3245
    %3247 = vmatprep.subr.mxu0 0.0
    %v3248 = vand.u32 %v1264, 4294901760
    %v3249 = vsub.f32 %v1264, %v3248
    %3250 = vmatpush2.msra.mxu0 %v3249
    %3251 = vmatprep.subr.mxu0 0.0
    %v3252 = vand.u32 %v1263, 4294901760
    %v3253 = vsub.f32 %v1263, %v3252
    %3254 = vmatpush2.msra.mxu0 %v3253
    %3255 = vmatprep.subr.mxu0 0.0
    %v3256 = vand.u32 %v1262, 4294901760
    %v3257 = vsub.f32 %v1262, %v3256
    %3258 = vmatpush2.msra.mxu0 %v3257
    %3259 = vmatprep.subr.mxu0 0.0
    %v3260 = vand.u32 %v1261, 4294901760
    %v3261 = vsub.f32 %v1261, %v3260
    %3262 = vmatpush2.msra.mxu0 %v3261
    %3263 = vmatprep.subr.mxu0 0.0
    %v3264 = vand.u32 %v1260, 4294901760
    %v3265 = vsub.f32 %v1260, %v3264
    %3266 = vmatpush2.msra.mxu0 %v3265
    %v3267 = vand.u32 %v1236, 4294901760
    %v3268 = vsub.f32 %v1236, %v3267
    %3269 = vmatprep.mubr.f32.mxu0 %v3268
    %v3270 = vand.u32 %v1229, 4294901760
    %v3271 = vsub.f32 %v1229, %v3270
    %3272 = vmatmul.mubr.f32.gmra.mxu0 %v3271
    %v3273 = vpop.f32.mrf.mxu0
    %v3274 = vadd.f32 %v3136, %v3273
    %v3275 = vpop.f32.mrf.mxu0
    %3276 = vdwg.mxu0
    %3277 = vmatprep.subr.mxu0 0.0
    %v3278 = vand.u32 %v1259, 4294901760
    %3279 = vmatpush1.msra.mxu0 %v3278
    %3280 = vmatprep.subr.mxu0 0.0
    %v3281 = vand.u32 %v1258, 4294901760
    %3282 = vmatpush1.msra.mxu0 %v3281
    %3283 = vmatprep.subr.mxu0 0.0
    %v3284 = vand.u32 %v1257, 4294901760
    %3285 = vmatpush1.msra.mxu0 %v3284
    %3286 = vmatprep.subr.mxu0 0.0
    %v3287 = vand.u32 %v1256, 4294901760
    %3288 = vmatpush1.msra.mxu0 %v3287
    %3289 = vmatprep.subr.mxu0 0.0
    %v3290 = vand.u32 %v1255, 4294901760
    %3291 = vmatpush1.msra.mxu0 %v3290
    %3292 = vmatprep.subr.mxu0 0.0
    %v3293 = vand.u32 %v1254, 4294901760
    %3294 = vmatpush1.msra.mxu0 %v3293
    %3295 = vmatprep.subr.mxu0 0.0
    %v3296 = vand.u32 %v1253, 4294901760
    %3297 = vmatpush1.msra.mxu0 %v3296
    %3298 = vmatprep.subr.mxu0 0.0
    %v3299 = vand.u32 %v1252, 4294901760
    %3300 = vmatpush1.msra.mxu0 %v3299
    %3301 = vmatprep.subr.mxu0 0.0
    %v3302 = vand.u32 %v1251, 4294901760
    %3303 = vmatpush1.msra.mxu0 %v3302
    %3304 = vmatprep.subr.mxu0 0.0
    %v3305 = vand.u32 %v1250, 4294901760
    %3306 = vmatpush1.msra.mxu0 %v3305
    %3307 = vmatprep.subr.mxu0 0.0
    %v3308 = vand.u32 %v1249, 4294901760
    %3309 = vmatpush1.msra.mxu0 %v3308
    %3310 = vmatprep.subr.mxu0 0.0
    %v3311 = vand.u32 %v1248, 4294901760
    %3312 = vmatpush1.msra.mxu0 %v3311
    %3313 = vmatprep.subr.mxu0 0.0
    %v3314 = vand.u32 %v1247, 4294901760
    %3315 = vmatpush1.msra.mxu0 %v3314
    %3316 = vmatprep.subr.mxu0 0.0
    %v3317 = vand.u32 %v1246, 4294901760
    %3318 = vmatpush1.msra.mxu0 %v3317
    %3319 = vmatprep.subr.mxu0 0.0
    %v3320 = vand.u32 %v1245, 4294901760
    %3321 = vmatpush1.msra.mxu0 %v3320
    %3322 = vmatprep.subr.mxu0 0.0
    %v3323 = vand.u32 %v1244, 4294901760
    %3324 = vmatpush1.msra.mxu0 %v3323
    %3325 = vmatprep.subr.mxu0 0.0
    %v3326 = vand.u32 %v1275, 4294901760
    %3327 = vmatpush2.msra.mxu0 %v3326
    %3328 = vmatprep.subr.mxu0 0.0
    %v3329 = vand.u32 %v1274, 4294901760
    %3330 = vmatpush2.msra.mxu0 %v3329
    %3331 = vmatprep.subr.mxu0 0.0
    %v3332 = vand.u32 %v1273, 4294901760
    %3333 = vmatpush2.msra.mxu0 %v3332
    %3334 = vmatprep.subr.mxu0 0.0
    %v3335 = vand.u32 %v1272, 4294901760
    %3336 = vmatpush2.msra.mxu0 %v3335
    %3337 = vmatprep.subr.mxu0 0.0
    %v3338 = vand.u32 %v1271, 4294901760
    %3339 = vmatpush2.msra.mxu0 %v3338
    %3340 = vmatprep.subr.mxu0 0.0
    %v3341 = vand.u32 %v1270, 4294901760
    %3342 = vmatpush2.msra.mxu0 %v3341
    %3343 = vmatprep.subr.mxu0 0.0
    %v3344 = vand.u32 %v1269, 4294901760
    %3345 = vmatpush2.msra.mxu0 %v3344
    %3346 = vmatprep.subr.mxu0 0.0
    %v3347 = vand.u32 %v1268, 4294901760
    %3348 = vmatpush2.msra.mxu0 %v3347
    %3349 = vmatprep.subr.mxu0 0.0
    %v3350 = vand.u32 %v1267, 4294901760
    %3351 = vmatpush2.msra.mxu0 %v3350
    %3352 = vmatprep.subr.mxu0 0.0
    %v3353 = vand.u32 %v1266, 4294901760
    %3354 = vmatpush2.msra.mxu0 %v3353
    %3355 = vmatprep.subr.mxu0 0.0
    %v3356 = vand.u32 %v1265, 4294901760
    %3357 = vmatpush2.msra.mxu0 %v3356
    %3358 = vmatprep.subr.mxu0 0.0
    %v3359 = vand.u32 %v1264, 4294901760
    %3360 = vmatpush2.msra.mxu0 %v3359
    %3361 = vmatprep.subr.mxu0 0.0
    %v3362 = vand.u32 %v1263, 4294901760
    %3363 = vmatpush2.msra.mxu0 %v3362
    %3364 = vmatprep.subr.mxu0 0.0
    %v3365 = vand.u32 %v1262, 4294901760
    %3366 = vmatpush2.msra.mxu0 %v3365
    %3367 = vmatprep.subr.mxu0 0.0
    %v3368 = vand.u32 %v1261, 4294901760
    %3369 = vmatpush2.msra.mxu0 %v3368
    %3370 = vmatprep.subr.mxu0 0.0
    %v3371 = vand.u32 %v1260, 4294901760
    %3372 = vmatpush2.msra.mxu0 %v3371
    %v3373 = vand.u32 %v1236, 4294901760
    %v3374 = vsub.f32 %v1236, %v3373
    %v3375 = vand.u32 %v3374, 4294901760
    %3376 = vmatprep.mubr.f32.mxu0 %v3375
    %v3377 = vand.u32 %v1229, 4294901760
    %v3378 = vsub.f32 %v1229, %v3377
    %v3379 = vand.u32 %v3378, 4294901760
    %3380 = vmatmul.mubr.f32.gmra.mxu0 %v3379
    %v3381 = vpop.f32.mrf.mxu0
    %v3382 = vadd.f32 %v3274, %v3381
    %v3383 = vpop.f32.mrf.mxu0
    %3384 = vdwg.mxu0
    %3385 = vmatprep.subr.mxu0 0.0
    %v3386 = vand.u32 %v1259, 4294901760
    %v3387 = vsub.f32 %v1259, %v3386
    %v3388 = vand.u32 %v3387, 4294901760
    %3389 = vmatpush1.msra.mxu0 %v3388
    %3390 = vmatprep.subr.mxu0 0.0
    %v3391 = vand.u32 %v1258, 4294901760
    %v3392 = vsub.f32 %v1258, %v3391
    %v3393 = vand.u32 %v3392, 4294901760
    %3394 = vmatpush1.msra.mxu0 %v3393
    %3395 = vmatprep.subr.mxu0 0.0
    %v3396 = vand.u32 %v1257, 4294901760
    %v3397 = vsub.f32 %v1257, %v3396
    %v3398 = vand.u32 %v3397, 4294901760
    %3399 = vmatpush1.msra.mxu0 %v3398
    %3400 = vmatprep.subr.mxu0 0.0
    %v3401 = vand.u32 %v1256, 4294901760
    %v3402 = vsub.f32 %v1256, %v3401
    %v3403 = vand.u32 %v3402, 4294901760
    %3404 = vmatpush1.msra.mxu0 %v3403
    %3405 = vmatprep.subr.mxu0 0.0
    %v3406 = vand.u32 %v1255, 4294901760
    %v3407 = vsub.f32 %v1255, %v3406
    %v3408 = vand.u32 %v3407, 4294901760
    %3409 = vmatpush1.msra.mxu0 %v3408
    %3410 = vmatprep.subr.mxu0 0.0
    %v3411 = vand.u32 %v1254, 4294901760
    %v3412 = vsub.f32 %v1254, %v3411
    %v3413 = vand.u32 %v3412, 4294901760
    %3414 = vmatpush1.msra.mxu0 %v3413
    %3415 = vmatprep.subr.mxu0 0.0
    %v3416 = vand.u32 %v1253, 4294901760
    %v3417 = vsub.f32 %v1253, %v3416
    %v3418 = vand.u32 %v3417, 4294901760
    %3419 = vmatpush1.msra.mxu0 %v3418
    %3420 = vmatprep.subr.mxu0 0.0
    %v3421 = vand.u32 %v1252, 4294901760
    %v3422 = vsub.f32 %v1252, %v3421
    %v3423 = vand.u32 %v3422, 4294901760
    %3424 = vmatpush1.msra.mxu0 %v3423
    %3425 = vmatprep.subr.mxu0 0.0
    %v3426 = vand.u32 %v1251, 4294901760
    %v3427 = vsub.f32 %v1251, %v3426
    %v3428 = vand.u32 %v3427, 4294901760
    %3429 = vmatpush1.msra.mxu0 %v3428
    %3430 = vmatprep.subr.mxu0 0.0
    %v3431 = vand.u32 %v1250, 4294901760
    %v3432 = vsub.f32 %v1250, %v3431
    %v3433 = vand.u32 %v3432, 4294901760
    %3434 = vmatpush1.msra.mxu0 %v3433
    %3435 = vmatprep.subr.mxu0 0.0
    %v3436 = vand.u32 %v1249, 4294901760
    %v3437 = vsub.f32 %v1249, %v3436
    %v3438 = vand.u32 %v3437, 4294901760
    %3439 = vmatpush1.msra.mxu0 %v3438
    %3440 = vmatprep.subr.mxu0 0.0
    %v3441 = vand.u32 %v1248, 4294901760
    %v3442 = vsub.f32 %v1248, %v3441
    %v3443 = vand.u32 %v3442, 4294901760
    %3444 = vmatpush1.msra.mxu0 %v3443
    %3445 = vmatprep.subr.mxu0 0.0
    %v3446 = vand.u32 %v1247, 4294901760
    %v3447 = vsub.f32 %v1247, %v3446
    %v3448 = vand.u32 %v3447, 4294901760
    %3449 = vmatpush1.msra.mxu0 %v3448
    %3450 = vmatprep.subr.mxu0 0.0
    %v3451 = vand.u32 %v1246, 4294901760
    %v3452 = vsub.f32 %v1246, %v3451
    %v3453 = vand.u32 %v3452, 4294901760
    %3454 = vmatpush1.msra.mxu0 %v3453
    %3455 = vmatprep.subr.mxu0 0.0
    %v3456 = vand.u32 %v1245, 4294901760
    %v3457 = vsub.f32 %v1245, %v3456
    %v3458 = vand.u32 %v3457, 4294901760
    %3459 = vmatpush1.msra.mxu0 %v3458
    %3460 = vmatprep.subr.mxu0 0.0
    %v3461 = vand.u32 %v1244, 4294901760
    %v3462 = vsub.f32 %v1244, %v3461
    %v3463 = vand.u32 %v3462, 4294901760
    %3464 = vmatpush1.msra.mxu0 %v3463
    %3465 = vmatprep.subr.mxu0 0.0
    %v3466 = vand.u32 %v1275, 4294901760
    %v3467 = vsub.f32 %v1275, %v3466
    %v3468 = vand.u32 %v3467, 4294901760
    %3469 = vmatpush2.msra.mxu0 %v3468
    %3470 = vmatprep.subr.mxu0 0.0
    %v3471 = vand.u32 %v1274, 4294901760
    %v3472 = vsub.f32 %v1274, %v3471
    %v3473 = vand.u32 %v3472, 4294901760
    %3474 = vmatpush2.msra.mxu0 %v3473
    %3475 = vmatprep.subr.mxu0 0.0
    %v3476 = vand.u32 %v1273, 4294901760
    %v3477 = vsub.f32 %v1273, %v3476
    %v3478 = vand.u32 %v3477, 4294901760
    %3479 = vmatpush2.msra.mxu0 %v3478
    %3480 = vmatprep.subr.mxu0 0.0
    %v3481 = vand.u32 %v1272, 4294901760
    %v3482 = vsub.f32 %v1272, %v3481
    %v3483 = vand.u32 %v3482, 4294901760
    %3484 = vmatpush2.msra.mxu0 %v3483
    %3485 = vmatprep.subr.mxu0 0.0
    %v3486 = vand.u32 %v1271, 4294901760
    %v3487 = vsub.f32 %v1271, %v3486
    %v3488 = vand.u32 %v3487, 4294901760
    %3489 = vmatpush2.msra.mxu0 %v3488
    %3490 = vmatprep.subr.mxu0 0.0
    %v3491 = vand.u32 %v1270, 4294901760
    %v3492 = vsub.f32 %v1270, %v3491
    %v3493 = vand.u32 %v3492, 4294901760
    %3494 = vmatpush2.msra.mxu0 %v3493
    %3495 = vmatprep.subr.mxu0 0.0
    %v3496 = vand.u32 %v1269, 4294901760
    %v3497 = vsub.f32 %v1269, %v3496
    %v3498 = vand.u32 %v3497, 4294901760
    %3499 = vmatpush2.msra.mxu0 %v3498
    %3500 = vmatprep.subr.mxu0 0.0
    %v3501 = vand.u32 %v1268, 4294901760
    %v3502 = vsub.f32 %v1268, %v3501
    %v3503 = vand.u32 %v3502, 4294901760
    %3504 = vmatpush2.msra.mxu0 %v3503
    %3505 = vmatprep.subr.mxu0 0.0
    %v3506 = vand.u32 %v1267, 4294901760
    %v3507 = vsub.f32 %v1267, %v3506
    %v3508 = vand.u32 %v3507, 4294901760
    %3509 = vmatpush2.msra.mxu0 %v3508
    %3510 = vmatprep.subr.mxu0 0.0
    %v3511 = vand.u32 %v1266, 4294901760
    %v3512 = vsub.f32 %v1266, %v3511
    %v3513 = vand.u32 %v3512, 4294901760
    %3514 = vmatpush2.msra.mxu0 %v3513
    %3515 = vmatprep.subr.mxu0 0.0
    %v3516 = vand.u32 %v1265, 4294901760
    %v3517 = vsub.f32 %v1265, %v3516
    %v3518 = vand.u32 %v3517, 4294901760
    %3519 = vmatpush2.msra.mxu0 %v3518
    %3520 = vmatprep.subr.mxu0 0.0
    %v3521 = vand.u32 %v1264, 4294901760
    %v3522 = vsub.f32 %v1264, %v3521
    %v3523 = vand.u32 %v3522, 4294901760
    %3524 = vmatpush2.msra.mxu0 %v3523
    %3525 = vmatprep.subr.mxu0 0.0
    %v3526 = vand.u32 %v1263, 4294901760
    %v3527 = vsub.f32 %v1263, %v3526
    %v3528 = vand.u32 %v3527, 4294901760
    %3529 = vmatpush2.msra.mxu0 %v3528
    %3530 = vmatprep.subr.mxu0 0.0
    %v3531 = vand.u32 %v1262, 4294901760
    %v3532 = vsub.f32 %v1262, %v3531
    %v3533 = vand.u32 %v3532, 4294901760
    %3534 = vmatpush2.msra.mxu0 %v3533
    %3535 = vmatprep.subr.mxu0 0.0
    %v3536 = vand.u32 %v1261, 4294901760
    %v3537 = vsub.f32 %v1261, %v3536
    %v3538 = vand.u32 %v3537, 4294901760
    %3539 = vmatpush2.msra.mxu0 %v3538
    %3540 = vmatprep.subr.mxu0 0.0
    %v3541 = vand.u32 %v1260, 4294901760
    %v3542 = vsub.f32 %v1260, %v3541
    %v3543 = vand.u32 %v3542, 4294901760
    %3544 = vmatpush2.msra.mxu0 %v3543
    %v3545 = vand.u32 %v1236, 4294901760
    %3546 = vmatprep.mubr.f32.mxu0 %v3545
    %v3547 = vand.u32 %v1229, 4294901760
    %3548 = vmatmul.mubr.f32.gmra.mxu0 %v3547
    %v3549 = vpop.f32.mrf.mxu0
    %v3550 = vadd.f32 %v3382, %v3549
    %v3551 = vpop.f32.mrf.mxu0
    %3552 = vdwg.mxu0
    %3553 = vmatprep.subr.mxu0 0.0
    %v3554 = vand.u32 %v1259, 4294901760
    %3555 = vmatpush1.msra.mxu0 %v3554
    %3556 = vmatprep.subr.mxu0 0.0
    %v3557 = vand.u32 %v1258, 4294901760
    %3558 = vmatpush1.msra.mxu0 %v3557
    %3559 = vmatprep.subr.mxu0 0.0
    %v3560 = vand.u32 %v1257, 4294901760
    %3561 = vmatpush1.msra.mxu0 %v3560
    %3562 = vmatprep.subr.mxu0 0.0
    %v3563 = vand.u32 %v1256, 4294901760
    %3564 = vmatpush1.msra.mxu0 %v3563
    %3565 = vmatprep.subr.mxu0 0.0
    %v3566 = vand.u32 %v1255, 4294901760
    %3567 = vmatpush1.msra.mxu0 %v3566
    %3568 = vmatprep.subr.mxu0 0.0
    %v3569 = vand.u32 %v1254, 4294901760
    %3570 = vmatpush1.msra.mxu0 %v3569
    %3571 = vmatprep.subr.mxu0 0.0
    %v3572 = vand.u32 %v1253, 4294901760
    %3573 = vmatpush1.msra.mxu0 %v3572
    %3574 = vmatprep.subr.mxu0 0.0
    %v3575 = vand.u32 %v1252, 4294901760
    %3576 = vmatpush1.msra.mxu0 %v3575
    %3577 = vmatprep.subr.mxu0 0.0
    %v3578 = vand.u32 %v1251, 4294901760
    %3579 = vmatpush1.msra.mxu0 %v3578
    %3580 = vmatprep.subr.mxu0 0.0
    %v3581 = vand.u32 %v1250, 4294901760
    %3582 = vmatpush1.msra.mxu0 %v3581
    %3583 = vmatprep.subr.mxu0 0.0
    %v3584 = vand.u32 %v1249, 4294901760
    %3585 = vmatpush1.msra.mxu0 %v3584
    %3586 = vmatprep.subr.mxu0 0.0
    %v3587 = vand.u32 %v1248, 4294901760
    %3588 = vmatpush1.msra.mxu0 %v3587
    %3589 = vmatprep.subr.mxu0 0.0
    %v3590 = vand.u32 %v1247, 4294901760
    %3591 = vmatpush1.msra.mxu0 %v3590
    %3592 = vmatprep.subr.mxu0 0.0
    %v3593 = vand.u32 %v1246, 4294901760
    %3594 = vmatpush1.msra.mxu0 %v3593
    %3595 = vmatprep.subr.mxu0 0.0
    %v3596 = vand.u32 %v1245, 4294901760
    %3597 = vmatpush1.msra.mxu0 %v3596
    %3598 = vmatprep.subr.mxu0 0.0
    %v3599 = vand.u32 %v1244, 4294901760
    %3600 = vmatpush1.msra.mxu0 %v3599
    %3601 = vmatprep.subr.mxu0 0.0
    %v3602 = vand.u32 %v1275, 4294901760
    %3603 = vmatpush2.msra.mxu0 %v3602
    %3604 = vmatprep.subr.mxu0 0.0
    %v3605 = vand.u32 %v1274, 4294901760
    %3606 = vmatpush2.msra.mxu0 %v3605
    %3607 = vmatprep.subr.mxu0 0.0
    %v3608 = vand.u32 %v1273, 4294901760
    %3609 = vmatpush2.msra.mxu0 %v3608
    %3610 = vmatprep.subr.mxu0 0.0
    %v3611 = vand.u32 %v1272, 4294901760
    %3612 = vmatpush2.msra.mxu0 %v3611
    %3613 = vmatprep.subr.mxu0 0.0
    %v3614 = vand.u32 %v1271, 4294901760
    %3615 = vmatpush2.msra.mxu0 %v3614
    %3616 = vmatprep.subr.mxu0 0.0
    %v3617 = vand.u32 %v1270, 4294901760
    %3618 = vmatpush2.msra.mxu0 %v3617
    %3619 = vmatprep.subr.mxu0 0.0
    %v3620 = vand.u32 %v1269, 4294901760
    %3621 = vmatpush2.msra.mxu0 %v3620
    %3622 = vmatprep.subr.mxu0 0.0
    %v3623 = vand.u32 %v1268, 4294901760
    %3624 = vmatpush2.msra.mxu0 %v3623
    %3625 = vmatprep.subr.mxu0 0.0
    %v3626 = vand.u32 %v1267, 4294901760
    %3627 = vmatpush2.msra.mxu0 %v3626
    %3628 = vmatprep.subr.mxu0 0.0
    %v3629 = vand.u32 %v1266, 4294901760
    %3630 = vmatpush2.msra.mxu0 %v3629
    %3631 = vmatprep.subr.mxu0 0.0
    %v3632 = vand.u32 %v1265, 4294901760
    %3633 = vmatpush2.msra.mxu0 %v3632
    %3634 = vmatprep.subr.mxu0 0.0
    %v3635 = vand.u32 %v1264, 4294901760
    %3636 = vmatpush2.msra.mxu0 %v3635
    %3637 = vmatprep.subr.mxu0 0.0
    %v3638 = vand.u32 %v1263, 4294901760
    %3639 = vmatpush2.msra.mxu0 %v3638
    %3640 = vmatprep.subr.mxu0 0.0
    %v3641 = vand.u32 %v1262, 4294901760
    %3642 = vmatpush2.msra.mxu0 %v3641
    %3643 = vmatprep.subr.mxu0 0.0
    %v3644 = vand.u32 %v1261, 4294901760
    %3645 = vmatpush2.msra.mxu0 %v3644
    %3646 = vmatprep.subr.mxu0 0.0
    %v3647 = vand.u32 %v1260, 4294901760
    %3648 = vmatpush2.msra.mxu0 %v3647
    %v3649 = vand.u32 %v1236, 4294901760
    %3650 = vmatprep.mubr.f32.mxu0 %v3649
    %v3651 = vand.u32 %v1229, 4294901760
    %3652 = vmatmul.mubr.f32.gmra.mxu0 %v3651
    %v3653 = vpop.f32.mrf.mxu0
    %v3654 = vadd.f32 %v3550, %v3653
    %v3655 = vpop.f32.mrf.mxu0
    %3656 = vdwg.mxu0
    %3657 = vmatprep.subr.mxu0 0.0
    %v3658 = vand.u32 %v1291, 4294901760
    %3659 = vmatpush1.msra.mxu0 %v3658
    %3660 = vmatprep.subr.mxu0 0.0
    %v3661 = vand.u32 %v1290, 4294901760
    %3662 = vmatpush1.msra.mxu0 %v3661
    %3663 = vmatprep.subr.mxu0 0.0
    %v3664 = vand.u32 %v1289, 4294901760
    %3665 = vmatpush1.msra.mxu0 %v3664
    %3666 = vmatprep.subr.mxu0 0.0
    %v3667 = vand.u32 %v1288, 4294901760
    %3668 = vmatpush1.msra.mxu0 %v3667
    %3669 = vmatprep.subr.mxu0 0.0
    %v3670 = vand.u32 %v1287, 4294901760
    %3671 = vmatpush1.msra.mxu0 %v3670
    %3672 = vmatprep.subr.mxu0 0.0
    %v3673 = vand.u32 %v1286, 4294901760
    %3674 = vmatpush1.msra.mxu0 %v3673
    %3675 = vmatprep.subr.mxu0 0.0
    %v3676 = vand.u32 %v1285, 4294901760
    %3677 = vmatpush1.msra.mxu0 %v3676
    %3678 = vmatprep.subr.mxu0 0.0
    %v3679 = vand.u32 %v1284, 4294901760
    %3680 = vmatpush1.msra.mxu0 %v3679
    %3681 = vmatprep.subr.mxu0 0.0
    %v3682 = vand.u32 %v1283, 4294901760
    %3683 = vmatpush1.msra.mxu0 %v3682
    %3684 = vmatprep.subr.mxu0 0.0
    %v3685 = vand.u32 %v1282, 4294901760
    %3686 = vmatpush1.msra.mxu0 %v3685
    %3687 = vmatprep.subr.mxu0 0.0
    %v3688 = vand.u32 %v1281, 4294901760
    %3689 = vmatpush1.msra.mxu0 %v3688
    %3690 = vmatprep.subr.mxu0 0.0
    %v3691 = vand.u32 %v1280, 4294901760
    %3692 = vmatpush1.msra.mxu0 %v3691
    %3693 = vmatprep.subr.mxu0 0.0
    %v3694 = vand.u32 %v1279, 4294901760
    %3695 = vmatpush1.msra.mxu0 %v3694
    %3696 = vmatprep.subr.mxu0 0.0
    %v3697 = vand.u32 %v1278, 4294901760
    %3698 = vmatpush1.msra.mxu0 %v3697
    %3699 = vmatprep.subr.mxu0 0.0
    %v3700 = vand.u32 %v1277, 4294901760
    %3701 = vmatpush1.msra.mxu0 %v3700
    %3702 = vmatprep.subr.mxu0 0.0
    %v3703 = vand.u32 %v1276, 4294901760
    %3704 = vmatpush1.msra.mxu0 %v3703
    %3705 = vmatprep.subr.mxu0 0.0
    %3706 = vmatpush2.msra.mxu0 0.0
    %3707 = vmatprep.subr.mxu0 0.0
    %3708 = vmatpush2.msra.mxu0 0.0
    %3709 = vmatprep.subr.mxu0 0.0
    %3710 = vmatpush2.msra.mxu0 0.0
    %3711 = vmatprep.subr.mxu0 0.0
    %3712 = vmatpush2.msra.mxu0 0.0
    %3713 = vmatprep.subr.mxu0 0.0
    %3714 = vmatpush2.msra.mxu0 0.0
    %3715 = vmatprep.subr.mxu0 0.0
    %3716 = vmatpush2.msra.mxu0 0.0
    %3717 = vmatprep.subr.mxu0 0.0
    %3718 = vmatpush2.msra.mxu0 0.0
    %3719 = vmatprep.subr.mxu0 0.0
    %3720 = vmatpush2.msra.mxu0 0.0
    %3721 = vmatprep.subr.mxu0 0.0
    %3722 = vmatpush2.msra.mxu0 0.0
    %3723 = vmatprep.subr.mxu0 0.0
    %3724 = vmatpush2.msra.mxu0 0.0
    %3725 = vmatprep.subr.mxu0 0.0
    %3726 = vmatpush2.msra.mxu0 0.0
    %3727 = vmatprep.subr.mxu0 0.0
    %3728 = vmatpush2.msra.mxu0 0.0
    %3729 = vmatprep.subr.mxu0 0.0
    %3730 = vmatpush2.msra.mxu0 0.0
    %3731 = vmatprep.subr.mxu0 0.0
    %3732 = vmatpush2.msra.mxu0 0.0
    %3733 = vmatprep.subr.mxu0 0.0
    %3734 = vmatpush2.msra.mxu0 0.0
    %3735 = vmatprep.subr.mxu0 0.0
    %3736 = vmatpush2.msra.mxu0 0.0
    %3737 = vmatprep.mubr.f32.mxu0 0.0
    %v3738 = vand.u32 %v1243, 4294901760
    %v3739 = vsub.f32 %v1243, %v3738
    %v3740 = vand.u32 %v3739, 4294901760
    %v3741 = vsub.f32 %v3739, %v3740
    %v3742 = vand.u32 %v3741, 4294901760
    %3743 = vmatmul.mubr.f32.gmra.mxu0 %v3742
    %v3744 = vpop.f32.mrf.mxu0
    %v3745 = vadd.f32 %v3654, %v3744
    %v3746 = vpop.f32.mrf.mxu0
    %3747 = vdwg.mxu0
    %3748 = vmatprep.subr.mxu0 0.0
    %v3749 = vand.u32 %v1291, 4294901760
    %v3750 = vsub.f32 %v1291, %v3749
    %v3751 = vand.u32 %v3750, 4294901760
    %v3752 = vsub.f32 %v3750, %v3751
    %v3753 = vand.u32 %v3752, 4294901760
    %3754 = vmatpush1.msra.mxu0 %v3753
    %3755 = vmatprep.subr.mxu0 0.0
    %v3756 = vand.u32 %v1290, 4294901760
    %v3757 = vsub.f32 %v1290, %v3756
    %v3758 = vand.u32 %v3757, 4294901760
    %v3759 = vsub.f32 %v3757, %v3758
    %v3760 = vand.u32 %v3759, 4294901760
    %3761 = vmatpush1.msra.mxu0 %v3760
    %3762 = vmatprep.subr.mxu0 0.0
    %v3763 = vand.u32 %v1289, 4294901760
    %v3764 = vsub.f32 %v1289, %v3763
    %v3765 = vand.u32 %v3764, 4294901760
    %v3766 = vsub.f32 %v3764, %v3765
    %v3767 = vand.u32 %v3766, 4294901760
    %3768 = vmatpush1.msra.mxu0 %v3767
    %3769 = vmatprep.subr.mxu0 0.0
    %v3770 = vand.u32 %v1288, 4294901760
    %v3771 = vsub.f32 %v1288, %v3770
    %v3772 = vand.u32 %v3771, 4294901760
    %v3773 = vsub.f32 %v3771, %v3772
    %v3774 = vand.u32 %v3773, 4294901760
    %3775 = vmatpush1.msra.mxu0 %v3774
    %3776 = vmatprep.subr.mxu0 0.0
    %v3777 = vand.u32 %v1287, 4294901760
    %v3778 = vsub.f32 %v1287, %v3777
    %v3779 = vand.u32 %v3778, 4294901760
    %v3780 = vsub.f32 %v3778, %v3779
    %v3781 = vand.u32 %v3780, 4294901760
    %3782 = vmatpush1.msra.mxu0 %v3781
    %3783 = vmatprep.subr.mxu0 0.0
    %v3784 = vand.u32 %v1286, 4294901760
    %v3785 = vsub.f32 %v1286, %v3784
    %v3786 = vand.u32 %v3785, 4294901760
    %v3787 = vsub.f32 %v3785, %v3786
    %v3788 = vand.u32 %v3787, 4294901760
    %3789 = vmatpush1.msra.mxu0 %v3788
    %3790 = vmatprep.subr.mxu0 0.0
    %v3791 = vand.u32 %v1285, 4294901760
    %v3792 = vsub.f32 %v1285, %v3791
    %v3793 = vand.u32 %v3792, 4294901760
    %v3794 = vsub.f32 %v3792, %v3793
    %v3795 = vand.u32 %v3794, 4294901760
    %3796 = vmatpush1.msra.mxu0 %v3795
    %3797 = vmatprep.subr.mxu0 0.0
    %v3798 = vand.u32 %v1284, 4294901760
    %v3799 = vsub.f32 %v1284, %v3798
    %v3800 = vand.u32 %v3799, 4294901760
    %v3801 = vsub.f32 %v3799, %v3800
    %v3802 = vand.u32 %v3801, 4294901760
    %3803 = vmatpush1.msra.mxu0 %v3802
    %3804 = vmatprep.subr.mxu0 0.0
    %v3805 = vand.u32 %v1283, 4294901760
    %v3806 = vsub.f32 %v1283, %v3805
    %v3807 = vand.u32 %v3806, 4294901760
    %v3808 = vsub.f32 %v3806, %v3807
    %v3809 = vand.u32 %v3808, 4294901760
    %3810 = vmatpush1.msra.mxu0 %v3809
    %3811 = vmatprep.subr.mxu0 0.0
    %v3812 = vand.u32 %v1282, 4294901760
    %v3813 = vsub.f32 %v1282, %v3812
    %v3814 = vand.u32 %v3813, 4294901760
    %v3815 = vsub.f32 %v3813, %v3814
    %v3816 = vand.u32 %v3815, 4294901760
    %3817 = vmatpush1.msra.mxu0 %v3816
    %3818 = vmatprep.subr.mxu0 0.0
    %v3819 = vand.u32 %v1281, 4294901760
    %v3820 = vsub.f32 %v1281, %v3819
    %v3821 = vand.u32 %v3820, 4294901760
    %v3822 = vsub.f32 %v3820, %v3821
    %v3823 = vand.u32 %v3822, 4294901760
    %3824 = vmatpush1.msra.mxu0 %v3823
    %3825 = vmatprep.subr.mxu0 0.0
    %v3826 = vand.u32 %v1280, 4294901760
    %v3827 = vsub.f32 %v1280, %v3826
    %v3828 = vand.u32 %v3827, 4294901760
    %v3829 = vsub.f32 %v3827, %v3828
    %v3830 = vand.u32 %v3829, 4294901760
    %3831 = vmatpush1.msra.mxu0 %v3830
    %3832 = vmatprep.subr.mxu0 0.0
    %v3833 = vand.u32 %v1279, 4294901760
    %v3834 = vsub.f32 %v1279, %v3833
    %v3835 = vand.u32 %v3834, 4294901760
    %v3836 = vsub.f32 %v3834, %v3835
    %v3837 = vand.u32 %v3836, 4294901760
    %3838 = vmatpush1.msra.mxu0 %v3837
    %3839 = vmatprep.subr.mxu0 0.0
    %v3840 = vand.u32 %v1278, 4294901760
    %v3841 = vsub.f32 %v1278, %v3840
    %v3842 = vand.u32 %v3841, 4294901760
    %v3843 = vsub.f32 %v3841, %v3842
    %v3844 = vand.u32 %v3843, 4294901760
    %3845 = vmatpush1.msra.mxu0 %v3844
    %3846 = vmatprep.subr.mxu0 0.0
    %v3847 = vand.u32 %v1277, 4294901760
    %v3848 = vsub.f32 %v1277, %v3847
    %v3849 = vand.u32 %v3848, 4294901760
    %v3850 = vsub.f32 %v3848, %v3849
    %v3851 = vand.u32 %v3850, 4294901760
    %3852 = vmatpush1.msra.mxu0 %v3851
    %3853 = vmatprep.subr.mxu0 0.0
    %v3854 = vand.u32 %v1276, 4294901760
    %v3855 = vsub.f32 %v1276, %v3854
    %v3856 = vand.u32 %v3855, 4294901760
    %v3857 = vsub.f32 %v3855, %v3856
    %v3858 = vand.u32 %v3857, 4294901760
    %3859 = vmatpush1.msra.mxu0 %v3858
    %3860 = vmatprep.subr.mxu0 0.0
    %3861 = vmatpush2.msra.mxu0 0.0
    %3862 = vmatprep.subr.mxu0 0.0
    %3863 = vmatpush2.msra.mxu0 0.0
    %3864 = vmatprep.subr.mxu0 0.0
    %3865 = vmatpush2.msra.mxu0 0.0
    %3866 = vmatprep.subr.mxu0 0.0
    %3867 = vmatpush2.msra.mxu0 0.0
    %3868 = vmatprep.subr.mxu0 0.0
    %3869 = vmatpush2.msra.mxu0 0.0
    %3870 = vmatprep.subr.mxu0 0.0
    %3871 = vmatpush2.msra.mxu0 0.0
    %3872 = vmatprep.subr.mxu0 0.0
    %3873 = vmatpush2.msra.mxu0 0.0
    %3874 = vmatprep.subr.mxu0 0.0
    %3875 = vmatpush2.msra.mxu0 0.0
    %3876 = vmatprep.subr.mxu0 0.0
    %3877 = vmatpush2.msra.mxu0 0.0
    %3878 = vmatprep.subr.mxu0 0.0
    %3879 = vmatpush2.msra.mxu0 0.0
    %3880 = vmatprep.subr.mxu0 0.0
    %3881 = vmatpush2.msra.mxu0 0.0
    %3882 = vmatprep.subr.mxu0 0.0
    %3883 = vmatpush2.msra.mxu0 0.0
    %3884 = vmatprep.subr.mxu0 0.0
    %3885 = vmatpush2.msra.mxu0 0.0
    %3886 = vmatprep.subr.mxu0 0.0
    %3887 = vmatpush2.msra.mxu0 0.0
    %3888 = vmatprep.subr.mxu0 0.0
    %3889 = vmatpush2.msra.mxu0 0.0
    %3890 = vmatprep.subr.mxu0 0.0
    %3891 = vmatpush2.msra.mxu0 0.0
    %3892 = vmatprep.mubr.f32.mxu0 0.0
    %v3893 = vand.u32 %v1243, 4294901760
    %3894 = vmatmul.mubr.f32.gmra.mxu0 %v3893
    %v3895 = vpop.f32.mrf.mxu0
    %v3896 = vadd.f32 %v3745, %v3895
    %v3897 = vpop.f32.mrf.mxu0
    %3898 = vdwg.mxu0
    %3899 = vmatprep.subr.mxu0 0.0
    %v3900 = vand.u32 %v1291, 4294901760
    %v3901 = vsub.f32 %v1291, %v3900
    %3902 = vmatpush1.msra.mxu0 %v3901
    %3903 = vmatprep.subr.mxu0 0.0
    %v3904 = vand.u32 %v1290, 4294901760
    %v3905 = vsub.f32 %v1290, %v3904
    %3906 = vmatpush1.msra.mxu0 %v3905
    %3907 = vmatprep.subr.mxu0 0.0
    %v3908 = vand.u32 %v1289, 4294901760
    %v3909 = vsub.f32 %v1289, %v3908
    %3910 = vmatpush1.msra.mxu0 %v3909
    %3911 = vmatprep.subr.mxu0 0.0
    %v3912 = vand.u32 %v1288, 4294901760
    %v3913 = vsub.f32 %v1288, %v3912
    %3914 = vmatpush1.msra.mxu0 %v3913
    %3915 = vmatprep.subr.mxu0 0.0
    %v3916 = vand.u32 %v1287, 4294901760
    %v3917 = vsub.f32 %v1287, %v3916
    %3918 = vmatpush1.msra.mxu0 %v3917
    %3919 = vmatprep.subr.mxu0 0.0
    %v3920 = vand.u32 %v1286, 4294901760
    %v3921 = vsub.f32 %v1286, %v3920
    %3922 = vmatpush1.msra.mxu0 %v3921
    %3923 = vmatprep.subr.mxu0 0.0
    %v3924 = vand.u32 %v1285, 4294901760
    %v3925 = vsub.f32 %v1285, %v3924
    %3926 = vmatpush1.msra.mxu0 %v3925
    %3927 = vmatprep.subr.mxu0 0.0
    %v3928 = vand.u32 %v1284, 4294901760
    %v3929 = vsub.f32 %v1284, %v3928
    %3930 = vmatpush1.msra.mxu0 %v3929
    %3931 = vmatprep.subr.mxu0 0.0
    %v3932 = vand.u32 %v1283, 4294901760
    %v3933 = vsub.f32 %v1283, %v3932
    %3934 = vmatpush1.msra.mxu0 %v3933
    %3935 = vmatprep.subr.mxu0 0.0
    %v3936 = vand.u32 %v1282, 4294901760
    %v3937 = vsub.f32 %v1282, %v3936
    %3938 = vmatpush1.msra.mxu0 %v3937
    %3939 = vmatprep.subr.mxu0 0.0
    %v3940 = vand.u32 %v1281, 4294901760
    %v3941 = vsub.f32 %v1281, %v3940
    %3942 = vmatpush1.msra.mxu0 %v3941
    %3943 = vmatprep.subr.mxu0 0.0
    %v3944 = vand.u32 %v1280, 4294901760
    %v3945 = vsub.f32 %v1280, %v3944
    %3946 = vmatpush1.msra.mxu0 %v3945
    %3947 = vmatprep.subr.mxu0 0.0
    %v3948 = vand.u32 %v1279, 4294901760
    %v3949 = vsub.f32 %v1279, %v3948
    %3950 = vmatpush1.msra.mxu0 %v3949
    %3951 = vmatprep.subr.mxu0 0.0
    %v3952 = vand.u32 %v1278, 4294901760
    %v3953 = vsub.f32 %v1278, %v3952
    %3954 = vmatpush1.msra.mxu0 %v3953
    %3955 = vmatprep.subr.mxu0 0.0
    %v3956 = vand.u32 %v1277, 4294901760
    %v3957 = vsub.f32 %v1277, %v3956
    %3958 = vmatpush1.msra.mxu0 %v3957
    %3959 = vmatprep.subr.mxu0 0.0
    %v3960 = vand.u32 %v1276, 4294901760
    %v3961 = vsub.f32 %v1276, %v3960
    %3962 = vmatpush1.msra.mxu0 %v3961
    %3963 = vmatprep.subr.mxu0 0.0
    %3964 = vmatpush2.msra.mxu0 0.0
    %3965 = vmatprep.subr.mxu0 0.0
    %3966 = vmatpush2.msra.mxu0 0.0
    %3967 = vmatprep.subr.mxu0 0.0
    %3968 = vmatpush2.msra.mxu0 0.0
    %3969 = vmatprep.subr.mxu0 0.0
    %3970 = vmatpush2.msra.mxu0 0.0
    %3971 = vmatprep.subr.mxu0 0.0
    %3972 = vmatpush2.msra.mxu0 0.0
    %3973 = vmatprep.subr.mxu0 0.0
    %3974 = vmatpush2.msra.mxu0 0.0
    %3975 = vmatprep.subr.mxu0 0.0
    %3976 = vmatpush2.msra.mxu0 0.0
    %3977 = vmatprep.subr.mxu0 0.0
    %3978 = vmatpush2.msra.mxu0 0.0
    %3979 = vmatprep.subr.mxu0 0.0
    %3980 = vmatpush2.msra.mxu0 0.0
    %3981 = vmatprep.subr.mxu0 0.0
    %3982 = vmatpush2.msra.mxu0 0.0
    %3983 = vmatprep.subr.mxu0 0.0
    %3984 = vmatpush2.msra.mxu0 0.0
    %3985 = vmatprep.subr.mxu0 0.0
    %3986 = vmatpush2.msra.mxu0 0.0
    %3987 = vmatprep.subr.mxu0 0.0
    %3988 = vmatpush2.msra.mxu0 0.0
    %3989 = vmatprep.subr.mxu0 0.0
    %3990 = vmatpush2.msra.mxu0 0.0
    %3991 = vmatprep.subr.mxu0 0.0
    %3992 = vmatpush2.msra.mxu0 0.0
    %3993 = vmatprep.subr.mxu0 0.0
    %3994 = vmatpush2.msra.mxu0 0.0
    %3995 = vmatprep.mubr.f32.mxu0 0.0
    %v3996 = vand.u32 %v1243, 4294901760
    %v3997 = vsub.f32 %v1243, %v3996
    %3998 = vmatmul.mubr.f32.gmra.mxu0 %v3997
    %v3999 = vpop.f32.mrf.mxu0
    %v4000 = vadd.f32 %v3896, %v3999
    %v4001 = vpop.f32.mrf.mxu0
    %4002 = vdwg.mxu0
    %4003 = vmatprep.subr.mxu0 0.0
    %v4004 = vand.u32 %v1291, 4294901760
    %4005 = vmatpush1.msra.mxu0 %v4004
    %4006 = vmatprep.subr.mxu0 0.0
    %v4007 = vand.u32 %v1290, 4294901760
    %4008 = vmatpush1.msra.mxu0 %v4007
    %4009 = vmatprep.subr.mxu0 0.0
    %v4010 = vand.u32 %v1289, 4294901760
    %4011 = vmatpush1.msra.mxu0 %v4010
    %4012 = vmatprep.subr.mxu0 0.0
    %v4013 = vand.u32 %v1288, 4294901760
    %4014 = vmatpush1.msra.mxu0 %v4013
    %4015 = vmatprep.subr.mxu0 0.0
    %v4016 = vand.u32 %v1287, 4294901760
    %4017 = vmatpush1.msra.mxu0 %v4016
    %4018 = vmatprep.subr.mxu0 0.0
    %v4019 = vand.u32 %v1286, 4294901760
    %4020 = vmatpush1.msra.mxu0 %v4019
    %4021 = vmatprep.subr.mxu0 0.0
    %v4022 = vand.u32 %v1285, 4294901760
    %4023 = vmatpush1.msra.mxu0 %v4022
    %4024 = vmatprep.subr.mxu0 0.0
    %v4025 = vand.u32 %v1284, 4294901760
    %4026 = vmatpush1.msra.mxu0 %v4025
    %4027 = vmatprep.subr.mxu0 0.0
    %v4028 = vand.u32 %v1283, 4294901760
    %4029 = vmatpush1.msra.mxu0 %v4028
    %4030 = vmatprep.subr.mxu0 0.0
    %v4031 = vand.u32 %v1282, 4294901760
    %4032 = vmatpush1.msra.mxu0 %v4031
    %4033 = vmatprep.subr.mxu0 0.0
    %v4034 = vand.u32 %v1281, 4294901760
    %4035 = vmatpush1.msra.mxu0 %v4034
    %4036 = vmatprep.subr.mxu0 0.0
    %v4037 = vand.u32 %v1280, 4294901760
    %4038 = vmatpush1.msra.mxu0 %v4037
    %4039 = vmatprep.subr.mxu0 0.0
    %v4040 = vand.u32 %v1279, 4294901760
    %4041 = vmatpush1.msra.mxu0 %v4040
    %4042 = vmatprep.subr.mxu0 0.0
    %v4043 = vand.u32 %v1278, 4294901760
    %4044 = vmatpush1.msra.mxu0 %v4043
    %4045 = vmatprep.subr.mxu0 0.0
    %v4046 = vand.u32 %v1277, 4294901760
    %4047 = vmatpush1.msra.mxu0 %v4046
    %4048 = vmatprep.subr.mxu0 0.0
    %v4049 = vand.u32 %v1276, 4294901760
    %4050 = vmatpush1.msra.mxu0 %v4049
    %4051 = vmatprep.subr.mxu0 0.0
    %4052 = vmatpush2.msra.mxu0 0.0
    %4053 = vmatprep.subr.mxu0 0.0
    %4054 = vmatpush2.msra.mxu0 0.0
    %4055 = vmatprep.subr.mxu0 0.0
    %4056 = vmatpush2.msra.mxu0 0.0
    %4057 = vmatprep.subr.mxu0 0.0
    %4058 = vmatpush2.msra.mxu0 0.0
    %4059 = vmatprep.subr.mxu0 0.0
    %4060 = vmatpush2.msra.mxu0 0.0
    %4061 = vmatprep.subr.mxu0 0.0
    %4062 = vmatpush2.msra.mxu0 0.0
    %4063 = vmatprep.subr.mxu0 0.0
    %4064 = vmatpush2.msra.mxu0 0.0
    %4065 = vmatprep.subr.mxu0 0.0
    %4066 = vmatpush2.msra.mxu0 0.0
    %4067 = vmatprep.subr.mxu0 0.0
    %4068 = vmatpush2.msra.mxu0 0.0
    %4069 = vmatprep.subr.mxu0 0.0
    %4070 = vmatpush2.msra.mxu0 0.0
    %4071 = vmatprep.subr.mxu0 0.0
    %4072 = vmatpush2.msra.mxu0 0.0
    %4073 = vmatprep.subr.mxu0 0.0
    %4074 = vmatpush2.msra.mxu0 0.0
    %4075 = vmatprep.subr.mxu0 0.0
    %4076 = vmatpush2.msra.mxu0 0.0
    %4077 = vmatprep.subr.mxu0 0.0
    %4078 = vmatpush2.msra.mxu0 0.0
    %4079 = vmatprep.subr.mxu0 0.0
    %4080 = vmatpush2.msra.mxu0 0.0
    %4081 = vmatprep.subr.mxu0 0.0
    %4082 = vmatpush2.msra.mxu0 0.0
    %4083 = vmatprep.mubr.f32.mxu0 0.0
    %v4084 = vand.u32 %v1243, 4294901760
    %v4085 = vsub.f32 %v1243, %v4084
    %v4086 = vand.u32 %v4085, 4294901760
    %4087 = vmatmul.mubr.f32.gmra.mxu0 %v4086
    %v4088 = vpop.f32.mrf.mxu0
    %v4089 = vadd.f32 %v4000, %v4088
    %v4090 = vpop.f32.mrf.mxu0
    %4091 = vdwg.mxu0
    %4092 = vmatprep.subr.mxu0 0.0
    %v4093 = vand.u32 %v1291, 4294901760
    %v4094 = vsub.f32 %v1291, %v4093
    %v4095 = vand.u32 %v4094, 4294901760
    %4096 = vmatpush1.msra.mxu0 %v4095
    %4097 = vmatprep.subr.mxu0 0.0
    %v4098 = vand.u32 %v1290, 4294901760
    %v4099 = vsub.f32 %v1290, %v4098
    %v4100 = vand.u32 %v4099, 4294901760
    %4101 = vmatpush1.msra.mxu0 %v4100
    %4102 = vmatprep.subr.mxu0 0.0
    %v4103 = vand.u32 %v1289, 4294901760
    %v4104 = vsub.f32 %v1289, %v4103
    %v4105 = vand.u32 %v4104, 4294901760
    %4106 = vmatpush1.msra.mxu0 %v4105
    %4107 = vmatprep.subr.mxu0 0.0
    %v4108 = vand.u32 %v1288, 4294901760
    %v4109 = vsub.f32 %v1288, %v4108
    %v4110 = vand.u32 %v4109, 4294901760
    %4111 = vmatpush1.msra.mxu0 %v4110
    %4112 = vmatprep.subr.mxu0 0.0
    %v4113 = vand.u32 %v1287, 4294901760
    %v4114 = vsub.f32 %v1287, %v4113
    %v4115 = vand.u32 %v4114, 4294901760
    %4116 = vmatpush1.msra.mxu0 %v4115
    %4117 = vmatprep.subr.mxu0 0.0
    %v4118 = vand.u32 %v1286, 4294901760
    %v4119 = vsub.f32 %v1286, %v4118
    %v4120 = vand.u32 %v4119, 4294901760
    %4121 = vmatpush1.msra.mxu0 %v4120
    %4122 = vmatprep.subr.mxu0 0.0
    %v4123 = vand.u32 %v1285, 4294901760
    %v4124 = vsub.f32 %v1285, %v4123
    %v4125 = vand.u32 %v4124, 4294901760
    %4126 = vmatpush1.msra.mxu0 %v4125
    %4127 = vmatprep.subr.mxu0 0.0
    %v4128 = vand.u32 %v1284, 4294901760
    %v4129 = vsub.f32 %v1284, %v4128
    %v4130 = vand.u32 %v4129, 4294901760
    %4131 = vmatpush1.msra.mxu0 %v4130
    %4132 = vmatprep.subr.mxu0 0.0
    %v4133 = vand.u32 %v1283, 4294901760
    %v4134 = vsub.f32 %v1283, %v4133
    %v4135 = vand.u32 %v4134, 4294901760
    %4136 = vmatpush1.msra.mxu0 %v4135
    %4137 = vmatprep.subr.mxu0 0.0
    %v4138 = vand.u32 %v1282, 4294901760
    %v4139 = vsub.f32 %v1282, %v4138
    %v4140 = vand.u32 %v4139, 4294901760
    %4141 = vmatpush1.msra.mxu0 %v4140
    %4142 = vmatprep.subr.mxu0 0.0
    %v4143 = vand.u32 %v1281, 4294901760
    %v4144 = vsub.f32 %v1281, %v4143
    %v4145 = vand.u32 %v4144, 4294901760
    %4146 = vmatpush1.msra.mxu0 %v4145
    %4147 = vmatprep.subr.mxu0 0.0
    %v4148 = vand.u32 %v1280, 4294901760
    %v4149 = vsub.f32 %v1280, %v4148
    %v4150 = vand.u32 %v4149, 4294901760
    %4151 = vmatpush1.msra.mxu0 %v4150
    %4152 = vmatprep.subr.mxu0 0.0
    %v4153 = vand.u32 %v1279, 4294901760
    %v4154 = vsub.f32 %v1279, %v4153
    %v4155 = vand.u32 %v4154, 4294901760
    %4156 = vmatpush1.msra.mxu0 %v4155
    %4157 = vmatprep.subr.mxu0 0.0
    %v4158 = vand.u32 %v1278, 4294901760
    %v4159 = vsub.f32 %v1278, %v4158
    %v4160 = vand.u32 %v4159, 4294901760
    %4161 = vmatpush1.msra.mxu0 %v4160
    %4162 = vmatprep.subr.mxu0 0.0
    %v4163 = vand.u32 %v1277, 4294901760
    %v4164 = vsub.f32 %v1277, %v4163
    %v4165 = vand.u32 %v4164, 4294901760
    %4166 = vmatpush1.msra.mxu0 %v4165
    %4167 = vmatprep.subr.mxu0 0.0
    %v4168 = vand.u32 %v1276, 4294901760
    %v4169 = vsub.f32 %v1276, %v4168
    %v4170 = vand.u32 %v4169, 4294901760
    %4171 = vmatpush1.msra.mxu0 %v4170
    %4172 = vmatprep.subr.mxu0 0.0
    %4173 = vmatpush2.msra.mxu0 0.0
    %4174 = vmatprep.subr.mxu0 0.0
    %4175 = vmatpush2.msra.mxu0 0.0
    %4176 = vmatprep.subr.mxu0 0.0
    %4177 = vmatpush2.msra.mxu0 0.0
    %4178 = vmatprep.subr.mxu0 0.0
    %4179 = vmatpush2.msra.mxu0 0.0
    %4180 = vmatprep.subr.mxu0 0.0
    %4181 = vmatpush2.msra.mxu0 0.0
    %4182 = vmatprep.subr.mxu0 0.0
    %4183 = vmatpush2.msra.mxu0 0.0
    %4184 = vmatprep.subr.mxu0 0.0
    %4185 = vmatpush2.msra.mxu0 0.0
    %4186 = vmatprep.subr.mxu0 0.0
    %4187 = vmatpush2.msra.mxu0 0.0
    %4188 = vmatprep.subr.mxu0 0.0
    %4189 = vmatpush2.msra.mxu0 0.0
    %4190 = vmatprep.subr.mxu0 0.0
    %4191 = vmatpush2.msra.mxu0 0.0
    %4192 = vmatprep.subr.mxu0 0.0
    %4193 = vmatpush2.msra.mxu0 0.0
    %4194 = vmatprep.subr.mxu0 0.0
    %4195 = vmatpush2.msra.mxu0 0.0
    %4196 = vmatprep.subr.mxu0 0.0
    %4197 = vmatpush2.msra.mxu0 0.0
    %4198 = vmatprep.subr.mxu0 0.0
    %4199 = vmatpush2.msra.mxu0 0.0
    %4200 = vmatprep.subr.mxu0 0.0
    %4201 = vmatpush2.msra.mxu0 0.0
    %4202 = vmatprep.subr.mxu0 0.0
    %4203 = vmatpush2.msra.mxu0 0.0
    %4204 = vmatprep.mubr.f32.mxu0 0.0
    %v4205 = vand.u32 %v1243, 4294901760
    %4206 = vmatmul.mubr.f32.gmra.mxu0 %v4205
    %v4207 = vpop.f32.mrf.mxu0
    %v4208 = vadd.f32 %v4089, %v4207
    %v4209 = vpop.f32.mrf.mxu0
    %4210 = vdwg.mxu0
    %4211 = vmatprep.subr.mxu0 0.0
    %v4212 = vand.u32 %v1291, 4294901760
    %4213 = vmatpush1.msra.mxu0 %v4212
    %4214 = vmatprep.subr.mxu0 0.0
    %v4215 = vand.u32 %v1290, 4294901760
    %4216 = vmatpush1.msra.mxu0 %v4215
    %4217 = vmatprep.subr.mxu0 0.0
    %v4218 = vand.u32 %v1289, 4294901760
    %4219 = vmatpush1.msra.mxu0 %v4218
    %4220 = vmatprep.subr.mxu0 0.0
    %v4221 = vand.u32 %v1288, 4294901760
    %4222 = vmatpush1.msra.mxu0 %v4221
    %4223 = vmatprep.subr.mxu0 0.0
    %v4224 = vand.u32 %v1287, 4294901760
    %4225 = vmatpush1.msra.mxu0 %v4224
    %4226 = vmatprep.subr.mxu0 0.0
    %v4227 = vand.u32 %v1286, 4294901760
    %4228 = vmatpush1.msra.mxu0 %v4227
    %4229 = vmatprep.subr.mxu0 0.0
    %v4230 = vand.u32 %v1285, 4294901760
    %4231 = vmatpush1.msra.mxu0 %v4230
    %4232 = vmatprep.subr.mxu0 0.0
    %v4233 = vand.u32 %v1284, 4294901760
    %4234 = vmatpush1.msra.mxu0 %v4233
    %4235 = vmatprep.subr.mxu0 0.0
    %v4236 = vand.u32 %v1283, 4294901760
    %4237 = vmatpush1.msra.mxu0 %v4236
    %4238 = vmatprep.subr.mxu0 0.0
    %v4239 = vand.u32 %v1282, 4294901760
    %4240 = vmatpush1.msra.mxu0 %v4239
    %4241 = vmatprep.subr.mxu0 0.0
    %v4242 = vand.u32 %v1281, 4294901760
    %4243 = vmatpush1.msra.mxu0 %v4242
    %4244 = vmatprep.subr.mxu0 0.0
    %v4245 = vand.u32 %v1280, 4294901760
    %4246 = vmatpush1.msra.mxu0 %v4245
    %4247 = vmatprep.subr.mxu0 0.0
    %v4248 = vand.u32 %v1279, 4294901760
    %4249 = vmatpush1.msra.mxu0 %v4248
    %4250 = vmatprep.subr.mxu0 0.0
    %v4251 = vand.u32 %v1278, 4294901760
    %4252 = vmatpush1.msra.mxu0 %v4251
    %4253 = vmatprep.subr.mxu0 0.0
    %v4254 = vand.u32 %v1277, 4294901760
    %4255 = vmatpush1.msra.mxu0 %v4254
    %4256 = vmatprep.subr.mxu0 0.0
    %v4257 = vand.u32 %v1276, 4294901760
    %4258 = vmatpush1.msra.mxu0 %v4257
    %4259 = vmatprep.subr.mxu0 0.0
    %4260 = vmatpush2.msra.mxu0 0.0
    %4261 = vmatprep.subr.mxu0 0.0
    %4262 = vmatpush2.msra.mxu0 0.0
    %4263 = vmatprep.subr.mxu0 0.0
    %4264 = vmatpush2.msra.mxu0 0.0
    %4265 = vmatprep.subr.mxu0 0.0
    %4266 = vmatpush2.msra.mxu0 0.0
    %4267 = vmatprep.subr.mxu0 0.0
    %4268 = vmatpush2.msra.mxu0 0.0
    %4269 = vmatprep.subr.mxu0 0.0
    %4270 = vmatpush2.msra.mxu0 0.0
    %4271 = vmatprep.subr.mxu0 0.0
    %4272 = vmatpush2.msra.mxu0 0.0
    %4273 = vmatprep.subr.mxu0 0.0
    %4274 = vmatpush2.msra.mxu0 0.0
    %4275 = vmatprep.subr.mxu0 0.0
    %4276 = vmatpush2.msra.mxu0 0.0
    %4277 = vmatprep.subr.mxu0 0.0
    %4278 = vmatpush2.msra.mxu0 0.0
    %4279 = vmatprep.subr.mxu0 0.0
    %4280 = vmatpush2.msra.mxu0 0.0
    %4281 = vmatprep.subr.mxu0 0.0
    %4282 = vmatpush2.msra.mxu0 0.0
    %4283 = vmatprep.subr.mxu0 0.0
    %4284 = vmatpush2.msra.mxu0 0.0
    %4285 = vmatprep.subr.mxu0 0.0
    %4286 = vmatpush2.msra.mxu0 0.0
    %4287 = vmatprep.subr.mxu0 0.0
    %4288 = vmatpush2.msra.mxu0 0.0
    %4289 = vmatprep.subr.mxu0 0.0
    %4290 = vmatpush2.msra.mxu0 0.0
    %4291 = vmatprep.mubr.f32.mxu0 0.0
    %v4292 = vand.u32 %v1243, 4294901760
    %4293 = vmatmul.mubr.f32.gmra.mxu0 %v4292
    %v4294 = vpop.f32.mrf.mxu0
    %v4295 = vadd.f32 %v4208, %v4294
    %v4296 = vpop.f32.mrf.mxu0
    %4297 = vdwg.mxu0
    %v4298 = vmul.f32 %v2792, 0.00390625
    %v4299 = vmul.f32 %v4295, 0.00390625
    %v4300 = vmul.f32 %v4298, %v4298
    %v4301 = vsub.f32 %v4299, %v4300
    %v4302 = vadd.f32 %v4301, 1e-05
    %v4303 = vrsqrt.pop %v4302
    %v4304 = vld [vmem:[#allocation10] sm:$0xff]
    %v4305 = vld [vmem:[#allocation10 + $0x8] sm:$0xff]
    %v4306 = vld [vmem:[#allocation10 + $0x10] sm:$0xff]
    %v4307 = vld [vmem:[#allocation10 + $0x18] sm:$0xff]
    %v4308 = vld [vmem:[#allocation10 + $0x20] sm:$0xff]
    %v4309 = vld [vmem:[#allocation10 + $0x28] sm:$0xff]
    %v4310 = vld [vmem:[#allocation10 + $0x30] sm:$0xff]
    %v4311 = vld [vmem:[#allocation10 + $0x38] sm:$0xff]
    %v4312 = vld [vmem:[#allocation10 + $0x40] sm:$0xff]
    %v4313 = vld [vmem:[#allocation10 + $0x48] sm:$0xff]
    %v4314 = vld [vmem:[#allocation10 + $0x50] sm:$0xff]
    %v4315 = vld [vmem:[#allocation10 + $0x58] sm:$0xff]
    %v4316 = vld [vmem:[#allocation10 + $0x60] sm:$0xff]
    %v4317 = vld [vmem:[#allocation10 + $0x68] sm:$0xff]
    %v4318 = vld [vmem:[#allocation10 + $0x70] sm:$0xff]
    %v4319 = vld [vmem:[#allocation10 + $0x78] sm:$0xff]
    %v4320 = vld [vmem:[#allocation10 + $0x80] sm:$0xff]
    %v4321 = vld [vmem:[#allocation10 + $0x88] sm:$0xff]
    %v4322 = vld [vmem:[#allocation10 + $0x90] sm:$0xff]
    %v4323 = vld [vmem:[#allocation10 + $0x98] sm:$0xff]
    %v4324 = vld [vmem:[#allocation10 + $0xa0] sm:$0xff]
    %v4325 = vld [vmem:[#allocation10 + $0xa8] sm:$0xff]
    %v4326 = vld [vmem:[#allocation10 + $0xb0] sm:$0xff]
    %v4327 = vld [vmem:[#allocation10 + $0xb8] sm:$0xff]
    %v4328 = vld [vmem:[#allocation10 + $0xc0] sm:$0xff]
    %v4329 = vld [vmem:[#allocation10 + $0xc8] sm:$0xff]
    %v4330 = vld [vmem:[#allocation10 + $0xd0] sm:$0xff]
    %v4331 = vld [vmem:[#allocation10 + $0xd8] sm:$0xff]
    %v4332 = vld [vmem:[#allocation10 + $0xe0] sm:$0xff]
    %v4333 = vld [vmem:[#allocation10 + $0xe8] sm:$0xff]
    %v4334 = vld [vmem:[#allocation10 + $0xf0] sm:$0xff]
    %v4335 = vld [vmem:[#allocation10 + $0xf8] sm:$0xff]
    %v4336 = vld [vmem:[#allocation10 + $0x100] sm:$0xff]
    %v4337 = vld [vmem:[#allocation10 + $0x108] sm:$0xff]
    %v4338 = vld [vmem:[#allocation10 + $0x110] sm:$0xff]
    %v4339 = vld [vmem:[#allocation10 + $0x118] sm:$0xff]
    %v4340 = vld [vmem:[#allocation10 + $0x120] sm:$0xff]
    %v4341 = vld [vmem:[#allocation10 + $0x128] sm:$0xff]
    %v4342 = vld [vmem:[#allocation10 + $0x130] sm:$0xff]
    %v4343 = vld [vmem:[#allocation10 + $0x138] sm:$0xff]
    %v4344 = vld [vmem:[#allocation10 + $0x140] sm:$0xff]
    %v4345 = vld [vmem:[#allocation10 + $0x148] sm:$0xff]
    %v4346 = vld [vmem:[#allocation10 + $0x150] sm:$0xff]
    %v4347 = vld [vmem:[#allocation10 + $0x158] sm:$0xff]
    %v4348 = vld [vmem:[#allocation10 + $0x160] sm:$0xff]
    %v4349 = vld [vmem:[#allocation10 + $0x168] sm:$0xff]
    %v4350 = vld [vmem:[#allocation10 + $0x170] sm:$0xff]
    %v4351 = vld [vmem:[#allocation10 + $0x178] sm:$0xff]
    %v4352 = vand.u32 %v4350, 4294901760
    %4353 = vmatprep.subr.mxu0 %v4352
    %v4354 = vand.u32 %v4349, 4294901760
    %4355 = vmatpush1.msra.mxu0 %v4354
    %v4356 = vand.u32 %v4347, 4294901760
    %4357 = vmatprep.subr.mxu0 %v4356
    %v4358 = vand.u32 %v4346, 4294901760
    %4359 = vmatpush1.msra.mxu0 %v4358
    %v4360 = vand.u32 %v4344, 4294901760
    %4361 = vmatprep.subr.mxu0 %v4360
    %v4362 = vand.u32 %v4343, 4294901760
    %4363 = vmatpush1.msra.mxu0 %v4362
    %v4364 = vand.u32 %v4341, 4294901760
    %4365 = vmatprep.subr.mxu0 %v4364
    %v4366 = vand.u32 %v4340, 4294901760
    %4367 = vmatpush1.msra.mxu0 %v4366
    %v4368 = vand.u32 %v4338, 4294901760
    %4369 = vmatprep.subr.mxu0 %v4368
    %v4370 = vand.u32 %v4337, 4294901760
    %4371 = vmatpush1.msra.mxu0 %v4370
    %v4372 = vand.u32 %v4335, 4294901760
    %4373 = vmatprep.subr.mxu0 %v4372
    %v4374 = vand.u32 %v4334, 4294901760
    %4375 = vmatpush1.msra.mxu0 %v4374
    %v4376 = vand.u32 %v4332, 4294901760
    %4377 = vmatprep.subr.mxu0 %v4376
    %v4378 = vand.u32 %v4331, 4294901760
    %4379 = vmatpush1.msra.mxu0 %v4378
    %v4380 = vand.u32 %v4329, 4294901760
    %4381 = vmatprep.subr.mxu0 %v4380
    %v4382 = vand.u32 %v4328, 4294901760
    %4383 = vmatpush1.msra.mxu0 %v4382
    %v4384 = vand.u32 %v4326, 4294901760
    %4385 = vmatprep.subr.mxu0 %v4384
    %v4386 = vand.u32 %v4325, 4294901760
    %4387 = vmatpush1.msra.mxu0 %v4386
    %v4388 = vand.u32 %v4323, 4294901760
    %4389 = vmatprep.subr.mxu0 %v4388
    %v4390 = vand.u32 %v4322, 4294901760
    %4391 = vmatpush1.msra.mxu0 %v4390
    %v4392 = vand.u32 %v4320, 4294901760
    %4393 = vmatprep.subr.mxu0 %v4392
    %v4394 = vand.u32 %v4319, 4294901760
    %4395 = vmatpush1.msra.mxu0 %v4394
    %v4396 = vand.u32 %v4317, 4294901760
    %4397 = vmatprep.subr.mxu0 %v4396
    %v4398 = vand.u32 %v4316, 4294901760
    %4399 = vmatpush1.msra.mxu0 %v4398
    %v4400 = vand.u32 %v4314, 4294901760
    %4401 = vmatprep.subr.mxu0 %v4400
    %v4402 = vand.u32 %v4313, 4294901760
    %4403 = vmatpush1.msra.mxu0 %v4402
    %v4404 = vand.u32 %v4311, 4294901760
    %4405 = vmatprep.subr.mxu0 %v4404
    %v4406 = vand.u32 %v4310, 4294901760
    %4407 = vmatpush1.msra.mxu0 %v4406
    %v4408 = vand.u32 %v4308, 4294901760
    %4409 = vmatprep.subr.mxu0 %v4408
    %v4410 = vand.u32 %v4307, 4294901760
    %4411 = vmatpush1.msra.mxu0 %v4410
    %v4412 = vand.u32 %v4305, 4294901760
    %4413 = vmatprep.subr.mxu0 %v4412
    %v4414 = vand.u32 %v4304, 4294901760
    %4415 = vmatpush1.msra.mxu0 %v4414
    %4416 = vmatprep.subr.mxu0 0.0
    %4417 = vmatpush2.msra.mxu0 0.0
    %4418 = vmatprep.subr.mxu0 0.0
    %4419 = vmatpush2.msra.mxu0 0.0
    %4420 = vmatprep.subr.mxu0 0.0
    %4421 = vmatpush2.msra.mxu0 0.0
    %4422 = vmatprep.subr.mxu0 0.0
    %4423 = vmatpush2.msra.mxu0 0.0
    %4424 = vmatprep.subr.mxu0 0.0
    %4425 = vmatpush2.msra.mxu0 0.0
    %4426 = vmatprep.subr.mxu0 0.0
    %4427 = vmatpush2.msra.mxu0 0.0
    %4428 = vmatprep.subr.mxu0 0.0
    %4429 = vmatpush2.msra.mxu0 0.0
    %4430 = vmatprep.subr.mxu0 0.0
    %4431 = vmatpush2.msra.mxu0 0.0
    %4432 = vmatprep.subr.mxu0 0.0
    %4433 = vmatpush2.msra.mxu0 0.0
    %4434 = vmatprep.subr.mxu0 0.0
    %4435 = vmatpush2.msra.mxu0 0.0
    %4436 = vmatprep.subr.mxu0 0.0
    %4437 = vmatpush2.msra.mxu0 0.0
    %4438 = vmatprep.subr.mxu0 0.0
    %4439 = vmatpush2.msra.mxu0 0.0
    %4440 = vmatprep.subr.mxu0 0.0
    %4441 = vmatpush2.msra.mxu0 0.0
    %4442 = vmatprep.subr.mxu0 0.0
    %4443 = vmatpush2.msra.mxu0 0.0
    %4444 = vmatprep.subr.mxu0 0.0
    %4445 = vmatpush2.msra.mxu0 0.0
    %4446 = vmatprep.subr.mxu0 0.0
    %4447 = vmatpush2.msra.mxu0 0.0
    %4448 = vmatprep.mubr.f32.mxu0 0.0
    %v4449 = vand.u32 %v4298, 4294901760
    %v4450 = vsub.f32 %v4298, %v4449
    %v4451 = vand.u32 %v4450, 4294901760
    %v4452 = vsub.f32 %v4450, %v4451
    %v4453 = vand.u32 %v4452, 4294901760
    %4454 = vmatmul.mubr.f32.gmra.mxu0 %v4453
    %v4455 = vpop.f32.mrf.mxu0
    %v4456 = vadd.f32 0.0, %v4455
    %v4457 = vpop.f32.mrf.mxu0
    %v4458 = vadd.f32 0.0, %v4457
    %4459 = vdwg.mxu0
    %v4460 = vand.u32 %v4350, 4294901760
    %v4461 = vsub.f32 %v4350, %v4460
    %v4462 = vand.u32 %v4461, 4294901760
    %v4463 = vsub.f32 %v4461, %v4462
    %v4464 = vand.u32 %v4463, 4294901760
    %4465 = vmatprep.subr.mxu0 %v4464
    %v4466 = vand.u32 %v4349, 4294901760
    %v4467 = vsub.f32 %v4349, %v4466
    %v4468 = vand.u32 %v4467, 4294901760
    %v4469 = vsub.f32 %v4467, %v4468
    %v4470 = vand.u32 %v4469, 4294901760
    %4471 = vmatpush1.msra.mxu0 %v4470
    %v4472 = vand.u32 %v4347, 4294901760
    %v4473 = vsub.f32 %v4347, %v4472
    %v4474 = vand.u32 %v4473, 4294901760
    %v4475 = vsub.f32 %v4473, %v4474
    %v4476 = vand.u32 %v4475, 4294901760
    %4477 = vmatprep.subr.mxu0 %v4476
    %v4478 = vand.u32 %v4346, 4294901760
    %v4479 = vsub.f32 %v4346, %v4478
    %v4480 = vand.u32 %v4479, 4294901760
    %v4481 = vsub.f32 %v4479, %v4480
    %v4482 = vand.u32 %v4481, 4294901760
    %4483 = vmatpush1.msra.mxu0 %v4482
    %v4484 = vand.u32 %v4344, 4294901760
    %v4485 = vsub.f32 %v4344, %v4484
    %v4486 = vand.u32 %v4485, 4294901760
    %v4487 = vsub.f32 %v4485, %v4486
    %v4488 = vand.u32 %v4487, 4294901760
    %4489 = vmatprep.subr.mxu0 %v4488
    %v4490 = vand.u32 %v4343, 4294901760
    %v4491 = vsub.f32 %v4343, %v4490
    %v4492 = vand.u32 %v4491, 4294901760
    %v4493 = vsub.f32 %v4491, %v4492
    %v4494 = vand.u32 %v4493, 4294901760
    %4495 = vmatpush1.msra.mxu0 %v4494
    %v4496 = vand.u32 %v4341, 4294901760
    %v4497 = vsub.f32 %v4341, %v4496
    %v4498 = vand.u32 %v4497, 4294901760
    %v4499 = vsub.f32 %v4497, %v4498
    %v4500 = vand.u32 %v4499, 4294901760
    %4501 = vmatprep.subr.mxu0 %v4500
    %v4502 = vand.u32 %v4340, 4294901760
    %v4503 = vsub.f32 %v4340, %v4502
    %v4504 = vand.u32 %v4503, 4294901760
    %v4505 = vsub.f32 %v4503, %v4504
    %v4506 = vand.u32 %v4505, 4294901760
    %4507 = vmatpush1.msra.mxu0 %v4506
    %v4508 = vand.u32 %v4338, 4294901760
    %v4509 = vsub.f32 %v4338, %v4508
    %v4510 = vand.u32 %v4509, 4294901760
    %v4511 = vsub.f32 %v4509, %v4510
    %v4512 = vand.u32 %v4511, 4294901760
    %4513 = vmatprep.subr.mxu0 %v4512
    %v4514 = vand.u32 %v4337, 4294901760
    %v4515 = vsub.f32 %v4337, %v4514
    %v4516 = vand.u32 %v4515, 4294901760
    %v4517 = vsub.f32 %v4515, %v4516
    %v4518 = vand.u32 %v4517, 4294901760
    %4519 = vmatpush1.msra.mxu0 %v4518
    %v4520 = vand.u32 %v4335, 4294901760
    %v4521 = vsub.f32 %v4335, %v4520
    %v4522 = vand.u32 %v4521, 4294901760
    %v4523 = vsub.f32 %v4521, %v4522
    %v4524 = vand.u32 %v4523, 4294901760
    %4525 = vmatprep.subr.mxu0 %v4524
    %v4526 = vand.u32 %v4334, 4294901760
    %v4527 = vsub.f32 %v4334, %v4526
    %v4528 = vand.u32 %v4527, 4294901760
    %v4529 = vsub.f32 %v4527, %v4528
    %v4530 = vand.u32 %v4529, 4294901760
    %4531 = vmatpush1.msra.mxu0 %v4530
    %v4532 = vand.u32 %v4332, 4294901760
    %v4533 = vsub.f32 %v4332, %v4532
    %v4534 = vand.u32 %v4533, 4294901760
    %v4535 = vsub.f32 %v4533, %v4534
    %v4536 = vand.u32 %v4535, 4294901760
    %4537 = vmatprep.subr.mxu0 %v4536
    %v4538 = vand.u32 %v4331, 4294901760
    %v4539 = vsub.f32 %v4331, %v4538
    %v4540 = vand.u32 %v4539, 4294901760
    %v4541 = vsub.f32 %v4539, %v4540
    %v4542 = vand.u32 %v4541, 4294901760
    %4543 = vmatpush1.msra.mxu0 %v4542
    %v4544 = vand.u32 %v4329, 4294901760
    %v4545 = vsub.f32 %v4329, %v4544
    %v4546 = vand.u32 %v4545, 4294901760
    %v4547 = vsub.f32 %v4545, %v4546
    %v4548 = vand.u32 %v4547, 4294901760
    %4549 = vmatprep.subr.mxu0 %v4548
    %v4550 = vand.u32 %v4328, 4294901760
    %v4551 = vsub.f32 %v4328, %v4550
    %v4552 = vand.u32 %v4551, 4294901760
    %v4553 = vsub.f32 %v4551, %v4552
    %v4554 = vand.u32 %v4553, 4294901760
    %4555 = vmatpush1.msra.mxu0 %v4554
    %v4556 = vand.u32 %v4326, 4294901760
    %v4557 = vsub.f32 %v4326, %v4556
    %v4558 = vand.u32 %v4557, 4294901760
    %v4559 = vsub.f32 %v4557, %v4558
    %v4560 = vand.u32 %v4559, 4294901760
    %4561 = vmatprep.subr.mxu0 %v4560
    %v4562 = vand.u32 %v4325, 4294901760
    %v4563 = vsub.f32 %v4325, %v4562
    %v4564 = vand.u32 %v4563, 4294901760
    %v4565 = vsub.f32 %v4563, %v4564
    %v4566 = vand.u32 %v4565, 4294901760
    %4567 = vmatpush1.msra.mxu0 %v4566
    %v4568 = vand.u32 %v4323, 4294901760
    %v4569 = vsub.f32 %v4323, %v4568
    %v4570 = vand.u32 %v4569, 4294901760
    %v4571 = vsub.f32 %v4569, %v4570
    %v4572 = vand.u32 %v4571, 4294901760
    %4573 = vmatprep.subr.mxu0 %v4572
    %v4574 = vand.u32 %v4322, 4294901760
    %v4575 = vsub.f32 %v4322, %v4574
    %v4576 = vand.u32 %v4575, 4294901760
    %v4577 = vsub.f32 %v4575, %v4576
    %v4578 = vand.u32 %v4577, 4294901760
    %4579 = vmatpush1.msra.mxu0 %v4578
    %v4580 = vand.u32 %v4320, 4294901760
    %v4581 = vsub.f32 %v4320, %v4580
    %v4582 = vand.u32 %v4581, 4294901760
    %v4583 = vsub.f32 %v4581, %v4582
    %v4584 = vand.u32 %v4583, 4294901760
    %4585 = vmatprep.subr.mxu0 %v4584
    %v4586 = vand.u32 %v4319, 4294901760
    %v4587 = vsub.f32 %v4319, %v4586
    %v4588 = vand.u32 %v4587, 4294901760
    %v4589 = vsub.f32 %v4587, %v4588
    %v4590 = vand.u32 %v4589, 4294901760
    %4591 = vmatpush1.msra.mxu0 %v4590
    %v4592 = vand.u32 %v4317, 4294901760
    %v4593 = vsub.f32 %v4317, %v4592
    %v4594 = vand.u32 %v4593, 4294901760
    %v4595 = vsub.f32 %v4593, %v4594
    %v4596 = vand.u32 %v4595, 4294901760
    %4597 = vmatprep.subr.mxu0 %v4596
    %v4598 = vand.u32 %v4316, 4294901760
    %v4599 = vsub.f32 %v4316, %v4598
    %v4600 = vand.u32 %v4599, 4294901760
    %v4601 = vsub.f32 %v4599, %v4600
    %v4602 = vand.u32 %v4601, 4294901760
    %4603 = vmatpush1.msra.mxu0 %v4602
    %v4604 = vand.u32 %v4314, 4294901760
    %v4605 = vsub.f32 %v4314, %v4604
    %v4606 = vand.u32 %v4605, 4294901760
    %v4607 = vsub.f32 %v4605, %v4606
    %v4608 = vand.u32 %v4607, 4294901760
    %4609 = vmatprep.subr.mxu0 %v4608
    %v4610 = vand.u32 %v4313, 4294901760
    %v4611 = vsub.f32 %v4313, %v4610
    %v4612 = vand.u32 %v4611, 4294901760
    %v4613 = vsub.f32 %v4611, %v4612
    %v4614 = vand.u32 %v4613, 4294901760
    %4615 = vmatpush1.msra.mxu0 %v4614
    %v4616 = vand.u32 %v4311, 4294901760
    %v4617 = vsub.f32 %v4311, %v4616
    %v4618 = vand.u32 %v4617, 4294901760
    %v4619 = vsub.f32 %v4617, %v4618
    %v4620 = vand.u32 %v4619, 4294901760
    %4621 = vmatprep.subr.mxu0 %v4620
    %v4622 = vand.u32 %v4310, 4294901760
    %v4623 = vsub.f32 %v4310, %v4622
    %v4624 = vand.u32 %v4623, 4294901760
    %v4625 = vsub.f32 %v4623, %v4624
    %v4626 = vand.u32 %v4625, 4294901760
    %4627 = vmatpush1.msra.mxu0 %v4626
    %v4628 = vand.u32 %v4308, 4294901760
    %v4629 = vsub.f32 %v4308, %v4628
    %v4630 = vand.u32 %v4629, 4294901760
    %v4631 = vsub.f32 %v4629, %v4630
    %v4632 = vand.u32 %v4631, 4294901760
    %4633 = vmatprep.subr.mxu0 %v4632
    %v4634 = vand.u32 %v4307, 4294901760
    %v4635 = vsub.f32 %v4307, %v4634
    %v4636 = vand.u32 %v4635, 4294901760
    %v4637 = vsub.f32 %v4635, %v4636
    %v4638 = vand.u32 %v4637, 4294901760
    %4639 = vmatpush1.msra.mxu0 %v4638
    %v4640 = vand.u32 %v4305, 4294901760
    %v4641 = vsub.f32 %v4305, %v4640
    %v4642 = vand.u32 %v4641, 4294901760
    %v4643 = vsub.f32 %v4641, %v4642
    %v4644 = vand.u32 %v4643, 4294901760
    %4645 = vmatprep.subr.mxu0 %v4644
    %v4646 = vand.u32 %v4304, 4294901760
    %v4647 = vsub.f32 %v4304, %v4646
    %v4648 = vand.u32 %v4647, 4294901760
    %v4649 = vsub.f32 %v4647, %v4648
    %v4650 = vand.u32 %v4649, 4294901760
    %4651 = vmatpush1.msra.mxu0 %v4650
    %4652 = vmatprep.subr.mxu0 0.0
    %4653 = vmatpush2.msra.mxu0 0.0
    %4654 = vmatprep.subr.mxu0 0.0
    %4655 = vmatpush2.msra.mxu0 0.0
    %4656 = vmatprep.subr.mxu0 0.0
    %4657 = vmatpush2.msra.mxu0 0.0
    %4658 = vmatprep.subr.mxu0 0.0
    %4659 = vmatpush2.msra.mxu0 0.0
    %4660 = vmatprep.subr.mxu0 0.0
    %4661 = vmatpush2.msra.mxu0 0.0
    %4662 = vmatprep.subr.mxu0 0.0
    %4663 = vmatpush2.msra.mxu0 0.0
    %4664 = vmatprep.subr.mxu0 0.0
    %4665 = vmatpush2.msra.mxu0 0.0
    %4666 = vmatprep.subr.mxu0 0.0
    %4667 = vmatpush2.msra.mxu0 0.0
    %4668 = vmatprep.subr.mxu0 0.0
    %4669 = vmatpush2.msra.mxu0 0.0
    %4670 = vmatprep.subr.mxu0 0.0
    %4671 = vmatpush2.msra.mxu0 0.0
    %4672 = vmatprep.subr.mxu0 0.0
    %4673 = vmatpush2.msra.mxu0 0.0
    %4674 = vmatprep.subr.mxu0 0.0
    %4675 = vmatpush2.msra.mxu0 0.0
    %4676 = vmatprep.subr.mxu0 0.0
    %4677 = vmatpush2.msra.mxu0 0.0
    %4678 = vmatprep.subr.mxu0 0.0
    %4679 = vmatpush2.msra.mxu0 0.0
    %4680 = vmatprep.subr.mxu0 0.0
    %4681 = vmatpush2.msra.mxu0 0.0
    %4682 = vmatprep.subr.mxu0 0.0
    %4683 = vmatpush2.msra.mxu0 0.0
    %4684 = vmatprep.mubr.f32.mxu0 0.0
    %v4685 = vand.u32 %v4298, 4294901760
    %4686 = vmatmul.mubr.f32.gmra.mxu0 %v4685
    %v4687 = vpop.f32.mrf.mxu0
    %v4688 = vadd.f32 %v4456, %v4687
    %v4689 = vpop.f32.mrf.mxu0
    %v4690 = vadd.f32 %v4458, %v4689
    %4691 = vdwg.mxu0
    %v4692 = vand.u32 %v4350, 4294901760
    %v4693 = vsub.f32 %v4350, %v4692
    %4694 = vmatprep.subr.mxu0 %v4693
    %v4695 = vand.u32 %v4349, 4294901760
    %v4696 = vsub.f32 %v4349, %v4695
    %4697 = vmatpush1.msra.mxu0 %v4696
    %v4698 = vand.u32 %v4347, 4294901760
    %v4699 = vsub.f32 %v4347, %v4698
    %4700 = vmatprep.subr.mxu0 %v4699
    %v4701 = vand.u32 %v4346, 4294901760
    %v4702 = vsub.f32 %v4346, %v4701
    %4703 = vmatpush1.msra.mxu0 %v4702
    %v4704 = vand.u32 %v4344, 4294901760
    %v4705 = vsub.f32 %v4344, %v4704
    %4706 = vmatprep.subr.mxu0 %v4705
    %v4707 = vand.u32 %v4343, 4294901760
    %v4708 = vsub.f32 %v4343, %v4707
    %4709 = vmatpush1.msra.mxu0 %v4708
    %v4710 = vand.u32 %v4341, 4294901760
    %v4711 = vsub.f32 %v4341, %v4710
    %4712 = vmatprep.subr.mxu0 %v4711
    %v4713 = vand.u32 %v4340, 4294901760
    %v4714 = vsub.f32 %v4340, %v4713
    %4715 = vmatpush1.msra.mxu0 %v4714
    %v4716 = vand.u32 %v4338, 4294901760
    %v4717 = vsub.f32 %v4338, %v4716
    %4718 = vmatprep.subr.mxu0 %v4717
    %v4719 = vand.u32 %v4337, 4294901760
    %v4720 = vsub.f32 %v4337, %v4719
    %4721 = vmatpush1.msra.mxu0 %v4720
    %v4722 = vand.u32 %v4335, 4294901760
    %v4723 = vsub.f32 %v4335, %v4722
    %4724 = vmatprep.subr.mxu0 %v4723
    %v4725 = vand.u32 %v4334, 4294901760
    %v4726 = vsub.f32 %v4334, %v4725
    %4727 = vmatpush1.msra.mxu0 %v4726
    %v4728 = vand.u32 %v4332, 4294901760
    %v4729 = vsub.f32 %v4332, %v4728
    %4730 = vmatprep.subr.mxu0 %v4729
    %v4731 = vand.u32 %v4331, 4294901760
    %v4732 = vsub.f32 %v4331, %v4731
    %4733 = vmatpush1.msra.mxu0 %v4732
    %v4734 = vand.u32 %v4329, 4294901760
    %v4735 = vsub.f32 %v4329, %v4734
    %4736 = vmatprep.subr.mxu0 %v4735
    %v4737 = vand.u32 %v4328, 4294901760
    %v4738 = vsub.f32 %v4328, %v4737
    %4739 = vmatpush1.msra.mxu0 %v4738
    %v4740 = vand.u32 %v4326, 4294901760
    %v4741 = vsub.f32 %v4326, %v4740
    %4742 = vmatprep.subr.mxu0 %v4741
    %v4743 = vand.u32 %v4325, 4294901760
    %v4744 = vsub.f32 %v4325, %v4743
    %4745 = vmatpush1.msra.mxu0 %v4744
    %v4746 = vand.u32 %v4323, 4294901760
    %v4747 = vsub.f32 %v4323, %v4746
    %4748 = vmatprep.subr.mxu0 %v4747
    %v4749 = vand.u32 %v4322, 4294901760
    %v4750 = vsub.f32 %v4322, %v4749
    %4751 = vmatpush1.msra.mxu0 %v4750
    %v4752 = vand.u32 %v4320, 4294901760
    %v4753 = vsub.f32 %v4320, %v4752
    %4754 = vmatprep.subr.mxu0 %v4753
    %v4755 = vand.u32 %v4319, 4294901760
    %v4756 = vsub.f32 %v4319, %v4755
    %4757 = vmatpush1.msra.mxu0 %v4756
    %v4758 = vand.u32 %v4317, 4294901760
    %v4759 = vsub.f32 %v4317, %v4758
    %4760 = vmatprep.subr.mxu0 %v4759
    %v4761 = vand.u32 %v4316, 4294901760
    %v4762 = vsub.f32 %v4316, %v4761
    %4763 = vmatpush1.msra.mxu0 %v4762
    %v4764 = vand.u32 %v4314, 4294901760
    %v4765 = vsub.f32 %v4314, %v4764
    %4766 = vmatprep.subr.mxu0 %v4765
    %v4767 = vand.u32 %v4313, 4294901760
    %v4768 = vsub.f32 %v4313, %v4767
    %4769 = vmatpush1.msra.mxu0 %v4768
    %v4770 = vand.u32 %v4311, 4294901760
    %v4771 = vsub.f32 %v4311, %v4770
    %4772 = vmatprep.subr.mxu0 %v4771
    %v4773 = vand.u32 %v4310, 4294901760
    %v4774 = vsub.f32 %v4310, %v4773
    %4775 = vmatpush1.msra.mxu0 %v4774
    %v4776 = vand.u32 %v4308, 4294901760
    %v4777 = vsub.f32 %v4308, %v4776
    %4778 = vmatprep.subr.mxu0 %v4777
    %v4779 = vand.u32 %v4307, 4294901760
    %v4780 = vsub.f32 %v4307, %v4779
    %4781 = vmatpush1.msra.mxu0 %v4780
    %v4782 = vand.u32 %v4305, 4294901760
    %v4783 = vsub.f32 %v4305, %v4782
    %4784 = vmatprep.subr.mxu0 %v4783
    %v4785 = vand.u32 %v4304, 4294901760
    %v4786 = vsub.f32 %v4304, %v4785
    %4787 = vmatpush1.msra.mxu0 %v4786
    %4788 = vmatprep.subr.mxu0 0.0
    %4789 = vmatpush2.msra.mxu0 0.0
    %4790 = vmatprep.subr.mxu0 0.0
    %4791 = vmatpush2.msra.mxu0 0.0
    %4792 = vmatprep.subr.mxu0 0.0
    %4793 = vmatpush2.msra.mxu0 0.0
    %4794 = vmatprep.subr.mxu0 0.0
    %4795 = vmatpush2.msra.mxu0 0.0
    %4796 = vmatprep.subr.mxu0 0.0
    %4797 = vmatpush2.msra.mxu0 0.0
    %4798 = vmatprep.subr.mxu0 0.0
    %4799 = vmatpush2.msra.mxu0 0.0
    %4800 = vmatprep.subr.mxu0 0.0
    %4801 = vmatpush2.msra.mxu0 0.0
    %4802 = vmatprep.subr.mxu0 0.0
    %4803 = vmatpush2.msra.mxu0 0.0
    %4804 = vmatprep.subr.mxu0 0.0
    %4805 = vmatpush2.msra.mxu0 0.0
    %4806 = vmatprep.subr.mxu0 0.0
    %4807 = vmatpush2.msra.mxu0 0.0
    %4808 = vmatprep.subr.mxu0 0.0
    %4809 = vmatpush2.msra.mxu0 0.0
    %4810 = vmatprep.subr.mxu0 0.0
    %4811 = vmatpush2.msra.mxu0 0.0
    %4812 = vmatprep.subr.mxu0 0.0
    %4813 = vmatpush2.msra.mxu0 0.0
    %4814 = vmatprep.subr.mxu0 0.0
    %4815 = vmatpush2.msra.mxu0 0.0
    %4816 = vmatprep.subr.mxu0 0.0
    %4817 = vmatpush2.msra.mxu0 0.0
    %4818 = vmatprep.subr.mxu0 0.0
    %4819 = vmatpush2.msra.mxu0 0.0
    %4820 = vmatprep.mubr.f32.mxu0 0.0
    %v4821 = vand.u32 %v4298, 4294901760
    %v4822 = vsub.f32 %v4298, %v4821
    %4823 = vmatmul.mubr.f32.gmra.mxu0 %v4822
    %v4824 = vpop.f32.mrf.mxu0
    %v4825 = vadd.f32 %v4688, %v4824
    %v4826 = vpop.f32.mrf.mxu0
    %v4827 = vadd.f32 %v4690, %v4826
    %4828 = vdwg.mxu0
    %v4829 = vand.u32 %v4350, 4294901760
    %4830 = vmatprep.subr.mxu0 %v4829
    %v4831 = vand.u32 %v4349, 4294901760
    %4832 = vmatpush1.msra.mxu0 %v4831
    %v4833 = vand.u32 %v4347, 4294901760
    %4834 = vmatprep.subr.mxu0 %v4833
    %v4835 = vand.u32 %v4346, 4294901760
    %4836 = vmatpush1.msra.mxu0 %v4835
    %v4837 = vand.u32 %v4344, 4294901760
    %4838 = vmatprep.subr.mxu0 %v4837
    %v4839 = vand.u32 %v4343, 4294901760
    %4840 = vmatpush1.msra.mxu0 %v4839
    %v4841 = vand.u32 %v4341, 4294901760
    %4842 = vmatprep.subr.mxu0 %v4841
    %v4843 = vand.u32 %v4340, 4294901760
    %4844 = vmatpush1.msra.mxu0 %v4843
    %v4845 = vand.u32 %v4338, 4294901760
    %4846 = vmatprep.subr.mxu0 %v4845
    %v4847 = vand.u32 %v4337, 4294901760
    %4848 = vmatpush1.msra.mxu0 %v4847
    %v4849 = vand.u32 %v4335, 4294901760
    %4850 = vmatprep.subr.mxu0 %v4849
    %v4851 = vand.u32 %v4334, 4294901760
    %4852 = vmatpush1.msra.mxu0 %v4851
    %v4853 = vand.u32 %v4332, 4294901760
    %4854 = vmatprep.subr.mxu0 %v4853
    %v4855 = vand.u32 %v4331, 4294901760
    %4856 = vmatpush1.msra.mxu0 %v4855
    %v4857 = vand.u32 %v4329, 4294901760
    %4858 = vmatprep.subr.mxu0 %v4857
    %v4859 = vand.u32 %v4328, 4294901760
    %4860 = vmatpush1.msra.mxu0 %v4859
    %v4861 = vand.u32 %v4326, 4294901760
    %4862 = vmatprep.subr.mxu0 %v4861
    %v4863 = vand.u32 %v4325, 4294901760
    %4864 = vmatpush1.msra.mxu0 %v4863
    %v4865 = vand.u32 %v4323, 4294901760
    %4866 = vmatprep.subr.mxu0 %v4865
    %v4867 = vand.u32 %v4322, 4294901760
    %4868 = vmatpush1.msra.mxu0 %v4867
    %v4869 = vand.u32 %v4320, 4294901760
    %4870 = vmatprep.subr.mxu0 %v4869
    %v4871 = vand.u32 %v4319, 4294901760
    %4872 = vmatpush1.msra.mxu0 %v4871
    %v4873 = vand.u32 %v4317, 4294901760
    %4874 = vmatprep.subr.mxu0 %v4873
    %v4875 = vand.u32 %v4316, 4294901760
    %4876 = vmatpush1.msra.mxu0 %v4875
    %v4877 = vand.u32 %v4314, 4294901760
    %4878 = vmatprep.subr.mxu0 %v4877
    %v4879 = vand.u32 %v4313, 4294901760
    %4880 = vmatpush1.msra.mxu0 %v4879
    %v4881 = vand.u32 %v4311, 4294901760
    %4882 = vmatprep.subr.mxu0 %v4881
    %v4883 = vand.u32 %v4310, 4294901760
    %4884 = vmatpush1.msra.mxu0 %v4883
    %v4885 = vand.u32 %v4308, 4294901760
    %4886 = vmatprep.subr.mxu0 %v4885
    %v4887 = vand.u32 %v4307, 4294901760
    %4888 = vmatpush1.msra.mxu0 %v4887
    %v4889 = vand.u32 %v4305, 4294901760
    %4890 = vmatprep.subr.mxu0 %v4889
    %v4891 = vand.u32 %v4304, 4294901760
    %4892 = vmatpush1.msra.mxu0 %v4891
    %4893 = vmatprep.subr.mxu0 0.0
    %4894 = vmatpush2.msra.mxu0 0.0
    %4895 = vmatprep.subr.mxu0 0.0
    %4896 = vmatpush2.msra.mxu0 0.0
    %4897 = vmatprep.subr.mxu0 0.0
    %4898 = vmatpush2.msra.mxu0 0.0
    %4899 = vmatprep.subr.mxu0 0.0
    %4900 = vmatpush2.msra.mxu0 0.0
    %4901 = vmatprep.subr.mxu0 0.0
    %4902 = vmatpush2.msra.mxu0 0.0
    %4903 = vmatprep.subr.mxu0 0.0
    %4904 = vmatpush2.msra.mxu0 0.0
    %4905 = vmatprep.subr.mxu0 0.0
    %4906 = vmatpush2.msra.mxu0 0.0
    %4907 = vmatprep.subr.mxu0 0.0
    %4908 = vmatpush2.msra.mxu0 0.0
    %4909 = vmatprep.subr.mxu0 0.0
    %4910 = vmatpush2.msra.mxu0 0.0
    %4911 = vmatprep.subr.mxu0 0.0
    %4912 = vmatpush2.msra.mxu0 0.0
    %4913 = vmatprep.subr.mxu0 0.0
    %4914 = vmatpush2.msra.mxu0 0.0
    %4915 = vmatprep.subr.mxu0 0.0
    %4916 = vmatpush2.msra.mxu0 0.0
    %4917 = vmatprep.subr.mxu0 0.0
    %4918 = vmatpush2.msra.mxu0 0.0
    %4919 = vmatprep.subr.mxu0 0.0
    %4920 = vmatpush2.msra.mxu0 0.0
    %4921 = vmatprep.subr.mxu0 0.0
    %4922 = vmatpush2.msra.mxu0 0.0
    %4923 = vmatprep.subr.mxu0 0.0
    %4924 = vmatpush2.msra.mxu0 0.0
    %4925 = vmatprep.mubr.f32.mxu0 0.0
    %v4926 = vand.u32 %v4298, 4294901760
    %v4927 = vsub.f32 %v4298, %v4926
    %v4928 = vand.u32 %v4927, 4294901760
    %4929 = vmatmul.mubr.f32.gmra.mxu0 %v4928
    %v4930 = vpop.f32.mrf.mxu0
    %v4931 = vadd.f32 %v4825, %v4930
    %v4932 = vpop.f32.mrf.mxu0
    %v4933 = vadd.f32 %v4827, %v4932
    %4934 = vdwg.mxu0
    %v4935 = vand.u32 %v4350, 4294901760
    %v4936 = vsub.f32 %v4350, %v4935
    %v4937 = vand.u32 %v4936, 4294901760
    %4938 = vmatprep.subr.mxu0 %v4937
    %v4939 = vand.u32 %v4349, 4294901760
    %v4940 = vsub.f32 %v4349, %v4939
    %v4941 = vand.u32 %v4940, 4294901760
    %4942 = vmatpush1.msra.mxu0 %v4941
    %v4943 = vand.u32 %v4347, 4294901760
    %v4944 = vsub.f32 %v4347, %v4943
    %v4945 = vand.u32 %v4944, 4294901760
    %4946 = vmatprep.subr.mxu0 %v4945
    %v4947 = vand.u32 %v4346, 4294901760
    %v4948 = vsub.f32 %v4346, %v4947
    %v4949 = vand.u32 %v4948, 4294901760
    %4950 = vmatpush1.msra.mxu0 %v4949
    %v4951 = vand.u32 %v4344, 4294901760
    %v4952 = vsub.f32 %v4344, %v4951
    %v4953 = vand.u32 %v4952, 4294901760
    %4954 = vmatprep.subr.mxu0 %v4953
    %v4955 = vand.u32 %v4343, 4294901760
    %v4956 = vsub.f32 %v4343, %v4955
    %v4957 = vand.u32 %v4956, 4294901760
    %4958 = vmatpush1.msra.mxu0 %v4957
    %v4959 = vand.u32 %v4341, 4294901760
    %v4960 = vsub.f32 %v4341, %v4959
    %v4961 = vand.u32 %v4960, 4294901760
    %4962 = vmatprep.subr.mxu0 %v4961
    %v4963 = vand.u32 %v4340, 4294901760
    %v4964 = vsub.f32 %v4340, %v4963
    %v4965 = vand.u32 %v4964, 4294901760
    %4966 = vmatpush1.msra.mxu0 %v4965
    %v4967 = vand.u32 %v4338, 4294901760
    %v4968 = vsub.f32 %v4338, %v4967
    %v4969 = vand.u32 %v4968, 4294901760
    %4970 = vmatprep.subr.mxu0 %v4969
    %v4971 = vand.u32 %v4337, 4294901760
    %v4972 = vsub.f32 %v4337, %v4971
    %v4973 = vand.u32 %v4972, 4294901760
    %4974 = vmatpush1.msra.mxu0 %v4973
    %v4975 = vand.u32 %v4335, 4294901760
    %v4976 = vsub.f32 %v4335, %v4975
    %v4977 = vand.u32 %v4976, 4294901760
    %4978 = vmatprep.subr.mxu0 %v4977
    %v4979 = vand.u32 %v4334, 4294901760
    %v4980 = vsub.f32 %v4334, %v4979
    %v4981 = vand.u32 %v4980, 4294901760
    %4982 = vmatpush1.msra.mxu0 %v4981
    %v4983 = vand.u32 %v4332, 4294901760
    %v4984 = vsub.f32 %v4332, %v4983
    %v4985 = vand.u32 %v4984, 4294901760
    %4986 = vmatprep.subr.mxu0 %v4985
    %v4987 = vand.u32 %v4331, 4294901760
    %v4988 = vsub.f32 %v4331, %v4987
    %v4989 = vand.u32 %v4988, 4294901760
    %4990 = vmatpush1.msra.mxu0 %v4989
    %v4991 = vand.u32 %v4329, 4294901760
    %v4992 = vsub.f32 %v4329, %v4991
    %v4993 = vand.u32 %v4992, 4294901760
    %4994 = vmatprep.subr.mxu0 %v4993
    %v4995 = vand.u32 %v4328, 4294901760
    %v4996 = vsub.f32 %v4328, %v4995
    %v4997 = vand.u32 %v4996, 4294901760
    %4998 = vmatpush1.msra.mxu0 %v4997
    %v4999 = vand.u32 %v4326, 4294901760
    %v5000 = vsub.f32 %v4326, %v4999
    %v5001 = vand.u32 %v5000, 4294901760
    %5002 = vmatprep.subr.mxu0 %v5001
    %v5003 = vand.u32 %v4325, 4294901760
    %v5004 = vsub.f32 %v4325, %v5003
    %v5005 = vand.u32 %v5004, 4294901760
    %5006 = vmatpush1.msra.mxu0 %v5005
    %v5007 = vand.u32 %v4323, 4294901760
    %v5008 = vsub.f32 %v4323, %v5007
    %v5009 = vand.u32 %v5008, 4294901760
    %5010 = vmatprep.subr.mxu0 %v5009
    %v5011 = vand.u32 %v4322, 4294901760
    %v5012 = vsub.f32 %v4322, %v5011
    %v5013 = vand.u32 %v5012, 4294901760
    %5014 = vmatpush1.msra.mxu0 %v5013
    %v5015 = vand.u32 %v4320, 4294901760
    %v5016 = vsub.f32 %v4320, %v5015
    %v5017 = vand.u32 %v5016, 4294901760
    %5018 = vmatprep.subr.mxu0 %v5017
    %v5019 = vand.u32 %v4319, 4294901760
    %v5020 = vsub.f32 %v4319, %v5019
    %v5021 = vand.u32 %v5020, 4294901760
    %5022 = vmatpush1.msra.mxu0 %v5021
    %v5023 = vand.u32 %v4317, 4294901760
    %v5024 = vsub.f32 %v4317, %v5023
    %v5025 = vand.u32 %v5024, 4294901760
    %5026 = vmatprep.subr.mxu0 %v5025
    %v5027 = vand.u32 %v4316, 4294901760
    %v5028 = vsub.f32 %v4316, %v5027
    %v5029 = vand.u32 %v5028, 4294901760
    %5030 = vmatpush1.msra.mxu0 %v5029
    %v5031 = vand.u32 %v4314, 4294901760
    %v5032 = vsub.f32 %v4314, %v5031
    %v5033 = vand.u32 %v5032, 4294901760
    %5034 = vmatprep.subr.mxu0 %v5033
    %v5035 = vand.u32 %v4313, 4294901760
    %v5036 = vsub.f32 %v4313, %v5035
    %v5037 = vand.u32 %v5036, 4294901760
    %5038 = vmatpush1.msra.mxu0 %v5037
    %v5039 = vand.u32 %v4311, 4294901760
    %v5040 = vsub.f32 %v4311, %v5039
    %v5041 = vand.u32 %v5040, 4294901760
    %5042 = vmatprep.subr.mxu0 %v5041
    %v5043 = vand.u32 %v4310, 4294901760
    %v5044 = vsub.f32 %v4310, %v5043
    %v5045 = vand.u32 %v5044, 4294901760
    %5046 = vmatpush1.msra.mxu0 %v5045
    %v5047 = vand.u32 %v4308, 4294901760
    %v5048 = vsub.f32 %v4308, %v5047
    %v5049 = vand.u32 %v5048, 4294901760
    %5050 = vmatprep.subr.mxu0 %v5049
    %v5051 = vand.u32 %v4307, 4294901760
    %v5052 = vsub.f32 %v4307, %v5051
    %v5053 = vand.u32 %v5052, 4294901760
    %5054 = vmatpush1.msra.mxu0 %v5053
    %v5055 = vand.u32 %v4305, 4294901760
    %v5056 = vsub.f32 %v4305, %v5055
    %v5057 = vand.u32 %v5056, 4294901760
    %5058 = vmatprep.subr.mxu0 %v5057
    %v5059 = vand.u32 %v4304, 4294901760
    %v5060 = vsub.f32 %v4304, %v5059
    %v5061 = vand.u32 %v5060, 4294901760
    %5062 = vmatpush1.msra.mxu0 %v5061
    %5063 = vmatprep.subr.mxu0 0.0
    %5064 = vmatpush2.msra.mxu0 0.0
    %5065 = vmatprep.subr.mxu0 0.0
    %5066 = vmatpush2.msra.mxu0 0.0
    %5067 = vmatprep.subr.mxu0 0.0
    %5068 = vmatpush2.msra.mxu0 0.0
    %5069 = vmatprep.subr.mxu0 0.0
    %5070 = vmatpush2.msra.mxu0 0.0
    %5071 = vmatprep.subr.mxu0 0.0
    %5072 = vmatpush2.msra.mxu0 0.0
    %5073 = vmatprep.subr.mxu0 0.0
    %5074 = vmatpush2.msra.mxu0 0.0
    %5075 = vmatprep.subr.mxu0 0.0
    %5076 = vmatpush2.msra.mxu0 0.0
    %5077 = vmatprep.subr.mxu0 0.0
    %5078 = vmatpush2.msra.mxu0 0.0
    %5079 = vmatprep.subr.mxu0 0.0
    %5080 = vmatpush2.msra.mxu0 0.0
    %5081 = vmatprep.subr.mxu0 0.0
    %5082 = vmatpush2.msra.mxu0 0.0
    %5083 = vmatprep.subr.mxu0 0.0
    %5084 = vmatpush2.msra.mxu0 0.0
    %5085 = vmatprep.subr.mxu0 0.0
    %5086 = vmatpush2.msra.mxu0 0.0
    %5087 = vmatprep.subr.mxu0 0.0
    %5088 = vmatpush2.msra.mxu0 0.0
    %5089 = vmatprep.subr.mxu0 0.0
    %5090 = vmatpush2.msra.mxu0 0.0
    %5091 = vmatprep.subr.mxu0 0.0
    %5092 = vmatpush2.msra.mxu0 0.0
    %5093 = vmatprep.subr.mxu0 0.0
    %5094 = vmatpush2.msra.mxu0 0.0
    %5095 = vmatprep.mubr.f32.mxu0 0.0
    %v5096 = vand.u32 %v4298, 4294901760
    %5097 = vmatmul.mubr.f32.gmra.mxu0 %v5096
    %v5098 = vpop.f32.mrf.mxu0
    %v5099 = vadd.f32 %v4931, %v5098
    %v5100 = vpop.f32.mrf.mxu0
    %v5101 = vadd.f32 %v4933, %v5100
    %5102 = vdwg.mxu0
    %v5103 = vand.u32 %v4350, 4294901760
    %5104 = vmatprep.subr.mxu0 %v5103
    %v5105 = vand.u32 %v4349, 4294901760
    %5106 = vmatpush1.msra.mxu0 %v5105
    %v5107 = vand.u32 %v4347, 4294901760
    %5108 = vmatprep.subr.mxu0 %v5107
    %v5109 = vand.u32 %v4346, 4294901760
    %5110 = vmatpush1.msra.mxu0 %v5109
    %v5111 = vand.u32 %v4344, 4294901760
    %5112 = vmatprep.subr.mxu0 %v5111
    %v5113 = vand.u32 %v4343, 4294901760
    %5114 = vmatpush1.msra.mxu0 %v5113
    %v5115 = vand.u32 %v4341, 4294901760
    %5116 = vmatprep.subr.mxu0 %v5115
    %v5117 = vand.u32 %v4340, 4294901760
    %5118 = vmatpush1.msra.mxu0 %v5117
    %v5119 = vand.u32 %v4338, 4294901760
    %5120 = vmatprep.subr.mxu0 %v5119
    %v5121 = vand.u32 %v4337, 4294901760
    %5122 = vmatpush1.msra.mxu0 %v5121
    %v5123 = vand.u32 %v4335, 4294901760
    %5124 = vmatprep.subr.mxu0 %v5123
    %v5125 = vand.u32 %v4334, 4294901760
    %5126 = vmatpush1.msra.mxu0 %v5125
    %v5127 = vand.u32 %v4332, 4294901760
    %5128 = vmatprep.subr.mxu0 %v5127
    %v5129 = vand.u32 %v4331, 4294901760
    %5130 = vmatpush1.msra.mxu0 %v5129
    %v5131 = vand.u32 %v4329, 4294901760
    %5132 = vmatprep.subr.mxu0 %v5131
    %v5133 = vand.u32 %v4328, 4294901760
    %5134 = vmatpush1.msra.mxu0 %v5133
    %v5135 = vand.u32 %v4326, 4294901760
    %5136 = vmatprep.subr.mxu0 %v5135
    %v5137 = vand.u32 %v4325, 4294901760
    %5138 = vmatpush1.msra.mxu0 %v5137
    %v5139 = vand.u32 %v4323, 4294901760
    %5140 = vmatprep.subr.mxu0 %v5139
    %v5141 = vand.u32 %v4322, 4294901760
    %5142 = vmatpush1.msra.mxu0 %v5141
    %v5143 = vand.u32 %v4320, 4294901760
    %5144 = vmatprep.subr.mxu0 %v5143
    %v5145 = vand.u32 %v4319, 4294901760
    %5146 = vmatpush1.msra.mxu0 %v5145
    %v5147 = vand.u32 %v4317, 4294901760
    %5148 = vmatprep.subr.mxu0 %v5147
    %v5149 = vand.u32 %v4316, 4294901760
    %5150 = vmatpush1.msra.mxu0 %v5149
    %v5151 = vand.u32 %v4314, 4294901760
    %5152 = vmatprep.subr.mxu0 %v5151
    %v5153 = vand.u32 %v4313, 4294901760
    %5154 = vmatpush1.msra.mxu0 %v5153
    %v5155 = vand.u32 %v4311, 4294901760
    %5156 = vmatprep.subr.mxu0 %v5155
    %v5157 = vand.u32 %v4310, 4294901760
    %5158 = vmatpush1.msra.mxu0 %v5157
    %v5159 = vand.u32 %v4308, 4294901760
    %5160 = vmatprep.subr.mxu0 %v5159
    %v5161 = vand.u32 %v4307, 4294901760
    %5162 = vmatpush1.msra.mxu0 %v5161
    %v5163 = vand.u32 %v4305, 4294901760
    %5164 = vmatprep.subr.mxu0 %v5163
    %v5165 = vand.u32 %v4304, 4294901760
    %5166 = vmatpush1.msra.mxu0 %v5165
    %5167 = vmatprep.subr.mxu0 0.0
    %5168 = vmatpush2.msra.mxu0 0.0
    %5169 = vmatprep.subr.mxu0 0.0
    %5170 = vmatpush2.msra.mxu0 0.0
    %5171 = vmatprep.subr.mxu0 0.0
    %5172 = vmatpush2.msra.mxu0 0.0
    %5173 = vmatprep.subr.mxu0 0.0
    %5174 = vmatpush2.msra.mxu0 0.0
    %5175 = vmatprep.subr.mxu0 0.0
    %5176 = vmatpush2.msra.mxu0 0.0
    %5177 = vmatprep.subr.mxu0 0.0
    %5178 = vmatpush2.msra.mxu0 0.0
    %5179 = vmatprep.subr.mxu0 0.0
    %5180 = vmatpush2.msra.mxu0 0.0
    %5181 = vmatprep.subr.mxu0 0.0
    %5182 = vmatpush2.msra.mxu0 0.0
    %5183 = vmatprep.subr.mxu0 0.0
    %5184 = vmatpush2.msra.mxu0 0.0
    %5185 = vmatprep.subr.mxu0 0.0
    %5186 = vmatpush2.msra.mxu0 0.0
    %5187 = vmatprep.subr.mxu0 0.0
    %5188 = vmatpush2.msra.mxu0 0.0
    %5189 = vmatprep.subr.mxu0 0.0
    %5190 = vmatpush2.msra.mxu0 0.0
    %5191 = vmatprep.subr.mxu0 0.0
    %5192 = vmatpush2.msra.mxu0 0.0
    %5193 = vmatprep.subr.mxu0 0.0
    %5194 = vmatpush2.msra.mxu0 0.0
    %5195 = vmatprep.subr.mxu0 0.0
    %5196 = vmatpush2.msra.mxu0 0.0
    %5197 = vmatprep.subr.mxu0 0.0
    %5198 = vmatpush2.msra.mxu0 0.0
    %5199 = vmatprep.mubr.f32.mxu0 0.0
    %v5200 = vand.u32 %v4298, 4294901760
    %5201 = vmatmul.mubr.f32.gmra.mxu0 %v5200
    %v5202 = vpop.f32.mrf.mxu0
    %v5203 = vadd.f32 %v5099, %v5202
    %v5204 = vpop.f32.mrf.mxu0
    %v5205 = vadd.f32 %v5101, %v5204
    %5206 = vdwg.mxu0
    %5207 = vmatprep.subr.mxu0 0.0
    %v5208 = vand.u32 %v4351, 4294901760
    %5209 = vmatpush1.msra.mxu0 %v5208
    %5210 = vmatprep.subr.mxu0 0.0
    %v5211 = vand.u32 %v4348, 4294901760
    %5212 = vmatpush1.msra.mxu0 %v5211
    %5213 = vmatprep.subr.mxu0 0.0
    %v5214 = vand.u32 %v4345, 4294901760
    %5215 = vmatpush1.msra.mxu0 %v5214
    %5216 = vmatprep.subr.mxu0 0.0
    %v5217 = vand.u32 %v4342, 4294901760
    %5218 = vmatpush1.msra.mxu0 %v5217
    %5219 = vmatprep.subr.mxu0 0.0
    %v5220 = vand.u32 %v4339, 4294901760
    %5221 = vmatpush1.msra.mxu0 %v5220
    %5222 = vmatprep.subr.mxu0 0.0
    %v5223 = vand.u32 %v4336, 4294901760
    %5224 = vmatpush1.msra.mxu0 %v5223
    %5225 = vmatprep.subr.mxu0 0.0
    %v5226 = vand.u32 %v4333, 4294901760
    %5227 = vmatpush1.msra.mxu0 %v5226
    %5228 = vmatprep.subr.mxu0 0.0
    %v5229 = vand.u32 %v4330, 4294901760
    %5230 = vmatpush1.msra.mxu0 %v5229
    %5231 = vmatprep.subr.mxu0 0.0
    %v5232 = vand.u32 %v4327, 4294901760
    %5233 = vmatpush1.msra.mxu0 %v5232
    %5234 = vmatprep.subr.mxu0 0.0
    %v5235 = vand.u32 %v4324, 4294901760
    %5236 = vmatpush1.msra.mxu0 %v5235
    %5237 = vmatprep.subr.mxu0 0.0
    %v5238 = vand.u32 %v4321, 4294901760
    %5239 = vmatpush1.msra.mxu0 %v5238
    %5240 = vmatprep.subr.mxu0 0.0
    %v5241 = vand.u32 %v4318, 4294901760
    %5242 = vmatpush1.msra.mxu0 %v5241
    %5243 = vmatprep.subr.mxu0 0.0
    %v5244 = vand.u32 %v4315, 4294901760
    %5245 = vmatpush1.msra.mxu0 %v5244
    %5246 = vmatprep.subr.mxu0 0.0
    %v5247 = vand.u32 %v4312, 4294901760
    %5248 = vmatpush1.msra.mxu0 %v5247
    %5249 = vmatprep.subr.mxu0 0.0
    %v5250 = vand.u32 %v4309, 4294901760
    %5251 = vmatpush1.msra.mxu0 %v5250
    %5252 = vmatprep.subr.mxu0 0.0
    %v5253 = vand.u32 %v4306, 4294901760
    %5254 = vmatpush1.msra.mxu0 %v5253
    %5255 = vmatprep.subr.mxu0 0.0
    %5256 = vmatpush2.msra.mxu0 0.0
    %5257 = vmatprep.subr.mxu0 0.0
    %5258 = vmatpush2.msra.mxu0 0.0
    %5259 = vmatprep.subr.mxu0 0.0
    %5260 = vmatpush2.msra.mxu0 0.0
    %5261 = vmatprep.subr.mxu0 0.0
    %5262 = vmatpush2.msra.mxu0 0.0
    %5263 = vmatprep.subr.mxu0 0.0
    %5264 = vmatpush2.msra.mxu0 0.0
    %5265 = vmatprep.subr.mxu0 0.0
    %5266 = vmatpush2.msra.mxu0 0.0
    %5267 = vmatprep.subr.mxu0 0.0
    %5268 = vmatpush2.msra.mxu0 0.0
    %5269 = vmatprep.subr.mxu0 0.0
    %5270 = vmatpush2.msra.mxu0 0.0
    %5271 = vmatprep.subr.mxu0 0.0
    %5272 = vmatpush2.msra.mxu0 0.0
    %5273 = vmatprep.subr.mxu0 0.0
    %5274 = vmatpush2.msra.mxu0 0.0
    %5275 = vmatprep.subr.mxu0 0.0
    %5276 = vmatpush2.msra.mxu0 0.0
    %5277 = vmatprep.subr.mxu0 0.0
    %5278 = vmatpush2.msra.mxu0 0.0
    %5279 = vmatprep.subr.mxu0 0.0
    %5280 = vmatpush2.msra.mxu0 0.0
    %5281 = vmatprep.subr.mxu0 0.0
    %5282 = vmatpush2.msra.mxu0 0.0
    %5283 = vmatprep.subr.mxu0 0.0
    %5284 = vmatpush2.msra.mxu0 0.0
    %5285 = vmatprep.subr.mxu0 0.0
    %5286 = vmatpush2.msra.mxu0 0.0
    %5287 = vmatprep.mubr.f32.mxu0 0.0
    %v5288 = vand.u32 %v4298, 4294901760
    %v5289 = vsub.f32 %v4298, %v5288
    %v5290 = vand.u32 %v5289, 4294901760
    %v5291 = vsub.f32 %v5289, %v5290
    %v5292 = vand.u32 %v5291, 4294901760
    %5293 = vmatmul.mubr.f32.gmra.mxu0 %v5292
    %v5294 = vpop.f32.mrf.mxu0
    %v5295 = vadd.f32 0.0, %v5294
    %v5296 = vpop.f32.mrf.mxu0
    %5297 = vdwg.mxu0
    %5298 = vmatprep.subr.mxu0 0.0
    %v5299 = vand.u32 %v4351, 4294901760
    %v5300 = vsub.f32 %v4351, %v5299
    %v5301 = vand.u32 %v5300, 4294901760
    %v5302 = vsub.f32 %v5300, %v5301
    %v5303 = vand.u32 %v5302, 4294901760
    %5304 = vmatpush1.msra.mxu0 %v5303
    %5305 = vmatprep.subr.mxu0 0.0
    %v5306 = vand.u32 %v4348, 4294901760
    %v5307 = vsub.f32 %v4348, %v5306
    %v5308 = vand.u32 %v5307, 4294901760
    %v5309 = vsub.f32 %v5307, %v5308
    %v5310 = vand.u32 %v5309, 4294901760
    %5311 = vmatpush1.msra.mxu0 %v5310
    %5312 = vmatprep.subr.mxu0 0.0
    %v5313 = vand.u32 %v4345, 4294901760
    %v5314 = vsub.f32 %v4345, %v5313
    %v5315 = vand.u32 %v5314, 4294901760
    %v5316 = vsub.f32 %v5314, %v5315
    %v5317 = vand.u32 %v5316, 4294901760
    %5318 = vmatpush1.msra.mxu0 %v5317
    %5319 = vmatprep.subr.mxu0 0.0
    %v5320 = vand.u32 %v4342, 4294901760
    %v5321 = vsub.f32 %v4342, %v5320
    %v5322 = vand.u32 %v5321, 4294901760
    %v5323 = vsub.f32 %v5321, %v5322
    %v5324 = vand.u32 %v5323, 4294901760
    %5325 = vmatpush1.msra.mxu0 %v5324
    %5326 = vmatprep.subr.mxu0 0.0
    %v5327 = vand.u32 %v4339, 4294901760
    %v5328 = vsub.f32 %v4339, %v5327
    %v5329 = vand.u32 %v5328, 4294901760
    %v5330 = vsub.f32 %v5328, %v5329
    %v5331 = vand.u32 %v5330, 4294901760
    %5332 = vmatpush1.msra.mxu0 %v5331
    %5333 = vmatprep.subr.mxu0 0.0
    %v5334 = vand.u32 %v4336, 4294901760
    %v5335 = vsub.f32 %v4336, %v5334
    %v5336 = vand.u32 %v5335, 4294901760
    %v5337 = vsub.f32 %v5335, %v5336
    %v5338 = vand.u32 %v5337, 4294901760
    %5339 = vmatpush1.msra.mxu0 %v5338
    %5340 = vmatprep.subr.mxu0 0.0
    %v5341 = vand.u32 %v4333, 4294901760
    %v5342 = vsub.f32 %v4333, %v5341
    %v5343 = vand.u32 %v5342, 4294901760
    %v5344 = vsub.f32 %v5342, %v5343
    %v5345 = vand.u32 %v5344, 4294901760
    %5346 = vmatpush1.msra.mxu0 %v5345
    %5347 = vmatprep.subr.mxu0 0.0
    %v5348 = vand.u32 %v4330, 4294901760
    %v5349 = vsub.f32 %v4330, %v5348
    %v5350 = vand.u32 %v5349, 4294901760
    %v5351 = vsub.f32 %v5349, %v5350
    %v5352 = vand.u32 %v5351, 4294901760
    %5353 = vmatpush1.msra.mxu0 %v5352
    %5354 = vmatprep.subr.mxu0 0.0
    %v5355 = vand.u32 %v4327, 4294901760
    %v5356 = vsub.f32 %v4327, %v5355
    %v5357 = vand.u32 %v5356, 4294901760
    %v5358 = vsub.f32 %v5356, %v5357
    %v5359 = vand.u32 %v5358, 4294901760
    %5360 = vmatpush1.msra.mxu0 %v5359
    %5361 = vmatprep.subr.mxu0 0.0
    %v5362 = vand.u32 %v4324, 4294901760
    %v5363 = vsub.f32 %v4324, %v5362
    %v5364 = vand.u32 %v5363, 4294901760
    %v5365 = vsub.f32 %v5363, %v5364
    %v5366 = vand.u32 %v5365, 4294901760
    %5367 = vmatpush1.msra.mxu0 %v5366
    %5368 = vmatprep.subr.mxu0 0.0
    %v5369 = vand.u32 %v4321, 4294901760
    %v5370 = vsub.f32 %v4321, %v5369
    %v5371 = vand.u32 %v5370, 4294901760
    %v5372 = vsub.f32 %v5370, %v5371
    %v5373 = vand.u32 %v5372, 4294901760
    %5374 = vmatpush1.msra.mxu0 %v5373
    %5375 = vmatprep.subr.mxu0 0.0
    %v5376 = vand.u32 %v4318, 4294901760
    %v5377 = vsub.f32 %v4318, %v5376
    %v5378 = vand.u32 %v5377, 4294901760
    %v5379 = vsub.f32 %v5377, %v5378
    %v5380 = vand.u32 %v5379, 4294901760
    %5381 = vmatpush1.msra.mxu0 %v5380
    %5382 = vmatprep.subr.mxu0 0.0
    %v5383 = vand.u32 %v4315, 4294901760
    %v5384 = vsub.f32 %v4315, %v5383
    %v5385 = vand.u32 %v5384, 4294901760
    %v5386 = vsub.f32 %v5384, %v5385
    %v5387 = vand.u32 %v5386, 4294901760
    %5388 = vmatpush1.msra.mxu0 %v5387
    %5389 = vmatprep.subr.mxu0 0.0
    %v5390 = vand.u32 %v4312, 4294901760
    %v5391 = vsub.f32 %v4312, %v5390
    %v5392 = vand.u32 %v5391, 4294901760
    %v5393 = vsub.f32 %v5391, %v5392
    %v5394 = vand.u32 %v5393, 4294901760
    %5395 = vmatpush1.msra.mxu0 %v5394
    %5396 = vmatprep.subr.mxu0 0.0
    %v5397 = vand.u32 %v4309, 4294901760
    %v5398 = vsub.f32 %v4309, %v5397
    %v5399 = vand.u32 %v5398, 4294901760
    %v5400 = vsub.f32 %v5398, %v5399
    %v5401 = vand.u32 %v5400, 4294901760
    %5402 = vmatpush1.msra.mxu0 %v5401
    %5403 = vmatprep.subr.mxu0 0.0
    %v5404 = vand.u32 %v4306, 4294901760
    %v5405 = vsub.f32 %v4306, %v5404
    %v5406 = vand.u32 %v5405, 4294901760
    %v5407 = vsub.f32 %v5405, %v5406
    %v5408 = vand.u32 %v5407, 4294901760
    %5409 = vmatpush1.msra.mxu0 %v5408
    %5410 = vmatprep.subr.mxu0 0.0
    %5411 = vmatpush2.msra.mxu0 0.0
    %5412 = vmatprep.subr.mxu0 0.0
    %5413 = vmatpush2.msra.mxu0 0.0
    %5414 = vmatprep.subr.mxu0 0.0
    %5415 = vmatpush2.msra.mxu0 0.0
    %5416 = vmatprep.subr.mxu0 0.0
    %5417 = vmatpush2.msra.mxu0 0.0
    %5418 = vmatprep.subr.mxu0 0.0
    %5419 = vmatpush2.msra.mxu0 0.0
    %5420 = vmatprep.subr.mxu0 0.0
    %5421 = vmatpush2.msra.mxu0 0.0
    %5422 = vmatprep.subr.mxu0 0.0
    %5423 = vmatpush2.msra.mxu0 0.0
    %5424 = vmatprep.subr.mxu0 0.0
    %5425 = vmatpush2.msra.mxu0 0.0
    %5426 = vmatprep.subr.mxu0 0.0
    %5427 = vmatpush2.msra.mxu0 0.0
    %5428 = vmatprep.subr.mxu0 0.0
    %5429 = vmatpush2.msra.mxu0 0.0
    %5430 = vmatprep.subr.mxu0 0.0
    %5431 = vmatpush2.msra.mxu0 0.0
    %5432 = vmatprep.subr.mxu0 0.0
    %5433 = vmatpush2.msra.mxu0 0.0
    %5434 = vmatprep.subr.mxu0 0.0
    %5435 = vmatpush2.msra.mxu0 0.0
    %5436 = vmatprep.subr.mxu0 0.0
    %5437 = vmatpush2.msra.mxu0 0.0
    %5438 = vmatprep.subr.mxu0 0.0
    %5439 = vmatpush2.msra.mxu0 0.0
    %5440 = vmatprep.subr.mxu0 0.0
    %5441 = vmatpush2.msra.mxu0 0.0
    %5442 = vmatprep.mubr.f32.mxu0 0.0
    %v5443 = vand.u32 %v4298, 4294901760
    %5444 = vmatmul.mubr.f32.gmra.mxu0 %v5443
    %v5445 = vpop.f32.mrf.mxu0
    %v5446 = vadd.f32 %v5295, %v5445
    %v5447 = vpop.f32.mrf.mxu0
    %5448 = vdwg.mxu0
    %5449 = vmatprep.subr.mxu0 0.0
    %v5450 = vand.u32 %v4351, 4294901760
    %v5451 = vsub.f32 %v4351, %v5450
    %5452 = vmatpush1.msra.mxu0 %v5451
    %5453 = vmatprep.subr.mxu0 0.0
    %v5454 = vand.u32 %v4348, 4294901760
    %v5455 = vsub.f32 %v4348, %v5454
    %5456 = vmatpush1.msra.mxu0 %v5455
    %5457 = vmatprep.subr.mxu0 0.0
    %v5458 = vand.u32 %v4345, 4294901760
    %v5459 = vsub.f32 %v4345, %v5458
    %5460 = vmatpush1.msra.mxu0 %v5459
    %5461 = vmatprep.subr.mxu0 0.0
    %v5462 = vand.u32 %v4342, 4294901760
    %v5463 = vsub.f32 %v4342, %v5462
    %5464 = vmatpush1.msra.mxu0 %v5463
    %5465 = vmatprep.subr.mxu0 0.0
    %v5466 = vand.u32 %v4339, 4294901760
    %v5467 = vsub.f32 %v4339, %v5466
    %5468 = vmatpush1.msra.mxu0 %v5467
    %5469 = vmatprep.subr.mxu0 0.0
    %v5470 = vand.u32 %v4336, 4294901760
    %v5471 = vsub.f32 %v4336, %v5470
    %5472 = vmatpush1.msra.mxu0 %v5471
    %5473 = vmatprep.subr.mxu0 0.0
    %v5474 = vand.u32 %v4333, 4294901760
    %v5475 = vsub.f32 %v4333, %v5474
    %5476 = vmatpush1.msra.mxu0 %v5475
    %5477 = vmatprep.subr.mxu0 0.0
    %v5478 = vand.u32 %v4330, 4294901760
    %v5479 = vsub.f32 %v4330, %v5478
    %5480 = vmatpush1.msra.mxu0 %v5479
    %5481 = vmatprep.subr.mxu0 0.0
    %v5482 = vand.u32 %v4327, 4294901760
    %v5483 = vsub.f32 %v4327, %v5482
    %5484 = vmatpush1.msra.mxu0 %v5483
    %5485 = vmatprep.subr.mxu0 0.0
    %v5486 = vand.u32 %v4324, 4294901760
    %v5487 = vsub.f32 %v4324, %v5486
    %5488 = vmatpush1.msra.mxu0 %v5487
    %5489 = vmatprep.subr.mxu0 0.0
    %v5490 = vand.u32 %v4321, 4294901760
    %v5491 = vsub.f32 %v4321, %v5490
    %5492 = vmatpush1.msra.mxu0 %v5491
    %5493 = vmatprep.subr.mxu0 0.0
    %v5494 = vand.u32 %v4318, 4294901760
    %v5495 = vsub.f32 %v4318, %v5494
    %5496 = vmatpush1.msra.mxu0 %v5495
    %5497 = vmatprep.subr.mxu0 0.0
    %v5498 = vand.u32 %v4315, 4294901760
    %v5499 = vsub.f32 %v4315, %v5498
    %5500 = vmatpush1.msra.mxu0 %v5499
    %5501 = vmatprep.subr.mxu0 0.0
    %v5502 = vand.u32 %v4312, 4294901760
    %v5503 = vsub.f32 %v4312, %v5502
    %5504 = vmatpush1.msra.mxu0 %v5503
    %5505 = vmatprep.subr.mxu0 0.0
    %v5506 = vand.u32 %v4309, 4294901760
    %v5507 = vsub.f32 %v4309, %v5506
    %5508 = vmatpush1.msra.mxu0 %v5507
    %5509 = vmatprep.subr.mxu0 0.0
    %v5510 = vand.u32 %v4306, 4294901760
    %v5511 = vsub.f32 %v4306, %v5510
    %5512 = vmatpush1.msra.mxu0 %v5511
    %5513 = vmatprep.subr.mxu0 0.0
    %5514 = vmatpush2.msra.mxu0 0.0
    %5515 = vmatprep.subr.mxu0 0.0
    %5516 = vmatpush2.msra.mxu0 0.0
    %5517 = vmatprep.subr.mxu0 0.0
    %5518 = vmatpush2.msra.mxu0 0.0
    %5519 = vmatprep.subr.mxu0 0.0
    %5520 = vmatpush2.msra.mxu0 0.0
    %5521 = vmatprep.subr.mxu0 0.0
    %5522 = vmatpush2.msra.mxu0 0.0
    %5523 = vmatprep.subr.mxu0 0.0
    %5524 = vmatpush2.msra.mxu0 0.0
    %5525 = vmatprep.subr.mxu0 0.0
    %5526 = vmatpush2.msra.mxu0 0.0
    %5527 = vmatprep.subr.mxu0 0.0
    %5528 = vmatpush2.msra.mxu0 0.0
    %5529 = vmatprep.subr.mxu0 0.0
    %5530 = vmatpush2.msra.mxu0 0.0
    %5531 = vmatprep.subr.mxu0 0.0
    %5532 = vmatpush2.msra.mxu0 0.0
    %5533 = vmatprep.subr.mxu0 0.0
    %5534 = vmatpush2.msra.mxu0 0.0
    %5535 = vmatprep.subr.mxu0 0.0
    %5536 = vmatpush2.msra.mxu0 0.0
    %5537 = vmatprep.subr.mxu0 0.0
    %5538 = vmatpush2.msra.mxu0 0.0
    %5539 = vmatprep.subr.mxu0 0.0
    %5540 = vmatpush2.msra.mxu0 0.0
    %5541 = vmatprep.subr.mxu0 0.0
    %5542 = vmatpush2.msra.mxu0 0.0
    %5543 = vmatprep.subr.mxu0 0.0
    %5544 = vmatpush2.msra.mxu0 0.0
    %5545 = vmatprep.mubr.f32.mxu0 0.0
    %v5546 = vand.u32 %v4298, 4294901760
    %v5547 = vsub.f32 %v4298, %v5546
    %5548 = vmatmul.mubr.f32.gmra.mxu0 %v5547
    %v5549 = vpop.f32.mrf.mxu0
    %v5550 = vadd.f32 %v5446, %v5549
    %v5551 = vpop.f32.mrf.mxu0
    %5552 = vdwg.mxu0
    %5553 = vmatprep.subr.mxu0 0.0
    %v5554 = vand.u32 %v4351, 4294901760
    %5555 = vmatpush1.msra.mxu0 %v5554
    %5556 = vmatprep.subr.mxu0 0.0
    %v5557 = vand.u32 %v4348, 4294901760
    %5558 = vmatpush1.msra.mxu0 %v5557
    %5559 = vmatprep.subr.mxu0 0.0
    %v5560 = vand.u32 %v4345, 4294901760
    %5561 = vmatpush1.msra.mxu0 %v5560
    %5562 = vmatprep.subr.mxu0 0.0
    %v5563 = vand.u32 %v4342, 4294901760
    %5564 = vmatpush1.msra.mxu0 %v5563
    %5565 = vmatprep.subr.mxu0 0.0
    %v5566 = vand.u32 %v4339, 4294901760
    %5567 = vmatpush1.msra.mxu0 %v5566
    %5568 = vmatprep.subr.mxu0 0.0
    %v5569 = vand.u32 %v4336, 4294901760
    %5570 = vmatpush1.msra.mxu0 %v5569
    %5571 = vmatprep.subr.mxu0 0.0
    %v5572 = vand.u32 %v4333, 4294901760
    %5573 = vmatpush1.msra.mxu0 %v5572
    %5574 = vmatprep.subr.mxu0 0.0
    %v5575 = vand.u32 %v4330, 4294901760
    %5576 = vmatpush1.msra.mxu0 %v5575
    %5577 = vmatprep.subr.mxu0 0.0
    %v5578 = vand.u32 %v4327, 4294901760
    %5579 = vmatpush1.msra.mxu0 %v5578
    %5580 = vmatprep.subr.mxu0 0.0
    %v5581 = vand.u32 %v4324, 4294901760
    %5582 = vmatpush1.msra.mxu0 %v5581
    %5583 = vmatprep.subr.mxu0 0.0
    %v5584 = vand.u32 %v4321, 4294901760
    %5585 = vmatpush1.msra.mxu0 %v5584
    %5586 = vmatprep.subr.mxu0 0.0
    %v5587 = vand.u32 %v4318, 4294901760
    %5588 = vmatpush1.msra.mxu0 %v5587
    %5589 = vmatprep.subr.mxu0 0.0
    %v5590 = vand.u32 %v4315, 4294901760
    %5591 = vmatpush1.msra.mxu0 %v5590
    %5592 = vmatprep.subr.mxu0 0.0
    %v5593 = vand.u32 %v4312, 4294901760
    %5594 = vmatpush1.msra.mxu0 %v5593
    %5595 = vmatprep.subr.mxu0 0.0
    %v5596 = vand.u32 %v4309, 4294901760
    %5597 = vmatpush1.msra.mxu0 %v5596
    %5598 = vmatprep.subr.mxu0 0.0
    %v5599 = vand.u32 %v4306, 4294901760
    %5600 = vmatpush1.msra.mxu0 %v5599
    %5601 = vmatprep.subr.mxu0 0.0
    %5602 = vmatpush2.msra.mxu0 0.0
    %5603 = vmatprep.subr.mxu0 0.0
    %5604 = vmatpush2.msra.mxu0 0.0
    %5605 = vmatprep.subr.mxu0 0.0
    %5606 = vmatpush2.msra.mxu0 0.0
    %5607 = vmatprep.subr.mxu0 0.0
    %5608 = vmatpush2.msra.mxu0 0.0
    %5609 = vmatprep.subr.mxu0 0.0
    %5610 = vmatpush2.msra.mxu0 0.0
    %5611 = vmatprep.subr.mxu0 0.0
    %5612 = vmatpush2.msra.mxu0 0.0
    %5613 = vmatprep.subr.mxu0 0.0
    %5614 = vmatpush2.msra.mxu0 0.0
    %5615 = vmatprep.subr.mxu0 0.0
    %5616 = vmatpush2.msra.mxu0 0.0
    %5617 = vmatprep.subr.mxu0 0.0
    %5618 = vmatpush2.msra.mxu0 0.0
    %5619 = vmatprep.subr.mxu0 0.0
    %5620 = vmatpush2.msra.mxu0 0.0
    %5621 = vmatprep.subr.mxu0 0.0
    %5622 = vmatpush2.msra.mxu0 0.0
    %5623 = vmatprep.subr.mxu0 0.0
    %5624 = vmatpush2.msra.mxu0 0.0
    %5625 = vmatprep.subr.mxu0 0.0
    %5626 = vmatpush2.msra.mxu0 0.0
    %5627 = vmatprep.subr.mxu0 0.0
    %5628 = vmatpush2.msra.mxu0 0.0
    %5629 = vmatprep.subr.mxu0 0.0
    %5630 = vmatpush2.msra.mxu0 0.0
    %5631 = vmatprep.subr.mxu0 0.0
    %5632 = vmatpush2.msra.mxu0 0.0
    %5633 = vmatprep.mubr.f32.mxu0 0.0
    %v5634 = vand.u32 %v4298, 4294901760
    %v5635 = vsub.f32 %v4298, %v5634
    %v5636 = vand.u32 %v5635, 4294901760
    %5637 = vmatmul.mubr.f32.gmra.mxu0 %v5636
    %v5638 = vpop.f32.mrf.mxu0
    %v5639 = vadd.f32 %v5550, %v5638
    %v5640 = vpop.f32.mrf.mxu0
    %5641 = vdwg.mxu0
    %5642 = vmatprep.subr.mxu0 0.0
    %v5643 = vand.u32 %v4351, 4294901760
    %v5644 = vsub.f32 %v4351, %v5643
    %v5645 = vand.u32 %v5644, 4294901760
    %5646 = vmatpush1.msra.mxu0 %v5645
    %5647 = vmatprep.subr.mxu0 0.0
    %v5648 = vand.u32 %v4348, 4294901760
    %v5649 = vsub.f32 %v4348, %v5648
    %v5650 = vand.u32 %v5649, 4294901760
    %5651 = vmatpush1.msra.mxu0 %v5650
    %5652 = vmatprep.subr.mxu0 0.0
    %v5653 = vand.u32 %v4345, 4294901760
    %v5654 = vsub.f32 %v4345, %v5653
    %v5655 = vand.u32 %v5654, 4294901760
    %5656 = vmatpush1.msra.mxu0 %v5655
    %5657 = vmatprep.subr.mxu0 0.0
    %v5658 = vand.u32 %v4342, 4294901760
    %v5659 = vsub.f32 %v4342, %v5658
    %v5660 = vand.u32 %v5659, 4294901760
    %5661 = vmatpush1.msra.mxu0 %v5660
    %5662 = vmatprep.subr.mxu0 0.0
    %v5663 = vand.u32 %v4339, 4294901760
    %v5664 = vsub.f32 %v4339, %v5663
    %v5665 = vand.u32 %v5664, 4294901760
    %5666 = vmatpush1.msra.mxu0 %v5665
    %5667 = vmatprep.subr.mxu0 0.0
    %v5668 = vand.u32 %v4336, 4294901760
    %v5669 = vsub.f32 %v4336, %v5668
    %v5670 = vand.u32 %v5669, 4294901760
    %5671 = vmatpush1.msra.mxu0 %v5670
    %5672 = vmatprep.subr.mxu0 0.0
    %v5673 = vand.u32 %v4333, 4294901760
    %v5674 = vsub.f32 %v4333, %v5673
    %v5675 = vand.u32 %v5674, 4294901760
    %5676 = vmatpush1.msra.mxu0 %v5675
    %5677 = vmatprep.subr.mxu0 0.0
    %v5678 = vand.u32 %v4330, 4294901760
    %v5679 = vsub.f32 %v4330, %v5678
    %v5680 = vand.u32 %v5679, 4294901760
    %5681 = vmatpush1.msra.mxu0 %v5680
    %5682 = vmatprep.subr.mxu0 0.0
    %v5683 = vand.u32 %v4327, 4294901760
    %v5684 = vsub.f32 %v4327, %v5683
    %v5685 = vand.u32 %v5684, 4294901760
    %5686 = vmatpush1.msra.mxu0 %v5685
    %5687 = vmatprep.subr.mxu0 0.0
    %v5688 = vand.u32 %v4324, 4294901760
    %v5689 = vsub.f32 %v4324, %v5688
    %v5690 = vand.u32 %v5689, 4294901760
    %5691 = vmatpush1.msra.mxu0 %v5690
    %5692 = vmatprep.subr.mxu0 0.0
    %v5693 = vand.u32 %v4321, 4294901760
    %v5694 = vsub.f32 %v4321, %v5693
    %v5695 = vand.u32 %v5694, 4294901760
    %5696 = vmatpush1.msra.mxu0 %v5695
    %5697 = vmatprep.subr.mxu0 0.0
    %v5698 = vand.u32 %v4318, 4294901760
    %v5699 = vsub.f32 %v4318, %v5698
    %v5700 = vand.u32 %v5699, 4294901760
    %5701 = vmatpush1.msra.mxu0 %v5700
    %5702 = vmatprep.subr.mxu0 0.0
    %v5703 = vand.u32 %v4315, 4294901760
    %v5704 = vsub.f32 %v4315, %v5703
    %v5705 = vand.u32 %v5704, 4294901760
    %5706 = vmatpush1.msra.mxu0 %v5705
    %5707 = vmatprep.subr.mxu0 0.0
    %v5708 = vand.u32 %v4312, 4294901760
    %v5709 = vsub.f32 %v4312, %v5708
    %v5710 = vand.u32 %v5709, 4294901760
    %5711 = vmatpush1.msra.mxu0 %v5710
    %5712 = vmatprep.subr.mxu0 0.0
    %v5713 = vand.u32 %v4309, 4294901760
    %v5714 = vsub.f32 %v4309, %v5713
    %v5715 = vand.u32 %v5714, 4294901760
    %5716 = vmatpush1.msra.mxu0 %v5715
    %5717 = vmatprep.subr.mxu0 0.0
    %v5718 = vand.u32 %v4306, 4294901760
    %v5719 = vsub.f32 %v4306, %v5718
    %v5720 = vand.u32 %v5719, 4294901760
    %5721 = vmatpush1.msra.mxu0 %v5720
    %5722 = vmatprep.subr.mxu0 0.0
    %5723 = vmatpush2.msra.mxu0 0.0
    %5724 = vmatprep.subr.mxu0 0.0
    %5725 = vmatpush2.msra.mxu0 0.0
    %5726 = vmatprep.subr.mxu0 0.0
    %5727 = vmatpush2.msra.mxu0 0.0
    %5728 = vmatprep.subr.mxu0 0.0
    %5729 = vmatpush2.msra.mxu0 0.0
    %5730 = vmatprep.subr.mxu0 0.0
    %5731 = vmatpush2.msra.mxu0 0.0
    %5732 = vmatprep.subr.mxu0 0.0
    %5733 = vmatpush2.msra.mxu0 0.0
    %5734 = vmatprep.subr.mxu0 0.0
    %5735 = vmatpush2.msra.mxu0 0.0
    %5736 = vmatprep.subr.mxu0 0.0
    %5737 = vmatpush2.msra.mxu0 0.0
    %5738 = vmatprep.subr.mxu0 0.0
    %5739 = vmatpush2.msra.mxu0 0.0
    %5740 = vmatprep.subr.mxu0 0.0
    %5741 = vmatpush2.msra.mxu0 0.0
    %5742 = vmatprep.subr.mxu0 0.0
    %5743 = vmatpush2.msra.mxu0 0.0
    %5744 = vmatprep.subr.mxu0 0.0
    %5745 = vmatpush2.msra.mxu0 0.0
    %5746 = vmatprep.subr.mxu0 0.0
    %5747 = vmatpush2.msra.mxu0 0.0
    %5748 = vmatprep.subr.mxu0 0.0
    %5749 = vmatpush2.msra.mxu0 0.0
    %5750 = vmatprep.subr.mxu0 0.0
    %5751 = vmatpush2.msra.mxu0 0.0
    %5752 = vmatprep.subr.mxu0 0.0
    %5753 = vmatpush2.msra.mxu0 0.0
    %5754 = vmatprep.mubr.f32.mxu0 0.0
    %v5755 = vand.u32 %v4298, 4294901760
    %5756 = vmatmul.mubr.f32.gmra.mxu0 %v5755
    %v5757 = vpop.f32.mrf.mxu0
    %v5758 = vadd.f32 %v5639, %v5757
    %v5759 = vpop.f32.mrf.mxu0
    %5760 = vdwg.mxu0
    %5761 = vmatprep.subr.mxu0 0.0
    %v5762 = vand.u32 %v4351, 4294901760
    %5763 = vmatpush1.msra.mxu0 %v5762
    %5764 = vmatprep.subr.mxu0 0.0
    %v5765 = vand.u32 %v4348, 4294901760
    %5766 = vmatpush1.msra.mxu0 %v5765
    %5767 = vmatprep.subr.mxu0 0.0
    %v5768 = vand.u32 %v4345, 4294901760
    %5769 = vmatpush1.msra.mxu0 %v5768
    %5770 = vmatprep.subr.mxu0 0.0
    %v5771 = vand.u32 %v4342, 4294901760
    %5772 = vmatpush1.msra.mxu0 %v5771
    %5773 = vmatprep.subr.mxu0 0.0
    %v5774 = vand.u32 %v4339, 4294901760
    %5775 = vmatpush1.msra.mxu0 %v5774
    %5776 = vmatprep.subr.mxu0 0.0
    %v5777 = vand.u32 %v4336, 4294901760
    %5778 = vmatpush1.msra.mxu0 %v5777
    %5779 = vmatprep.subr.mxu0 0.0
    %v5780 = vand.u32 %v4333, 4294901760
    %5781 = vmatpush1.msra.mxu0 %v5780
    %5782 = vmatprep.subr.mxu0 0.0
    %v5783 = vand.u32 %v4330, 4294901760
    %5784 = vmatpush1.msra.mxu0 %v5783
    %5785 = vmatprep.subr.mxu0 0.0
    %v5786 = vand.u32 %v4327, 4294901760
    %5787 = vmatpush1.msra.mxu0 %v5786
    %5788 = vmatprep.subr.mxu0 0.0
    %v5789 = vand.u32 %v4324, 4294901760
    %5790 = vmatpush1.msra.mxu0 %v5789
    %5791 = vmatprep.subr.mxu0 0.0
    %v5792 = vand.u32 %v4321, 4294901760
    %5793 = vmatpush1.msra.mxu0 %v5792
    %5794 = vmatprep.subr.mxu0 0.0
    %v5795 = vand.u32 %v4318, 4294901760
    %5796 = vmatpush1.msra.mxu0 %v5795
    %5797 = vmatprep.subr.mxu0 0.0
    %v5798 = vand.u32 %v4315, 4294901760
    %5799 = vmatpush1.msra.mxu0 %v5798
    %5800 = vmatprep.subr.mxu0 0.0
    %v5801 = vand.u32 %v4312, 4294901760
    %5802 = vmatpush1.msra.mxu0 %v5801
    %5803 = vmatprep.subr.mxu0 0.0
    %v5804 = vand.u32 %v4309, 4294901760
    %5805 = vmatpush1.msra.mxu0 %v5804
    %5806 = vmatprep.subr.mxu0 0.0
    %v5807 = vand.u32 %v4306, 4294901760
    %5808 = vmatpush1.msra.mxu0 %v5807
    %5809 = vmatprep.subr.mxu0 0.0
    %5810 = vmatpush2.msra.mxu0 0.0
    %5811 = vmatprep.subr.mxu0 0.0
    %5812 = vmatpush2.msra.mxu0 0.0
    %5813 = vmatprep.subr.mxu0 0.0
    %5814 = vmatpush2.msra.mxu0 0.0
    %5815 = vmatprep.subr.mxu0 0.0
    %5816 = vmatpush2.msra.mxu0 0.0
    %5817 = vmatprep.subr.mxu0 0.0
    %5818 = vmatpush2.msra.mxu0 0.0
    %5819 = vmatprep.subr.mxu0 0.0
    %5820 = vmatpush2.msra.mxu0 0.0
    %5821 = vmatprep.subr.mxu0 0.0
    %5822 = vmatpush2.msra.mxu0 0.0
    %5823 = vmatprep.subr.mxu0 0.0
    %5824 = vmatpush2.msra.mxu0 0.0
    %5825 = vmatprep.subr.mxu0 0.0
    %5826 = vmatpush2.msra.mxu0 0.0
    %5827 = vmatprep.subr.mxu0 0.0
    %5828 = vmatpush2.msra.mxu0 0.0
    %5829 = vmatprep.subr.mxu0 0.0
    %5830 = vmatpush2.msra.mxu0 0.0
    %5831 = vmatprep.subr.mxu0 0.0
    %5832 = vmatpush2.msra.mxu0 0.0
    %5833 = vmatprep.subr.mxu0 0.0
    %5834 = vmatpush2.msra.mxu0 0.0
    %5835 = vmatprep.subr.mxu0 0.0
    %5836 = vmatpush2.msra.mxu0 0.0
    %5837 = vmatprep.subr.mxu0 0.0
    %5838 = vmatpush2.msra.mxu0 0.0
    %5839 = vmatprep.subr.mxu0 0.0
    %5840 = vmatpush2.msra.mxu0 0.0
    %5841 = vmatprep.mubr.f32.mxu0 0.0
    %v5842 = vand.u32 %v4298, 4294901760
    %5843 = vmatmul.mubr.f32.gmra.mxu0 %v5842
    %v5844 = vpop.f32.mrf.mxu0
    %v5845 = vadd.f32 %v5758, %v5844
    %v5846 = vpop.f32.mrf.mxu0
    %5847 = vdwg.mxu0
    %v5848 = vand.u32 %v4350, 4294901760
    %5849 = vmatprep.subr.mxu0 %v5848
    %v5850 = vand.u32 %v4349, 4294901760
    %5851 = vmatpush1.msra.mxu0 %v5850
    %v5852 = vand.u32 %v4347, 4294901760
    %5853 = vmatprep.subr.mxu0 %v5852
    %v5854 = vand.u32 %v4346, 4294901760
    %5855 = vmatpush1.msra.mxu0 %v5854
    %v5856 = vand.u32 %v4344, 4294901760
    %5857 = vmatprep.subr.mxu0 %v5856
    %v5858 = vand.u32 %v4343, 4294901760
    %5859 = vmatpush1.msra.mxu0 %v5858
    %v5860 = vand.u32 %v4341, 4294901760
    %5861 = vmatprep.subr.mxu0 %v5860
    %v5862 = vand.u32 %v4340, 4294901760
    %5863 = vmatpush1.msra.mxu0 %v5862
    %v5864 = vand.u32 %v4338, 4294901760
    %5865 = vmatprep.subr.mxu0 %v5864
    %v5866 = vand.u32 %v4337, 4294901760
    %5867 = vmatpush1.msra.mxu0 %v5866
    %v5868 = vand.u32 %v4335, 4294901760
    %5869 = vmatprep.subr.mxu0 %v5868
    %v5870 = vand.u32 %v4334, 4294901760
    %5871 = vmatpush1.msra.mxu0 %v5870
    %v5872 = vand.u32 %v4332, 4294901760
    %5873 = vmatprep.subr.mxu0 %v5872
    %v5874 = vand.u32 %v4331, 4294901760
    %5875 = vmatpush1.msra.mxu0 %v5874
    %v5876 = vand.u32 %v4329, 4294901760
    %5877 = vmatprep.subr.mxu0 %v5876
    %v5878 = vand.u32 %v4328, 4294901760
    %5879 = vmatpush1.msra.mxu0 %v5878
    %v5880 = vand.u32 %v4326, 4294901760
    %5881 = vmatprep.subr.mxu0 %v5880
    %v5882 = vand.u32 %v4325, 4294901760
    %5883 = vmatpush1.msra.mxu0 %v5882
    %v5884 = vand.u32 %v4323, 4294901760
    %5885 = vmatprep.subr.mxu0 %v5884
    %v5886 = vand.u32 %v4322, 4294901760
    %5887 = vmatpush1.msra.mxu0 %v5886
    %v5888 = vand.u32 %v4320, 4294901760
    %5889 = vmatprep.subr.mxu0 %v5888
    %v5890 = vand.u32 %v4319, 4294901760
    %5891 = vmatpush1.msra.mxu0 %v5890
    %v5892 = vand.u32 %v4317, 4294901760
    %5893 = vmatprep.subr.mxu0 %v5892
    %v5894 = vand.u32 %v4316, 4294901760
    %5895 = vmatpush1.msra.mxu0 %v5894
    %v5896 = vand.u32 %v4314, 4294901760
    %5897 = vmatprep.subr.mxu0 %v5896
    %v5898 = vand.u32 %v4313, 4294901760
    %5899 = vmatpush1.msra.mxu0 %v5898
    %v5900 = vand.u32 %v4311, 4294901760
    %5901 = vmatprep.subr.mxu0 %v5900
    %v5902 = vand.u32 %v4310, 4294901760
    %5903 = vmatpush1.msra.mxu0 %v5902
    %v5904 = vand.u32 %v4308, 4294901760
    %5905 = vmatprep.subr.mxu0 %v5904
    %v5906 = vand.u32 %v4307, 4294901760
    %5907 = vmatpush1.msra.mxu0 %v5906
    %v5908 = vand.u32 %v4305, 4294901760
    %5909 = vmatprep.subr.mxu0 %v5908
    %v5910 = vand.u32 %v4304, 4294901760
    %5911 = vmatpush1.msra.mxu0 %v5910
    %5912 = vmatprep.subr.mxu0 0.0
    %5913 = vmatpush2.msra.mxu0 0.0
    %5914 = vmatprep.subr.mxu0 0.0
    %5915 = vmatpush2.msra.mxu0 0.0
    %5916 = vmatprep.subr.mxu0 0.0
    %5917 = vmatpush2.msra.mxu0 0.0
    %5918 = vmatprep.subr.mxu0 0.0
    %5919 = vmatpush2.msra.mxu0 0.0
    %5920 = vmatprep.subr.mxu0 0.0
    %5921 = vmatpush2.msra.mxu0 0.0
    %5922 = vmatprep.subr.mxu0 0.0
    %5923 = vmatpush2.msra.mxu0 0.0
    %5924 = vmatprep.subr.mxu0 0.0
    %5925 = vmatpush2.msra.mxu0 0.0
    %5926 = vmatprep.subr.mxu0 0.0
    %5927 = vmatpush2.msra.mxu0 0.0
    %5928 = vmatprep.subr.mxu0 0.0
    %5929 = vmatpush2.msra.mxu0 0.0
    %5930 = vmatprep.subr.mxu0 0.0
    %5931 = vmatpush2.msra.mxu0 0.0
    %5932 = vmatprep.subr.mxu0 0.0
    %5933 = vmatpush2.msra.mxu0 0.0
    %5934 = vmatprep.subr.mxu0 0.0
    %5935 = vmatpush2.msra.mxu0 0.0
    %5936 = vmatprep.subr.mxu0 0.0
    %5937 = vmatpush2.msra.mxu0 0.0
    %5938 = vmatprep.subr.mxu0 0.0
    %5939 = vmatpush2.msra.mxu0 0.0
    %5940 = vmatprep.subr.mxu0 0.0
    %5941 = vmatpush2.msra.mxu0 0.0
    %5942 = vmatprep.subr.mxu0 0.0
    %5943 = vmatpush2.msra.mxu0 0.0
    %5944 = vmatprep.mubr.f32.mxu0 0.0
    %v5945 = vand.u32 %v4303, 4294901760
    %v5946 = vsub.f32 %v4303, %v5945
    %v5947 = vand.u32 %v5946, 4294901760
    %v5948 = vsub.f32 %v5946, %v5947
    %v5949 = vand.u32 %v5948, 4294901760
    %5950 = vmatmul.mubr.f32.gmra.mxu0 %v5949
    %v5951 = vpop.f32.mrf.mxu0
    %v5952 = vadd.f32 0.0, %v5951
    %v5953 = vpop.f32.mrf.mxu0
    %v5954 = vadd.f32 0.0, %v5953
    %5955 = vdwg.mxu0
    %v5956 = vand.u32 %v4350, 4294901760
    %v5957 = vsub.f32 %v4350, %v5956
    %v5958 = vand.u32 %v5957, 4294901760
    %v5959 = vsub.f32 %v5957, %v5958
    %v5960 = vand.u32 %v5959, 4294901760
    %5961 = vmatprep.subr.mxu0 %v5960
    %v5962 = vand.u32 %v4349, 4294901760
    %v5963 = vsub.f32 %v4349, %v5962
    %v5964 = vand.u32 %v5963, 4294901760
    %v5965 = vsub.f32 %v5963, %v5964
    %v5966 = vand.u32 %v5965, 4294901760
    %5967 = vmatpush1.msra.mxu0 %v5966
    %v5968 = vand.u32 %v4347, 4294901760
    %v5969 = vsub.f32 %v4347, %v5968
    %v5970 = vand.u32 %v5969, 4294901760
    %v5971 = vsub.f32 %v5969, %v5970
    %v5972 = vand.u32 %v5971, 4294901760
    %5973 = vmatprep.subr.mxu0 %v5972
    %v5974 = vand.u32 %v4346, 4294901760
    %v5975 = vsub.f32 %v4346, %v5974
    %v5976 = vand.u32 %v5975, 4294901760
    %v5977 = vsub.f32 %v5975, %v5976
    %v5978 = vand.u32 %v5977, 4294901760
    %5979 = vmatpush1.msra.mxu0 %v5978
    %v5980 = vand.u32 %v4344, 4294901760
    %v5981 = vsub.f32 %v4344, %v5980
    %v5982 = vand.u32 %v5981, 4294901760
    %v5983 = vsub.f32 %v5981, %v5982
    %v5984 = vand.u32 %v5983, 4294901760
    %5985 = vmatprep.subr.mxu0 %v5984
    %v5986 = vand.u32 %v4343, 4294901760
    %v5987 = vsub.f32 %v4343, %v5986
    %v5988 = vand.u32 %v5987, 4294901760
    %v5989 = vsub.f32 %v5987, %v5988
    %v5990 = vand.u32 %v5989, 4294901760
    %5991 = vmatpush1.msra.mxu0 %v5990
    %v5992 = vand.u32 %v4341, 4294901760
    %v5993 = vsub.f32 %v4341, %v5992
    %v5994 = vand.u32 %v5993, 4294901760
    %v5995 = vsub.f32 %v5993, %v5994
    %v5996 = vand.u32 %v5995, 4294901760
    %5997 = vmatprep.subr.mxu0 %v5996
    %v5998 = vand.u32 %v4340, 4294901760
    %v5999 = vsub.f32 %v4340, %v5998
    %v6000 = vand.u32 %v5999, 4294901760
    %v6001 = vsub.f32 %v5999, %v6000
    %v6002 = vand.u32 %v6001, 4294901760
    %6003 = vmatpush1.msra.mxu0 %v6002
    %v6004 = vand.u32 %v4338, 4294901760
    %v6005 = vsub.f32 %v4338, %v6004
    %v6006 = vand.u32 %v6005, 4294901760
    %v6007 = vsub.f32 %v6005, %v6006
    %v6008 = vand.u32 %v6007, 4294901760
    %6009 = vmatprep.subr.mxu0 %v6008
    %v6010 = vand.u32 %v4337, 4294901760
    %v6011 = vsub.f32 %v4337, %v6010
    %v6012 = vand.u32 %v6011, 4294901760
    %v6013 = vsub.f32 %v6011, %v6012
    %v6014 = vand.u32 %v6013, 4294901760
    %6015 = vmatpush1.msra.mxu0 %v6014
    %v6016 = vand.u32 %v4335, 4294901760
    %v6017 = vsub.f32 %v4335, %v6016
    %v6018 = vand.u32 %v6017, 4294901760
    %v6019 = vsub.f32 %v6017, %v6018
    %v6020 = vand.u32 %v6019, 4294901760
    %6021 = vmatprep.subr.mxu0 %v6020
    %v6022 = vand.u32 %v4334, 4294901760
    %v6023 = vsub.f32 %v4334, %v6022
    %v6024 = vand.u32 %v6023, 4294901760
    %v6025 = vsub.f32 %v6023, %v6024
    %v6026 = vand.u32 %v6025, 4294901760
    %6027 = vmatpush1.msra.mxu0 %v6026
    %v6028 = vand.u32 %v4332, 4294901760
    %v6029 = vsub.f32 %v4332, %v6028
    %v6030 = vand.u32 %v6029, 4294901760
    %v6031 = vsub.f32 %v6029, %v6030
    %v6032 = vand.u32 %v6031, 4294901760
    %6033 = vmatprep.subr.mxu0 %v6032
    %v6034 = vand.u32 %v4331, 4294901760
    %v6035 = vsub.f32 %v4331, %v6034
    %v6036 = vand.u32 %v6035, 4294901760
    %v6037 = vsub.f32 %v6035, %v6036
    %v6038 = vand.u32 %v6037, 4294901760
    %6039 = vmatpush1.msra.mxu0 %v6038
    %v6040 = vand.u32 %v4329, 4294901760
    %v6041 = vsub.f32 %v4329, %v6040
    %v6042 = vand.u32 %v6041, 4294901760
    %v6043 = vsub.f32 %v6041, %v6042
    %v6044 = vand.u32 %v6043, 4294901760
    %6045 = vmatprep.subr.mxu0 %v6044
    %v6046 = vand.u32 %v4328, 4294901760
    %v6047 = vsub.f32 %v4328, %v6046
    %v6048 = vand.u32 %v6047, 4294901760
    %v6049 = vsub.f32 %v6047, %v6048
    %v6050 = vand.u32 %v6049, 4294901760
    %6051 = vmatpush1.msra.mxu0 %v6050
    %v6052 = vand.u32 %v4326, 4294901760
    %v6053 = vsub.f32 %v4326, %v6052
    %v6054 = vand.u32 %v6053, 4294901760
    %v6055 = vsub.f32 %v6053, %v6054
    %v6056 = vand.u32 %v6055, 4294901760
    %6057 = vmatprep.subr.mxu0 %v6056
    %v6058 = vand.u32 %v4325, 4294901760
    %v6059 = vsub.f32 %v4325, %v6058
    %v6060 = vand.u32 %v6059, 4294901760
    %v6061 = vsub.f32 %v6059, %v6060
    %v6062 = vand.u32 %v6061, 4294901760
    %6063 = vmatpush1.msra.mxu0 %v6062
    %v6064 = vand.u32 %v4323, 4294901760
    %v6065 = vsub.f32 %v4323, %v6064
    %v6066 = vand.u32 %v6065, 4294901760
    %v6067 = vsub.f32 %v6065, %v6066
    %v6068 = vand.u32 %v6067, 4294901760
    %6069 = vmatprep.subr.mxu0 %v6068
    %v6070 = vand.u32 %v4322, 4294901760
    %v6071 = vsub.f32 %v4322, %v6070
    %v6072 = vand.u32 %v6071, 4294901760
    %v6073 = vsub.f32 %v6071, %v6072
    %v6074 = vand.u32 %v6073, 4294901760
    %6075 = vmatpush1.msra.mxu0 %v6074
    %v6076 = vand.u32 %v4320, 4294901760
    %v6077 = vsub.f32 %v4320, %v6076
    %v6078 = vand.u32 %v6077, 4294901760
    %v6079 = vsub.f32 %v6077, %v6078
    %v6080 = vand.u32 %v6079, 4294901760
    %6081 = vmatprep.subr.mxu0 %v6080
    %v6082 = vand.u32 %v4319, 4294901760
    %v6083 = vsub.f32 %v4319, %v6082
    %v6084 = vand.u32 %v6083, 4294901760
    %v6085 = vsub.f32 %v6083, %v6084
    %v6086 = vand.u32 %v6085, 4294901760
    %6087 = vmatpush1.msra.mxu0 %v6086
    %v6088 = vand.u32 %v4317, 4294901760
    %v6089 = vsub.f32 %v4317, %v6088
    %v6090 = vand.u32 %v6089, 4294901760
    %v6091 = vsub.f32 %v6089, %v6090
    %v6092 = vand.u32 %v6091, 4294901760
    %6093 = vmatprep.subr.mxu0 %v6092
    %v6094 = vand.u32 %v4316, 4294901760
    %v6095 = vsub.f32 %v4316, %v6094
    %v6096 = vand.u32 %v6095, 4294901760
    %v6097 = vsub.f32 %v6095, %v6096
    %v6098 = vand.u32 %v6097, 4294901760
    %6099 = vmatpush1.msra.mxu0 %v6098
    %v6100 = vand.u32 %v4314, 4294901760
    %v6101 = vsub.f32 %v4314, %v6100
    %v6102 = vand.u32 %v6101, 4294901760
    %v6103 = vsub.f32 %v6101, %v6102
    %v6104 = vand.u32 %v6103, 4294901760
    %6105 = vmatprep.subr.mxu0 %v6104
    %v6106 = vand.u32 %v4313, 4294901760
    %v6107 = vsub.f32 %v4313, %v6106
    %v6108 = vand.u32 %v6107, 4294901760
    %v6109 = vsub.f32 %v6107, %v6108
    %v6110 = vand.u32 %v6109, 4294901760
    %6111 = vmatpush1.msra.mxu0 %v6110
    %v6112 = vand.u32 %v4311, 4294901760
    %v6113 = vsub.f32 %v4311, %v6112
    %v6114 = vand.u32 %v6113, 4294901760
    %v6115 = vsub.f32 %v6113, %v6114
    %v6116 = vand.u32 %v6115, 4294901760
    %6117 = vmatprep.subr.mxu0 %v6116
    %v6118 = vand.u32 %v4310, 4294901760
    %v6119 = vsub.f32 %v4310, %v6118
    %v6120 = vand.u32 %v6119, 4294901760
    %v6121 = vsub.f32 %v6119, %v6120
    %v6122 = vand.u32 %v6121, 4294901760
    %6123 = vmatpush1.msra.mxu0 %v6122
    %v6124 = vand.u32 %v4308, 4294901760
    %v6125 = vsub.f32 %v4308, %v6124
    %v6126 = vand.u32 %v6125, 4294901760
    %v6127 = vsub.f32 %v6125, %v6126
    %v6128 = vand.u32 %v6127, 4294901760
    %6129 = vmatprep.subr.mxu0 %v6128
    %v6130 = vand.u32 %v4307, 4294901760
    %v6131 = vsub.f32 %v4307, %v6130
    %v6132 = vand.u32 %v6131, 4294901760
    %v6133 = vsub.f32 %v6131, %v6132
    %v6134 = vand.u32 %v6133, 4294901760
    %6135 = vmatpush1.msra.mxu0 %v6134
    %v6136 = vand.u32 %v4305, 4294901760
    %v6137 = vsub.f32 %v4305, %v6136
    %v6138 = vand.u32 %v6137, 4294901760
    %v6139 = vsub.f32 %v6137, %v6138
    %v6140 = vand.u32 %v6139, 4294901760
    %6141 = vmatprep.subr.mxu0 %v6140
    %v6142 = vand.u32 %v4304, 4294901760
    %v6143 = vsub.f32 %v4304, %v6142
    %v6144 = vand.u32 %v6143, 4294901760
    %v6145 = vsub.f32 %v6143, %v6144
    %v6146 = vand.u32 %v6145, 4294901760
    %6147 = vmatpush1.msra.mxu0 %v6146
    %6148 = vmatprep.subr.mxu0 0.0
    %6149 = vmatpush2.msra.mxu0 0.0
    %6150 = vmatprep.subr.mxu0 0.0
    %6151 = vmatpush2.msra.mxu0 0.0
    %6152 = vmatprep.subr.mxu0 0.0
    %6153 = vmatpush2.msra.mxu0 0.0
    %6154 = vmatprep.subr.mxu0 0.0
    %6155 = vmatpush2.msra.mxu0 0.0
    %6156 = vmatprep.subr.mxu0 0.0
    %6157 = vmatpush2.msra.mxu0 0.0
    %6158 = vmatprep.subr.mxu0 0.0
    %6159 = vmatpush2.msra.mxu0 0.0
    %6160 = vmatprep.subr.mxu0 0.0
    %6161 = vmatpush2.msra.mxu0 0.0
    %6162 = vmatprep.subr.mxu0 0.0
    %6163 = vmatpush2.msra.mxu0 0.0
    %6164 = vmatprep.subr.mxu0 0.0
    %6165 = vmatpush2.msra.mxu0 0.0
    %6166 = vmatprep.subr.mxu0 0.0
    %6167 = vmatpush2.msra.mxu0 0.0
    %6168 = vmatprep.subr.mxu0 0.0
    %6169 = vmatpush2.msra.mxu0 0.0
    %6170 = vmatprep.subr.mxu0 0.0
    %6171 = vmatpush2.msra.mxu0 0.0
    %6172 = vmatprep.subr.mxu0 0.0
    %6173 = vmatpush2.msra.mxu0 0.0
    %6174 = vmatprep.subr.mxu0 0.0
    %6175 = vmatpush2.msra.mxu0 0.0
    %6176 = vmatprep.subr.mxu0 0.0
    %6177 = vmatpush2.msra.mxu0 0.0
    %6178 = vmatprep.subr.mxu0 0.0
    %6179 = vmatpush2.msra.mxu0 0.0
    %6180 = vmatprep.mubr.f32.mxu0 0.0
    %v6181 = vand.u32 %v4303, 4294901760
    %6182 = vmatmul.mubr.f32.gmra.mxu0 %v6181
    %v6183 = vpop.f32.mrf.mxu0
    %v6184 = vadd.f32 %v5952, %v6183
    %v6185 = vpop.f32.mrf.mxu0
    %v6186 = vadd.f32 %v5954, %v6185
    %6187 = vdwg.mxu0
    %v6188 = vand.u32 %v4350, 4294901760
    %v6189 = vsub.f32 %v4350, %v6188
    %6190 = vmatprep.subr.mxu0 %v6189
    %v6191 = vand.u32 %v4349, 4294901760
    %v6192 = vsub.f32 %v4349, %v6191
    %6193 = vmatpush1.msra.mxu0 %v6192
    %v6194 = vand.u32 %v4347, 4294901760
    %v6195 = vsub.f32 %v4347, %v6194
    %6196 = vmatprep.subr.mxu0 %v6195
    %v6197 = vand.u32 %v4346, 4294901760
    %v6198 = vsub.f32 %v4346, %v6197
    %6199 = vmatpush1.msra.mxu0 %v6198
    %v6200 = vand.u32 %v4344, 4294901760
    %v6201 = vsub.f32 %v4344, %v6200
    %6202 = vmatprep.subr.mxu0 %v6201
    %v6203 = vand.u32 %v4343, 4294901760
    %v6204 = vsub.f32 %v4343, %v6203
    %6205 = vmatpush1.msra.mxu0 %v6204
    %v6206 = vand.u32 %v4341, 4294901760
    %v6207 = vsub.f32 %v4341, %v6206
    %6208 = vmatprep.subr.mxu0 %v6207
    %v6209 = vand.u32 %v4340, 4294901760
    %v6210 = vsub.f32 %v4340, %v6209
    %6211 = vmatpush1.msra.mxu0 %v6210
    %v6212 = vand.u32 %v4338, 4294901760
    %v6213 = vsub.f32 %v4338, %v6212
    %6214 = vmatprep.subr.mxu0 %v6213
    %v6215 = vand.u32 %v4337, 4294901760
    %v6216 = vsub.f32 %v4337, %v6215
    %6217 = vmatpush1.msra.mxu0 %v6216
    %v6218 = vand.u32 %v4335, 4294901760
    %v6219 = vsub.f32 %v4335, %v6218
    %6220 = vmatprep.subr.mxu0 %v6219
    %v6221 = vand.u32 %v4334, 4294901760
    %v6222 = vsub.f32 %v4334, %v6221
    %6223 = vmatpush1.msra.mxu0 %v6222
    %v6224 = vand.u32 %v4332, 4294901760
    %v6225 = vsub.f32 %v4332, %v6224
    %6226 = vmatprep.subr.mxu0 %v6225
    %v6227 = vand.u32 %v4331, 4294901760
    %v6228 = vsub.f32 %v4331, %v6227
    %6229 = vmatpush1.msra.mxu0 %v6228
    %v6230 = vand.u32 %v4329, 4294901760
    %v6231 = vsub.f32 %v4329, %v6230
    %6232 = vmatprep.subr.mxu0 %v6231
    %v6233 = vand.u32 %v4328, 4294901760
    %v6234 = vsub.f32 %v4328, %v6233
    %6235 = vmatpush1.msra.mxu0 %v6234
    %v6236 = vand.u32 %v4326, 4294901760
    %v6237 = vsub.f32 %v4326, %v6236
    %6238 = vmatprep.subr.mxu0 %v6237
    %v6239 = vand.u32 %v4325, 4294901760
    %v6240 = vsub.f32 %v4325, %v6239
    %6241 = vmatpush1.msra.mxu0 %v6240
    %v6242 = vand.u32 %v4323, 4294901760
    %v6243 = vsub.f32 %v4323, %v6242
    %6244 = vmatprep.subr.mxu0 %v6243
    %v6245 = vand.u32 %v4322, 4294901760
    %v6246 = vsub.f32 %v4322, %v6245
    %6247 = vmatpush1.msra.mxu0 %v6246
    %v6248 = vand.u32 %v4320, 4294901760
    %v6249 = vsub.f32 %v4320, %v6248
    %6250 = vmatprep.subr.mxu0 %v6249
    %v6251 = vand.u32 %v4319, 4294901760
    %v6252 = vsub.f32 %v4319, %v6251
    %6253 = vmatpush1.msra.mxu0 %v6252
    %v6254 = vand.u32 %v4317, 4294901760
    %v6255 = vsub.f32 %v4317, %v6254
    %6256 = vmatprep.subr.mxu0 %v6255
    %v6257 = vand.u32 %v4316, 4294901760
    %v6258 = vsub.f32 %v4316, %v6257
    %6259 = vmatpush1.msra.mxu0 %v6258
    %v6260 = vand.u32 %v4314, 4294901760
    %v6261 = vsub.f32 %v4314, %v6260
    %6262 = vmatprep.subr.mxu0 %v6261
    %v6263 = vand.u32 %v4313, 4294901760
    %v6264 = vsub.f32 %v4313, %v6263
    %6265 = vmatpush1.msra.mxu0 %v6264
    %v6266 = vand.u32 %v4311, 4294901760
    %v6267 = vsub.f32 %v4311, %v6266
    %6268 = vmatprep.subr.mxu0 %v6267
    %v6269 = vand.u32 %v4310, 4294901760
    %v6270 = vsub.f32 %v4310, %v6269
    %6271 = vmatpush1.msra.mxu0 %v6270
    %v6272 = vand.u32 %v4308, 4294901760
    %v6273 = vsub.f32 %v4308, %v6272
    %6274 = vmatprep.subr.mxu0 %v6273
    %v6275 = vand.u32 %v4307, 4294901760
    %v6276 = vsub.f32 %v4307, %v6275
    %6277 = vmatpush1.msra.mxu0 %v6276
    %v6278 = vand.u32 %v4305, 4294901760
    %v6279 = vsub.f32 %v4305, %v6278
    %6280 = vmatprep.subr.mxu0 %v6279
    %v6281 = vand.u32 %v4304, 4294901760
    %v6282 = vsub.f32 %v4304, %v6281
    %6283 = vmatpush1.msra.mxu0 %v6282
    %6284 = vmatprep.subr.mxu0 0.0
    %6285 = vmatpush2.msra.mxu0 0.0
    %6286 = vmatprep.subr.mxu0 0.0
    %6287 = vmatpush2.msra.mxu0 0.0
    %6288 = vmatprep.subr.mxu0 0.0
    %6289 = vmatpush2.msra.mxu0 0.0
    %6290 = vmatprep.subr.mxu0 0.0
    %6291 = vmatpush2.msra.mxu0 0.0
    %6292 = vmatprep.subr.mxu0 0.0
    %6293 = vmatpush2.msra.mxu0 0.0
    %6294 = vmatprep.subr.mxu0 0.0
    %6295 = vmatpush2.msra.mxu0 0.0
    %6296 = vmatprep.subr.mxu0 0.0
    %6297 = vmatpush2.msra.mxu0 0.0
    %6298 = vmatprep.subr.mxu0 0.0
    %6299 = vmatpush2.msra.mxu0 0.0
    %6300 = vmatprep.subr.mxu0 0.0
    %6301 = vmatpush2.msra.mxu0 0.0
    %6302 = vmatprep.subr.mxu0 0.0
    %6303 = vmatpush2.msra.mxu0 0.0
    %6304 = vmatprep.subr.mxu0 0.0
    %6305 = vmatpush2.msra.mxu0 0.0
    %6306 = vmatprep.subr.mxu0 0.0
    %6307 = vmatpush2.msra.mxu0 0.0
    %6308 = vmatprep.subr.mxu0 0.0
    %6309 = vmatpush2.msra.mxu0 0.0
    %6310 = vmatprep.subr.mxu0 0.0
    %6311 = vmatpush2.msra.mxu0 0.0
    %6312 = vmatprep.subr.mxu0 0.0
    %6313 = vmatpush2.msra.mxu0 0.0
    %6314 = vmatprep.subr.mxu0 0.0
    %6315 = vmatpush2.msra.mxu0 0.0
    %6316 = vmatprep.mubr.f32.mxu0 0.0
    %v6317 = vand.u32 %v4303, 4294901760
    %v6318 = vsub.f32 %v4303, %v6317
    %6319 = vmatmul.mubr.f32.gmra.mxu0 %v6318
    %v6320 = vpop.f32.mrf.mxu0
    %v6321 = vadd.f32 %v6184, %v6320
    %v6322 = vpop.f32.mrf.mxu0
    %v6323 = vadd.f32 %v6186, %v6322
    %6324 = vdwg.mxu0
    %v6325 = vand.u32 %v4350, 4294901760
    %6326 = vmatprep.subr.mxu0 %v6325
    %v6327 = vand.u32 %v4349, 4294901760
    %6328 = vmatpush1.msra.mxu0 %v6327
    %v6329 = vand.u32 %v4347, 4294901760
    %6330 = vmatprep.subr.mxu0 %v6329
    %v6331 = vand.u32 %v4346, 4294901760
    %6332 = vmatpush1.msra.mxu0 %v6331
    %v6333 = vand.u32 %v4344, 4294901760
    %6334 = vmatprep.subr.mxu0 %v6333
    %v6335 = vand.u32 %v4343, 4294901760
    %6336 = vmatpush1.msra.mxu0 %v6335
    %v6337 = vand.u32 %v4341, 4294901760
    %6338 = vmatprep.subr.mxu0 %v6337
    %v6339 = vand.u32 %v4340, 4294901760
    %6340 = vmatpush1.msra.mxu0 %v6339
    %v6341 = vand.u32 %v4338, 4294901760
    %6342 = vmatprep.subr.mxu0 %v6341
    %v6343 = vand.u32 %v4337, 4294901760
    %6344 = vmatpush1.msra.mxu0 %v6343
    %v6345 = vand.u32 %v4335, 4294901760
    %6346 = vmatprep.subr.mxu0 %v6345
    %v6347 = vand.u32 %v4334, 4294901760
    %6348 = vmatpush1.msra.mxu0 %v6347
    %v6349 = vand.u32 %v4332, 4294901760
    %6350 = vmatprep.subr.mxu0 %v6349
    %v6351 = vand.u32 %v4331, 4294901760
    %6352 = vmatpush1.msra.mxu0 %v6351
    %v6353 = vand.u32 %v4329, 4294901760
    %6354 = vmatprep.subr.mxu0 %v6353
    %v6355 = vand.u32 %v4328, 4294901760
    %6356 = vmatpush1.msra.mxu0 %v6355
    %v6357 = vand.u32 %v4326, 4294901760
    %6358 = vmatprep.subr.mxu0 %v6357
    %v6359 = vand.u32 %v4325, 4294901760
    %6360 = vmatpush1.msra.mxu0 %v6359
    %v6361 = vand.u32 %v4323, 4294901760
    %6362 = vmatprep.subr.mxu0 %v6361
    %v6363 = vand.u32 %v4322, 4294901760
    %6364 = vmatpush1.msra.mxu0 %v6363
    %v6365 = vand.u32 %v4320, 4294901760
    %6366 = vmatprep.subr.mxu0 %v6365
    %v6367 = vand.u32 %v4319, 4294901760
    %6368 = vmatpush1.msra.mxu0 %v6367
    %v6369 = vand.u32 %v4317, 4294901760
    %6370 = vmatprep.subr.mxu0 %v6369
    %v6371 = vand.u32 %v4316, 4294901760
    %6372 = vmatpush1.msra.mxu0 %v6371
    %v6373 = vand.u32 %v4314, 4294901760
    %6374 = vmatprep.subr.mxu0 %v6373
    %v6375 = vand.u32 %v4313, 4294901760
    %6376 = vmatpush1.msra.mxu0 %v6375
    %v6377 = vand.u32 %v4311, 4294901760
    %6378 = vmatprep.subr.mxu0 %v6377
    %v6379 = vand.u32 %v4310, 4294901760
    %6380 = vmatpush1.msra.mxu0 %v6379
    %v6381 = vand.u32 %v4308, 4294901760
    %6382 = vmatprep.subr.mxu0 %v6381
    %v6383 = vand.u32 %v4307, 4294901760
    %6384 = vmatpush1.msra.mxu0 %v6383
    %v6385 = vand.u32 %v4305, 4294901760
    %6386 = vmatprep.subr.mxu0 %v6385
    %v6387 = vand.u32 %v4304, 4294901760
    %6388 = vmatpush1.msra.mxu0 %v6387
    %6389 = vmatprep.subr.mxu0 0.0
    %6390 = vmatpush2.msra.mxu0 0.0
    %6391 = vmatprep.subr.mxu0 0.0
    %6392 = vmatpush2.msra.mxu0 0.0
    %6393 = vmatprep.subr.mxu0 0.0
    %6394 = vmatpush2.msra.mxu0 0.0
    %6395 = vmatprep.subr.mxu0 0.0
    %6396 = vmatpush2.msra.mxu0 0.0
    %6397 = vmatprep.subr.mxu0 0.0
    %6398 = vmatpush2.msra.mxu0 0.0
    %6399 = vmatprep.subr.mxu0 0.0
    %6400 = vmatpush2.msra.mxu0 0.0
    %6401 = vmatprep.subr.mxu0 0.0
    %6402 = vmatpush2.msra.mxu0 0.0
    %6403 = vmatprep.subr.mxu0 0.0
    %6404 = vmatpush2.msra.mxu0 0.0
    %6405 = vmatprep.subr.mxu0 0.0
    %6406 = vmatpush2.msra.mxu0 0.0
    %6407 = vmatprep.subr.mxu0 0.0
    %6408 = vmatpush2.msra.mxu0 0.0
    %6409 = vmatprep.subr.mxu0 0.0
    %6410 = vmatpush2.msra.mxu0 0.0
    %6411 = vmatprep.subr.mxu0 0.0
    %6412 = vmatpush2.msra.mxu0 0.0
    %6413 = vmatprep.subr.mxu0 0.0
    %6414 = vmatpush2.msra.mxu0 0.0
    %6415 = vmatprep.subr.mxu0 0.0
    %6416 = vmatpush2.msra.mxu0 0.0
    %6417 = vmatprep.subr.mxu0 0.0
    %6418 = vmatpush2.msra.mxu0 0.0
    %6419 = vmatprep.subr.mxu0 0.0
    %6420 = vmatpush2.msra.mxu0 0.0
    %6421 = vmatprep.mubr.f32.mxu0 0.0
    %v6422 = vand.u32 %v4303, 4294901760
    %v6423 = vsub.f32 %v4303, %v6422
    %v6424 = vand.u32 %v6423, 4294901760
    %6425 = vmatmul.mubr.f32.gmra.mxu0 %v6424
    %v6426 = vpop.f32.mrf.mxu0
    %v6427 = vadd.f32 %v6321, %v6426
    %v6428 = vpop.f32.mrf.mxu0
    %v6429 = vadd.f32 %v6323, %v6428
    %6430 = vdwg.mxu0
    %v6431 = vand.u32 %v4350, 4294901760
    %v6432 = vsub.f32 %v4350, %v6431
    %v6433 = vand.u32 %v6432, 4294901760
    %6434 = vmatprep.subr.mxu0 %v6433
    %v6435 = vand.u32 %v4349, 4294901760
    %v6436 = vsub.f32 %v4349, %v6435
    %v6437 = vand.u32 %v6436, 4294901760
    %6438 = vmatpush1.msra.mxu0 %v6437
    %v6439 = vand.u32 %v4347, 4294901760
    %v6440 = vsub.f32 %v4347, %v6439
    %v6441 = vand.u32 %v6440, 4294901760
    %6442 = vmatprep.subr.mxu0 %v6441
    %v6443 = vand.u32 %v4346, 4294901760
    %v6444 = vsub.f32 %v4346, %v6443
    %v6445 = vand.u32 %v6444, 4294901760
    %6446 = vmatpush1.msra.mxu0 %v6445
    %v6447 = vand.u32 %v4344, 4294901760
    %v6448 = vsub.f32 %v4344, %v6447
    %v6449 = vand.u32 %v6448, 4294901760
    %6450 = vmatprep.subr.mxu0 %v6449
    %v6451 = vand.u32 %v4343, 4294901760
    %v6452 = vsub.f32 %v4343, %v6451
    %v6453 = vand.u32 %v6452, 4294901760
    %6454 = vmatpush1.msra.mxu0 %v6453
    %v6455 = vand.u32 %v4341, 4294901760
    %v6456 = vsub.f32 %v4341, %v6455
    %v6457 = vand.u32 %v6456, 4294901760
    %6458 = vmatprep.subr.mxu0 %v6457
    %v6459 = vand.u32 %v4340, 4294901760
    %v6460 = vsub.f32 %v4340, %v6459
    %v6461 = vand.u32 %v6460, 4294901760
    %6462 = vmatpush1.msra.mxu0 %v6461
    %v6463 = vand.u32 %v4338, 4294901760
    %v6464 = vsub.f32 %v4338, %v6463
    %v6465 = vand.u32 %v6464, 4294901760
    %6466 = vmatprep.subr.mxu0 %v6465
    %v6467 = vand.u32 %v4337, 4294901760
    %v6468 = vsub.f32 %v4337, %v6467
    %v6469 = vand.u32 %v6468, 4294901760
    %6470 = vmatpush1.msra.mxu0 %v6469
    %v6471 = vand.u32 %v4335, 4294901760
    %v6472 = vsub.f32 %v4335, %v6471
    %v6473 = vand.u32 %v6472, 4294901760
    %6474 = vmatprep.subr.mxu0 %v6473
    %v6475 = vand.u32 %v4334, 4294901760
    %v6476 = vsub.f32 %v4334, %v6475
    %v6477 = vand.u32 %v6476, 4294901760
    %6478 = vmatpush1.msra.mxu0 %v6477
    %v6479 = vand.u32 %v4332, 4294901760
    %v6480 = vsub.f32 %v4332, %v6479
    %v6481 = vand.u32 %v6480, 4294901760
    %6482 = vmatprep.subr.mxu0 %v6481
    %v6483 = vand.u32 %v4331, 4294901760
    %v6484 = vsub.f32 %v4331, %v6483
    %v6485 = vand.u32 %v6484, 4294901760
    %6486 = vmatpush1.msra.mxu0 %v6485
    %v6487 = vand.u32 %v4329, 4294901760
    %v6488 = vsub.f32 %v4329, %v6487
    %v6489 = vand.u32 %v6488, 4294901760
    %6490 = vmatprep.subr.mxu0 %v6489
    %v6491 = vand.u32 %v4328, 4294901760
    %v6492 = vsub.f32 %v4328, %v6491
    %v6493 = vand.u32 %v6492, 4294901760
    %6494 = vmatpush1.msra.mxu0 %v6493
    %v6495 = vand.u32 %v4326, 4294901760
    %v6496 = vsub.f32 %v4326, %v6495
    %v6497 = vand.u32 %v6496, 4294901760
    %6498 = vmatprep.subr.mxu0 %v6497
    %v6499 = vand.u32 %v4325, 4294901760
    %v6500 = vsub.f32 %v4325, %v6499
    %v6501 = vand.u32 %v6500, 4294901760
    %6502 = vmatpush1.msra.mxu0 %v6501
    %v6503 = vand.u32 %v4323, 4294901760
    %v6504 = vsub.f32 %v4323, %v6503
    %v6505 = vand.u32 %v6504, 4294901760
    %6506 = vmatprep.subr.mxu0 %v6505
    %v6507 = vand.u32 %v4322, 4294901760
    %v6508 = vsub.f32 %v4322, %v6507
    %v6509 = vand.u32 %v6508, 4294901760
    %6510 = vmatpush1.msra.mxu0 %v6509
    %v6511 = vand.u32 %v4320, 4294901760
    %v6512 = vsub.f32 %v4320, %v6511
    %v6513 = vand.u32 %v6512, 4294901760
    %6514 = vmatprep.subr.mxu0 %v6513
    %v6515 = vand.u32 %v4319, 4294901760
    %v6516 = vsub.f32 %v4319, %v6515
    %v6517 = vand.u32 %v6516, 4294901760
    %6518 = vmatpush1.msra.mxu0 %v6517
    %v6519 = vand.u32 %v4317, 4294901760
    %v6520 = vsub.f32 %v4317, %v6519
    %v6521 = vand.u32 %v6520, 4294901760
    %6522 = vmatprep.subr.mxu0 %v6521
    %v6523 = vand.u32 %v4316, 4294901760
    %v6524 = vsub.f32 %v4316, %v6523
    %v6525 = vand.u32 %v6524, 4294901760
    %6526 = vmatpush1.msra.mxu0 %v6525
    %v6527 = vand.u32 %v4314, 4294901760
    %v6528 = vsub.f32 %v4314, %v6527
    %v6529 = vand.u32 %v6528, 4294901760
    %6530 = vmatprep.subr.mxu0 %v6529
    %v6531 = vand.u32 %v4313, 4294901760
    %v6532 = vsub.f32 %v4313, %v6531
    %v6533 = vand.u32 %v6532, 4294901760
    %6534 = vmatpush1.msra.mxu0 %v6533
    %v6535 = vand.u32 %v4311, 4294901760
    %v6536 = vsub.f32 %v4311, %v6535
    %v6537 = vand.u32 %v6536, 4294901760
    %6538 = vmatprep.subr.mxu0 %v6537
    %v6539 = vand.u32 %v4310, 4294901760
    %v6540 = vsub.f32 %v4310, %v6539
    %v6541 = vand.u32 %v6540, 4294901760
    %6542 = vmatpush1.msra.mxu0 %v6541
    %v6543 = vand.u32 %v4308, 4294901760
    %v6544 = vsub.f32 %v4308, %v6543
    %v6545 = vand.u32 %v6544, 4294901760
    %6546 = vmatprep.subr.mxu0 %v6545
    %v6547 = vand.u32 %v4307, 4294901760
    %v6548 = vsub.f32 %v4307, %v6547
    %v6549 = vand.u32 %v6548, 4294901760
    %6550 = vmatpush1.msra.mxu0 %v6549
    %v6551 = vand.u32 %v4305, 4294901760
    %v6552 = vsub.f32 %v4305, %v6551
    %v6553 = vand.u32 %v6552, 4294901760
    %6554 = vmatprep.subr.mxu0 %v6553
    %v6555 = vand.u32 %v4304, 4294901760
    %v6556 = vsub.f32 %v4304, %v6555
    %v6557 = vand.u32 %v6556, 4294901760
    %6558 = vmatpush1.msra.mxu0 %v6557
    %6559 = vmatprep.subr.mxu0 0.0
    %6560 = vmatpush2.msra.mxu0 0.0
    %6561 = vmatprep.subr.mxu0 0.0
    %6562 = vmatpush2.msra.mxu0 0.0
    %6563 = vmatprep.subr.mxu0 0.0
    %6564 = vmatpush2.msra.mxu0 0.0
    %6565 = vmatprep.subr.mxu0 0.0
    %6566 = vmatpush2.msra.mxu0 0.0
    %6567 = vmatprep.subr.mxu0 0.0
    %6568 = vmatpush2.msra.mxu0 0.0
    %6569 = vmatprep.subr.mxu0 0.0
    %6570 = vmatpush2.msra.mxu0 0.0
    %6571 = vmatprep.subr.mxu0 0.0
    %6572 = vmatpush2.msra.mxu0 0.0
    %6573 = vmatprep.subr.mxu0 0.0
    %6574 = vmatpush2.msra.mxu0 0.0
    %6575 = vmatprep.subr.mxu0 0.0
    %6576 = vmatpush2.msra.mxu0 0.0
    %6577 = vmatprep.subr.mxu0 0.0
    %6578 = vmatpush2.msra.mxu0 0.0
    %6579 = vmatprep.subr.mxu0 0.0
    %6580 = vmatpush2.msra.mxu0 0.0
    %6581 = vmatprep.subr.mxu0 0.0
    %6582 = vmatpush2.msra.mxu0 0.0
    %6583 = vmatprep.subr.mxu0 0.0
    %6584 = vmatpush2.msra.mxu0 0.0
    %6585 = vmatprep.subr.mxu0 0.0
    %6586 = vmatpush2.msra.mxu0 0.0
    %6587 = vmatprep.subr.mxu0 0.0
    %6588 = vmatpush2.msra.mxu0 0.0
    %6589 = vmatprep.subr.mxu0 0.0
    %6590 = vmatpush2.msra.mxu0 0.0
    %6591 = vmatprep.mubr.f32.mxu0 0.0
    %v6592 = vand.u32 %v4303, 4294901760
    %6593 = vmatmul.mubr.f32.gmra.mxu0 %v6592
    %v6594 = vpop.f32.mrf.mxu0
    %v6595 = vadd.f32 %v6427, %v6594
    %v6596 = vpop.f32.mrf.mxu0
    %v6597 = vadd.f32 %v6429, %v6596
    %6598 = vdwg.mxu0
    %v6599 = vand.u32 %v4350, 4294901760
    %6600 = vmatprep.subr.mxu0 %v6599
    %v6601 = vand.u32 %v4349, 4294901760
    %6602 = vmatpush1.msra.mxu0 %v6601
    %v6603 = vand.u32 %v4347, 4294901760
    %6604 = vmatprep.subr.mxu0 %v6603
    %v6605 = vand.u32 %v4346, 4294901760
    %6606 = vmatpush1.msra.mxu0 %v6605
    %v6607 = vand.u32 %v4344, 4294901760
    %6608 = vmatprep.subr.mxu0 %v6607
    %v6609 = vand.u32 %v4343, 4294901760
    %6610 = vmatpush1.msra.mxu0 %v6609
    %v6611 = vand.u32 %v4341, 4294901760
    %6612 = vmatprep.subr.mxu0 %v6611
    %v6613 = vand.u32 %v4340, 4294901760
    %6614 = vmatpush1.msra.mxu0 %v6613
    %v6615 = vand.u32 %v4338, 4294901760
    %6616 = vmatprep.subr.mxu0 %v6615
    %v6617 = vand.u32 %v4337, 4294901760
    %6618 = vmatpush1.msra.mxu0 %v6617
    %v6619 = vand.u32 %v4335, 4294901760
    %6620 = vmatprep.subr.mxu0 %v6619
    %v6621 = vand.u32 %v4334, 4294901760
    %6622 = vmatpush1.msra.mxu0 %v6621
    %v6623 = vand.u32 %v4332, 4294901760
    %6624 = vmatprep.subr.mxu0 %v6623
    %v6625 = vand.u32 %v4331, 4294901760
    %6626 = vmatpush1.msra.mxu0 %v6625
    %v6627 = vand.u32 %v4329, 4294901760
    %6628 = vmatprep.subr.mxu0 %v6627
    %v6629 = vand.u32 %v4328, 4294901760
    %6630 = vmatpush1.msra.mxu0 %v6629
    %v6631 = vand.u32 %v4326, 4294901760
    %6632 = vmatprep.subr.mxu0 %v6631
    %v6633 = vand.u32 %v4325, 4294901760
    %6634 = vmatpush1.msra.mxu0 %v6633
    %v6635 = vand.u32 %v4323, 4294901760
    %6636 = vmatprep.subr.mxu0 %v6635
    %v6637 = vand.u32 %v4322, 4294901760
    %6638 = vmatpush1.msra.mxu0 %v6637
    %v6639 = vand.u32 %v4320, 4294901760
    %6640 = vmatprep.subr.mxu0 %v6639
    %v6641 = vand.u32 %v4319, 4294901760
    %6642 = vmatpush1.msra.mxu0 %v6641
    %v6643 = vand.u32 %v4317, 4294901760
    %6644 = vmatprep.subr.mxu0 %v6643
    %v6645 = vand.u32 %v4316, 4294901760
    %6646 = vmatpush1.msra.mxu0 %v6645
    %v6647 = vand.u32 %v4314, 4294901760
    %6648 = vmatprep.subr.mxu0 %v6647
    %v6649 = vand.u32 %v4313, 4294901760
    %6650 = vmatpush1.msra.mxu0 %v6649
    %v6651 = vand.u32 %v4311, 4294901760
    %6652 = vmatprep.subr.mxu0 %v6651
    %v6653 = vand.u32 %v4310, 4294901760
    %6654 = vmatpush1.msra.mxu0 %v6653
    %v6655 = vand.u32 %v4308, 4294901760
    %6656 = vmatprep.subr.mxu0 %v6655
    %v6657 = vand.u32 %v4307, 4294901760
    %6658 = vmatpush1.msra.mxu0 %v6657
    %v6659 = vand.u32 %v4305, 4294901760
    %6660 = vmatprep.subr.mxu0 %v6659
    %v6661 = vand.u32 %v4304, 4294901760
    %6662 = vmatpush1.msra.mxu0 %v6661
    %6663 = vmatprep.subr.mxu0 0.0
    %6664 = vmatpush2.msra.mxu0 0.0
    %6665 = vmatprep.subr.mxu0 0.0
    %6666 = vmatpush2.msra.mxu0 0.0
    %6667 = vmatprep.subr.mxu0 0.0
    %6668 = vmatpush2.msra.mxu0 0.0
    %6669 = vmatprep.subr.mxu0 0.0
    %6670 = vmatpush2.msra.mxu0 0.0
    %6671 = vmatprep.subr.mxu0 0.0
    %6672 = vmatpush2.msra.mxu0 0.0
    %6673 = vmatprep.subr.mxu0 0.0
    %6674 = vmatpush2.msra.mxu0 0.0
    %6675 = vmatprep.subr.mxu0 0.0
    %6676 = vmatpush2.msra.mxu0 0.0
    %6677 = vmatprep.subr.mxu0 0.0
    %6678 = vmatpush2.msra.mxu0 0.0
    %6679 = vmatprep.subr.mxu0 0.0
    %6680 = vmatpush2.msra.mxu0 0.0
    %6681 = vmatprep.subr.mxu0 0.0
    %6682 = vmatpush2.msra.mxu0 0.0
    %6683 = vmatprep.subr.mxu0 0.0
    %6684 = vmatpush2.msra.mxu0 0.0
    %6685 = vmatprep.subr.mxu0 0.0
    %6686 = vmatpush2.msra.mxu0 0.0
    %6687 = vmatprep.subr.mxu0 0.0
    %6688 = vmatpush2.msra.mxu0 0.0
    %6689 = vmatprep.subr.mxu0 0.0
    %6690 = vmatpush2.msra.mxu0 0.0
    %6691 = vmatprep.subr.mxu0 0.0
    %6692 = vmatpush2.msra.mxu0 0.0
    %6693 = vmatprep.subr.mxu0 0.0
    %6694 = vmatpush2.msra.mxu0 0.0
    %6695 = vmatprep.mubr.f32.mxu0 0.0
    %v6696 = vand.u32 %v4303, 4294901760
    %6697 = vmatmul.mubr.f32.gmra.mxu0 %v6696
    %v6698 = vpop.f32.mrf.mxu0
    %v6699 = vadd.f32 %v6595, %v6698
    %v6700 = vpop.f32.mrf.mxu0
    %v6701 = vadd.f32 %v6597, %v6700
    %6702 = vdwg.mxu0
    %6703 = vmatprep.subr.mxu0 0.0
    %v6704 = vand.u32 %v4351, 4294901760
    %6705 = vmatpush1.msra.mxu0 %v6704
    %6706 = vmatprep.subr.mxu0 0.0
    %v6707 = vand.u32 %v4348, 4294901760
    %6708 = vmatpush1.msra.mxu0 %v6707
    %6709 = vmatprep.subr.mxu0 0.0
    %v6710 = vand.u32 %v4345, 4294901760
    %6711 = vmatpush1.msra.mxu0 %v6710
    %6712 = vmatprep.subr.mxu0 0.0
    %v6713 = vand.u32 %v4342, 4294901760
    %6714 = vmatpush1.msra.mxu0 %v6713
    %6715 = vmatprep.subr.mxu0 0.0
    %v6716 = vand.u32 %v4339, 4294901760
    %6717 = vmatpush1.msra.mxu0 %v6716
    %6718 = vmatprep.subr.mxu0 0.0
    %v6719 = vand.u32 %v4336, 4294901760
    %6720 = vmatpush1.msra.mxu0 %v6719
    %6721 = vmatprep.subr.mxu0 0.0
    %v6722 = vand.u32 %v4333, 4294901760
    %6723 = vmatpush1.msra.mxu0 %v6722
    %6724 = vmatprep.subr.mxu0 0.0
    %v6725 = vand.u32 %v4330, 4294901760
    %6726 = vmatpush1.msra.mxu0 %v6725
    %6727 = vmatprep.subr.mxu0 0.0
    %v6728 = vand.u32 %v4327, 4294901760
    %6729 = vmatpush1.msra.mxu0 %v6728
    %6730 = vmatprep.subr.mxu0 0.0
    %v6731 = vand.u32 %v4324, 4294901760
    %6732 = vmatpush1.msra.mxu0 %v6731
    %6733 = vmatprep.subr.mxu0 0.0
    %v6734 = vand.u32 %v4321, 4294901760
    %6735 = vmatpush1.msra.mxu0 %v6734
    %6736 = vmatprep.subr.mxu0 0.0
    %v6737 = vand.u32 %v4318, 4294901760
    %6738 = vmatpush1.msra.mxu0 %v6737
    %6739 = vmatprep.subr.mxu0 0.0
    %v6740 = vand.u32 %v4315, 4294901760
    %6741 = vmatpush1.msra.mxu0 %v6740
    %6742 = vmatprep.subr.mxu0 0.0
    %v6743 = vand.u32 %v4312, 4294901760
    %6744 = vmatpush1.msra.mxu0 %v6743
    %6745 = vmatprep.subr.mxu0 0.0
    %v6746 = vand.u32 %v4309, 4294901760
    %6747 = vmatpush1.msra.mxu0 %v6746
    %6748 = vmatprep.subr.mxu0 0.0
    %v6749 = vand.u32 %v4306, 4294901760
    %6750 = vmatpush1.msra.mxu0 %v6749
    %6751 = vmatprep.subr.mxu0 0.0
    %6752 = vmatpush2.msra.mxu0 0.0
    %6753 = vmatprep.subr.mxu0 0.0
    %6754 = vmatpush2.msra.mxu0 0.0
    %6755 = vmatprep.subr.mxu0 0.0
    %6756 = vmatpush2.msra.mxu0 0.0
    %6757 = vmatprep.subr.mxu0 0.0
    %6758 = vmatpush2.msra.mxu0 0.0
    %6759 = vmatprep.subr.mxu0 0.0
    %6760 = vmatpush2.msra.mxu0 0.0
    %6761 = vmatprep.subr.mxu0 0.0
    %6762 = vmatpush2.msra.mxu0 0.0
    %6763 = vmatprep.subr.mxu0 0.0
    %6764 = vmatpush2.msra.mxu0 0.0
    %6765 = vmatprep.subr.mxu0 0.0
    %6766 = vmatpush2.msra.mxu0 0.0
    %6767 = vmatprep.subr.mxu0 0.0
    %6768 = vmatpush2.msra.mxu0 0.0
    %6769 = vmatprep.subr.mxu0 0.0
    %6770 = vmatpush2.msra.mxu0 0.0
    %6771 = vmatprep.subr.mxu0 0.0
    %6772 = vmatpush2.msra.mxu0 0.0
    %6773 = vmatprep.subr.mxu0 0.0
    %6774 = vmatpush2.msra.mxu0 0.0
    %6775 = vmatprep.subr.mxu0 0.0
    %6776 = vmatpush2.msra.mxu0 0.0
    %6777 = vmatprep.subr.mxu0 0.0
    %6778 = vmatpush2.msra.mxu0 0.0
    %6779 = vmatprep.subr.mxu0 0.0
    %6780 = vmatpush2.msra.mxu0 0.0
    %6781 = vmatprep.subr.mxu0 0.0
    %6782 = vmatpush2.msra.mxu0 0.0
    %6783 = vmatprep.mubr.f32.mxu0 0.0
    %v6784 = vand.u32 %v4303, 4294901760
    %v6785 = vsub.f32 %v4303, %v6784
    %v6786 = vand.u32 %v6785, 4294901760
    %v6787 = vsub.f32 %v6785, %v6786
    %v6788 = vand.u32 %v6787, 4294901760
    %6789 = vmatmul.mubr.f32.gmra.mxu0 %v6788
    %v6790 = vpop.f32.mrf.mxu0
    %v6791 = vadd.f32 0.0, %v6790
    %v6792 = vpop.f32.mrf.mxu0
    %6793 = vdwg.mxu0
    %6794 = vmatprep.subr.mxu0 0.0
    %v6795 = vand.u32 %v4351, 4294901760
    %v6796 = vsub.f32 %v4351, %v6795
    %v6797 = vand.u32 %v6796, 4294901760
    %v6798 = vsub.f32 %v6796, %v6797
    %v6799 = vand.u32 %v6798, 4294901760
    %6800 = vmatpush1.msra.mxu0 %v6799
    %6801 = vmatprep.subr.mxu0 0.0
    %v6802 = vand.u32 %v4348, 4294901760
    %v6803 = vsub.f32 %v4348, %v6802
    %v6804 = vand.u32 %v6803, 4294901760
    %v6805 = vsub.f32 %v6803, %v6804
    %v6806 = vand.u32 %v6805, 4294901760
    %6807 = vmatpush1.msra.mxu0 %v6806
    %6808 = vmatprep.subr.mxu0 0.0
    %v6809 = vand.u32 %v4345, 4294901760
    %v6810 = vsub.f32 %v4345, %v6809
    %v6811 = vand.u32 %v6810, 4294901760
    %v6812 = vsub.f32 %v6810, %v6811
    %v6813 = vand.u32 %v6812, 4294901760
    %6814 = vmatpush1.msra.mxu0 %v6813
    %6815 = vmatprep.subr.mxu0 0.0
    %v6816 = vand.u32 %v4342, 4294901760
    %v6817 = vsub.f32 %v4342, %v6816
    %v6818 = vand.u32 %v6817, 4294901760
    %v6819 = vsub.f32 %v6817, %v6818
    %v6820 = vand.u32 %v6819, 4294901760
    %6821 = vmatpush1.msra.mxu0 %v6820
    %6822 = vmatprep.subr.mxu0 0.0
    %v6823 = vand.u32 %v4339, 4294901760
    %v6824 = vsub.f32 %v4339, %v6823
    %v6825 = vand.u32 %v6824, 4294901760
    %v6826 = vsub.f32 %v6824, %v6825
    %v6827 = vand.u32 %v6826, 4294901760
    %6828 = vmatpush1.msra.mxu0 %v6827
    %6829 = vmatprep.subr.mxu0 0.0
    %v6830 = vand.u32 %v4336, 4294901760
    %v6831 = vsub.f32 %v4336, %v6830
    %v6832 = vand.u32 %v6831, 4294901760
    %v6833 = vsub.f32 %v6831, %v6832
    %v6834 = vand.u32 %v6833, 4294901760
    %6835 = vmatpush1.msra.mxu0 %v6834
    %6836 = vmatprep.subr.mxu0 0.0
    %v6837 = vand.u32 %v4333, 4294901760
    %v6838 = vsub.f32 %v4333, %v6837
    %v6839 = vand.u32 %v6838, 4294901760
    %v6840 = vsub.f32 %v6838, %v6839
    %v6841 = vand.u32 %v6840, 4294901760
    %6842 = vmatpush1.msra.mxu0 %v6841
    %6843 = vmatprep.subr.mxu0 0.0
    %v6844 = vand.u32 %v4330, 4294901760
    %v6845 = vsub.f32 %v4330, %v6844
    %v6846 = vand.u32 %v6845, 4294901760
    %v6847 = vsub.f32 %v6845, %v6846
    %v6848 = vand.u32 %v6847, 4294901760
    %6849 = vmatpush1.msra.mxu0 %v6848
    %6850 = vmatprep.subr.mxu0 0.0
    %v6851 = vand.u32 %v4327, 4294901760
    %v6852 = vsub.f32 %v4327, %v6851
    %v6853 = vand.u32 %v6852, 4294901760
    %v6854 = vsub.f32 %v6852, %v6853
    %v6855 = vand.u32 %v6854, 4294901760
    %6856 = vmatpush1.msra.mxu0 %v6855
    %6857 = vmatprep.subr.mxu0 0.0
    %v6858 = vand.u32 %v4324, 4294901760
    %v6859 = vsub.f32 %v4324, %v6858
    %v6860 = vand.u32 %v6859, 4294901760
    %v6861 = vsub.f32 %v6859, %v6860
    %v6862 = vand.u32 %v6861, 4294901760
    %6863 = vmatpush1.msra.mxu0 %v6862
    %6864 = vmatprep.subr.mxu0 0.0
    %v6865 = vand.u32 %v4321, 4294901760
    %v6866 = vsub.f32 %v4321, %v6865
    %v6867 = vand.u32 %v6866, 4294901760
    %v6868 = vsub.f32 %v6866, %v6867
    %v6869 = vand.u32 %v6868, 4294901760
    %6870 = vmatpush1.msra.mxu0 %v6869
    %6871 = vmatprep.subr.mxu0 0.0
    %v6872 = vand.u32 %v4318, 4294901760
    %v6873 = vsub.f32 %v4318, %v6872
    %v6874 = vand.u32 %v6873, 4294901760
    %v6875 = vsub.f32 %v6873, %v6874
    %v6876 = vand.u32 %v6875, 4294901760
    %6877 = vmatpush1.msra.mxu0 %v6876
    %6878 = vmatprep.subr.mxu0 0.0
    %v6879 = vand.u32 %v4315, 4294901760
    %v6880 = vsub.f32 %v4315, %v6879
    %v6881 = vand.u32 %v6880, 4294901760
    %v6882 = vsub.f32 %v6880, %v6881
    %v6883 = vand.u32 %v6882, 4294901760
    %6884 = vmatpush1.msra.mxu0 %v6883
    %6885 = vmatprep.subr.mxu0 0.0
    %v6886 = vand.u32 %v4312, 4294901760
    %v6887 = vsub.f32 %v4312, %v6886
    %v6888 = vand.u32 %v6887, 4294901760
    %v6889 = vsub.f32 %v6887, %v6888
    %v6890 = vand.u32 %v6889, 4294901760
    %6891 = vmatpush1.msra.mxu0 %v6890
    %6892 = vmatprep.subr.mxu0 0.0
    %v6893 = vand.u32 %v4309, 4294901760
    %v6894 = vsub.f32 %v4309, %v6893
    %v6895 = vand.u32 %v6894, 4294901760
    %v6896 = vsub.f32 %v6894, %v6895
    %v6897 = vand.u32 %v6896, 4294901760
    %6898 = vmatpush1.msra.mxu0 %v6897
    %6899 = vmatprep.subr.mxu0 0.0
    %v6900 = vand.u32 %v4306, 4294901760
    %v6901 = vsub.f32 %v4306, %v6900
    %v6902 = vand.u32 %v6901, 4294901760
    %v6903 = vsub.f32 %v6901, %v6902
    %v6904 = vand.u32 %v6903, 4294901760
    %6905 = vmatpush1.msra.mxu0 %v6904
    %6906 = vmatprep.subr.mxu0 0.0
    %6907 = vmatpush2.msra.mxu0 0.0
    %6908 = vmatprep.subr.mxu0 0.0
    %6909 = vmatpush2.msra.mxu0 0.0
    %6910 = vmatprep.subr.mxu0 0.0
    %6911 = vmatpush2.msra.mxu0 0.0
    %6912 = vmatprep.subr.mxu0 0.0
    %6913 = vmatpush2.msra.mxu0 0.0
    %6914 = vmatprep.subr.mxu0 0.0
    %6915 = vmatpush2.msra.mxu0 0.0
    %6916 = vmatprep.subr.mxu0 0.0
    %6917 = vmatpush2.msra.mxu0 0.0
    %6918 = vmatprep.subr.mxu0 0.0
    %6919 = vmatpush2.msra.mxu0 0.0
    %6920 = vmatprep.subr.mxu0 0.0
    %6921 = vmatpush2.msra.mxu0 0.0
    %6922 = vmatprep.subr.mxu0 0.0
    %6923 = vmatpush2.msra.mxu0 0.0
    %6924 = vmatprep.subr.mxu0 0.0
    %6925 = vmatpush2.msra.mxu0 0.0
    %6926 = vmatprep.subr.mxu0 0.0
    %6927 = vmatpush2.msra.mxu0 0.0
    %6928 = vmatprep.subr.mxu0 0.0
    %6929 = vmatpush2.msra.mxu0 0.0
    %6930 = vmatprep.subr.mxu0 0.0
    %6931 = vmatpush2.msra.mxu0 0.0
    %6932 = vmatprep.subr.mxu0 0.0
    %6933 = vmatpush2.msra.mxu0 0.0
    %6934 = vmatprep.subr.mxu0 0.0
    %6935 = vmatpush2.msra.mxu0 0.0
    %6936 = vmatprep.subr.mxu0 0.0
    %6937 = vmatpush2.msra.mxu0 0.0
    %6938 = vmatprep.mubr.f32.mxu0 0.0
    %v6939 = vand.u32 %v4303, 4294901760
    %6940 = vmatmul.mubr.f32.gmra.mxu0 %v6939
    %v6941 = vpop.f32.mrf.mxu0
    %v6942 = vadd.f32 %v6791, %v6941
    %v6943 = vpop.f32.mrf.mxu0
    %6944 = vdwg.mxu0
    %6945 = vmatprep.subr.mxu0 0.0
    %v6946 = vand.u32 %v4351, 4294901760
    %v6947 = vsub.f32 %v4351, %v6946
    %6948 = vmatpush1.msra.mxu0 %v6947
    %6949 = vmatprep.subr.mxu0 0.0
    %v6950 = vand.u32 %v4348, 4294901760
    %v6951 = vsub.f32 %v4348, %v6950
    %6952 = vmatpush1.msra.mxu0 %v6951
    %6953 = vmatprep.subr.mxu0 0.0
    %v6954 = vand.u32 %v4345, 4294901760
    %v6955 = vsub.f32 %v4345, %v6954
    %6956 = vmatpush1.msra.mxu0 %v6955
    %6957 = vmatprep.subr.mxu0 0.0
    %v6958 = vand.u32 %v4342, 4294901760
    %v6959 = vsub.f32 %v4342, %v6958
    %6960 = vmatpush1.msra.mxu0 %v6959
    %6961 = vmatprep.subr.mxu0 0.0
    %v6962 = vand.u32 %v4339, 4294901760
    %v6963 = vsub.f32 %v4339, %v6962
    %6964 = vmatpush1.msra.mxu0 %v6963
    %6965 = vmatprep.subr.mxu0 0.0
    %v6966 = vand.u32 %v4336, 4294901760
    %v6967 = vsub.f32 %v4336, %v6966
    %6968 = vmatpush1.msra.mxu0 %v6967
    %6969 = vmatprep.subr.mxu0 0.0
    %v6970 = vand.u32 %v4333, 4294901760
    %v6971 = vsub.f32 %v4333, %v6970
    %6972 = vmatpush1.msra.mxu0 %v6971
    %6973 = vmatprep.subr.mxu0 0.0
    %v6974 = vand.u32 %v4330, 4294901760
    %v6975 = vsub.f32 %v4330, %v6974
    %6976 = vmatpush1.msra.mxu0 %v6975
    %6977 = vmatprep.subr.mxu0 0.0
    %v6978 = vand.u32 %v4327, 4294901760
    %v6979 = vsub.f32 %v4327, %v6978
    %6980 = vmatpush1.msra.mxu0 %v6979
    %6981 = vmatprep.subr.mxu0 0.0
    %v6982 = vand.u32 %v4324, 4294901760
    %v6983 = vsub.f32 %v4324, %v6982
    %6984 = vmatpush1.msra.mxu0 %v6983
    %6985 = vmatprep.subr.mxu0 0.0
    %v6986 = vand.u32 %v4321, 4294901760
    %v6987 = vsub.f32 %v4321, %v6986
    %6988 = vmatpush1.msra.mxu0 %v6987
    %6989 = vmatprep.subr.mxu0 0.0
    %v6990 = vand.u32 %v4318, 4294901760
    %v6991 = vsub.f32 %v4318, %v6990
    %6992 = vmatpush1.msra.mxu0 %v6991
    %6993 = vmatprep.subr.mxu0 0.0
    %v6994 = vand.u32 %v4315, 4294901760
    %v6995 = vsub.f32 %v4315, %v6994
    %6996 = vmatpush1.msra.mxu0 %v6995
    %6997 = vmatprep.subr.mxu0 0.0
    %v6998 = vand.u32 %v4312, 4294901760
    %v6999 = vsub.f32 %v4312, %v6998
    %7000 = vmatpush1.msra.mxu0 %v6999
    %7001 = vmatprep.subr.mxu0 0.0
    %v7002 = vand.u32 %v4309, 4294901760
    %v7003 = vsub.f32 %v4309, %v7002
    %7004 = vmatpush1.msra.mxu0 %v7003
    %7005 = vmatprep.subr.mxu0 0.0
    %v7006 = vand.u32 %v4306, 4294901760
    %v7007 = vsub.f32 %v4306, %v7006
    %7008 = vmatpush1.msra.mxu0 %v7007
    %7009 = vmatprep.subr.mxu0 0.0
    %7010 = vmatpush2.msra.mxu0 0.0
    %7011 = vmatprep.subr.mxu0 0.0
    %7012 = vmatpush2.msra.mxu0 0.0
    %7013 = vmatprep.subr.mxu0 0.0
    %7014 = vmatpush2.msra.mxu0 0.0
    %7015 = vmatprep.subr.mxu0 0.0
    %7016 = vmatpush2.msra.mxu0 0.0
    %7017 = vmatprep.subr.mxu0 0.0
    %7018 = vmatpush2.msra.mxu0 0.0
    %7019 = vmatprep.subr.mxu0 0.0
    %7020 = vmatpush2.msra.mxu0 0.0
    %7021 = vmatprep.subr.mxu0 0.0
    %7022 = vmatpush2.msra.mxu0 0.0
    %7023 = vmatprep.subr.mxu0 0.0
    %7024 = vmatpush2.msra.mxu0 0.0
    %7025 = vmatprep.subr.mxu0 0.0
    %7026 = vmatpush2.msra.mxu0 0.0
    %7027 = vmatprep.subr.mxu0 0.0
    %7028 = vmatpush2.msra.mxu0 0.0
    %7029 = vmatprep.subr.mxu0 0.0
    %7030 = vmatpush2.msra.mxu0 0.0
    %7031 = vmatprep.subr.mxu0 0.0
    %7032 = vmatpush2.msra.mxu0 0.0
    %7033 = vmatprep.subr.mxu0 0.0
    %7034 = vmatpush2.msra.mxu0 0.0
    %7035 = vmatprep.subr.mxu0 0.0
    %7036 = vmatpush2.msra.mxu0 0.0
    %7037 = vmatprep.subr.mxu0 0.0
    %7038 = vmatpush2.msra.mxu0 0.0
    %7039 = vmatprep.subr.mxu0 0.0
    %7040 = vmatpush2.msra.mxu0 0.0
    %7041 = vmatprep.mubr.f32.mxu0 0.0
    %v7042 = vand.u32 %v4303, 4294901760
    %v7043 = vsub.f32 %v4303, %v7042
    %7044 = vmatmul.mubr.f32.gmra.mxu0 %v7043
    %v7045 = vpop.f32.mrf.mxu0
    %v7046 = vadd.f32 %v6942, %v7045
    %v7047 = vpop.f32.mrf.mxu0
    %7048 = vdwg.mxu0
    %7049 = vmatprep.subr.mxu0 0.0
    %v7050 = vand.u32 %v4351, 4294901760
    %7051 = vmatpush1.msra.mxu0 %v7050
    %7052 = vmatprep.subr.mxu0 0.0
    %v7053 = vand.u32 %v4348, 4294901760
    %7054 = vmatpush1.msra.mxu0 %v7053
    %7055 = vmatprep.subr.mxu0 0.0
    %v7056 = vand.u32 %v4345, 4294901760
    %7057 = vmatpush1.msra.mxu0 %v7056
    %7058 = vmatprep.subr.mxu0 0.0
    %v7059 = vand.u32 %v4342, 4294901760
    %7060 = vmatpush1.msra.mxu0 %v7059
    %7061 = vmatprep.subr.mxu0 0.0
    %v7062 = vand.u32 %v4339, 4294901760
    %7063 = vmatpush1.msra.mxu0 %v7062
    %7064 = vmatprep.subr.mxu0 0.0
    %v7065 = vand.u32 %v4336, 4294901760
    %7066 = vmatpush1.msra.mxu0 %v7065
    %7067 = vmatprep.subr.mxu0 0.0
    %v7068 = vand.u32 %v4333, 4294901760
    %7069 = vmatpush1.msra.mxu0 %v7068
    %7070 = vmatprep.subr.mxu0 0.0
    %v7071 = vand.u32 %v4330, 4294901760
    %7072 = vmatpush1.msra.mxu0 %v7071
    %7073 = vmatprep.subr.mxu0 0.0
    %v7074 = vand.u32 %v4327, 4294901760
    %7075 = vmatpush1.msra.mxu0 %v7074
    %7076 = vmatprep.subr.mxu0 0.0
    %v7077 = vand.u32 %v4324, 4294901760
    %7078 = vmatpush1.msra.mxu0 %v7077
    %7079 = vmatprep.subr.mxu0 0.0
    %v7080 = vand.u32 %v4321, 4294901760
    %7081 = vmatpush1.msra.mxu0 %v7080
    %7082 = vmatprep.subr.mxu0 0.0
    %v7083 = vand.u32 %v4318, 4294901760
    %7084 = vmatpush1.msra.mxu0 %v7083
    %7085 = vmatprep.subr.mxu0 0.0
    %v7086 = vand.u32 %v4315, 4294901760
    %7087 = vmatpush1.msra.mxu0 %v7086
    %7088 = vmatprep.subr.mxu0 0.0
    %v7089 = vand.u32 %v4312, 4294901760
    %7090 = vmatpush1.msra.mxu0 %v7089
    %7091 = vmatprep.subr.mxu0 0.0
    %v7092 = vand.u32 %v4309, 4294901760
    %7093 = vmatpush1.msra.mxu0 %v7092
    %7094 = vmatprep.subr.mxu0 0.0
    %v7095 = vand.u32 %v4306, 4294901760
    %7096 = vmatpush1.msra.mxu0 %v7095
    %7097 = vmatprep.subr.mxu0 0.0
    %7098 = vmatpush2.msra.mxu0 0.0
    %7099 = vmatprep.subr.mxu0 0.0
    %7100 = vmatpush2.msra.mxu0 0.0
    %7101 = vmatprep.subr.mxu0 0.0
    %7102 = vmatpush2.msra.mxu0 0.0
    %7103 = vmatprep.subr.mxu0 0.0
    %7104 = vmatpush2.msra.mxu0 0.0
    %7105 = vmatprep.subr.mxu0 0.0
    %7106 = vmatpush2.msra.mxu0 0.0
    %7107 = vmatprep.subr.mxu0 0.0
    %7108 = vmatpush2.msra.mxu0 0.0
    %7109 = vmatprep.subr.mxu0 0.0
    %7110 = vmatpush2.msra.mxu0 0.0
    %7111 = vmatprep.subr.mxu0 0.0
    %7112 = vmatpush2.msra.mxu0 0.0
    %7113 = vmatprep.subr.mxu0 0.0
    %7114 = vmatpush2.msra.mxu0 0.0
    %7115 = vmatprep.subr.mxu0 0.0
    %7116 = vmatpush2.msra.mxu0 0.0
    %7117 = vmatprep.subr.mxu0 0.0
    %7118 = vmatpush2.msra.mxu0 0.0
    %7119 = vmatprep.subr.mxu0 0.0
    %7120 = vmatpush2.msra.mxu0 0.0
    %7121 = vmatprep.subr.mxu0 0.0
    %7122 = vmatpush2.msra.mxu0 0.0
    %7123 = vmatprep.subr.mxu0 0.0
    %7124 = vmatpush2.msra.mxu0 0.0
    %7125 = vmatprep.subr.mxu0 0.0
    %7126 = vmatpush2.msra.mxu0 0.0
    %7127 = vmatprep.subr.mxu0 0.0
    %7128 = vmatpush2.msra.mxu0 0.0
    %7129 = vmatprep.mubr.f32.mxu0 0.0
    %v7130 = vand.u32 %v4303, 4294901760
    %v7131 = vsub.f32 %v4303, %v7130
    %v7132 = vand.u32 %v7131, 4294901760
    %7133 = vmatmul.mubr.f32.gmra.mxu0 %v7132
    %v7134 = vpop.f32.mrf.mxu0
    %v7135 = vadd.f32 %v7046, %v7134
    %v7136 = vpop.f32.mrf.mxu0
    %7137 = vdwg.mxu0
    %7138 = vmatprep.subr.mxu0 0.0
    %v7139 = vand.u32 %v4351, 4294901760
    %v7140 = vsub.f32 %v4351, %v7139
    %v7141 = vand.u32 %v7140, 4294901760
    %7142 = vmatpush1.msra.mxu0 %v7141
    %7143 = vmatprep.subr.mxu0 0.0
    %v7144 = vand.u32 %v4348, 4294901760
    %v7145 = vsub.f32 %v4348, %v7144
    %v7146 = vand.u32 %v7145, 4294901760
    %7147 = vmatpush1.msra.mxu0 %v7146
    %7148 = vmatprep.subr.mxu0 0.0
    %v7149 = vand.u32 %v4345, 4294901760
    %v7150 = vsub.f32 %v4345, %v7149
    %v7151 = vand.u32 %v7150, 4294901760
    %7152 = vmatpush1.msra.mxu0 %v7151
    %7153 = vmatprep.subr.mxu0 0.0
    %v7154 = vand.u32 %v4342, 4294901760
    %v7155 = vsub.f32 %v4342, %v7154
    %v7156 = vand.u32 %v7155, 4294901760
    %7157 = vmatpush1.msra.mxu0 %v7156
    %7158 = vmatprep.subr.mxu0 0.0
    %v7159 = vand.u32 %v4339, 4294901760
    %v7160 = vsub.f32 %v4339, %v7159
    %v7161 = vand.u32 %v7160, 4294901760
    %7162 = vmatpush1.msra.mxu0 %v7161
    %7163 = vmatprep.subr.mxu0 0.0
    %v7164 = vand.u32 %v4336, 4294901760
    %v7165 = vsub.f32 %v4336, %v7164
    %v7166 = vand.u32 %v7165, 4294901760
    %7167 = vmatpush1.msra.mxu0 %v7166
    %7168 = vmatprep.subr.mxu0 0.0
    %v7169 = vand.u32 %v4333, 4294901760
    %v7170 = vsub.f32 %v4333, %v7169
    %v7171 = vand.u32 %v7170, 4294901760
    %7172 = vmatpush1.msra.mxu0 %v7171
    %7173 = vmatprep.subr.mxu0 0.0
    %v7174 = vand.u32 %v4330, 4294901760
    %v7175 = vsub.f32 %v4330, %v7174
    %v7176 = vand.u32 %v7175, 4294901760
    %7177 = vmatpush1.msra.mxu0 %v7176
    %7178 = vmatprep.subr.mxu0 0.0
    %v7179 = vand.u32 %v4327, 4294901760
    %v7180 = vsub.f32 %v4327, %v7179
    %v7181 = vand.u32 %v7180, 4294901760
    %7182 = vmatpush1.msra.mxu0 %v7181
    %7183 = vmatprep.subr.mxu0 0.0
    %v7184 = vand.u32 %v4324, 4294901760
    %v7185 = vsub.f32 %v4324, %v7184
    %v7186 = vand.u32 %v7185, 4294901760
    %7187 = vmatpush1.msra.mxu0 %v7186
    %7188 = vmatprep.subr.mxu0 0.0
    %v7189 = vand.u32 %v4321, 4294901760
    %v7190 = vsub.f32 %v4321, %v7189
    %v7191 = vand.u32 %v7190, 4294901760
    %7192 = vmatpush1.msra.mxu0 %v7191
    %7193 = vmatprep.subr.mxu0 0.0
    %v7194 = vand.u32 %v4318, 4294901760
    %v7195 = vsub.f32 %v4318, %v7194
    %v7196 = vand.u32 %v7195, 4294901760
    %7197 = vmatpush1.msra.mxu0 %v7196
    %7198 = vmatprep.subr.mxu0 0.0
    %v7199 = vand.u32 %v4315, 4294901760
    %v7200 = vsub.f32 %v4315, %v7199
    %v7201 = vand.u32 %v7200, 4294901760
    %7202 = vmatpush1.msra.mxu0 %v7201
    %7203 = vmatprep.subr.mxu0 0.0
    %v7204 = vand.u32 %v4312, 4294901760
    %v7205 = vsub.f32 %v4312, %v7204
    %v7206 = vand.u32 %v7205, 4294901760
    %7207 = vmatpush1.msra.mxu0 %v7206
    %7208 = vmatprep.subr.mxu0 0.0
    %v7209 = vand.u32 %v4309, 4294901760
    %v7210 = vsub.f32 %v4309, %v7209
    %v7211 = vand.u32 %v7210, 4294901760
    %7212 = vmatpush1.msra.mxu0 %v7211
    %7213 = vmatprep.subr.mxu0 0.0
    %v7214 = vand.u32 %v4306, 4294901760
    %v7215 = vsub.f32 %v4306, %v7214
    %v7216 = vand.u32 %v7215, 4294901760
    %7217 = vmatpush1.msra.mxu0 %v7216
    %7218 = vmatprep.subr.mxu0 0.0
    %7219 = vmatpush2.msra.mxu0 0.0
    %7220 = vmatprep.subr.mxu0 0.0
    %7221 = vmatpush2.msra.mxu0 0.0
    %7222 = vmatprep.subr.mxu0 0.0
    %7223 = vmatpush2.msra.mxu0 0.0
    %7224 = vmatprep.subr.mxu0 0.0
    %7225 = vmatpush2.msra.mxu0 0.0
    %7226 = vmatprep.subr.mxu0 0.0
    %7227 = vmatpush2.msra.mxu0 0.0
    %7228 = vmatprep.subr.mxu0 0.0
    %7229 = vmatpush2.msra.mxu0 0.0
    %7230 = vmatprep.subr.mxu0 0.0
    %7231 = vmatpush2.msra.mxu0 0.0
    %7232 = vmatprep.subr.mxu0 0.0
    %7233 = vmatpush2.msra.mxu0 0.0
    %7234 = vmatprep.subr.mxu0 0.0
    %7235 = vmatpush2.msra.mxu0 0.0
    %7236 = vmatprep.subr.mxu0 0.0
    %7237 = vmatpush2.msra.mxu0 0.0
    %7238 = vmatprep.subr.mxu0 0.0
    %7239 = vmatpush2.msra.mxu0 0.0
    %7240 = vmatprep.subr.mxu0 0.0
    %7241 = vmatpush2.msra.mxu0 0.0
    %7242 = vmatprep.subr.mxu0 0.0
    %7243 = vmatpush2.msra.mxu0 0.0
    %7244 = vmatprep.subr.mxu0 0.0
    %7245 = vmatpush2.msra.mxu0 0.0
    %7246 = vmatprep.subr.mxu0 0.0
    %7247 = vmatpush2.msra.mxu0 0.0
    %7248 = vmatprep.subr.mxu0 0.0
    %7249 = vmatpush2.msra.mxu0 0.0
    %7250 = vmatprep.mubr.f32.mxu0 0.0
    %v7251 = vand.u32 %v4303, 4294901760
    %7252 = vmatmul.mubr.f32.gmra.mxu0 %v7251
    %v7253 = vpop.f32.mrf.mxu0
    %v7254 = vadd.f32 %v7135, %v7253
    %v7255 = vpop.f32.mrf.mxu0
    %7256 = vdwg.mxu0
    %7257 = vmatprep.subr.mxu0 0.0
    %v7258 = vand.u32 %v4351, 4294901760
    %7259 = vmatpush1.msra.mxu0 %v7258
    %7260 = vmatprep.subr.mxu0 0.0
    %v7261 = vand.u32 %v4348, 4294901760
    %7262 = vmatpush1.msra.mxu0 %v7261
    %7263 = vmatprep.subr.mxu0 0.0
    %v7264 = vand.u32 %v4345, 4294901760
    %7265 = vmatpush1.msra.mxu0 %v7264
    %7266 = vmatprep.subr.mxu0 0.0
    %v7267 = vand.u32 %v4342, 4294901760
    %7268 = vmatpush1.msra.mxu0 %v7267
    %7269 = vmatprep.subr.mxu0 0.0
    %v7270 = vand.u32 %v4339, 4294901760
    %7271 = vmatpush1.msra.mxu0 %v7270
    %7272 = vmatprep.subr.mxu0 0.0
    %v7273 = vand.u32 %v4336, 4294901760
    %7274 = vmatpush1.msra.mxu0 %v7273
    %7275 = vmatprep.subr.mxu0 0.0
    %v7276 = vand.u32 %v4333, 4294901760
    %7277 = vmatpush1.msra.mxu0 %v7276
    %7278 = vmatprep.subr.mxu0 0.0
    %v7279 = vand.u32 %v4330, 4294901760
    %7280 = vmatpush1.msra.mxu0 %v7279
    %7281 = vmatprep.subr.mxu0 0.0
    %v7282 = vand.u32 %v4327, 4294901760
    %7283 = vmatpush1.msra.mxu0 %v7282
    %7284 = vmatprep.subr.mxu0 0.0
    %v7285 = vand.u32 %v4324, 4294901760
    %7286 = vmatpush1.msra.mxu0 %v7285
    %7287 = vmatprep.subr.mxu0 0.0
    %v7288 = vand.u32 %v4321, 4294901760
    %7289 = vmatpush1.msra.mxu0 %v7288
    %7290 = vmatprep.subr.mxu0 0.0
    %v7291 = vand.u32 %v4318, 4294901760
    %7292 = vmatpush1.msra.mxu0 %v7291
    %7293 = vmatprep.subr.mxu0 0.0
    %v7294 = vand.u32 %v4315, 4294901760
    %7295 = vmatpush1.msra.mxu0 %v7294
    %7296 = vmatprep.subr.mxu0 0.0
    %v7297 = vand.u32 %v4312, 4294901760
    %7298 = vmatpush1.msra.mxu0 %v7297
    %7299 = vmatprep.subr.mxu0 0.0
    %v7300 = vand.u32 %v4309, 4294901760
    %7301 = vmatpush1.msra.mxu0 %v7300
    %7302 = vmatprep.subr.mxu0 0.0
    %v7303 = vand.u32 %v4306, 4294901760
    %7304 = vmatpush1.msra.mxu0 %v7303
    %7305 = vmatprep.subr.mxu0 0.0
    %7306 = vmatpush2.msra.mxu0 0.0
    %7307 = vmatprep.subr.mxu0 0.0
    %7308 = vmatpush2.msra.mxu0 0.0
    %7309 = vmatprep.subr.mxu0 0.0
    %7310 = vmatpush2.msra.mxu0 0.0
    %7311 = vmatprep.subr.mxu0 0.0
    %7312 = vmatpush2.msra.mxu0 0.0
    %7313 = vmatprep.subr.mxu0 0.0
    %7314 = vmatpush2.msra.mxu0 0.0
    %7315 = vmatprep.subr.mxu0 0.0
    %7316 = vmatpush2.msra.mxu0 0.0
    %7317 = vmatprep.subr.mxu0 0.0
    %7318 = vmatpush2.msra.mxu0 0.0
    %7319 = vmatprep.subr.mxu0 0.0
    %7320 = vmatpush2.msra.mxu0 0.0
    %7321 = vmatprep.subr.mxu0 0.0
    %7322 = vmatpush2.msra.mxu0 0.0
    %7323 = vmatprep.subr.mxu0 0.0
    %7324 = vmatpush2.msra.mxu0 0.0
    %7325 = vmatprep.subr.mxu0 0.0
    %7326 = vmatpush2.msra.mxu0 0.0
    %7327 = vmatprep.subr.mxu0 0.0
    %7328 = vmatpush2.msra.mxu0 0.0
    %7329 = vmatprep.subr.mxu0 0.0
    %7330 = vmatpush2.msra.mxu0 0.0
    %7331 = vmatprep.subr.mxu0 0.0
    %7332 = vmatpush2.msra.mxu0 0.0
    %7333 = vmatprep.subr.mxu0 0.0
    %7334 = vmatpush2.msra.mxu0 0.0
    %7335 = vmatprep.subr.mxu0 0.0
    %7336 = vmatpush2.msra.mxu0 0.0
    %7337 = vmatprep.mubr.f32.mxu0 0.0
    %v7338 = vand.u32 %v4303, 4294901760
    %7339 = vmatmul.mubr.f32.gmra.mxu0 %v7338
    %v7340 = vpop.f32.mrf.mxu0
    %v7341 = vadd.f32 %v7254, %v7340
    %v7342 = vpop.f32.mrf.mxu0
    %7343 = vdwg.mxu0
    %v7344 = vld [vmem:[#allocation7] sm:$0x7]
    %v7346 = vlaneseq
    %v7347 = vshrl.u32 %v7346, 7
    %v7348 = vsub.s32 0, %v7347
    %v7349 = vrot.slane %v7344, %v7348
    %v7350 = vlaneseq
    %v7351 = vshrl.u32 %v7350, 7
    %v7352 = vsub.s32 1, %v7351
    %v7353 = vrot.slane %v7344, %v7352
    %v7354 = vlaneseq
    %v7355 = vshrl.u32 %v7354, 7
    %v7356 = vsub.s32 2, %v7355
    %v7357 = vrot.slane %v7344, %v7356
    %v7361 = vmul.f32 %v6699, %v7349
    %v7362 = vmul.f32 %v6701, %v7353
    %v7363 = vmul.f32 %v7341, %v7357
    %v7364 = vld [vmem:[%s4] sm:$0x7]
    %v7365 = vmul.f32 %v5203, %v7361
    %v7366 = vmul.f32 %v5205, %v7362
    %v7367 = vmul.f32 %v5845, %v7363
    %v7371 = vcombine.low %v7365, %v7366
    %v7373 = vunpack.c.l.s4 1966171168
    %v7374 = vunpack.c.0.s8 %v7373
    %v7375 = vlaneseq
    %v7376 = vshrl.u32 %v7375, 7
    %v7377 = vsub.s32 %v7374, %v7376
    %v7378 = vrot.slane %v7371, %v7377
    %v7380 = vunpack.c.l.s4 1966171168
    %v7381 = vunpack.c.0.s8 %v7380
    %v7382 = vlaneseq
    %v7383 = vshrl.u32 %v7382, 7
    %v7384 = vsub.s32 %v7381, %v7383
    %v7385 = vrot.slane %v7367, %v7384
    %v7386 = vcombine.low %v7378, %v7385
    %v7388 = vunpack.c.l.s4 1966171168
    %v7389 = vunpack.c.0.s8 %v7388
    %v7390 = vlaneseq
    %v7391 = vshrl.u32 %v7390, 7
    %v7392 = vsub.s32 %v7389, %v7391
    %v7393 = vrot.slane %v7386, %v7392
    %v7395 = vsub.f32 %v7364, %v7393
    %v7396 = vlaneseq
    %v7397 = vshrl.u32 %v7396, 7
    %v7398 = vsub.s32 0, %v7397
    %v7399 = vrot.slane %v7361, %v7398
    %v7400 = vlaneseq
    %v7401 = vshrl.u32 %v7400, 7
    %v7402 = vsub.s32 0, %v7401
    %v7403 = vrot.slane %v7362, %v7402
    %v7404 = vlaneseq
    %v7405 = vshrl.u32 %v7404, 7
    %v7406 = vsub.s32 0, %v7405
    %v7407 = vrot.slane %v7363, %v7406
    %v7408 = vmul.f32 %v1195, %v7399
    %v7409 = vmul.f32 %v1196, %v7403
    %v7410 = vmul.f32 %v1197, %v7407
    %v7412 = vlaneseq
    %v7413 = vshrl.u32 %v7412, 7
    %v7414 = vsub.s32 0, %v7413
    %v7415 = vrot.slane %v7395, %v7414
    %v7416 = vlaneseq
    %v7417 = vshrl.u32 %v7416, 7
    %v7418 = vsub.s32 1, %v7417
    %v7419 = vrot.slane %v7395, %v7418
    %v7420 = vlaneseq
    %v7421 = vshrl.u32 %v7420, 7
    %v7422 = vsub.s32 2, %v7421
    %v7423 = vrot.slane %v7395, %v7422
    %v7427 = vadd.f32 %v7408, %v7415
    %v7428 = vadd.f32 %v7409, %v7419
    %v7429 = vadd.f32 %v7410, %v7423
    %v7432 = vcombine.low %v7427, %v7428
    %7434 = vst [vmem:[#allocation11] sm:$0xff] %v7432
    %7435 = vst [vmem:[#allocation11 + $0x8] sm:$0xf] %v7429
    // Predicated region
    $region50: #{tpu_custom_call.1} parent=1 // pred_check
      _
    $region51: #{tpu_custom_call.1} parent=1 // pred_check_branch
      %7437 = sbr.rel (0) target = $region53
    $region52: #{tpu_custom_call.1} parent=1 // pred_region
      %s7439 = ssub.s32 192, 192
      %7440 = vsyncadd [#allocation4], %s7439
      %s7442 = sshll.u32 [#allocation11], 4
      %s7443 = int_to_ptr.vmem [resolvable:$true] %s7442
      %7445 = dma.vmem_to_hbm [thread:$0]  %s7443, 192, %s7, [#allocation4]
    $region53: #{tpu_custom_call.1} parent=1 // pred_fallthru
      _
    // Predicated region
    $region54: #{tpu_custom_call.1} parent=1 // pred_check
      _
    $region55: #{tpu_custom_call.1} parent=1 // pred_check_branch
      %7447 = sbr.rel (0) target = $region57
    $region56: #{tpu_custom_call.1} parent=1 // pred_region
      %7448 = dma.done [#allocation4], 192
    $region57: #{tpu_custom_call.1} parent=1 // pred_fallthru
      _
    %7449 = vsyncpa [#allocation3], 1
    %7450 = vsyncpa [#allocation6], 1
    %7451 = vsyncpa [#allocation9], 1
    %7452 = vsyncpa [#allocation4], 1

</llo_original>
